<compile_context>
chip_gen: v7x
topology: tpu7x:2x2x1
jax: 0.10.0
libtpu: 0.0.40
codegen_flags: <defaults>
</compile_context>

<pallas_src>
import functools

import jax
import jax.numpy as jnp
import numpy as np
from jax.experimental import pallas as pl
from jax.experimental.pallas import tpu as pltpu


def _round_up(v, m):
    return ((v + m - 1) // m) * m


# ----------------------------------------------------------------------------
# Fused whole-network kernel (one grid step = one batch element)
# ----------------------------------------------------------------------------
def make_network_kernel(meta):
    nblk = len(meta)

    def kernel(*refs):
        pos = 0
        x_ref = refs[pos]; pos += 1
        blk_refs = []
        for _ in range(nblk):
            blk_refs.append(refs[pos:pos + 10]); pos += 10
        wout_ref, bout_ref = refs[pos], refs[pos + 1]; pos += 2
        o_ref = refs[pos]; pos += 1
        pads = refs[pos:pos + nblk]; pos += nblk
        xbufs = refs[pos:pos + nblk - 1]          # inputs of blocks 1..nblk-1

        for bi in range(nblk):
            m = meta[bi]
            Wp, Nrp, S, W, C = m['Wp'], m['Nrp'], m['S'], m['W'], m['C']
            J, H2, W2 = m['J'], m['H2'], m['W2']
            wb, bb, w1s, b1s, s2s, t2s, w2s, b2s, w3s, b3s = blk_refs[bi]
            pad = pads[bi]

            # Zero halo + tail ONCE per block (interior is fully rewritten below).
            pad[...] = jnp.zeros_like(pad)

            # 1 on real pixels, 0 on the slack columns of the row-padded layout.
            col = jax.lax.broadcasted_iota(jnp.int32, (Nrp, 1), 0) % Wp
            vmask = (col < W).astype(jnp.float32)

            xin = x_ref[0] if bi == 0 else xbufs[bi - 1][...]

            # base 1x1 conv (input normalization folded into the first one).
            h = jnp.dot(xin, wb[...], preferred_element_type=jnp.float32) + bb[...]

            for j in range(J):
                # 1x1 conv (BN1 folded) + ReLU, explicit BN2 affine, zero slack
                # (the zeroed slack provides the conv's zero padding).
                h1 = jnp.maximum(
                    jnp.dot(h, w1s[j], preferred_element_type=jnp.float32)
                    + b1s[j], 0.0)
                h1 = (h1 * s2s[j] + t2s[j]) * vmask

                # 3x3 same conv as ONE matmul: 9 shifted tap slices of the padded
                # scratch concatenated along lanes -> (Nrp, 9*C) operand.
                pad[pl.ds(S, Nrp), :] = h1
                taps = []
                for dy in range(3):
                    for dx in range(3):
                        off = S + (dy - 1) * Wp + (dx - 1)
                        taps.append(pad[pl.ds(off, Nrp), :])
                t9 = jnp.concatenate(taps, axis=-1)                  # (Nrp, 9*C)
                h2 = jnp.maximum(
                    jnp.dot(t9, w2s[j], preferred_element_type=jnp.float32)
                    + b2s[j], 0.0)

                # 1x1 conv (BN3 folded) + ReLU, residual add.
                h3 = jnp.maximum(
                    jnp.dot(h2, w3s[j], preferred_element_type=jnp.float32)
                    + b3s[j], 0.0)
                h = h + h3

            # 2x2 max-pool straight out of VMEM (one staging store + strided reads;
            # the staging store is kept because strided reads need a Ref).
            pad[pl.ds(S, Nrp), :] = h
            if bi + 1 < nblk:
                nxt = xbufs[bi]
                nWp = meta[bi + 1]['Wp']
                nxt[...] = jnp.zeros_like(nxt)     # next block's slack columns = 0
                for i in range(H2):
                    base = S + 2 * i * Wp
                    a = pad[pl.ds(base, W2, stride=2), :]
                    b = pad[pl.ds(base + 1, W2, stride=2), :]
                    c = pad[pl.ds(base + Wp, W2, stride=2), :]
                    d = pad[pl.ds(base + Wp + 1, W2, stride=2), :]
                    nxt[pl.ds(i * nWp, W2), :] = jnp.maximum(
                        jnp.maximum(a, b), jnp.maximum(c, d))
            else:
                # Last block: pool + global mean (1/N folded into w_out) + Linear.
                acc = jnp.zeros((W2, C), jnp.float32)
                for i in range(H2):
                    base = S + 2 * i * Wp
                    a = pad[pl.ds(base, W2, stride=2), :]
                    b = pad[pl.ds(base + 1, W2, stride=2), :]
                    c = pad[pl.ds(base + Wp, W2, stride=2), :]
                    d = pad[pl.ds(base + Wp + 1, W2, stride=2), :]
                    acc = acc + jnp.maximum(jnp.maximum(a, b), jnp.maximum(c, d))
                pooled = jnp.sum(acc, axis=0, keepdims=True)          # (1, C)
                o_ref[0] = (jnp.dot(pooled, wout_ref[...],
                                    preferred_element_type=jnp.float32)
                            + bout_ref[...]).astype(o_ref.dtype)

    return kernel


# ----------------------------------------------------------------------------
# Pallas wrapper
# ----------------------------------------------------------------------------
def pallas_forward(x_nchw, folded, B, H0, W0):
    nhwc = jnp.transpose(x_nchw, (0, 2, 3, 1)).astype(jnp.float32)   # NCHW -> NHWC

    # Static per-block layout metadata.
    meta = []
    H, W = H0, W0
    for blk in folded['blocks']:
        Cin, C = blk['wb'].shape
        J = blk['w1s'].shape[0]
        Wp = _round_up(W + 2, 8)          # row stride, sublane aligned
        S = _round_up(Wp + 1, 8)          # aligned start of the conv interior
        Nrp = H * Wp
        Npad = S + Nrp + Wp + 8           # covers the farthest (+Wp+1) tap slice
        meta.append(dict(H=H, W=W, Wp=Wp, S=S, Nrp=Nrp, Npad=Npad,
                         Cin=Cin, C=C, J=J, H2=H // 2, W2=W // 2))
        H, W = H // 2, W // 2
    num_class = folded['w_out'].shape[1]

    # Host-side layout glue only: append slack columns + flatten rows of the input.
    m0 = meta[0]
    x_rp = jnp.pad(nhwc, ((0, 0), (0, 0), (0, m0['Wp'] - W0), (0, 0)))
    x_rp = x_rp.reshape(B, m0['Nrp'], m0['Cin'])

    # Fold the global-average 1/N into the output weights (head = sum @ w_out + b).
    inv_n = 1.0 / float(meta[-1]['H2'] * meta[-1]['W2'])
    w_out = folded['w_out'] * inv_n
    b_out = folded['b_out']

    weights = []
    for blk in folded['blocks']:
        weights += [blk['wb'], blk['bb'], blk['w1s'], blk['b1s'], blk['s2s'],
                    blk['t2s'], blk['w2s'], blk['b2s'], blk['w3s'], blk['b3s']]
    weights += [w_out, b_out]

    def wspec(arr):
        nd = arr.ndim
        return pl.BlockSpec(arr.shape, lambda b, _z=(0,) * nd: _z)

    scratch = [pltpu.VMEM((m['Npad'], m['C']), jnp.float32) for m in meta]
    scratch += [pltpu.VMEM((meta[i]['Nrp'], meta[i]['Cin']), jnp.float32)
                for i in range(1, len(meta))]

    out = pl.pallas_call(
        make_network_kernel(meta),
        out_shape=jax.ShapeDtypeStruct((B, 1, num_class), jnp.float32),
        grid=(B,),
        in_specs=[pl.BlockSpec((1, m0['Nrp'], m0['Cin']), lambda b: (b, 0, 0))]
                 + [wspec(w) for w in weights],
        out_specs=pl.BlockSpec((1, 1, num_class), lambda b: (b, 0, 0)),
        scratch_shapes=scratch,
        compiler_params=pltpu.CompilerParams(dimension_semantics=("parallel",)),
    )(x_rp, *weights)
    return out.reshape(B, num_class)


# ----------------------------------------------------------------------------
# Deterministic synthetic parameters + BN/weight folding
# ----------------------------------------------------------------------------
def init_params(key, in_ch, config):
    keys = iter(jax.random.split(key, 256))

    def nk():
        return next(keys)

    def bn_params(C):
        gamma = 1.0 + 0.1 * jax.random.normal(nk(), (C,))
        beta = 0.1 * jax.random.normal(nk(), (C,))
        rmean = 0.1 * jax.random.normal(nk(), (C,))
        rvar = jax.random.uniform(nk(), (C,), jnp.float32, 0.9, 1.1)
        scale = gamma / jnp.sqrt(rvar + 1e-5)
        shift = beta - rmean * scale
        return (scale.reshape(1, C).astype(jnp.float32),
                shift.reshape(1, C).astype(jnp.float32))

    blocks = []
    indim = in_ch
    for i in range(config['num_conv_outer']):
        outdim = config['nchannel_base'] * (2 ** i)
        w_base = (0.3 * jax.random.normal(nk(), (indim, outdim))).astype(jnp.float32)
        b_base = (0.05 * jax.random.normal(nk(), (1, outdim))).astype(jnp.float32)
        indim = outdim
        cbs = []
        for _j in range(config['num_conv_inner']):
            C = outdim
            s1, t1 = bn_params(C)
            w1 = (0.3 * jax.random.normal(nk(), (C, C))).astype(jnp.float32)
            b1 = (0.05 * jax.random.normal(nk(), (1, C))).astype(jnp.float32)
            s2, t2 = bn_params(C)
            w2 = (0.2 * jax.random.normal(nk(), (3, 3, C, C))).astype(jnp.float32)  # HWIO
            b2 = (0.05 * jax.random.normal(nk(), (1, C))).astype(jnp.float32)
            s3, t3 = bn_params(C)
            w3 = (0.3 * jax.random.normal(nk(), (C, C))).astype(jnp.float32)
            b3 = (0.05 * jax.random.normal(nk(), (1, C))).astype(jnp.float32)
            cbs.append(dict(s1=s1, t1=t1, w1=w1, b1=b1, s2=s2, t2=t2,
                            w2_hwio=w2, b2=b2, s3=s3, t3=t3, w3=w3, b3=b3))
        blocks.append(dict(w_base=w_base, b_base=b_base, convblocks=cbs))
    w_out = (0.3 * jax.random.normal(nk(), (indim, config['num_class']))).astype(jnp.float32)
    b_out = (0.05 * jax.random.normal(nk(), (1, config['num_class']))).astype(jnp.float32)
    return dict(blocks=blocks, w_out=w_out, b_out=b_out)


def fold_params(params):
    """Fold BN affines + input normalization into conv weights for the kernel."""
    folded_blocks = []
    first = True
    for blk in params['blocks']:
        wb, bb = blk['w_base'], blk['b_base']
        if first:  # (x - 128)/128 folded into the first base conv
            bb = bb - jnp.sum(wb, axis=0, keepdims=True)
            wb = wb / 128.0
            first = False
        w1s, b1s, s2s, t2s, w2s, b2s, w3s, b3s = [], [], [], [], [], [], [], []
        for cb in blk['convblocks']:
            C = cb['w1'].shape[0]
            w1s.append(cb['s1'].reshape(C, 1) * cb['w1'])                    # BN1 fold
            b1s.append((cb['t1'] @ cb['w1'] + cb['b1']).reshape(1, 1, C))
            s2s.append(cb['s2'].reshape(1, 1, C))                            # BN2 stays explicit
            t2s.append(cb['t2'].reshape(1, 1, C))
            w2s.append(cb['w2_hwio'].reshape(9 * C, C))                      # rows: (dy*3+dx)*C+cin
            b2s.append(cb['b2'].reshape(1, 1, C))
            w3s.append(cb['s3'].reshape(C, 1) * cb['w3'])                    # BN3 fold
            b3s.append((cb['t3'] @ cb['w3'] + cb['b3']).reshape(1, 1, C))
        folded_blocks.append(dict(
            wb=wb, bb=bb,
            w1s=jnp.stack(w1s), b1s=jnp.concatenate(b1s, axis=0),
            s2s=jnp.concatenate(s2s, axis=0), t2s=jnp.concatenate(t2s, axis=0),
            w2s=jnp.stack(w2s), b2s=jnp.concatenate(b2s, axis=0),
            w3s=jnp.stack(w3s), b3s=jnp.concatenate(b3s, axis=0)))
    return dict(blocks=folded_blocks, w_out=params['w_out'], b_out=params['b_out'])


# ----------------------------------------------------------------------------
# Pure-JAX reference (same math) for a correctness cross-check
# ----------------------------------------------------------------------------
def reference_forward(x_nchw, params):
    P = jax.lax.Precision.HIGHEST
    h = jnp.transpose(x_nchw, (0, 2, 3, 1)).astype(jnp.float32)
    h = (h - 128.0) / 128.0
    for blk in params['blocks']:
        h = jnp.einsum('bhwc,cd->bhwd', h, blk['w_base'], precision=P) \
            + blk['b_base'].reshape(1, 1, 1, -1)
        for cb in blk['convblocks']:
            res = h
            y = h * cb['s1'].reshape(1, 1, 1, -1) + cb['t1'].reshape(1, 1, 1, -1)
            y = jnp.maximum(jnp.einsum('bhwc,cd->bhwd', y, cb['w1'], precision=P)
                            + cb['b1'].reshape(1, 1, 1, -1), 0.0)
            y = y * cb['s2'].reshape(1, 1, 1, -1) + cb['t2'].reshape(1, 1, 1, -1)
            y = jax.lax.conv_general_dilated(
                y, cb['w2_hwio'], (1, 1), 'SAME',
                dimension_numbers=('NHWC', 'HWIO', 'NHWC'), precision=P)
            y = jnp.maximum(y + cb['b2'].reshape(1, 1, 1, -1), 0.0)
            y = y * cb['s3'].reshape(1, 1, 1, -1) + cb['t3'].reshape(1, 1, 1, -1)
            y = jnp.maximum(jnp.einsum('bhwc,cd->bhwd', y, cb['w3'], precision=P)
                            + cb['b3'].reshape(1, 1, 1, -1), 0.0)
            h = res + y
        B, H, W, C = h.shape
        h = h.reshape(B, H // 2, 2, W // 2, 2, C).max(axis=(2, 4))
    g = h.mean(axis=(1, 2))
    return jnp.einsum('bc,cd->bd', g, params['w_out'], precision=P) + params['b_out']


# ----------------------------------------------------------------------------
if __name__ == "__main__":
    # config: conv2d='custom', activation='ReLU', pool2d='MaxPool2d',
    #         num_conv_outer=2, num_conv_inner=1, nchannel_base=4, ksize=3,
    #         num_class=10;  input_shp = (4, 16, 16)
    config = dict(num_conv_outer=2, num_conv_inner=1, nchannel_base=4,
                  ksize=3, num_class=10)
    B, C, H, W = 2, 4, 16, 16

    key = jax.random.PRNGKey(0)
    kx, kp = jax.random.split(key)
    x = jax.random.uniform(kx, (B, C, H, W), jnp.float32, 0.0, 255.0)  # NCHW, image-like
    params = init_params(kp, C, config)
    folded = fold_params(params)

    fwd = jax.jit(functools.partial(pallas_forward, B=B, H0=H, W0=W))
    out = jax.block_until_ready(fwd(x, folded))
    ref = jax.block_until_ready(reference_forward(x, params))

    assert out.shape == (B, config['num_class'])
    np.testing.assert_allclose(np.asarray(out), np.asarray(ref), rtol=2e-3, atol=2e-3)
    print("KERNEL_OK")
</pallas_src>

<mosaic_0001>
module attributes {stable_mosaic.version = 11 : i64} {
  func.func @kernel(%arg0: i32, %arg1: memref<1x384x4xf32, #tpu.memory_space<vmem>>, %arg2: memref<4x4xf32, #tpu.memory_space<vmem>>, %arg3: memref<1x4xf32, #tpu.memory_space<vmem>>, %arg4: memref<1x4x4xf32, #tpu.memory_space<vmem>>, %arg5: memref<1x1x4xf32, #tpu.memory_space<vmem>>, %arg6: memref<1x1x4xf32, #tpu.memory_space<vmem>>, %arg7: memref<1x1x4xf32, #tpu.memory_space<vmem>>, %arg8: memref<1x36x4xf32, #tpu.memory_space<vmem>>, %arg9: memref<1x1x4xf32, #tpu.memory_space<vmem>>, %arg10: memref<1x4x4xf32, #tpu.memory_space<vmem>>, %arg11: memref<1x1x4xf32, #tpu.memory_space<vmem>>, %arg12: memref<4x8xf32, #tpu.memory_space<vmem>>, %arg13: memref<1x8xf32, #tpu.memory_space<vmem>>, %arg14: memref<1x8x8xf32, #tpu.memory_space<vmem>>, %arg15: memref<1x1x8xf32, #tpu.memory_space<vmem>>, %arg16: memref<1x1x8xf32, #tpu.memory_space<vmem>>, %arg17: memref<1x1x8xf32, #tpu.memory_space<vmem>>, %arg18: memref<1x72x8xf32, #tpu.memory_space<vmem>>, %arg19: memref<1x1x8xf32, #tpu.memory_space<vmem>>, %arg20: memref<1x8x8xf32, #tpu.memory_space<vmem>>, %arg21: memref<1x1x8xf32, #tpu.memory_space<vmem>>, %arg22: memref<8x10xf32, #tpu.memory_space<vmem>>, %arg23: memref<1x10xf32, #tpu.memory_space<vmem>>, %arg24: memref<1x1x10xf32, #tpu.memory_space<vmem>>, %arg25: memref<448x4xf32, #tpu.memory_space<vmem>>, %arg26: memref<176x8xf32, #tpu.memory_space<vmem>>, %arg27: memref<128x4xf32, #tpu.memory_space<vmem>>) attributes {dimension_semantics = [#tpu.dimension_semantics<parallel>], iteration_bounds = array<i64: 2>, scalar_prefetch = 0 : i64, scratch_operands = 3 : i64, tpu.core_type = #tpu.core_type<tc>, window_params = [{transform_indices = @transform_0, window_bounds = array<i64: 1, 384, 4>}, {pipeline_mode = #tpu.pipeline_mode<synchronous>, transform_indices = @transform_1, window_bounds = array<i64: 4, 4>}, {pipeline_mode = #tpu.pipeline_mode<synchronous>, transform_indices = @transform_2, window_bounds = array<i64: 1, 4>}, {pipeline_mode = #tpu.pipeline_mode<synchronous>, transform_indices = @transform_3, window_bounds = array<i64: 1, 4, 4>}, {pipeline_mode = #tpu.pipeline_mode<synchronous>, transform_indices = @transform_4, window_bounds = array<i64: 1, 1, 4>}, {pipeline_mode = #tpu.pipeline_mode<synchronous>, transform_indices = @transform_5, window_bounds = array<i64: 1, 1, 4>}, {pipeline_mode = #tpu.pipeline_mode<synchronous>, transform_indices = @transform_6, window_bounds = array<i64: 1, 1, 4>}, {pipeline_mode = #tpu.pipeline_mode<synchronous>, transform_indices = @transform_7, window_bounds = array<i64: 1, 36, 4>}, {pipeline_mode = #tpu.pipeline_mode<synchronous>, transform_indices = @transform_8, window_bounds = array<i64: 1, 1, 4>}, {pipeline_mode = #tpu.pipeline_mode<synchronous>, transform_indices = @transform_9, window_bounds = array<i64: 1, 4, 4>}, {pipeline_mode = #tpu.pipeline_mode<synchronous>, transform_indices = @transform_10, window_bounds = array<i64: 1, 1, 4>}, {pipeline_mode = #tpu.pipeline_mode<synchronous>, transform_indices = @transform_11, window_bounds = array<i64: 4, 8>}, {pipeline_mode = #tpu.pipeline_mode<synchronous>, transform_indices = @transform_12, window_bounds = array<i64: 1, 8>}, {pipeline_mode = #tpu.pipeline_mode<synchronous>, transform_indices = @transform_13, window_bounds = array<i64: 1, 8, 8>}, {pipeline_mode = #tpu.pipeline_mode<synchronous>, transform_indices = @transform_14, window_bounds = array<i64: 1, 1, 8>}, {pipeline_mode = #tpu.pipeline_mode<synchronous>, transform_indices = @transform_15, window_bounds = array<i64: 1, 1, 8>}, {pipeline_mode = #tpu.pipeline_mode<synchronous>, transform_indices = @transform_16, window_bounds = array<i64: 1, 1, 8>}, {pipeline_mode = #tpu.pipeline_mode<synchronous>, transform_indices = @transform_17, window_bounds = array<i64: 1, 72, 8>}, {pipeline_mode = #tpu.pipeline_mode<synchronous>, transform_indices = @transform_18, window_bounds = array<i64: 1, 1, 8>}, {pipeline_mode = #tpu.pipeline_mode<synchronous>, transform_indices = @transform_19, window_bounds = array<i64: 1, 8, 8>}, {pipeline_mode = #tpu.pipeline_mode<synchronous>, transform_indices = @transform_20, window_bounds = array<i64: 1, 1, 8>}, {pipeline_mode = #tpu.pipeline_mode<synchronous>, transform_indices = @transform_21, window_bounds = array<i64: 8, 10>}, {pipeline_mode = #tpu.pipeline_mode<synchronous>, transform_indices = @transform_22, window_bounds = array<i64: 1, 10>}, {transform_indices = @transform_23, window_bounds = array<i64: 1, 1, 10>}]} {
    %cst = arith.constant 0.000000e+00 : f32
    %0 = vector.broadcast %cst : f32 to vector<448x4xf32>
    %c0 = arith.constant 0 : index
    %c0_0 = arith.constant 0 : index
    %1 = vector.load %arg25[%c0, %c0_0] : memref<448x4xf32, #tpu.memory_space<vmem>>, vector<448x4xf32>
    tpu.vector_store %arg25[%c0, %c0_0], %0 {strides = array<i32>} : memref<448x4xf32, #tpu.memory_space<vmem>>, vector<448x4xf32>,
    %2 = tpu.iota {dimensions = array<i32: 0>} : vector<384x1xi32>
    %c24_i32 = arith.constant 24 : i32
    %c0_i32 = arith.constant 0 : i32
    %3 = arith.cmpi eq, %c24_i32, %c0_i32 : i32
    %c1_i32 = arith.constant 1 : i32
    %4 = arith.select %3, %c1_i32, %c24_i32 : i32
    %5 = vector.broadcast %4 : i32 to vector<384x1xi32>
    %6 = arith.remsi %2, %5 : vector<384x1xi32>
    %c0_i32_1 = arith.constant 0 : i32
    %7 = vector.broadcast %c0_i32_1 : i32 to vector<384x1xi32>
    %8 = arith.cmpi ne, %6, %7 : vector<384x1xi32>
    %c0_i32_2 = arith.constant 0 : i32
    %9 = vector.broadcast %c0_i32_2 : i32 to vector<384x1xi32>
    %10 = arith.cmpi slt, %6, %9 : vector<384x1xi32>
    %c0_i32_3 = arith.constant 0 : i32
    %11 = arith.cmpi slt, %4, %c0_i32_3 : i32
    %12 = vector.broadcast %11 : i1 to vector<384x1xi1>
    %13 = vector.broadcast %12 : vector<384x1xi1> to vector<384x1xi1>
    %14 = arith.xori %10, %13 : vector<384x1xi1>
    %15 = arith.andi %14, %8 : vector<384x1xi1>
    %16 = vector.broadcast %4 : i32 to vector<384x1xi32>
    %17 = arith.addi %6, %16 : vector<384x1xi32>
    %18 = arith.select %15, %17, %6 : vector<384x1xi1>, vector<384x1xi32>
    %c16_i32 = arith.constant 16 : i32
    %19 = vector.broadcast %c16_i32 : i32 to vector<384x1xi32>
    %20 = arith.cmpi slt, %18, %19 : vector<384x1xi32>
    %21 = arith.extui %20 : vector<384x1xi1> to vector<384x1xi32>
    %22 = arith.sitofp %21 : vector<384x1xi32> to vector<384x1xf32>
    %c0_4 = arith.constant 0 : index
    %c0_5 = arith.constant 0 : index
    %c0_6 = arith.constant 0 : index
    %23 = vector.load %arg1[%c0_4, %c0_5, %c0_6] : memref<1x384x4xf32, #tpu.memory_space<vmem>>, vector<1x384x4xf32>
    %24 = vector.shape_cast %23 : vector<1x384x4xf32> to vector<384x4xf32>
    %c0_7 = arith.constant 0 : index
    %c0_8 = arith.constant 0 : index
    %25 = vector.load %arg2[%c0_7, %c0_8] : memref<4x4xf32, #tpu.memory_space<vmem>>, vector<4x4xf32>
    %cst_9 = arith.constant dense<0.000000e+00> : vector<384x4xf32>
    %26 = tpu.matmul %24, %25, %cst_9 {dimension_numbers = #tpu.dot_dimension_numbers<[1], [0], [0], [1], [0, 0, 1, 1], [], []>} : vector<384x4xf32>, vector<4x4xf32>, vector<384x4xf32> -> vector<384x4xf32>
    %c0_10 = arith.constant 0 : index
    %c0_11 = arith.constant 0 : index
    %27 = vector.load %arg3[%c0_10, %c0_11] : memref<1x4xf32, #tpu.memory_space<vmem>>, vector<1x4xf32>
    %28 = vector.broadcast %27 : vector<1x4xf32> to vector<384x4xf32>
    %29 = arith.addf %26, %28 : vector<384x4xf32>
    %c0_12 = arith.constant 0 : index
    %c0_13 = arith.constant 0 : index
    %c0_14 = arith.constant 0 : index
    %30 = vector.load %arg4[%c0_12, %c0_13, %c0_14] : memref<1x4x4xf32, #tpu.memory_space<vmem>>, vector<1x4x4xf32>
    %31 = vector.shape_cast %30 : vector<1x4x4xf32> to vector<4x4xf32>
    %cst_15 = arith.constant dense<0.000000e+00> : vector<384x4xf32>
    %32 = tpu.matmul %29, %31, %cst_15 {dimension_numbers = #tpu.dot_dimension_numbers<[1], [0], [0], [1], [0, 0, 1, 1], [], []>} : vector<384x4xf32>, vector<4x4xf32>, vector<384x4xf32> -> vector<384x4xf32>
    %c0_16 = arith.constant 0 : index
    %c0_17 = arith.constant 0 : index
    %c0_18 = arith.constant 0 : index
    %33 = vector.load %arg5[%c0_16, %c0_17, %c0_18] : memref<1x1x4xf32, #tpu.memory_space<vmem>>, vector<1x1x4xf32>
    %34 = vector.shape_cast %33 : vector<1x1x4xf32> to vector<1x4xf32>
    %35 = vector.broadcast %34 : vector<1x4xf32> to vector<384x4xf32>
    %36 = arith.addf %32, %35 : vector<384x4xf32>
    %cst_19 = arith.constant 0.000000e+00 : f32
    %37 = vector.broadcast %cst_19 : f32 to vector<384x4xf32>
    %38 = arith.maximumf %36, %37 : vector<384x4xf32>
    %c0_20 = arith.constant 0 : index
    %c0_21 = arith.constant 0 : index
    %c0_22 = arith.constant 0 : index
    %39 = vector.load %arg6[%c0_20, %c0_21, %c0_22] : memref<1x1x4xf32, #tpu.memory_space<vmem>>, vector<1x1x4xf32>
    %40 = vector.shape_cast %39 : vector<1x1x4xf32> to vector<1x4xf32>
    %41 = vector.broadcast %40 : vector<1x4xf32> to vector<384x4xf32>
    %42 = arith.mulf %38, %41 : vector<384x4xf32>
    %c0_23 = arith.constant 0 : index
    %c0_24 = arith.constant 0 : index
    %c0_25 = arith.constant 0 : index
    %43 = vector.load %arg7[%c0_23, %c0_24, %c0_25] : memref<1x1x4xf32, #tpu.memory_space<vmem>>, vector<1x1x4xf32>
    %44 = vector.shape_cast %43 : vector<1x1x4xf32> to vector<1x4xf32>
    %45 = vector.broadcast %44 : vector<1x4xf32> to vector<384x4xf32>
    %46 = arith.addf %42, %45 : vector<384x4xf32>
    %47 = vector.broadcast %22 : vector<384x1xf32> to vector<384x4xf32>
    %48 = arith.mulf %46, %47 : vector<384x4xf32>
    %c32 = arith.constant 32 : index
    %c0_26 = arith.constant 0 : index
    %49 = vector.load %arg25[%c32, %c0_26] : memref<448x4xf32, #tpu.memory_space<vmem>>, vector<384x4xf32>
    tpu.vector_store %arg25[%c32, %c0_26], %48 {strides = array<i32>} : memref<448x4xf32, #tpu.memory_space<vmem>>, vector<384x4xf32>,
    %c7 = arith.constant 7 : index
    %c0_27 = arith.constant 0 : index
    %50 = vector.load %arg25[%c7, %c0_27] : memref<448x4xf32, #tpu.memory_space<vmem>>, vector<384x4xf32>
    %c8 = arith.constant 8 : index
    %c0_28 = arith.constant 0 : index
    %51 = vector.load %arg25[%c8, %c0_28] : memref<448x4xf32, #tpu.memory_space<vmem>>, vector<384x4xf32>
    %c9 = arith.constant 9 : index
    %c0_29 = arith.constant 0 : index
    %52 = vector.load %arg25[%c9, %c0_29] : memref<448x4xf32, #tpu.memory_space<vmem>>, vector<384x4xf32>
    %c31 = arith.constant 31 : index
    %c0_30 = arith.constant 0 : index
    %53 = vector.load %arg25[%c31, %c0_30] : memref<448x4xf32, #tpu.memory_space<vmem>>, vector<384x4xf32>
    %c32_31 = arith.constant 32 : index
    %c0_32 = arith.constant 0 : index
    %54 = vector.load %arg25[%c32_31, %c0_32] : memref<448x4xf32, #tpu.memory_space<vmem>>, vector<384x4xf32>
    %c33 = arith.constant 33 : index
    %c0_33 = arith.constant 0 : index
    %55 = vector.load %arg25[%c33, %c0_33] : memref<448x4xf32, #tpu.memory_space<vmem>>, vector<384x4xf32>
    %c55 = arith.constant 55 : index
    %c0_34 = arith.constant 0 : index
    %56 = vector.load %arg25[%c55, %c0_34] : memref<448x4xf32, #tpu.memory_space<vmem>>, vector<384x4xf32>
    %c56 = arith.constant 56 : index
    %c0_35 = arith.constant 0 : index
    %57 = vector.load %arg25[%c56, %c0_35] : memref<448x4xf32, #tpu.memory_space<vmem>>, vector<384x4xf32>
    %c57 = arith.constant 57 : index
    %c0_36 = arith.constant 0 : index
    %58 = vector.load %arg25[%c57, %c0_36] : memref<448x4xf32, #tpu.memory_space<vmem>>, vector<384x4xf32>
    %59 = tpu.concatenate %50, %51, %52, %53, %54, %55, %56, %57, %58 in 1 : vector<384x4xf32>, vector<384x4xf32>, vector<384x4xf32>, vector<384x4xf32>, vector<384x4xf32>, vector<384x4xf32>, vector<384x4xf32>, vector<384x4xf32>, vector<384x4xf32> -> vector<384x36xf32>
    %c0_37 = arith.constant 0 : index
    %c0_38 = arith.constant 0 : index
    %c0_39 = arith.constant 0 : index
    %60 = vector.load %arg8[%c0_37, %c0_38, %c0_39] : memref<1x36x4xf32, #tpu.memory_space<vmem>>, vector<1x36x4xf32>
    %61 = vector.shape_cast %60 : vector<1x36x4xf32> to vector<36x4xf32>
    %cst_40 = arith.constant dense<0.000000e+00> : vector<384x4xf32>
    %62 = tpu.matmul %59, %61, %cst_40 {dimension_numbers = #tpu.dot_dimension_numbers<[1], [0], [0], [1], [0, 0, 1, 1], [], []>} : vector<384x36xf32>, vector<36x4xf32>, vector<384x4xf32> -> vector<384x4xf32>
    %c0_41 = arith.constant 0 : index
    %c0_42 = arith.constant 0 : index
    %c0_43 = arith.constant 0 : index
    %63 = vector.load %arg9[%c0_41, %c0_42, %c0_43] : memref<1x1x4xf32, #tpu.memory_space<vmem>>, vector<1x1x4xf32>
    %64 = vector.shape_cast %63 : vector<1x1x4xf32> to vector<1x4xf32>
    %65 = vector.broadcast %64 : vector<1x4xf32> to vector<384x4xf32>
    %66 = arith.addf %62, %65 : vector<384x4xf32>
    %cst_44 = arith.constant 0.000000e+00 : f32
    %67 = vector.broadcast %cst_44 : f32 to vector<384x4xf32>
    %68 = arith.maximumf %66, %67 : vector<384x4xf32>
    %c0_45 = arith.constant 0 : index
    %c0_46 = arith.constant 0 : index
    %c0_47 = arith.constant 0 : index
    %69 = vector.load %arg10[%c0_45, %c0_46, %c0_47] : memref<1x4x4xf32, #tpu.memory_space<vmem>>, vector<1x4x4xf32>
    %70 = vector.shape_cast %69 : vector<1x4x4xf32> to vector<4x4xf32>
    %cst_48 = arith.constant dense<0.000000e+00> : vector<384x4xf32>
    %71 = tpu.matmul %68, %70, %cst_48 {dimension_numbers = #tpu.dot_dimension_numbers<[1], [0], [0], [1], [0, 0, 1, 1], [], []>} : vector<384x4xf32>, vector<4x4xf32>, vector<384x4xf32> -> vector<384x4xf32>
    %c0_49 = arith.constant 0 : index
    %c0_50 = arith.constant 0 : index
    %c0_51 = arith.constant 0 : index
    %72 = vector.load %arg11[%c0_49, %c0_50, %c0_51] : memref<1x1x4xf32, #tpu.memory_space<vmem>>, vector<1x1x4xf32>
    %73 = vector.shape_cast %72 : vector<1x1x4xf32> to vector<1x4xf32>
    %74 = vector.broadcast %73 : vector<1x4xf32> to vector<384x4xf32>
    %75 = arith.addf %71, %74 : vector<384x4xf32>
    %cst_52 = arith.constant 0.000000e+00 : f32
    %76 = vector.broadcast %cst_52 : f32 to vector<384x4xf32>
    %77 = arith.maximumf %75, %76 : vector<384x4xf32>
    %78 = arith.addf %29, %77 : vector<384x4xf32>
    %c32_53 = arith.constant 32 : index
    %c0_54 = arith.constant 0 : index
    %79 = vector.load %arg25[%c32_53, %c0_54] : memref<448x4xf32, #tpu.memory_space<vmem>>, vector<384x4xf32>
    tpu.vector_store %arg25[%c32_53, %c0_54], %78 {strides = array<i32>} : memref<448x4xf32, #tpu.memory_space<vmem>>, vector<384x4xf32>,
    %cst_55 = arith.constant 0.000000e+00 : f32
    %80 = vector.broadcast %cst_55 : f32 to vector<128x4xf32>
    %c0_56 = arith.constant 0 : index
    %c0_57 = arith.constant 0 : index
    %81 = vector.load %arg27[%c0_56, %c0_57] : memref<128x4xf32, #tpu.memory_space<vmem>>, vector<128x4xf32>
    tpu.vector_store %arg27[%c0_56, %c0_57], %80 {strides = array<i32>} : memref<128x4xf32, #tpu.memory_space<vmem>>, vector<128x4xf32>,
    %c32_58 = arith.constant 32 : index
    %c0_59 = arith.constant 0 : index
    %82 = tpu.strided_load %arg25[%c32_58, %c0_59] {strides = array<i32: 2, 1>} : memref<448x4xf32, #tpu.memory_space<vmem>>, vector<8x4xf32>
    %c33_60 = arith.constant 33 : index
    %c0_61 = arith.constant 0 : index
    %83 = tpu.strided_load %arg25[%c33_60, %c0_61] {strides = array<i32: 2, 1>} : memref<448x4xf32, #tpu.memory_space<vmem>>, vector<8x4xf32>
    %c56_62 = arith.constant 56 : index
    %c0_63 = arith.constant 0 : index
    %84 = tpu.strided_load %arg25[%c56_62, %c0_63] {strides = array<i32: 2, 1>} : memref<448x4xf32, #tpu.memory_space<vmem>>, vector<8x4xf32>
    %c57_64 = arith.constant 57 : index
    %c0_65 = arith.constant 0 : index
    %85 = tpu.strided_load %arg25[%c57_64, %c0_65] {strides = array<i32: 2, 1>} : memref<448x4xf32, #tpu.memory_space<vmem>>, vector<8x4xf32>
    %86 = arith.maximumf %82, %83 : vector<8x4xf32>
    %87 = arith.maximumf %84, %85 : vector<8x4xf32>
    %88 = arith.maximumf %86, %87 : vector<8x4xf32>
    %c0_66 = arith.constant 0 : index
    %c0_67 = arith.constant 0 : index
    %89 = vector.load %arg27[%c0_66, %c0_67] : memref<128x4xf32, #tpu.memory_space<vmem>>, vector<8x4xf32>
    tpu.vector_store %arg27[%c0_66, %c0_67], %88 {strides = array<i32>} : memref<128x4xf32, #tpu.memory_space<vmem>>, vector<8x4xf32>,
    %c80 = arith.constant 80 : index
    %c0_68 = arith.constant 0 : index
    %90 = tpu.strided_load %arg25[%c80, %c0_68] {strides = array<i32: 2, 1>} : memref<448x4xf32, #tpu.memory_space<vmem>>, vector<8x4xf32>
    %c81 = arith.constant 81 : index
    %c0_69 = arith.constant 0 : index
    %91 = tpu.strided_load %arg25[%c81, %c0_69] {strides = array<i32: 2, 1>} : memref<448x4xf32, #tpu.memory_space<vmem>>, vector<8x4xf32>
    %c104 = arith.constant 104 : index
    %c0_70 = arith.constant 0 : index
    %92 = tpu.strided_load %arg25[%c104, %c0_70] {strides = array<i32: 2, 1>} : memref<448x4xf32, #tpu.memory_space<vmem>>, vector<8x4xf32>
    %c105 = arith.constant 105 : index
    %c0_71 = arith.constant 0 : index
    %93 = tpu.strided_load %arg25[%c105, %c0_71] {strides = array<i32: 2, 1>} : memref<448x4xf32, #tpu.memory_space<vmem>>, vector<8x4xf32>
    %94 = arith.maximumf %90, %91 : vector<8x4xf32>
    %95 = arith.maximumf %92, %93 : vector<8x4xf32>
    %96 = arith.maximumf %94, %95 : vector<8x4xf32>
    %c16 = arith.constant 16 : index
    %c0_72 = arith.constant 0 : index
    %97 = vector.load %arg27[%c16, %c0_72] : memref<128x4xf32, #tpu.memory_space<vmem>>, vector<8x4xf32>
    tpu.vector_store %arg27[%c16, %c0_72], %96 {strides = array<i32>} : memref<128x4xf32, #tpu.memory_space<vmem>>, vector<8x4xf32>,
    %c128 = arith.constant 128 : index
    %c0_73 = arith.constant 0 : index
    %98 = tpu.strided_load %arg25[%c128, %c0_73] {strides = array<i32: 2, 1>} : memref<448x4xf32, #tpu.memory_space<vmem>>, vector<8x4xf32>
    %c129 = arith.constant 129 : index
    %c0_74 = arith.constant 0 : index
    %99 = tpu.strided_load %arg25[%c129, %c0_74] {strides = array<i32: 2, 1>} : memref<448x4xf32, #tpu.memory_space<vmem>>, vector<8x4xf32>
    %c152 = arith.constant 152 : index
    %c0_75 = arith.constant 0 : index
    %100 = tpu.strided_load %arg25[%c152, %c0_75] {strides = array<i32: 2, 1>} : memref<448x4xf32, #tpu.memory_space<vmem>>, vector<8x4xf32>
    %c153 = arith.constant 153 : index
    %c0_76 = arith.constant 0 : index
    %101 = tpu.strided_load %arg25[%c153, %c0_76] {strides = array<i32: 2, 1>} : memref<448x4xf32, #tpu.memory_space<vmem>>, vector<8x4xf32>
    %102 = arith.maximumf %98, %99 : vector<8x4xf32>
    %103 = arith.maximumf %100, %101 : vector<8x4xf32>
    %104 = arith.maximumf %102, %103 : vector<8x4xf32>
    %c32_77 = arith.constant 32 : index
    %c0_78 = arith.constant 0 : index
    %105 = vector.load %arg27[%c32_77, %c0_78] : memref<128x4xf32, #tpu.memory_space<vmem>>, vector<8x4xf32>
    tpu.vector_store %arg27[%c32_77, %c0_78], %104 {strides = array<i32>} : memref<128x4xf32, #tpu.memory_space<vmem>>, vector<8x4xf32>,
    %c176 = arith.constant 176 : index
    %c0_79 = arith.constant 0 : index
    %106 = tpu.strided_load %arg25[%c176, %c0_79] {strides = array<i32: 2, 1>} : memref<448x4xf32, #tpu.memory_space<vmem>>, vector<8x4xf32>
    %c177 = arith.constant 177 : index
    %c0_80 = arith.constant 0 : index
    %107 = tpu.strided_load %arg25[%c177, %c0_80] {strides = array<i32: 2, 1>} : memref<448x4xf32, #tpu.memory_space<vmem>>, vector<8x4xf32>
    %c200 = arith.constant 200 : index
    %c0_81 = arith.constant 0 : index
    %108 = tpu.strided_load %arg25[%c200, %c0_81] {strides = array<i32: 2, 1>} : memref<448x4xf32, #tpu.memory_space<vmem>>, vector<8x4xf32>
    %c201 = arith.constant 201 : index
    %c0_82 = arith.constant 0 : index
    %109 = tpu.strided_load %arg25[%c201, %c0_82] {strides = array<i32: 2, 1>} : memref<448x4xf32, #tpu.memory_space<vmem>>, vector<8x4xf32>
    %110 = arith.maximumf %106, %107 : vector<8x4xf32>
    %111 = arith.maximumf %108, %109 : vector<8x4xf32>
    %112 = arith.maximumf %110, %111 : vector<8x4xf32>
    %c48 = arith.constant 48 : index
    %c0_83 = arith.constant 0 : index
    %113 = vector.load %arg27[%c48, %c0_83] : memref<128x4xf32, #tpu.memory_space<vmem>>, vector<8x4xf32>
    tpu.vector_store %arg27[%c48, %c0_83], %112 {strides = array<i32>} : memref<128x4xf32, #tpu.memory_space<vmem>>, vector<8x4xf32>,
    %c224 = arith.constant 224 : index
    %c0_84 = arith.constant 0 : index
    %114 = tpu.strided_load %arg25[%c224, %c0_84] {strides = array<i32: 2, 1>} : memref<448x4xf32, #tpu.memory_space<vmem>>, vector<8x4xf32>
    %c225 = arith.constant 225 : index
    %c0_85 = arith.constant 0 : index
    %115 = tpu.strided_load %arg25[%c225, %c0_85] {strides = array<i32: 2, 1>} : memref<448x4xf32, #tpu.memory_space<vmem>>, vector<8x4xf32>
    %c248 = arith.constant 248 : index
    %c0_86 = arith.constant 0 : index
    %116 = tpu.strided_load %arg25[%c248, %c0_86] {strides = array<i32: 2, 1>} : memref<448x4xf32, #tpu.memory_space<vmem>>, vector<8x4xf32>
    %c249 = arith.constant 249 : index
    %c0_87 = arith.constant 0 : index
    %117 = tpu.strided_load %arg25[%c249, %c0_87] {strides = array<i32: 2, 1>} : memref<448x4xf32, #tpu.memory_space<vmem>>, vector<8x4xf32>
    %118 = arith.maximumf %114, %115 : vector<8x4xf32>
    %119 = arith.maximumf %116, %117 : vector<8x4xf32>
    %120 = arith.maximumf %118, %119 : vector<8x4xf32>
    %c64 = arith.constant 64 : index
    %c0_88 = arith.constant 0 : index
    %121 = vector.load %arg27[%c64, %c0_88] : memref<128x4xf32, #tpu.memory_space<vmem>>, vector<8x4xf32>
    tpu.vector_store %arg27[%c64, %c0_88], %120 {strides = array<i32>} : memref<128x4xf32, #tpu.memory_space<vmem>>, vector<8x4xf32>,
    %c272 = arith.constant 272 : index
    %c0_89 = arith.constant 0 : index
    %122 = tpu.strided_load %arg25[%c272, %c0_89] {strides = array<i32: 2, 1>} : memref<448x4xf32, #tpu.memory_space<vmem>>, vector<8x4xf32>
    %c273 = arith.constant 273 : index
    %c0_90 = arith.constant 0 : index
    %123 = tpu.strided_load %arg25[%c273, %c0_90] {strides = array<i32: 2, 1>} : memref<448x4xf32, #tpu.memory_space<vmem>>, vector<8x4xf32>
    %c296 = arith.constant 296 : index
    %c0_91 = arith.constant 0 : index
    %124 = tpu.strided_load %arg25[%c296, %c0_91] {strides = array<i32: 2, 1>} : memref<448x4xf32, #tpu.memory_space<vmem>>, vector<8x4xf32>
    %c297 = arith.constant 297 : index
    %c0_92 = arith.constant 0 : index
    %125 = tpu.strided_load %arg25[%c297, %c0_92] {strides = array<i32: 2, 1>} : memref<448x4xf32, #tpu.memory_space<vmem>>, vector<8x4xf32>
    %126 = arith.maximumf %122, %123 : vector<8x4xf32>
    %127 = arith.maximumf %124, %125 : vector<8x4xf32>
    %128 = arith.maximumf %126, %127 : vector<8x4xf32>
    %c80_93 = arith.constant 80 : index
    %c0_94 = arith.constant 0 : index
    %129 = vector.load %arg27[%c80_93, %c0_94] : memref<128x4xf32, #tpu.memory_space<vmem>>, vector<8x4xf32>
    tpu.vector_store %arg27[%c80_93, %c0_94], %128 {strides = array<i32>} : memref<128x4xf32, #tpu.memory_space<vmem>>, vector<8x4xf32>,
    %c320 = arith.constant 320 : index
    %c0_95 = arith.constant 0 : index
    %130 = tpu.strided_load %arg25[%c320, %c0_95] {strides = array<i32: 2, 1>} : memref<448x4xf32, #tpu.memory_space<vmem>>, vector<8x4xf32>
    %c321 = arith.constant 321 : index
    %c0_96 = arith.constant 0 : index
    %131 = tpu.strided_load %arg25[%c321, %c0_96] {strides = array<i32: 2, 1>} : memref<448x4xf32, #tpu.memory_space<vmem>>, vector<8x4xf32>
    %c344 = arith.constant 344 : index
    %c0_97 = arith.constant 0 : index
    %132 = tpu.strided_load %arg25[%c344, %c0_97] {strides = array<i32: 2, 1>} : memref<448x4xf32, #tpu.memory_space<vmem>>, vector<8x4xf32>
    %c345 = arith.constant 345 : index
    %c0_98 = arith.constant 0 : index
    %133 = tpu.strided_load %arg25[%c345, %c0_98] {strides = array<i32: 2, 1>} : memref<448x4xf32, #tpu.memory_space<vmem>>, vector<8x4xf32>
    %134 = arith.maximumf %130, %131 : vector<8x4xf32>
    %135 = arith.maximumf %132, %133 : vector<8x4xf32>
    %136 = arith.maximumf %134, %135 : vector<8x4xf32>
    %c96 = arith.constant 96 : index
    %c0_99 = arith.constant 0 : index
    %137 = vector.load %arg27[%c96, %c0_99] : memref<128x4xf32, #tpu.memory_space<vmem>>, vector<8x4xf32>
    tpu.vector_store %arg27[%c96, %c0_99], %136 {strides = array<i32>} : memref<128x4xf32, #tpu.memory_space<vmem>>, vector<8x4xf32>,
    %c368 = arith.constant 368 : index
    %c0_100 = arith.constant 0 : index
    %138 = tpu.strided_load %arg25[%c368, %c0_100] {strides = array<i32: 2, 1>} : memref<448x4xf32, #tpu.memory_space<vmem>>, vector<8x4xf32>
    %c369 = arith.constant 369 : index
    %c0_101 = arith.constant 0 : index
    %139 = tpu.strided_load %arg25[%c369, %c0_101] {strides = array<i32: 2, 1>} : memref<448x4xf32, #tpu.memory_space<vmem>>, vector<8x4xf32>
    %c392 = arith.constant 392 : index
    %c0_102 = arith.constant 0 : index
    %140 = tpu.strided_load %arg25[%c392, %c0_102] {strides = array<i32: 2, 1>} : memref<448x4xf32, #tpu.memory_space<vmem>>, vector<8x4xf32>
    %c393 = arith.constant 393 : index
    %c0_103 = arith.constant 0 : index
    %141 = tpu.strided_load %arg25[%c393, %c0_103] {strides = array<i32: 2, 1>} : memref<448x4xf32, #tpu.memory_space<vmem>>, vector<8x4xf32>
    %142 = arith.maximumf %138, %139 : vector<8x4xf32>
    %143 = arith.maximumf %140, %141 : vector<8x4xf32>
    %144 = arith.maximumf %142, %143 : vector<8x4xf32>
    %c112 = arith.constant 112 : index
    %c0_104 = arith.constant 0 : index
    %145 = vector.load %arg27[%c112, %c0_104] : memref<128x4xf32, #tpu.memory_space<vmem>>, vector<8x4xf32>
    tpu.vector_store %arg27[%c112, %c0_104], %144 {strides = array<i32>} : memref<128x4xf32, #tpu.memory_space<vmem>>, vector<8x4xf32>,
    %cst_105 = arith.constant 0.000000e+00 : f32
    %146 = vector.broadcast %cst_105 : f32 to vector<176x8xf32>
    %c0_106 = arith.constant 0 : index
    %c0_107 = arith.constant 0 : index
    %147 = vector.load %arg26[%c0_106, %c0_107] : memref<176x8xf32, #tpu.memory_space<vmem>>, vector<176x8xf32>
    tpu.vector_store %arg26[%c0_106, %c0_107], %146 {strides = array<i32>} : memref<176x8xf32, #tpu.memory_space<vmem>>, vector<176x8xf32>,
    %148 = tpu.iota {dimensions = array<i32: 0>} : vector<128x1xi32>
    %c16_i32_108 = arith.constant 16 : i32
    %c0_i32_109 = arith.constant 0 : i32
    %149 = arith.cmpi eq, %c16_i32_108, %c0_i32_109 : i32
    %c1_i32_110 = arith.constant 1 : i32
    %150 = arith.select %149, %c1_i32_110, %c16_i32_108 : i32
    %151 = vector.broadcast %150 : i32 to vector<128x1xi32>
    %152 = arith.remsi %148, %151 : vector<128x1xi32>
    %c0_i32_111 = arith.constant 0 : i32
    %153 = vector.broadcast %c0_i32_111 : i32 to vector<128x1xi32>
    %154 = arith.cmpi ne, %152, %153 : vector<128x1xi32>
    %c0_i32_112 = arith.constant 0 : i32
    %155 = vector.broadcast %c0_i32_112 : i32 to vector<128x1xi32>
    %156 = arith.cmpi slt, %152, %155 : vector<128x1xi32>
    %c0_i32_113 = arith.constant 0 : i32
    %157 = arith.cmpi slt, %150, %c0_i32_113 : i32
    %158 = vector.broadcast %157 : i1 to vector<128x1xi1>
    %159 = vector.broadcast %158 : vector<128x1xi1> to vector<128x1xi1>
    %160 = arith.xori %156, %159 : vector<128x1xi1>
    %161 = arith.andi %160, %154 : vector<128x1xi1>
    %162 = vector.broadcast %150 : i32 to vector<128x1xi32>
    %163 = arith.addi %152, %162 : vector<128x1xi32>
    %164 = arith.select %161, %163, %152 : vector<128x1xi1>, vector<128x1xi32>
    %c8_i32 = arith.constant 8 : i32
    %165 = vector.broadcast %c8_i32 : i32 to vector<128x1xi32>
    %166 = arith.cmpi slt, %164, %165 : vector<128x1xi32>
    %167 = arith.extui %166 : vector<128x1xi1> to vector<128x1xi32>
    %168 = arith.sitofp %167 : vector<128x1xi32> to vector<128x1xf32>
    %c0_114 = arith.constant 0 : index
    %c0_115 = arith.constant 0 : index
    %169 = vector.load %arg27[%c0_114, %c0_115] : memref<128x4xf32, #tpu.memory_space<vmem>>, vector<128x4xf32>
    %c0_116 = arith.constant 0 : index
    %c0_117 = arith.constant 0 : index
    %170 = vector.load %arg12[%c0_116, %c0_117] : memref<4x8xf32, #tpu.memory_space<vmem>>, vector<4x8xf32>
    %cst_118 = arith.constant dense<0.000000e+00> : vector<128x8xf32>
    %171 = tpu.matmul %169, %170, %cst_118 {dimension_numbers = #tpu.dot_dimension_numbers<[1], [0], [0], [1], [0, 0, 1, 1], [], []>} : vector<128x4xf32>, vector<4x8xf32>, vector<128x8xf32> -> vector<128x8xf32>
    %c0_119 = arith.constant 0 : index
    %c0_120 = arith.constant 0 : index
    %172 = vector.load %arg13[%c0_119, %c0_120] : memref<1x8xf32, #tpu.memory_space<vmem>>, vector<1x8xf32>
    %173 = vector.broadcast %172 : vector<1x8xf32> to vector<128x8xf32>
    %174 = arith.addf %171, %173 : vector<128x8xf32>
    %c0_121 = arith.constant 0 : index
    %c0_122 = arith.constant 0 : index
    %c0_123 = arith.constant 0 : index
    %175 = vector.load %arg14[%c0_121, %c0_122, %c0_123] : memref<1x8x8xf32, #tpu.memory_space<vmem>>, vector<1x8x8xf32>
    %176 = vector.shape_cast %175 : vector<1x8x8xf32> to vector<8x8xf32>
    %cst_124 = arith.constant dense<0.000000e+00> : vector<128x8xf32>
    %177 = tpu.matmul %174, %176, %cst_124 {dimension_numbers = #tpu.dot_dimension_numbers<[1], [0], [0], [1], [0, 0, 1, 1], [], []>} : vector<128x8xf32>, vector<8x8xf32>, vector<128x8xf32> -> vector<128x8xf32>
    %c0_125 = arith.constant 0 : index
    %c0_126 = arith.constant 0 : index
    %c0_127 = arith.constant 0 : index
    %178 = vector.load %arg15[%c0_125, %c0_126, %c0_127] : memref<1x1x8xf32, #tpu.memory_space<vmem>>, vector<1x1x8xf32>
    %179 = vector.shape_cast %178 : vector<1x1x8xf32> to vector<1x8xf32>
    %180 = vector.broadcast %179 : vector<1x8xf32> to vector<128x8xf32>
    %181 = arith.addf %177, %180 : vector<128x8xf32>
    %cst_128 = arith.constant 0.000000e+00 : f32
    %182 = vector.broadcast %cst_128 : f32 to vector<128x8xf32>
    %183 = arith.maximumf %181, %182 : vector<128x8xf32>
    %c0_129 = arith.constant 0 : index
    %c0_130 = arith.constant 0 : index
    %c0_131 = arith.constant 0 : index
    %184 = vector.load %arg16[%c0_129, %c0_130, %c0_131] : memref<1x1x8xf32, #tpu.memory_space<vmem>>, vector<1x1x8xf32>
    %185 = vector.shape_cast %184 : vector<1x1x8xf32> to vector<1x8xf32>
    %186 = vector.broadcast %185 : vector<1x8xf32> to vector<128x8xf32>
    %187 = arith.mulf %183, %186 : vector<128x8xf32>
    %c0_132 = arith.constant 0 : index
    %c0_133 = arith.constant 0 : index
    %c0_134 = arith.constant 0 : index
    %188 = vector.load %arg17[%c0_132, %c0_133, %c0_134] : memref<1x1x8xf32, #tpu.memory_space<vmem>>, vector<1x1x8xf32>
    %189 = vector.shape_cast %188 : vector<1x1x8xf32> to vector<1x8xf32>
    %190 = vector.broadcast %189 : vector<1x8xf32> to vector<128x8xf32>
    %191 = arith.addf %187, %190 : vector<128x8xf32>
    %192 = vector.broadcast %168 : vector<128x1xf32> to vector<128x8xf32>
    %193 = arith.mulf %191, %192 : vector<128x8xf32>
    %c24 = arith.constant 24 : index
    %c0_135 = arith.constant 0 : index
    %194 = vector.load %arg26[%c24, %c0_135] : memref<176x8xf32, #tpu.memory_space<vmem>>, vector<128x8xf32>
    tpu.vector_store %arg26[%c24, %c0_135], %193 {strides = array<i32>} : memref<176x8xf32, #tpu.memory_space<vmem>>, vector<128x8xf32>,
    %c7_136 = arith.constant 7 : index
    %c0_137 = arith.constant 0 : index
    %195 = vector.load %arg26[%c7_136, %c0_137] : memref<176x8xf32, #tpu.memory_space<vmem>>, vector<128x8xf32>
    %c8_138 = arith.constant 8 : index
    %c0_139 = arith.constant 0 : index
    %196 = vector.load %arg26[%c8_138, %c0_139] : memref<176x8xf32, #tpu.memory_space<vmem>>, vector<128x8xf32>
    %c9_140 = arith.constant 9 : index
    %c0_141 = arith.constant 0 : index
    %197 = vector.load %arg26[%c9_140, %c0_141] : memref<176x8xf32, #tpu.memory_space<vmem>>, vector<128x8xf32>
    %c23 = arith.constant 23 : index
    %c0_142 = arith.constant 0 : index
    %198 = vector.load %arg26[%c23, %c0_142] : memref<176x8xf32, #tpu.memory_space<vmem>>, vector<128x8xf32>
    %c24_143 = arith.constant 24 : index
    %c0_144 = arith.constant 0 : index
    %199 = vector.load %arg26[%c24_143, %c0_144] : memref<176x8xf32, #tpu.memory_space<vmem>>, vector<128x8xf32>
    %c25 = arith.constant 25 : index
    %c0_145 = arith.constant 0 : index
    %200 = vector.load %arg26[%c25, %c0_145] : memref<176x8xf32, #tpu.memory_space<vmem>>, vector<128x8xf32>
    %c39 = arith.constant 39 : index
    %c0_146 = arith.constant 0 : index
    %201 = vector.load %arg26[%c39, %c0_146] : memref<176x8xf32, #tpu.memory_space<vmem>>, vector<128x8xf32>
    %c40 = arith.constant 40 : index
    %c0_147 = arith.constant 0 : index
    %202 = vector.load %arg26[%c40, %c0_147] : memref<176x8xf32, #tpu.memory_space<vmem>>, vector<128x8xf32>
    %c41 = arith.constant 41 : index
    %c0_148 = arith.constant 0 : index
    %203 = vector.load %arg26[%c41, %c0_148] : memref<176x8xf32, #tpu.memory_space<vmem>>, vector<128x8xf32>
    %204 = tpu.concatenate %195, %196, %197, %198, %199, %200, %201, %202, %203 in 1 : vector<128x8xf32>, vector<128x8xf32>, vector<128x8xf32>, vector<128x8xf32>, vector<128x8xf32>, vector<128x8xf32>, vector<128x8xf32>, vector<128x8xf32>, vector<128x8xf32> -> vector<128x72xf32>
    %c0_149 = arith.constant 0 : index
    %c0_150 = arith.constant 0 : index
    %c0_151 = arith.constant 0 : index
    %205 = vector.load %arg18[%c0_149, %c0_150, %c0_151] : memref<1x72x8xf32, #tpu.memory_space<vmem>>, vector<1x72x8xf32>
    %206 = vector.shape_cast %205 : vector<1x72x8xf32> to vector<72x8xf32>
    %cst_152 = arith.constant dense<0.000000e+00> : vector<128x8xf32>
    %207 = tpu.matmul %204, %206, %cst_152 {dimension_numbers = #tpu.dot_dimension_numbers<[1], [0], [0], [1], [0, 0, 1, 1], [], []>} : vector<128x72xf32>, vector<72x8xf32>, vector<128x8xf32> -> vector<128x8xf32>
    %c0_153 = arith.constant 0 : index
    %c0_154 = arith.constant 0 : index
    %c0_155 = arith.constant 0 : index
    %208 = vector.load %arg19[%c0_153, %c0_154, %c0_155] : memref<1x1x8xf32, #tpu.memory_space<vmem>>, vector<1x1x8xf32>
    %209 = vector.shape_cast %208 : vector<1x1x8xf32> to vector<1x8xf32>
    %210 = vector.broadcast %209 : vector<1x8xf32> to vector<128x8xf32>
    %211 = arith.addf %207, %210 : vector<128x8xf32>
    %cst_156 = arith.constant 0.000000e+00 : f32
    %212 = vector.broadcast %cst_156 : f32 to vector<128x8xf32>
    %213 = arith.maximumf %211, %212 : vector<128x8xf32>
    %c0_157 = arith.constant 0 : index
    %c0_158 = arith.constant 0 : index
    %c0_159 = arith.constant 0 : index
    %214 = vector.load %arg20[%c0_157, %c0_158, %c0_159] : memref<1x8x8xf32, #tpu.memory_space<vmem>>, vector<1x8x8xf32>
    %215 = vector.shape_cast %214 : vector<1x8x8xf32> to vector<8x8xf32>
    %cst_160 = arith.constant dense<0.000000e+00> : vector<128x8xf32>
    %216 = tpu.matmul %213, %215, %cst_160 {dimension_numbers = #tpu.dot_dimension_numbers<[1], [0], [0], [1], [0, 0, 1, 1], [], []>} : vector<128x8xf32>, vector<8x8xf32>, vector<128x8xf32> -> vector<128x8xf32>
    %c0_161 = arith.constant 0 : index
    %c0_162 = arith.constant 0 : index
    %c0_163 = arith.constant 0 : index
    %217 = vector.load %arg21[%c0_161, %c0_162, %c0_163] : memref<1x1x8xf32, #tpu.memory_space<vmem>>, vector<1x1x8xf32>
    %218 = vector.shape_cast %217 : vector<1x1x8xf32> to vector<1x8xf32>
    %219 = vector.broadcast %218 : vector<1x8xf32> to vector<128x8xf32>
    %220 = arith.addf %216, %219 : vector<128x8xf32>
    %cst_164 = arith.constant 0.000000e+00 : f32
    %221 = vector.broadcast %cst_164 : f32 to vector<128x8xf32>
    %222 = arith.maximumf %220, %221 : vector<128x8xf32>
    %223 = arith.addf %174, %222 : vector<128x8xf32>
    %c24_165 = arith.constant 24 : index
    %c0_166 = arith.constant 0 : index
    %224 = vector.load %arg26[%c24_165, %c0_166] : memref<176x8xf32, #tpu.memory_space<vmem>>, vector<128x8xf32>
    tpu.vector_store %arg26[%c24_165, %c0_166], %223 {strides = array<i32>} : memref<176x8xf32, #tpu.memory_space<vmem>>, vector<128x8xf32>,
    %cst_167 = arith.constant 0.000000e+00 : f32
    %225 = vector.broadcast %cst_167 : f32 to vector<4x8xf32>
    %c24_168 = arith.constant 24 : index
    %c0_169 = arith.constant 0 : index
    %226 = tpu.strided_load %arg26[%c24_168, %c0_169] {strides = array<i32: 2, 1>} : memref<176x8xf32, #tpu.memory_space<vmem>>, vector<4x8xf32>
    %c25_170 = arith.constant 25 : index
    %c0_171 = arith.constant 0 : index
    %227 = tpu.strided_load %arg26[%c25_170, %c0_171] {strides = array<i32: 2, 1>} : memref<176x8xf32, #tpu.memory_space<vmem>>, vector<4x8xf32>
    %c40_172 = arith.constant 40 : index
    %c0_173 = arith.constant 0 : index
    %228 = tpu.strided_load %arg26[%c40_172, %c0_173] {strides = array<i32: 2, 1>} : memref<176x8xf32, #tpu.memory_space<vmem>>, vector<4x8xf32>
    %c41_174 = arith.constant 41 : index
    %c0_175 = arith.constant 0 : index
    %229 = tpu.strided_load %arg26[%c41_174, %c0_175] {strides = array<i32: 2, 1>} : memref<176x8xf32, #tpu.memory_space<vmem>>, vector<4x8xf32>
    %230 = arith.maximumf %226, %227 : vector<4x8xf32>
    %231 = arith.maximumf %228, %229 : vector<4x8xf32>
    %232 = arith.maximumf %230, %231 : vector<4x8xf32>
    %233 = arith.addf %225, %232 : vector<4x8xf32>
    %c56_176 = arith.constant 56 : index
    %c0_177 = arith.constant 0 : index
    %234 = tpu.strided_load %arg26[%c56_176, %c0_177] {strides = array<i32: 2, 1>} : memref<176x8xf32, #tpu.memory_space<vmem>>, vector<4x8xf32>
    %c57_178 = arith.constant 57 : index
    %c0_179 = arith.constant 0 : index
    %235 = tpu.strided_load %arg26[%c57_178, %c0_179] {strides = array<i32: 2, 1>} : memref<176x8xf32, #tpu.memory_space<vmem>>, vector<4x8xf32>
    %c72 = arith.constant 72 : index
    %c0_180 = arith.constant 0 : index
    %236 = tpu.strided_load %arg26[%c72, %c0_180] {strides = array<i32: 2, 1>} : memref<176x8xf32, #tpu.memory_space<vmem>>, vector<4x8xf32>
    %c73 = arith.constant 73 : index
    %c0_181 = arith.constant 0 : index
    %237 = tpu.strided_load %arg26[%c73, %c0_181] {strides = array<i32: 2, 1>} : memref<176x8xf32, #tpu.memory_space<vmem>>, vector<4x8xf32>
    %238 = arith.maximumf %234, %235 : vector<4x8xf32>
    %239 = arith.maximumf %236, %237 : vector<4x8xf32>
    %240 = arith.maximumf %238, %239 : vector<4x8xf32>
    %241 = arith.addf %233, %240 : vector<4x8xf32>
    %c88 = arith.constant 88 : index
    %c0_182 = arith.constant 0 : index
    %242 = tpu.strided_load %arg26[%c88, %c0_182] {strides = array<i32: 2, 1>} : memref<176x8xf32, #tpu.memory_space<vmem>>, vector<4x8xf32>
    %c89 = arith.constant 89 : index
    %c0_183 = arith.constant 0 : index
    %243 = tpu.strided_load %arg26[%c89, %c0_183] {strides = array<i32: 2, 1>} : memref<176x8xf32, #tpu.memory_space<vmem>>, vector<4x8xf32>
    %c104_184 = arith.constant 104 : index
    %c0_185 = arith.constant 0 : index
    %244 = tpu.strided_load %arg26[%c104_184, %c0_185] {strides = array<i32: 2, 1>} : memref<176x8xf32, #tpu.memory_space<vmem>>, vector<4x8xf32>
    %c105_186 = arith.constant 105 : index
    %c0_187 = arith.constant 0 : index
    %245 = tpu.strided_load %arg26[%c105_186, %c0_187] {strides = array<i32: 2, 1>} : memref<176x8xf32, #tpu.memory_space<vmem>>, vector<4x8xf32>
    %246 = arith.maximumf %242, %243 : vector<4x8xf32>
    %247 = arith.maximumf %244, %245 : vector<4x8xf32>
    %248 = arith.maximumf %246, %247 : vector<4x8xf32>
    %249 = arith.addf %241, %248 : vector<4x8xf32>
    %c120 = arith.constant 120 : index
    %c0_188 = arith.constant 0 : index
    %250 = tpu.strided_load %arg26[%c120, %c0_188] {strides = array<i32: 2, 1>} : memref<176x8xf32, #tpu.memory_space<vmem>>, vector<4x8xf32>
    %c121 = arith.constant 121 : index
    %c0_189 = arith.constant 0 : index
    %251 = tpu.strided_load %arg26[%c121, %c0_189] {strides = array<i32: 2, 1>} : memref<176x8xf32, #tpu.memory_space<vmem>>, vector<4x8xf32>
    %c136 = arith.constant 136 : index
    %c0_190 = arith.constant 0 : index
    %252 = tpu.strided_load %arg26[%c136, %c0_190] {strides = array<i32: 2, 1>} : memref<176x8xf32, #tpu.memory_space<vmem>>, vector<4x8xf32>
    %c137 = arith.constant 137 : index
    %c0_191 = arith.constant 0 : index
    %253 = tpu.strided_load %arg26[%c137, %c0_191] {strides = array<i32: 2, 1>} : memref<176x8xf32, #tpu.memory_space<vmem>>, vector<4x8xf32>
    %254 = arith.maximumf %250, %251 : vector<4x8xf32>
    %255 = arith.maximumf %252, %253 : vector<4x8xf32>
    %256 = arith.maximumf %254, %255 : vector<4x8xf32>
    %257 = arith.addf %249, %256 : vector<4x8xf32>
    %cst_192 = arith.constant dense<0.000000e+00> : vector<8xf32>
    %258 = vector.multi_reduction <add>, %257, %cst_192 [0] : vector<4x8xf32> to vector<8xf32>
    %259 = vector.shape_cast %258 : vector<8xf32> to vector<1x8xf32>
    %c0_193 = arith.constant 0 : index
    %c0_194 = arith.constant 0 : index
    %260 = vector.load %arg22[%c0_193, %c0_194] : memref<8x10xf32, #tpu.memory_space<vmem>>, vector<8x10xf32>
    %cst_195 = arith.constant dense<0.000000e+00> : vector<1x10xf32>
    %261 = tpu.matmul %259, %260, %cst_195 {dimension_numbers = #tpu.dot_dimension_numbers<[1], [0], [0], [1], [0, 0, 1, 1], [], []>} : vector<1x8xf32>, vector<8x10xf32>, vector<1x10xf32> -> vector<1x10xf32>
    %c0_196 = arith.constant 0 : index
    %c0_197 = arith.constant 0 : index
    %262 = vector.load %arg23[%c0_196, %c0_197] : memref<1x10xf32, #tpu.memory_space<vmem>>, vector<1x10xf32>
    %263 = arith.addf %261, %262 : vector<1x10xf32>
    %c0_198 = arith.constant 0 : index
    %c0_199 = arith.constant 0 : index
    %c0_200 = arith.constant 0 : index
    %264 = vector.load %arg24[%c0_198, %c0_199, %c0_200] : memref<1x1x10xf32, #tpu.memory_space<vmem>>, vector<1x1x10xf32>
    %265 = vector.shape_cast %264 : vector<1x1x10xf32> to vector<1x10xf32>
    %266 = vector.shape_cast %263 : vector<1x10xf32> to vector<1x1x10xf32>
    tpu.vector_store %arg24[%c0_198, %c0_199, %c0_200], %266 {strides = array<i32>} : memref<1x1x10xf32, #tpu.memory_space<vmem>>, vector<1x1x10xf32>,
    return
  }
  func.func @transform_0(%arg0: i32) -> (i32, i32, i32) {
    %c0_i32 = arith.constant 0 : i32
    %c0_i32_0 = arith.constant 0 : i32
    %c0_i32_1 = arith.constant 0 : i32
    return %arg0, %c0_i32, %c0_i32_0 : i32, i32, i32
  }
  func.func @transform_1(%arg0: i32) -> (i32, i32) {
    %c0_i32 = arith.constant 0 : i32
    %c0_i32_0 = arith.constant 0 : i32
    %c0_i32_1 = arith.constant 0 : i32
    return %c0_i32, %c0_i32_0 : i32, i32
  }
  func.func @transform_2(%arg0: i32) -> (i32, i32) {
    %c0_i32 = arith.constant 0 : i32
    %c0_i32_0 = arith.constant 0 : i32
    %c0_i32_1 = arith.constant 0 : i32
    return %c0_i32, %c0_i32_0 : i32, i32
  }
  func.func @transform_3(%arg0: i32) -> (i32, i32, i32) {
    %c0_i32 = arith.constant 0 : i32
    %c0_i32_0 = arith.constant 0 : i32
    %c0_i32_1 = arith.constant 0 : i32
    %c0_i32_2 = arith.constant 0 : i32
    return %c0_i32, %c0_i32_0, %c0_i32_1 : i32, i32, i32
  }
  func.func @transform_4(%arg0: i32) -> (i32, i32, i32) {
    %c0_i32 = arith.constant 0 : i32
    %c0_i32_0 = arith.constant 0 : i32
    %c0_i32_1 = arith.constant 0 : i32
    %c0_i32_2 = arith.constant 0 : i32
    return %c0_i32, %c0_i32_0, %c0_i32_1 : i32, i32, i32
  }
  func.func @transform_5(%arg0: i32) -> (i32, i32, i32) {
    %c0_i32 = arith.constant 0 : i32
    %c0_i32_0 = arith.constant 0 : i32
    %c0_i32_1 = arith.constant 0 : i32
    %c0_i32_2 = arith.constant 0 : i32
    return %c0_i32, %c0_i32_0, %c0_i32_1 : i32, i32, i32
  }
  func.func @transform_6(%arg0: i32) -> (i32, i32, i32) {
    %c0_i32 = arith.constant 0 : i32
    %c0_i32_0 = arith.constant 0 : i32
    %c0_i32_1 = arith.constant 0 : i32
    %c0_i32_2 = arith.constant 0 : i32
    return %c0_i32, %c0_i32_0, %c0_i32_1 : i32, i32, i32
  }
  func.func @transform_7(%arg0: i32) -> (i32, i32, i32) {
    %c0_i32 = arith.constant 0 : i32
    %c0_i32_0 = arith.constant 0 : i32
    %c0_i32_1 = arith.constant 0 : i32
    %c0_i32_2 = arith.constant 0 : i32
    return %c0_i32, %c0_i32_0, %c0_i32_1 : i32, i32, i32
  }
  func.func @transform_8(%arg0: i32) -> (i32, i32, i32) {
    %c0_i32 = arith.constant 0 : i32
    %c0_i32_0 = arith.constant 0 : i32
    %c0_i32_1 = arith.constant 0 : i32
    %c0_i32_2 = arith.constant 0 : i32
    return %c0_i32, %c0_i32_0, %c0_i32_1 : i32, i32, i32
  }
  func.func @transform_9(%arg0: i32) -> (i32, i32, i32) {
    %c0_i32 = arith.constant 0 : i32
    %c0_i32_0 = arith.constant 0 : i32
    %c0_i32_1 = arith.constant 0 : i32
    %c0_i32_2 = arith.constant 0 : i32
    return %c0_i32, %c0_i32_0, %c0_i32_1 : i32, i32, i32
  }
  func.func @transform_10(%arg0: i32) -> (i32, i32, i32) {
    %c0_i32 = arith.constant 0 : i32
    %c0_i32_0 = arith.constant 0 : i32
    %c0_i32_1 = arith.constant 0 : i32
    %c0_i32_2 = arith.constant 0 : i32
    return %c0_i32, %c0_i32_0, %c0_i32_1 : i32, i32, i32
  }
  func.func @transform_11(%arg0: i32) -> (i32, i32) {
    %c0_i32 = arith.constant 0 : i32
    %c0_i32_0 = arith.constant 0 : i32
    %c0_i32_1 = arith.constant 0 : i32
    return %c0_i32, %c0_i32_0 : i32, i32
  }
  func.func @transform_12(%arg0: i32) -> (i32, i32) {
    %c0_i32 = arith.constant 0 : i32
    %c0_i32_0 = arith.constant 0 : i32
    %c0_i32_1 = arith.constant 0 : i32
    return %c0_i32, %c0_i32_0 : i32, i32
  }
  func.func @transform_13(%arg0: i32) -> (i32, i32, i32) {
    %c0_i32 = arith.constant 0 : i32
    %c0_i32_0 = arith.constant 0 : i32
    %c0_i32_1 = arith.constant 0 : i32
    %c0_i32_2 = arith.constant 0 : i32
    return %c0_i32, %c0_i32_0, %c0_i32_1 : i32, i32, i32
  }
  func.func @transform_14(%arg0: i32) -> (i32, i32, i32) {
    %c0_i32 = arith.constant 0 : i32
    %c0_i32_0 = arith.constant 0 : i32
    %c0_i32_1 = arith.constant 0 : i32
    %c0_i32_2 = arith.constant 0 : i32
    return %c0_i32, %c0_i32_0, %c0_i32_1 : i32, i32, i32
  }
  func.func @transform_15(%arg0: i32) -> (i32, i32, i32) {
    %c0_i32 = arith.constant 0 : i32
    %c0_i32_0 = arith.constant 0 : i32
    %c0_i32_1 = arith.constant 0 : i32
    %c0_i32_2 = arith.constant 0 : i32
    return %c0_i32, %c0_i32_0, %c0_i32_1 : i32, i32, i32
  }
  func.func @transform_16(%arg0: i32) -> (i32, i32, i32) {
    %c0_i32 = arith.constant 0 : i32
    %c0_i32_0 = arith.constant 0 : i32
    %c0_i32_1 = arith.constant 0 : i32
    %c0_i32_2 = arith.constant 0 : i32
    return %c0_i32, %c0_i32_0, %c0_i32_1 : i32, i32, i32
  }
  func.func @transform_17(%arg0: i32) -> (i32, i32, i32) {
    %c0_i32 = arith.constant 0 : i32
    %c0_i32_0 = arith.constant 0 : i32
    %c0_i32_1 = arith.constant 0 : i32
    %c0_i32_2 = arith.constant 0 : i32
    return %c0_i32, %c0_i32_0, %c0_i32_1 : i32, i32, i32
  }
  func.func @transform_18(%arg0: i32) -> (i32, i32, i32) {
    %c0_i32 = arith.constant 0 : i32
    %c0_i32_0 = arith.constant 0 : i32
    %c0_i32_1 = arith.constant 0 : i32
    %c0_i32_2 = arith.constant 0 : i32
    return %c0_i32, %c0_i32_0, %c0_i32_1 : i32, i32, i32
  }
  func.func @transform_19(%arg0: i32) -> (i32, i32, i32) {
    %c0_i32 = arith.constant 0 : i32
    %c0_i32_0 = arith.constant 0 : i32
    %c0_i32_1 = arith.constant 0 : i32
    %c0_i32_2 = arith.constant 0 : i32
    return %c0_i32, %c0_i32_0, %c0_i32_1 : i32, i32, i32
  }
  func.func @transform_20(%arg0: i32) -> (i32, i32, i32) {
    %c0_i32 = arith.constant 0 : i32
    %c0_i32_0 = arith.constant 0 : i32
    %c0_i32_1 = arith.constant 0 : i32
    %c0_i32_2 = arith.constant 0 : i32
    return %c0_i32, %c0_i32_0, %c0_i32_1 : i32, i32, i32
  }
  func.func @transform_21(%arg0: i32) -> (i32, i32) {
    %c0_i32 = arith.constant 0 : i32
    %c0_i32_0 = arith.constant 0 : i32
    %c0_i32_1 = arith.constant 0 : i32
    return %c0_i32, %c0_i32_0 : i32, i32
  }
  func.func @transform_22(%arg0: i32) -> (i32, i32) {
    %c0_i32 = arith.constant 0 : i32
    %c0_i32_0 = arith.constant 0 : i32
    %c0_i32_1 = arith.constant 0 : i32
    return %c0_i32, %c0_i32_0 : i32, i32
  }
  func.func @transform_23(%arg0: i32) -> (i32, i32, i32) {
    %c0_i32 = arith.constant 0 : i32
    %c0_i32_0 = arith.constant 0 : i32
    %c0_i32_1 = arith.constant 0 : i32
    return %arg0, %c0_i32, %c0_i32_0 : i32, i32, i32
  }
}

</mosaic_0001>

<llo_original>
// kernel: pallas_forward.1
$region0: #{pallas_forward.1}
  #allocation0 [shape = 'u32[]', space=smem, size = 0x4, offset = 0x4, fixed_abs, tag = 'smem constant byte address 0x4 - core index']
  #allocation1 [shape = 'u32[144,128]{1,0:T(1,128)}', space=vmem, size = 0x12000, scoped, tag = 'internal scratch']
  #allocation2 [shape = 'f32[448,4]{1,0:T(8,128)}', space=vmem, size = 0x38000, scoped, tag = 'scratch operand']
  #allocation3 [shape = 'f32[176,8]{1,0:T(8,128)}', space=vmem, size = 0x16000, scoped, tag = 'scratch operand']
  #allocation4 [shape = 'f32[128,4]{1,0:T(8,128)}', space=vmem, size = 0x10000, scoped, tag = 'scratch operand']
  %s0 = inlined_call_operand.vmem [shape: f32[2,384,4], index: 0, kind: input, shape index: {}]
  %s1 = inlined_call_operand.vmem [shape: f32[4,4], index: 1, kind: input, shape index: {}]
  %s2 = inlined_call_operand.vmem [shape: f32[1,4], index: 2, kind: input, shape index: {}]
  %s3 = inlined_call_operand.vmem [shape: f32[1,4,4], index: 3, kind: input, shape index: {}]
  %s4 = inlined_call_operand.vmem [shape: f32[1,1,4], index: 4, kind: input, shape index: {}]
  %s5 = inlined_call_operand.vmem [shape: f32[1,1,4], index: 5, kind: input, shape index: {}]
  %s6 = inlined_call_operand.vmem [shape: f32[1,1,4], index: 6, kind: input, shape index: {}]
  %s7 = inlined_call_operand.vmem [shape: f32[1,36,4], index: 7, kind: input, shape index: {}]
  %s8 = inlined_call_operand.vmem [shape: f32[1,1,4], index: 8, kind: input, shape index: {}]
  %s9 = inlined_call_operand.vmem [shape: f32[1,4,4], index: 9, kind: input, shape index: {}]
  %s10 = inlined_call_operand.vmem [shape: f32[1,1,4], index: 10, kind: input, shape index: {}]
  %s11 = inlined_call_operand.vmem [shape: f32[4,8], index: 11, kind: input, shape index: {}]
  %s12 = inlined_call_operand.vmem [shape: f32[1,8], index: 12, kind: input, shape index: {}]
  %s13 = inlined_call_operand.vmem [shape: f32[1,8,8], index: 13, kind: input, shape index: {}]
  %s14 = inlined_call_operand.vmem [shape: f32[1,1,8], index: 14, kind: input, shape index: {}]
  %s15 = inlined_call_operand.vmem [shape: f32[1,1,8], index: 15, kind: input, shape index: {}]
  %s16 = inlined_call_operand.vmem [shape: f32[1,1,8], index: 16, kind: input, shape index: {}]
  %s17 = inlined_call_operand.vmem [shape: f32[1,72,8], index: 17, kind: input, shape index: {}]
  %s18 = inlined_call_operand.vmem [shape: f32[1,1,8], index: 18, kind: input, shape index: {}]
  %s19 = inlined_call_operand.vmem [shape: f32[1,8,8], index: 19, kind: input, shape index: {}]
  %s20 = inlined_call_operand.vmem [shape: f32[1,1,8], index: 20, kind: input, shape index: {}]
  %s21 = inlined_call_operand.vmem [shape: f32[8,10], index: 21, kind: input, shape index: {}]
  %s22 = inlined_call_operand.vmem [shape: f32[1,10], index: 22, kind: input, shape index: {}]
  %s23 = inlined_call_operand.hbm [shape: f32[2,1,10], index: 23, kind: output, shape index: {}]
  %s24 = sld [smem:[#allocation0]]
  $region125: #{pallas_forward.1} parent=0
    _
  %s26 = ssub.s32 1, %s24
  %s27 = scalar_select 0, %s26, %s24
  $region1: #{pallas_forward.1} parent=0
    #allocation5 [shape = 'u8[1024]{0}', space=vmem, size = 0x400, scoped, tag = 'output window, operand 0']
    #allocation6 [shape = 's32[2]{0}', space=sflag, size = 0x8, scoped, tag = 'scoped memory for pallas_forward.1']
    %28 = vsyncpa [#allocation6], 0
    %s29 = scalar_lea.sflag [#allocation6], 1
    %30 = vsyncpa %s29, 0
    loop: start=0, step=1, limit=4
    $region2: #{pallas_forward.1} parent=1 // loop_pre_header
      _
    $region3: #{pallas_forward.1} parent=1 // loop_header
      %s32 = sphi 0, %s36
      %p33 = scmp.ge.s32.totalorder %s32, 4
      %s42 = sphi 0, %s44
      %s45 = sphi 0, %s42
      %s46 = sphi 0, %s45
      %s62 = sphi 0, %s46
      %s66 = sphi 0, %s66
      %s68 = sphi 0, %s66
      %s69 = sphi 0, %s68
      %s83 = sphi 0, %s69
      %s87 = sphi 0, %s87
      %s89 = sphi 0, %s87
      %s90 = sphi 0, %s89
      %s104 = sphi 0, %s90
      %s108 = sphi 0, %s108
      %s110 = sphi 0, %s108
      %s111 = sphi 0, %s110
      %s125 = sphi 0, %s111
      %s129 = sphi 0, %s129
      %s131 = sphi 0, %s129
      %s132 = sphi 0, %s131
      %s146 = sphi 0, %s132
      %s150 = sphi 0, %s150
      %s152 = sphi 0, %s150
      %s153 = sphi 0, %s152
      %s167 = sphi 0, %s153
      %s171 = sphi 0, %s171
      %s173 = sphi 0, %s171
      %s174 = sphi 0, %s173
      %s188 = sphi 0, %s174
      %s192 = sphi 0, %s192
      %s194 = sphi 0, %s192
      %s195 = sphi 0, %s194
      %s209 = sphi 0, %s195
      %s213 = sphi 0, %s213
      %s215 = sphi 0, %s213
      %s216 = sphi 0, %s215
      %s230 = sphi 0, %s216
      %s234 = sphi 0, %s234
      %s236 = sphi 0, %s234
      %s237 = sphi 0, %s236
      %s251 = sphi 0, %s237
      %s255 = sphi 0, %s255
      %s257 = sphi 0, %s255
      %s258 = sphi 0, %s257
      %s272 = sphi 0, %s258
      %s276 = sphi 0, %s276
      %s278 = sphi 0, %s276
      %s279 = sphi 0, %s278
      %s293 = sphi 0, %s279
      %s297 = sphi 0, %s297
      %s299 = sphi 0, %s297
      %s300 = sphi 0, %s299
      %s314 = sphi 0, %s300
      %s318 = sphi 0, %s318
      %s320 = sphi 0, %s318
      %s321 = sphi 0, %s320
      %s335 = sphi 0, %s321
      %s339 = sphi 0, %s339
      %s341 = sphi 0, %s339
      %s342 = sphi 0, %s341
      %s356 = sphi 0, %s342
      %s360 = sphi 0, %s360
      %s362 = sphi 0, %s360
      %s363 = sphi 0, %s362
      %s377 = sphi 0, %s363
      %s381 = sphi 0, %s381
      %s383 = sphi 0, %s381
      %s384 = sphi 0, %s383
      %s398 = sphi 0, %s384
      %s402 = sphi 0, %s402
      %s404 = sphi 0, %s402
      %s405 = sphi 0, %s404
      %s419 = sphi 0, %s405
      %s423 = sphi 0, %s423
      %s425 = sphi 0, %s423
      %s426 = sphi 0, %s425
      %s440 = sphi 0, %s426
      %s444 = sphi 0, %s444
      %s446 = sphi 0, %s444
      %s447 = sphi 0, %s446
      %s461 = sphi 0, %s447
      %s465 = sphi 0, %s465
      %s467 = sphi 0, %s465
      %s468 = sphi 0, %s467
      %s482 = sphi 0, %s468
      %s486 = sphi 0, %s486
      %s488 = sphi 0, %s486
      %s489 = sphi 0, %s488
      %s503 = sphi 0, %s489
      %s507 = sphi 0, %s507
      %s509 = sphi 0, %s507
      %s510 = sphi 0, %s509
      %s524 = sphi 0, %s510
      %s530 = sphi 0, %s532
      %s533 = sphi 0, %s530
      %s534 = sphi 0, %s533
      %s550 = sphi 0, %s534
    $region4: #{pallas_forward.1} parent=1 // loop_header_branch
      %35 = sbr.rel (%p33) target = $region8
    $region5: #{pallas_forward.1} parent=1 // loop_body
      %s37 = ssub.s32 %s32, 1
      %s38 = ssub.s32 %s32, 2
      %s39 = sadd.s32 %s32, 1
      %s40 = ssub.s32 %s32, %s39
      %p41 = scmp.eq.s32.totalorder %s40, 0
      %s43 = sadd.s32 %s42, 1
      %s44 = scalar_select %p41, %s42, %s43
      %p47 = pneg %p41
      %p48 = scmp.eq.s32.totalorder %s32, 1
      %p49 = por %p47, %p48
      %p50 = scmp.ne.s32.totalorder %s42, %s45
      %p51 = scmp.eq.s32.totalorder %s32, 0
      %p52 = por %p50, %p51
      %p53 = scmp.ne.s32.totalorder %s42, %s45
      %p54 = scmp.eq.s32.totalorder %s37, 1
      %p55 = por %p53, %p54
      %p56 = scmp.ne.s32.totalorder %s45, %s46
      %p57 = scmp.eq.s32.totalorder %s37, 0
      %p58 = por %p56, %p57
      %p59 = scmp.ne.s32.totalorder %s45, %s46
      %p60 = scmp.eq.s32.totalorder %s38, 1
      %p61 = por %p59, %p60
      %p63 = scmp.ne.s32.totalorder %s46, %s62
      %p64 = scmp.eq.s32.totalorder %s38, 0
      %p65 = por %p63, %p64
      %s67 = sadd.s32 %s66, 1
      %p70 = scmp.eq.s32.totalorder %s32, 1
      %p71 = scmp.ne.s32.totalorder %s66, %s68
      %p72 = scmp.eq.s32.totalorder %s32, 0
      %p73 = por %p71, %p72
      %p74 = scmp.ne.s32.totalorder %s66, %s68
      %p75 = scmp.eq.s32.totalorder %s37, 1
      %p76 = por %p74, %p75
      %p77 = scmp.ne.s32.totalorder %s68, %s69
      %p78 = scmp.eq.s32.totalorder %s37, 0
      %p79 = por %p77, %p78
      %p80 = scmp.ne.s32.totalorder %s68, %s69
      %p81 = scmp.eq.s32.totalorder %s38, 1
      %p82 = por %p80, %p81
      %p84 = scmp.ne.s32.totalorder %s69, %s83
      %p85 = scmp.eq.s32.totalorder %s38, 0
      %p86 = por %p84, %p85
      %s88 = sadd.s32 %s87, 1
      %p91 = scmp.eq.s32.totalorder %s32, 1
      %p92 = scmp.ne.s32.totalorder %s87, %s89
      %p93 = scmp.eq.s32.totalorder %s32, 0
      %p94 = por %p92, %p93
      %p95 = scmp.ne.s32.totalorder %s87, %s89
      %p96 = scmp.eq.s32.totalorder %s37, 1
      %p97 = por %p95, %p96
      %p98 = scmp.ne.s32.totalorder %s89, %s90
      %p99 = scmp.eq.s32.totalorder %s37, 0
      %p100 = por %p98, %p99
      %p101 = scmp.ne.s32.totalorder %s89, %s90
      %p102 = scmp.eq.s32.totalorder %s38, 1
      %p103 = por %p101, %p102
      %p105 = scmp.ne.s32.totalorder %s90, %s104
      %p106 = scmp.eq.s32.totalorder %s38, 0
      %p107 = por %p105, %p106
      %s109 = sadd.s32 %s108, 1
      %p112 = scmp.eq.s32.totalorder %s32, 1
      %p113 = scmp.ne.s32.totalorder %s108, %s110
      %p114 = scmp.eq.s32.totalorder %s32, 0
      %p115 = por %p113, %p114
      %p116 = scmp.ne.s32.totalorder %s108, %s110
      %p117 = scmp.eq.s32.totalorder %s37, 1
      %p118 = por %p116, %p117
      %p119 = scmp.ne.s32.totalorder %s110, %s111
      %p120 = scmp.eq.s32.totalorder %s37, 0
      %p121 = por %p119, %p120
      %p122 = scmp.ne.s32.totalorder %s110, %s111
      %p123 = scmp.eq.s32.totalorder %s38, 1
      %p124 = por %p122, %p123
      %p126 = scmp.ne.s32.totalorder %s111, %s125
      %p127 = scmp.eq.s32.totalorder %s38, 0
      %p128 = por %p126, %p127
      %s130 = sadd.s32 %s129, 1
      %p133 = scmp.eq.s32.totalorder %s32, 1
      %p134 = scmp.ne.s32.totalorder %s129, %s131
      %p135 = scmp.eq.s32.totalorder %s32, 0
      %p136 = por %p134, %p135
      %p137 = scmp.ne.s32.totalorder %s129, %s131
      %p138 = scmp.eq.s32.totalorder %s37, 1
      %p139 = por %p137, %p138
      %p140 = scmp.ne.s32.totalorder %s131, %s132
      %p141 = scmp.eq.s32.totalorder %s37, 0
      %p142 = por %p140, %p141
      %p143 = scmp.ne.s32.totalorder %s131, %s132
      %p144 = scmp.eq.s32.totalorder %s38, 1
      %p145 = por %p143, %p144
      %p147 = scmp.ne.s32.totalorder %s132, %s146
      %p148 = scmp.eq.s32.totalorder %s38, 0
      %p149 = por %p147, %p148
      %s151 = sadd.s32 %s150, 1
      %p154 = scmp.eq.s32.totalorder %s32, 1
      %p155 = scmp.ne.s32.totalorder %s150, %s152
      %p156 = scmp.eq.s32.totalorder %s32, 0
      %p157 = por %p155, %p156
      %p158 = scmp.ne.s32.totalorder %s150, %s152
      %p159 = scmp.eq.s32.totalorder %s37, 1
      %p160 = por %p158, %p159
      %p161 = scmp.ne.s32.totalorder %s152, %s153
      %p162 = scmp.eq.s32.totalorder %s37, 0
      %p163 = por %p161, %p162
      %p164 = scmp.ne.s32.totalorder %s152, %s153
      %p165 = scmp.eq.s32.totalorder %s38, 1
      %p166 = por %p164, %p165
      %p168 = scmp.ne.s32.totalorder %s153, %s167
      %p169 = scmp.eq.s32.totalorder %s38, 0
      %p170 = por %p168, %p169
      %s172 = sadd.s32 %s171, 1
      %p175 = scmp.eq.s32.totalorder %s32, 1
      %p176 = scmp.ne.s32.totalorder %s171, %s173
      %p177 = scmp.eq.s32.totalorder %s32, 0
      %p178 = por %p176, %p177
      %p179 = scmp.ne.s32.totalorder %s171, %s173
      %p180 = scmp.eq.s32.totalorder %s37, 1
      %p181 = por %p179, %p180
      %p182 = scmp.ne.s32.totalorder %s173, %s174
      %p183 = scmp.eq.s32.totalorder %s37, 0
      %p184 = por %p182, %p183
      %p185 = scmp.ne.s32.totalorder %s173, %s174
      %p186 = scmp.eq.s32.totalorder %s38, 1
      %p187 = por %p185, %p186
      %p189 = scmp.ne.s32.totalorder %s174, %s188
      %p190 = scmp.eq.s32.totalorder %s38, 0
      %p191 = por %p189, %p190
      %s193 = sadd.s32 %s192, 1
      %p196 = scmp.eq.s32.totalorder %s32, 1
      %p197 = scmp.ne.s32.totalorder %s192, %s194
      %p198 = scmp.eq.s32.totalorder %s32, 0
      %p199 = por %p197, %p198
      %p200 = scmp.ne.s32.totalorder %s192, %s194
      %p201 = scmp.eq.s32.totalorder %s37, 1
      %p202 = por %p200, %p201
      %p203 = scmp.ne.s32.totalorder %s194, %s195
      %p204 = scmp.eq.s32.totalorder %s37, 0
      %p205 = por %p203, %p204
      %p206 = scmp.ne.s32.totalorder %s194, %s195
      %p207 = scmp.eq.s32.totalorder %s38, 1
      %p208 = por %p206, %p207
      %p210 = scmp.ne.s32.totalorder %s195, %s209
      %p211 = scmp.eq.s32.totalorder %s38, 0
      %p212 = por %p210, %p211
      %s214 = sadd.s32 %s213, 1
      %p217 = scmp.eq.s32.totalorder %s32, 1
      %p218 = scmp.ne.s32.totalorder %s213, %s215
      %p219 = scmp.eq.s32.totalorder %s32, 0
      %p220 = por %p218, %p219
      %p221 = scmp.ne.s32.totalorder %s213, %s215
      %p222 = scmp.eq.s32.totalorder %s37, 1
      %p223 = por %p221, %p222
      %p224 = scmp.ne.s32.totalorder %s215, %s216
      %p225 = scmp.eq.s32.totalorder %s37, 0
      %p226 = por %p224, %p225
      %p227 = scmp.ne.s32.totalorder %s215, %s216
      %p228 = scmp.eq.s32.totalorder %s38, 1
      %p229 = por %p227, %p228
      %p231 = scmp.ne.s32.totalorder %s216, %s230
      %p232 = scmp.eq.s32.totalorder %s38, 0
      %p233 = por %p231, %p232
      %s235 = sadd.s32 %s234, 1
      %p238 = scmp.eq.s32.totalorder %s32, 1
      %p239 = scmp.ne.s32.totalorder %s234, %s236
      %p240 = scmp.eq.s32.totalorder %s32, 0
      %p241 = por %p239, %p240
      %p242 = scmp.ne.s32.totalorder %s234, %s236
      %p243 = scmp.eq.s32.totalorder %s37, 1
      %p244 = por %p242, %p243
      %p245 = scmp.ne.s32.totalorder %s236, %s237
      %p246 = scmp.eq.s32.totalorder %s37, 0
      %p247 = por %p245, %p246
      %p248 = scmp.ne.s32.totalorder %s236, %s237
      %p249 = scmp.eq.s32.totalorder %s38, 1
      %p250 = por %p248, %p249
      %p252 = scmp.ne.s32.totalorder %s237, %s251
      %p253 = scmp.eq.s32.totalorder %s38, 0
      %p254 = por %p252, %p253
      %s256 = sadd.s32 %s255, 1
      %p259 = scmp.eq.s32.totalorder %s32, 1
      %p260 = scmp.ne.s32.totalorder %s255, %s257
      %p261 = scmp.eq.s32.totalorder %s32, 0
      %p262 = por %p260, %p261
      %p263 = scmp.ne.s32.totalorder %s255, %s257
      %p264 = scmp.eq.s32.totalorder %s37, 1
      %p265 = por %p263, %p264
      %p266 = scmp.ne.s32.totalorder %s257, %s258
      %p267 = scmp.eq.s32.totalorder %s37, 0
      %p268 = por %p266, %p267
      %p269 = scmp.ne.s32.totalorder %s257, %s258
      %p270 = scmp.eq.s32.totalorder %s38, 1
      %p271 = por %p269, %p270
      %p273 = scmp.ne.s32.totalorder %s258, %s272
      %p274 = scmp.eq.s32.totalorder %s38, 0
      %p275 = por %p273, %p274
      %s277 = sadd.s32 %s276, 1
      %p280 = scmp.eq.s32.totalorder %s32, 1
      %p281 = scmp.ne.s32.totalorder %s276, %s278
      %p282 = scmp.eq.s32.totalorder %s32, 0
      %p283 = por %p281, %p282
      %p284 = scmp.ne.s32.totalorder %s276, %s278
      %p285 = scmp.eq.s32.totalorder %s37, 1
      %p286 = por %p284, %p285
      %p287 = scmp.ne.s32.totalorder %s278, %s279
      %p288 = scmp.eq.s32.totalorder %s37, 0
      %p289 = por %p287, %p288
      %p290 = scmp.ne.s32.totalorder %s278, %s279
      %p291 = scmp.eq.s32.totalorder %s38, 1
      %p292 = por %p290, %p291
      %p294 = scmp.ne.s32.totalorder %s279, %s293
      %p295 = scmp.eq.s32.totalorder %s38, 0
      %p296 = por %p294, %p295
      %s298 = sadd.s32 %s297, 1
      %p301 = scmp.eq.s32.totalorder %s32, 1
      %p302 = scmp.ne.s32.totalorder %s297, %s299
      %p303 = scmp.eq.s32.totalorder %s32, 0
      %p304 = por %p302, %p303
      %p305 = scmp.ne.s32.totalorder %s297, %s299
      %p306 = scmp.eq.s32.totalorder %s37, 1
      %p307 = por %p305, %p306
      %p308 = scmp.ne.s32.totalorder %s299, %s300
      %p309 = scmp.eq.s32.totalorder %s37, 0
      %p310 = por %p308, %p309
      %p311 = scmp.ne.s32.totalorder %s299, %s300
      %p312 = scmp.eq.s32.totalorder %s38, 1
      %p313 = por %p311, %p312
      %p315 = scmp.ne.s32.totalorder %s300, %s314
      %p316 = scmp.eq.s32.totalorder %s38, 0
      %p317 = por %p315, %p316
      %s319 = sadd.s32 %s318, 1
      %p322 = scmp.eq.s32.totalorder %s32, 1
      %p323 = scmp.ne.s32.totalorder %s318, %s320
      %p324 = scmp.eq.s32.totalorder %s32, 0
      %p325 = por %p323, %p324
      %p326 = scmp.ne.s32.totalorder %s318, %s320
      %p327 = scmp.eq.s32.totalorder %s37, 1
      %p328 = por %p326, %p327
      %p329 = scmp.ne.s32.totalorder %s320, %s321
      %p330 = scmp.eq.s32.totalorder %s37, 0
      %p331 = por %p329, %p330
      %p332 = scmp.ne.s32.totalorder %s320, %s321
      %p333 = scmp.eq.s32.totalorder %s38, 1
      %p334 = por %p332, %p333
      %p336 = scmp.ne.s32.totalorder %s321, %s335
      %p337 = scmp.eq.s32.totalorder %s38, 0
      %p338 = por %p336, %p337
      %s340 = sadd.s32 %s339, 1
      %p343 = scmp.eq.s32.totalorder %s32, 1
      %p344 = scmp.ne.s32.totalorder %s339, %s341
      %p345 = scmp.eq.s32.totalorder %s32, 0
      %p346 = por %p344, %p345
      %p347 = scmp.ne.s32.totalorder %s339, %s341
      %p348 = scmp.eq.s32.totalorder %s37, 1
      %p349 = por %p347, %p348
      %p350 = scmp.ne.s32.totalorder %s341, %s342
      %p351 = scmp.eq.s32.totalorder %s37, 0
      %p352 = por %p350, %p351
      %p353 = scmp.ne.s32.totalorder %s341, %s342
      %p354 = scmp.eq.s32.totalorder %s38, 1
      %p355 = por %p353, %p354
      %p357 = scmp.ne.s32.totalorder %s342, %s356
      %p358 = scmp.eq.s32.totalorder %s38, 0
      %p359 = por %p357, %p358
      %s361 = sadd.s32 %s360, 1
      %p364 = scmp.eq.s32.totalorder %s32, 1
      %p365 = scmp.ne.s32.totalorder %s360, %s362
      %p366 = scmp.eq.s32.totalorder %s32, 0
      %p367 = por %p365, %p366
      %p368 = scmp.ne.s32.totalorder %s360, %s362
      %p369 = scmp.eq.s32.totalorder %s37, 1
      %p370 = por %p368, %p369
      %p371 = scmp.ne.s32.totalorder %s362, %s363
      %p372 = scmp.eq.s32.totalorder %s37, 0
      %p373 = por %p371, %p372
      %p374 = scmp.ne.s32.totalorder %s362, %s363
      %p375 = scmp.eq.s32.totalorder %s38, 1
      %p376 = por %p374, %p375
      %p378 = scmp.ne.s32.totalorder %s363, %s377
      %p379 = scmp.eq.s32.totalorder %s38, 0
      %p380 = por %p378, %p379
      %s382 = sadd.s32 %s381, 1
      %p385 = scmp.eq.s32.totalorder %s32, 1
      %p386 = scmp.ne.s32.totalorder %s381, %s383
      %p387 = scmp.eq.s32.totalorder %s32, 0
      %p388 = por %p386, %p387
      %p389 = scmp.ne.s32.totalorder %s381, %s383
      %p390 = scmp.eq.s32.totalorder %s37, 1
      %p391 = por %p389, %p390
      %p392 = scmp.ne.s32.totalorder %s383, %s384
      %p393 = scmp.eq.s32.totalorder %s37, 0
      %p394 = por %p392, %p393
      %p395 = scmp.ne.s32.totalorder %s383, %s384
      %p396 = scmp.eq.s32.totalorder %s38, 1
      %p397 = por %p395, %p396
      %p399 = scmp.ne.s32.totalorder %s384, %s398
      %p400 = scmp.eq.s32.totalorder %s38, 0
      %p401 = por %p399, %p400
      %s403 = sadd.s32 %s402, 1
      %p406 = scmp.eq.s32.totalorder %s32, 1
      %p407 = scmp.ne.s32.totalorder %s402, %s404
      %p408 = scmp.eq.s32.totalorder %s32, 0
      %p409 = por %p407, %p408
      %p410 = scmp.ne.s32.totalorder %s402, %s404
      %p411 = scmp.eq.s32.totalorder %s37, 1
      %p412 = por %p410, %p411
      %p413 = scmp.ne.s32.totalorder %s404, %s405
      %p414 = scmp.eq.s32.totalorder %s37, 0
      %p415 = por %p413, %p414
      %p416 = scmp.ne.s32.totalorder %s404, %s405
      %p417 = scmp.eq.s32.totalorder %s38, 1
      %p418 = por %p416, %p417
      %p420 = scmp.ne.s32.totalorder %s405, %s419
      %p421 = scmp.eq.s32.totalorder %s38, 0
      %p422 = por %p420, %p421
      %s424 = sadd.s32 %s423, 1
      %p427 = scmp.eq.s32.totalorder %s32, 1
      %p428 = scmp.ne.s32.totalorder %s423, %s425
      %p429 = scmp.eq.s32.totalorder %s32, 0
      %p430 = por %p428, %p429
      %p431 = scmp.ne.s32.totalorder %s423, %s425
      %p432 = scmp.eq.s32.totalorder %s37, 1
      %p433 = por %p431, %p432
      %p434 = scmp.ne.s32.totalorder %s425, %s426
      %p435 = scmp.eq.s32.totalorder %s37, 0
      %p436 = por %p434, %p435
      %p437 = scmp.ne.s32.totalorder %s425, %s426
      %p438 = scmp.eq.s32.totalorder %s38, 1
      %p439 = por %p437, %p438
      %p441 = scmp.ne.s32.totalorder %s426, %s440
      %p442 = scmp.eq.s32.totalorder %s38, 0
      %p443 = por %p441, %p442
      %s445 = sadd.s32 %s444, 1
      %p448 = scmp.eq.s32.totalorder %s32, 1
      %p449 = scmp.ne.s32.totalorder %s444, %s446
      %p450 = scmp.eq.s32.totalorder %s32, 0
      %p451 = por %p449, %p450
      %p452 = scmp.ne.s32.totalorder %s444, %s446
      %p453 = scmp.eq.s32.totalorder %s37, 1
      %p454 = por %p452, %p453
      %p455 = scmp.ne.s32.totalorder %s446, %s447
      %p456 = scmp.eq.s32.totalorder %s37, 0
      %p457 = por %p455, %p456
      %p458 = scmp.ne.s32.totalorder %s446, %s447
      %p459 = scmp.eq.s32.totalorder %s38, 1
      %p460 = por %p458, %p459
      %p462 = scmp.ne.s32.totalorder %s447, %s461
      %p463 = scmp.eq.s32.totalorder %s38, 0
      %p464 = por %p462, %p463
      %s466 = sadd.s32 %s465, 1
      %p469 = scmp.eq.s32.totalorder %s32, 1
      %p470 = scmp.ne.s32.totalorder %s465, %s467
      %p471 = scmp.eq.s32.totalorder %s32, 0
      %p472 = por %p470, %p471
      %p473 = scmp.ne.s32.totalorder %s465, %s467
      %p474 = scmp.eq.s32.totalorder %s37, 1
      %p475 = por %p473, %p474
      %p476 = scmp.ne.s32.totalorder %s467, %s468
      %p477 = scmp.eq.s32.totalorder %s37, 0
      %p478 = por %p476, %p477
      %p479 = scmp.ne.s32.totalorder %s467, %s468
      %p480 = scmp.eq.s32.totalorder %s38, 1
      %p481 = por %p479, %p480
      %p483 = scmp.ne.s32.totalorder %s468, %s482
      %p484 = scmp.eq.s32.totalorder %s38, 0
      %p485 = por %p483, %p484
      %s487 = sadd.s32 %s486, 1
      %p490 = scmp.eq.s32.totalorder %s32, 1
      %p491 = scmp.ne.s32.totalorder %s486, %s488
      %p492 = scmp.eq.s32.totalorder %s32, 0
      %p493 = por %p491, %p492
      %p494 = scmp.ne.s32.totalorder %s486, %s488
      %p495 = scmp.eq.s32.totalorder %s37, 1
      %p496 = por %p494, %p495
      %p497 = scmp.ne.s32.totalorder %s488, %s489
      %p498 = scmp.eq.s32.totalorder %s37, 0
      %p499 = por %p497, %p498
      %p500 = scmp.ne.s32.totalorder %s488, %s489
      %p501 = scmp.eq.s32.totalorder %s38, 1
      %p502 = por %p500, %p501
      %p504 = scmp.ne.s32.totalorder %s489, %s503
      %p505 = scmp.eq.s32.totalorder %s38, 0
      %p506 = por %p504, %p505
      %s508 = sadd.s32 %s507, 1
      %p511 = scmp.eq.s32.totalorder %s32, 1
      %p512 = scmp.ne.s32.totalorder %s507, %s509
      %p513 = scmp.eq.s32.totalorder %s32, 0
      %p514 = por %p512, %p513
      %p515 = scmp.ne.s32.totalorder %s507, %s509
      %p516 = scmp.eq.s32.totalorder %s37, 1
      %p517 = por %p515, %p516
      %p518 = scmp.ne.s32.totalorder %s509, %s510
      %p519 = scmp.eq.s32.totalorder %s37, 0
      %p520 = por %p518, %p519
      %p521 = scmp.ne.s32.totalorder %s509, %s510
      %p522 = scmp.eq.s32.totalorder %s38, 1
      %p523 = por %p521, %p522
      %p525 = scmp.ne.s32.totalorder %s510, %s524
      %p526 = scmp.eq.s32.totalorder %s38, 0
      %p527 = por %p525, %p526
      %s528 = ssub.s32 %s32, %s39
      %p529 = scmp.eq.s32.totalorder %s528, 0
      %s531 = sadd.s32 %s530, 1
      %s532 = scalar_select %p529, %s530, %s531
      %p535 = pneg %p529
      %p536 = scmp.eq.s32.totalorder %s32, 1
      %p537 = por %p535, %p536
      %p538 = scmp.ne.s32.totalorder %s530, %s533
      %p539 = scmp.eq.s32.totalorder %s32, 0
      %p540 = por %p538, %p539
      %p541 = scmp.ne.s32.totalorder %s530, %s533
      %p542 = scmp.eq.s32.totalorder %s37, 1
      %p543 = por %p541, %p542
      %p544 = scmp.ne.s32.totalorder %s533, %s534
      %p545 = scmp.eq.s32.totalorder %s37, 0
      %p546 = por %p544, %p545
      %p547 = scmp.ne.s32.totalorder %s533, %s534
      %p548 = scmp.eq.s32.totalorder %s38, 1
      %p549 = por %p547, %p548
      %p551 = scmp.ne.s32.totalorder %s534, %s550
      %p552 = scmp.eq.s32.totalorder %s38, 0
      %p553 = por %p551, %p552
      %p554 = scmp.le.s32.totalorder 1, %s32
      %p555 = scmp.lt.s32.totalorder %s32, 3
      %p556 = pnand %p554, %p555
      %p557 = pneg %p556
      // Predicated region
      $region9: #{pallas_forward.1} parent=5 // pred_check
        _
      $region10: #{pallas_forward.1} parent=5 // pred_check_branch
        %559 = sbr.rel (%p556) target = $region12
      $region11: #{pallas_forward.1} parent=5 // pred_region
        %s560 = ssub.s32 %s32, 1
        // Predicated region
        $region13: #{pallas_forward.1} parent=11 // pred_check
          %p561 = pneg %p79
        $region14: #{pallas_forward.1} parent=11 // pred_check_branch
          %563 = sbr.rel (%p561) target = $region16
        $region15: #{pallas_forward.1} parent=11 // pred_region
          _
        $region16: #{pallas_forward.1} parent=11 // pred_fallthru
          _
        // Predicated region
        $region17: #{pallas_forward.1} parent=11 // pred_check
          %p564 = pneg %p100
        $region18: #{pallas_forward.1} parent=11 // pred_check_branch
          %566 = sbr.rel (%p564) target = $region20
        $region19: #{pallas_forward.1} parent=11 // pred_region
          _
        $region20: #{pallas_forward.1} parent=11 // pred_fallthru
          _
        // Predicated region
        $region21: #{pallas_forward.1} parent=11 // pred_check
          %p567 = pneg %p121
        $region22: #{pallas_forward.1} parent=11 // pred_check_branch
          %569 = sbr.rel (%p567) target = $region24
        $region23: #{pallas_forward.1} parent=11 // pred_region
          _
        $region24: #{pallas_forward.1} parent=11 // pred_fallthru
          _
        // Predicated region
        $region25: #{pallas_forward.1} parent=11 // pred_check
          %p570 = pneg %p142
        $region26: #{pallas_forward.1} parent=11 // pred_check_branch
          %572 = sbr.rel (%p570) target = $region28
        $region27: #{pallas_forward.1} parent=11 // pred_region
          _
        $region28: #{pallas_forward.1} parent=11 // pred_fallthru
          _
        // Predicated region
        $region29: #{pallas_forward.1} parent=11 // pred_check
          %p573 = pneg %p163
        $region30: #{pallas_forward.1} parent=11 // pred_check_branch
          %575 = sbr.rel (%p573) target = $region32
        $region31: #{pallas_forward.1} parent=11 // pred_region
          _
        $region32: #{pallas_forward.1} parent=11 // pred_fallthru
          _
        // Predicated region
        $region33: #{pallas_forward.1} parent=11 // pred_check
          %p576 = pneg %p184
        $region34: #{pallas_forward.1} parent=11 // pred_check_branch
          %578 = sbr.rel (%p576) target = $region36
        $region35: #{pallas_forward.1} parent=11 // pred_region
          _
        $region36: #{pallas_forward.1} parent=11 // pred_fallthru
          _
        // Predicated region
        $region37: #{pallas_forward.1} parent=11 // pred_check
          %p579 = pneg %p205
        $region38: #{pallas_forward.1} parent=11 // pred_check_branch
          %581 = sbr.rel (%p579) target = $region40
        $region39: #{pallas_forward.1} parent=11 // pred_region
          _
        $region40: #{pallas_forward.1} parent=11 // pred_fallthru
          _
        // Predicated region
        $region41: #{pallas_forward.1} parent=11 // pred_check
          %p582 = pneg %p226
        $region42: #{pallas_forward.1} parent=11 // pred_check_branch
          %584 = sbr.rel (%p582) target = $region44
        $region43: #{pallas_forward.1} parent=11 // pred_region
          _
        $region44: #{pallas_forward.1} parent=11 // pred_fallthru
          _
        // Predicated region
        $region45: #{pallas_forward.1} parent=11 // pred_check
          %p585 = pneg %p247
        $region46: #{pallas_forward.1} parent=11 // pred_check_branch
          %587 = sbr.rel (%p585) target = $region48
        $region47: #{pallas_forward.1} parent=11 // pred_region
          _
        $region48: #{pallas_forward.1} parent=11 // pred_fallthru
          _
        // Predicated region
        $region49: #{pallas_forward.1} parent=11 // pred_check
          %p588 = pneg %p268
        $region50: #{pallas_forward.1} parent=11 // pred_check_branch
          %590 = sbr.rel (%p588) target = $region52
        $region51: #{pallas_forward.1} parent=11 // pred_region
          _
        $region52: #{pallas_forward.1} parent=11 // pred_fallthru
          _
        // Predicated region
        $region53: #{pallas_forward.1} parent=11 // pred_check
          %p591 = pneg %p289
        $region54: #{pallas_forward.1} parent=11 // pred_check_branch
          %593 = sbr.rel (%p591) target = $region56
        $region55: #{pallas_forward.1} parent=11 // pred_region
          _
        $region56: #{pallas_forward.1} parent=11 // pred_fallthru
          _
        // Predicated region
        $region57: #{pallas_forward.1} parent=11 // pred_check
          %p594 = pneg %p310
        $region58: #{pallas_forward.1} parent=11 // pred_check_branch
          %596 = sbr.rel (%p594) target = $region60
        $region59: #{pallas_forward.1} parent=11 // pred_region
          _
        $region60: #{pallas_forward.1} parent=11 // pred_fallthru
          _
        // Predicated region
        $region61: #{pallas_forward.1} parent=11 // pred_check
          %p597 = pneg %p331
        $region62: #{pallas_forward.1} parent=11 // pred_check_branch
          %599 = sbr.rel (%p597) target = $region64
        $region63: #{pallas_forward.1} parent=11 // pred_region
          _
        $region64: #{pallas_forward.1} parent=11 // pred_fallthru
          _
        // Predicated region
        $region65: #{pallas_forward.1} parent=11 // pred_check
          %p600 = pneg %p352
        $region66: #{pallas_forward.1} parent=11 // pred_check_branch
          %602 = sbr.rel (%p600) target = $region68
        $region67: #{pallas_forward.1} parent=11 // pred_region
          _
        $region68: #{pallas_forward.1} parent=11 // pred_fallthru
          _
        // Predicated region
        $region69: #{pallas_forward.1} parent=11 // pred_check
          %p603 = pneg %p373
        $region70: #{pallas_forward.1} parent=11 // pred_check_branch
          %605 = sbr.rel (%p603) target = $region72
        $region71: #{pallas_forward.1} parent=11 // pred_region
          _
        $region72: #{pallas_forward.1} parent=11 // pred_fallthru
          _
        // Predicated region
        $region73: #{pallas_forward.1} parent=11 // pred_check
          %p606 = pneg %p394
        $region74: #{pallas_forward.1} parent=11 // pred_check_branch
          %608 = sbr.rel (%p606) target = $region76
        $region75: #{pallas_forward.1} parent=11 // pred_region
          _
        $region76: #{pallas_forward.1} parent=11 // pred_fallthru
          _
        // Predicated region
        $region77: #{pallas_forward.1} parent=11 // pred_check
          %p609 = pneg %p415
        $region78: #{pallas_forward.1} parent=11 // pred_check_branch
          %611 = sbr.rel (%p609) target = $region80
        $region79: #{pallas_forward.1} parent=11 // pred_region
          _
        $region80: #{pallas_forward.1} parent=11 // pred_fallthru
          _
        // Predicated region
        $region81: #{pallas_forward.1} parent=11 // pred_check
          %p612 = pneg %p436
        $region82: #{pallas_forward.1} parent=11 // pred_check_branch
          %614 = sbr.rel (%p612) target = $region84
        $region83: #{pallas_forward.1} parent=11 // pred_region
          _
        $region84: #{pallas_forward.1} parent=11 // pred_fallthru
          _
        // Predicated region
        $region85: #{pallas_forward.1} parent=11 // pred_check
          %p615 = pneg %p457
        $region86: #{pallas_forward.1} parent=11 // pred_check_branch
          %617 = sbr.rel (%p615) target = $region88
        $region87: #{pallas_forward.1} parent=11 // pred_region
          _
        $region88: #{pallas_forward.1} parent=11 // pred_fallthru
          _
        // Predicated region
        $region89: #{pallas_forward.1} parent=11 // pred_check
          %p618 = pneg %p478
        $region90: #{pallas_forward.1} parent=11 // pred_check_branch
          %620 = sbr.rel (%p618) target = $region92
        $region91: #{pallas_forward.1} parent=11 // pred_region
          _
        $region92: #{pallas_forward.1} parent=11 // pred_fallthru
          _
        // Predicated region
        $region93: #{pallas_forward.1} parent=11 // pred_check
          %p621 = pneg %p499
        $region94: #{pallas_forward.1} parent=11 // pred_check_branch
          %623 = sbr.rel (%p621) target = $region96
        $region95: #{pallas_forward.1} parent=11 // pred_region
          _
        $region96: #{pallas_forward.1} parent=11 // pred_fallthru
          _
        // Predicated region
        $region97: #{pallas_forward.1} parent=11 // pred_check
          %p624 = pneg %p520
        $region98: #{pallas_forward.1} parent=11 // pred_check_branch
          %626 = sbr.rel (%p624) target = $region100
        $region99: #{pallas_forward.1} parent=11 // pred_region
          _
        $region100: #{pallas_forward.1} parent=11 // pred_fallthru
          _
      $region12: #{pallas_forward.1} parent=5 // pred_fallthru
        _
      %p627 = scmp.lt.s32.totalorder %s32, 2
      // Predicated region
      $region101: #{pallas_forward.1} parent=5 // pred_check
        %p628 = pneg %p627
      $region102: #{pallas_forward.1} parent=5 // pred_check_branch
        %630 = sbr.rel (%p628) target = $region104
      $region103: #{pallas_forward.1} parent=5 // pred_region
        // Predicated region
        $region105: #{pallas_forward.1} parent=103 // pred_check
          %p631 = pneg %p52
        $region106: #{pallas_forward.1} parent=103 // pred_check_branch
          %633 = sbr.rel (%p631) target = $region108
        $region107: #{pallas_forward.1} parent=103 // pred_region
          %p634 = scmp.lt.s32.totalorder %s32, 1
          %s635 = scalar_select %p634, %s32, 1
          %s636 = smul.addr %s635, 48
          %s637 = smul.addr %s636, 8
          %s638 = scalar_lea.vmem %s0, %s637
        $region108: #{pallas_forward.1} parent=103 // pred_fallthru
          _
      $region104: #{pallas_forward.1} parent=5 // pred_fallthru
        _
      %p639 = scmp.le.s32.totalorder 1, %s32
      %p640 = scmp.lt.s32.totalorder %s32, 3
      %p641 = pnand %p639, %p640
      %p642 = pneg %p641
      // Predicated region
      $region109: #{pallas_forward.1} parent=5 // pred_check
        _
      $region110: #{pallas_forward.1} parent=5 // pred_check_branch
        %644 = sbr.rel (%p641) target = $region112
      $region111: #{pallas_forward.1} parent=5 // pred_region
        %s645 = ssub.s32 %s32, 1
        %p646 = scmp.lt.s32.totalorder %s37, 1
        %s647 = scalar_select %p646, %s37, 1
        %s648 = smul.addr %s647, 48
        %s649 = smul.addr %s648, 8
        %s650 = scalar_lea.vmem %s0, %s649
        %p651 = pneg %p58
        %p652 = pneg %p55
        %p653 = pneg %p79
        %p654 = pneg %p76
        %p655 = pneg %p100
        %p656 = pneg %p97
        %p657 = pneg %p121
        %p658 = pneg %p118
        %p659 = pneg %p142
        %p660 = pneg %p139
        %p661 = pneg %p163
        %p662 = pneg %p160
        %p663 = pneg %p184
        %p664 = pneg %p181
        %p665 = pneg %p205
        %p666 = pneg %p202
        %p667 = pneg %p226
        %p668 = pneg %p223
        %p669 = pneg %p247
        %p670 = pneg %p244
        %p671 = pneg %p268
        %p672 = pneg %p265
        %p673 = pneg %p289
        %p674 = pneg %p286
        %p675 = pneg %p310
        %p676 = pneg %p307
        %p677 = pneg %p331
        %p678 = pneg %p328
        %p679 = pneg %p352
        %p680 = pneg %p349
        %p681 = pneg %p373
        %p682 = pneg %p370
        %p683 = pneg %p394
        %p684 = pneg %p391
        %p685 = pneg %p415
        %p686 = pneg %p412
        %p687 = pneg %p436
        %p688 = pneg %p433
        %p689 = pneg %p457
        %p690 = pneg %p454
        %p691 = pneg %p478
        %p692 = pneg %p475
        %p693 = pneg %p499
        %p694 = pneg %p496
        %p695 = pneg %p520
        %p696 = pneg %p517
        %p697 = pneg %p546
        %p698 = pneg %p543
        %s699 = sand.u32 %s533, 1
        %s700 = scalar_lea.sflag [#allocation6], %s699
        %s701 = sand.u32 %s533, 1
        %s702 = scalar_lea.vmem [#allocation5], %s701
        %p703 = scmp.lt.s32.totalorder %s37, 1
        %s704 = scalar_select %p703, %s37, 1
        %s705 = smul.addr %s704, 48
        %s706 = smul.addr %s705, 8
        %s707 = scalar_lea.vmem %s0, %s706
        %vm708 = vcmask 31744
        %709 = vst.msk [vmem:[#allocation2] sm:$0xff] %vm708, 0.0
        %710 = vst.msk [vmem:[#allocation2 + $0x8] sm:$0xff] %vm708, 0.0
        %711 = vst.msk [vmem:[#allocation2 + $0x10] sm:$0xff] %vm708, 0.0
        %712 = vst.msk [vmem:[#allocation2 + $0x18] sm:$0xff] %vm708, 0.0
        %713 = vst.msk [vmem:[#allocation2 + $0x20] sm:$0xff] %vm708, 0.0
        %714 = vst.msk [vmem:[#allocation2 + $0x28] sm:$0xff] %vm708, 0.0
        %715 = vst.msk [vmem:[#allocation2 + $0x30] sm:$0xff] %vm708, 0.0
        %716 = vst.msk [vmem:[#allocation2 + $0x38] sm:$0xff] %vm708, 0.0
        %717 = vst.msk [vmem:[#allocation2 + $0x40] sm:$0xff] %vm708, 0.0
        %718 = vst.msk [vmem:[#allocation2 + $0x48] sm:$0xff] %vm708, 0.0
        %719 = vst.msk [vmem:[#allocation2 + $0x50] sm:$0xff] %vm708, 0.0
        %720 = vst.msk [vmem:[#allocation2 + $0x58] sm:$0xff] %vm708, 0.0
        %721 = vst.msk [vmem:[#allocation2 + $0x60] sm:$0xff] %vm708, 0.0
        %722 = vst.msk [vmem:[#allocation2 + $0x68] sm:$0xff] %vm708, 0.0
        %723 = vst.msk [vmem:[#allocation2 + $0x70] sm:$0xff] %vm708, 0.0
        %724 = vst.msk [vmem:[#allocation2 + $0x78] sm:$0xff] %vm708, 0.0
        %725 = vst.msk [vmem:[#allocation2 + $0x80] sm:$0xff] %vm708, 0.0
        %726 = vst.msk [vmem:[#allocation2 + $0x88] sm:$0xff] %vm708, 0.0
        %727 = vst.msk [vmem:[#allocation2 + $0x90] sm:$0xff] %vm708, 0.0
        %728 = vst.msk [vmem:[#allocation2 + $0x98] sm:$0xff] %vm708, 0.0
        %729 = vst.msk [vmem:[#allocation2 + $0xa0] sm:$0xff] %vm708, 0.0
        %730 = vst.msk [vmem:[#allocation2 + $0xa8] sm:$0xff] %vm708, 0.0
        %731 = vst.msk [vmem:[#allocation2 + $0xb0] sm:$0xff] %vm708, 0.0
        %732 = vst.msk [vmem:[#allocation2 + $0xb8] sm:$0xff] %vm708, 0.0
        %733 = vst.msk [vmem:[#allocation2 + $0xc0] sm:$0xff] %vm708, 0.0
        %734 = vst.msk [vmem:[#allocation2 + $0xc8] sm:$0xff] %vm708, 0.0
        %735 = vst.msk [vmem:[#allocation2 + $0xd0] sm:$0xff] %vm708, 0.0
        %736 = vst.msk [vmem:[#allocation2 + $0xd8] sm:$0xff] %vm708, 0.0
        %737 = vst.msk [vmem:[#allocation2 + $0xe0] sm:$0xff] %vm708, 0.0
        %738 = vst.msk [vmem:[#allocation2 + $0xe8] sm:$0xff] %vm708, 0.0
        %739 = vst.msk [vmem:[#allocation2 + $0xf0] sm:$0xff] %vm708, 0.0
        %740 = vst.msk [vmem:[#allocation2 + $0xf8] sm:$0xff] %vm708, 0.0
        %741 = vst.msk [vmem:[#allocation2 + $0x100] sm:$0xff] %vm708, 0.0
        %742 = vst.msk [vmem:[#allocation2 + $0x108] sm:$0xff] %vm708, 0.0
        %743 = vst.msk [vmem:[#allocation2 + $0x110] sm:$0xff] %vm708, 0.0
        %744 = vst.msk [vmem:[#allocation2 + $0x118] sm:$0xff] %vm708, 0.0
        %745 = vst.msk [vmem:[#allocation2 + $0x120] sm:$0xff] %vm708, 0.0
        %746 = vst.msk [vmem:[#allocation2 + $0x128] sm:$0xff] %vm708, 0.0
        %747 = vst.msk [vmem:[#allocation2 + $0x130] sm:$0xff] %vm708, 0.0
        %748 = vst.msk [vmem:[#allocation2 + $0x138] sm:$0xff] %vm708, 0.0
        %749 = vst.msk [vmem:[#allocation2 + $0x140] sm:$0xff] %vm708, 0.0
        %750 = vst.msk [vmem:[#allocation2 + $0x148] sm:$0xff] %vm708, 0.0
        %751 = vst.msk [vmem:[#allocation2 + $0x150] sm:$0xff] %vm708, 0.0
        %752 = vst.msk [vmem:[#allocation2 + $0x158] sm:$0xff] %vm708, 0.0
        %753 = vst.msk [vmem:[#allocation2 + $0x160] sm:$0xff] %vm708, 0.0
        %754 = vst.msk [vmem:[#allocation2 + $0x168] sm:$0xff] %vm708, 0.0
        %755 = vst.msk [vmem:[#allocation2 + $0x170] sm:$0xff] %vm708, 0.0
        %756 = vst.msk [vmem:[#allocation2 + $0x178] sm:$0xff] %vm708, 0.0
        %757 = vst.msk [vmem:[#allocation2 + $0x180] sm:$0xff] %vm708, 0.0
        %758 = vst.msk [vmem:[#allocation2 + $0x188] sm:$0xff] %vm708, 0.0
        %759 = vst.msk [vmem:[#allocation2 + $0x190] sm:$0xff] %vm708, 0.0
        %760 = vst.msk [vmem:[#allocation2 + $0x198] sm:$0xff] %vm708, 0.0
        %761 = vst.msk [vmem:[#allocation2 + $0x1a0] sm:$0xff] %vm708, 0.0
        %762 = vst.msk [vmem:[#allocation2 + $0x1a8] sm:$0xff] %vm708, 0.0
        %763 = vst.msk [vmem:[#allocation2 + $0x1b0] sm:$0xff] %vm708, 0.0
        %764 = vst.msk [vmem:[#allocation2 + $0x1b8] sm:$0xff] %vm708, 0.0
        %v765 = vlaneseq
        %v766 = vshrl.u32 %v765, 7
        %v767 = vadd.s32 %v766, 8
        %v768 = vadd.s32 %v766, 16
        %v769 = vadd.s32 %v766, 24
        %v770 = vadd.s32 %v766, 32
        %v771 = vadd.s32 %v766, 40
        %v772 = vadd.s32 %v766, 48
        %v773 = vadd.s32 %v766, 56
        %v774 = vadd.s32 %v766, 64
        %v775 = vadd.s32 %v766, 72
        %v776 = vadd.s32 %v766, 80
        %v777 = vadd.s32 %v766, 88
        %v778 = vadd.s32 %v766, 96
        %v779 = vadd.s32 %v766, 104
        %v780 = vadd.s32 %v766, 112
        %v781 = vadd.s32 %v766, 120
        %v782 = vadd.s32 %v766, 128
        %v783 = vadd.s32 %v766, 136
        %v784 = vadd.s32 %v766, 144
        %v785 = vadd.s32 %v766, 152
        %v786 = vadd.s32 %v766, 160
        %v787 = vadd.s32 %v766, 168
        %v788 = vadd.s32 %v766, 176
        %v789 = vadd.s32 %v766, 184
        %v790 = vadd.s32 %v766, 192
        %v791 = vadd.s32 %v766, 200
        %v792 = vadd.s32 %v766, 208
        %v793 = vadd.s32 %v766, 216
        %v794 = vadd.s32 %v766, 224
        %v795 = vadd.s32 %v766, 232
        %v796 = vadd.s32 %v766, 240
        %v797 = vadd.s32 %v766, 248
        %v798 = vadd.s32 %v766, 256
        %v799 = vadd.s32 %v766, 264
        %v800 = vadd.s32 %v766, 272
        %v801 = vadd.s32 %v766, 280
        %v802 = vadd.s32 %v766, 288
        %v803 = vadd.s32 %v766, 296
        %v804 = vadd.s32 %v766, 304
        %v805 = vadd.s32 %v766, 312
        %v806 = vadd.s32 %v766, 320
        %v807 = vadd.s32 %v766, 328
        %v808 = vadd.s32 %v766, 336
        %v809 = vadd.s32 %v766, 344
        %v810 = vadd.s32 %v766, 352
        %v811 = vadd.s32 %v766, 360
        %v812 = vadd.s32 %v766, 368
        %v813 = vadd.s32 %v766, 376
        %vm814 = vcmp.lt.s32.totalorder %v766, 0
        %v815 = vsub.s32 0, %v766
        %v816 = vsel %vm814, %v815, %v766
        %v817 = vmul.u32.u64.compose %v816, 2863311531
        %v818 = vextract.low.u32 %v817
        %v819 = vextract.high.u32 %v817
        %v820 = vshrl.u32 %v819, 4
        %v821 = vmul.u32 %v820, 24
        %v822 = vsub.s32 %v816, %v821
        %v823 = vsub.s32 0, %v822
        %v824 = vsel %vm814, %v823, %v822
        %vm825 = vcmp.lt.s32.totalorder %v767, 0
        %v826 = vsub.s32 0, %v767
        %v827 = vsel %vm825, %v826, %v767
        %v828 = vmul.u32.u64.compose %v827, 2863311531
        %v829 = vextract.low.u32 %v828
        %v830 = vextract.high.u32 %v828
        %v831 = vshrl.u32 %v830, 4
        %v832 = vmul.u32 %v831, 24
        %v833 = vsub.s32 %v827, %v832
        %v834 = vsub.s32 0, %v833
        %v835 = vsel %vm825, %v834, %v833
        %vm836 = vcmp.lt.s32.totalorder %v768, 0
        %v837 = vsub.s32 0, %v768
        %v838 = vsel %vm836, %v837, %v768
        %v839 = vmul.u32.u64.compose %v838, 2863311531
        %v840 = vextract.low.u32 %v839
        %v841 = vextract.high.u32 %v839
        %v842 = vshrl.u32 %v841, 4
        %v843 = vmul.u32 %v842, 24
        %v844 = vsub.s32 %v838, %v843
        %v845 = vsub.s32 0, %v844
        %v846 = vsel %vm836, %v845, %v844
        %vm847 = vcmp.lt.s32.totalorder %v769, 0
        %v848 = vsub.s32 0, %v769
        %v849 = vsel %vm847, %v848, %v769
        %v850 = vmul.u32.u64.compose %v849, 2863311531
        %v851 = vextract.low.u32 %v850
        %v852 = vextract.high.u32 %v850
        %v853 = vshrl.u32 %v852, 4
        %v854 = vmul.u32 %v853, 24
        %v855 = vsub.s32 %v849, %v854
        %v856 = vsub.s32 0, %v855
        %v857 = vsel %vm847, %v856, %v855
        %vm858 = vcmp.lt.s32.totalorder %v770, 0
        %v859 = vsub.s32 0, %v770
        %v860 = vsel %vm858, %v859, %v770
        %v861 = vmul.u32.u64.compose %v860, 2863311531
        %v862 = vextract.low.u32 %v861
        %v863 = vextract.high.u32 %v861
        %v864 = vshrl.u32 %v863, 4
        %v865 = vmul.u32 %v864, 24
        %v866 = vsub.s32 %v860, %v865
        %v867 = vsub.s32 0, %v866
        %v868 = vsel %vm858, %v867, %v866
        %vm869 = vcmp.lt.s32.totalorder %v771, 0
        %v870 = vsub.s32 0, %v771
        %v871 = vsel %vm869, %v870, %v771
        %v872 = vmul.u32.u64.compose %v871, 2863311531
        %v873 = vextract.low.u32 %v872
        %v874 = vextract.high.u32 %v872
        %v875 = vshrl.u32 %v874, 4
        %v876 = vmul.u32 %v875, 24
        %v877 = vsub.s32 %v871, %v876
        %v878 = vsub.s32 0, %v877
        %v879 = vsel %vm869, %v878, %v877
        %vm880 = vcmp.lt.s32.totalorder %v772, 0
        %v881 = vsub.s32 0, %v772
        %v882 = vsel %vm880, %v881, %v772
        %v883 = vmul.u32.u64.compose %v882, 2863311531
        %v884 = vextract.low.u32 %v883
        %v885 = vextract.high.u32 %v883
        %v886 = vshrl.u32 %v885, 4
        %v887 = vmul.u32 %v886, 24
        %v888 = vsub.s32 %v882, %v887
        %v889 = vsub.s32 0, %v888
        %v890 = vsel %vm880, %v889, %v888
        %vm891 = vcmp.lt.s32.totalorder %v773, 0
        %v892 = vsub.s32 0, %v773
        %v893 = vsel %vm891, %v892, %v773
        %v894 = vmul.u32.u64.compose %v893, 2863311531
        %v895 = vextract.low.u32 %v894
        %v896 = vextract.high.u32 %v894
        %v897 = vshrl.u32 %v896, 4
        %v898 = vmul.u32 %v897, 24
        %v899 = vsub.s32 %v893, %v898
        %v900 = vsub.s32 0, %v899
        %v901 = vsel %vm891, %v900, %v899
        %vm902 = vcmp.lt.s32.totalorder %v774, 0
        %v903 = vsub.s32 0, %v774
        %v904 = vsel %vm902, %v903, %v774
        %v905 = vmul.u32.u64.compose %v904, 2863311531
        %v906 = vextract.low.u32 %v905
        %v907 = vextract.high.u32 %v905
        %v908 = vshrl.u32 %v907, 4
        %v909 = vmul.u32 %v908, 24
        %v910 = vsub.s32 %v904, %v909
        %v911 = vsub.s32 0, %v910
        %v912 = vsel %vm902, %v911, %v910
        %vm913 = vcmp.lt.s32.totalorder %v775, 0
        %v914 = vsub.s32 0, %v775
        %v915 = vsel %vm913, %v914, %v775
        %v916 = vmul.u32.u64.compose %v915, 2863311531
        %v917 = vextract.low.u32 %v916
        %v918 = vextract.high.u32 %v916
        %v919 = vshrl.u32 %v918, 4
        %v920 = vmul.u32 %v919, 24
        %v921 = vsub.s32 %v915, %v920
        %v922 = vsub.s32 0, %v921
        %v923 = vsel %vm913, %v922, %v921
        %vm924 = vcmp.lt.s32.totalorder %v776, 0
        %v925 = vsub.s32 0, %v776
        %v926 = vsel %vm924, %v925, %v776
        %v927 = vmul.u32.u64.compose %v926, 2863311531
        %v928 = vextract.low.u32 %v927
        %v929 = vextract.high.u32 %v927
        %v930 = vshrl.u32 %v929, 4
        %v931 = vmul.u32 %v930, 24
        %v932 = vsub.s32 %v926, %v931
        %v933 = vsub.s32 0, %v932
        %v934 = vsel %vm924, %v933, %v932
        %vm935 = vcmp.lt.s32.totalorder %v777, 0
        %v936 = vsub.s32 0, %v777
        %v937 = vsel %vm935, %v936, %v777
        %v938 = vmul.u32.u64.compose %v937, 2863311531
        %v939 = vextract.low.u32 %v938
        %v940 = vextract.high.u32 %v938
        %v941 = vshrl.u32 %v940, 4
        %v942 = vmul.u32 %v941, 24
        %v943 = vsub.s32 %v937, %v942
        %v944 = vsub.s32 0, %v943
        %v945 = vsel %vm935, %v944, %v943
        %vm946 = vcmp.lt.s32.totalorder %v778, 0
        %v947 = vsub.s32 0, %v778
        %v948 = vsel %vm946, %v947, %v778
        %v949 = vmul.u32.u64.compose %v948, 2863311531
        %v950 = vextract.low.u32 %v949
        %v951 = vextract.high.u32 %v949
        %v952 = vshrl.u32 %v951, 4
        %v953 = vmul.u32 %v952, 24
        %v954 = vsub.s32 %v948, %v953
        %v955 = vsub.s32 0, %v954
        %v956 = vsel %vm946, %v955, %v954
        %vm957 = vcmp.lt.s32.totalorder %v779, 0
        %v958 = vsub.s32 0, %v779
        %v959 = vsel %vm957, %v958, %v779
        %v960 = vmul.u32.u64.compose %v959, 2863311531
        %v961 = vextract.low.u32 %v960
        %v962 = vextract.high.u32 %v960
        %v963 = vshrl.u32 %v962, 4
        %v964 = vmul.u32 %v963, 24
        %v965 = vsub.s32 %v959, %v964
        %v966 = vsub.s32 0, %v965
        %v967 = vsel %vm957, %v966, %v965
        %vm968 = vcmp.lt.s32.totalorder %v780, 0
        %v969 = vsub.s32 0, %v780
        %v970 = vsel %vm968, %v969, %v780
        %v971 = vmul.u32.u64.compose %v970, 2863311531
        %v972 = vextract.low.u32 %v971
        %v973 = vextract.high.u32 %v971
        %v974 = vshrl.u32 %v973, 4
        %v975 = vmul.u32 %v974, 24
        %v976 = vsub.s32 %v970, %v975
        %v977 = vsub.s32 0, %v976
        %v978 = vsel %vm968, %v977, %v976
        %vm979 = vcmp.lt.s32.totalorder %v781, 0
        %v980 = vsub.s32 0, %v781
        %v981 = vsel %vm979, %v980, %v781
        %v982 = vmul.u32.u64.compose %v981, 2863311531
        %v983 = vextract.low.u32 %v982
        %v984 = vextract.high.u32 %v982
        %v985 = vshrl.u32 %v984, 4
        %v986 = vmul.u32 %v985, 24
        %v987 = vsub.s32 %v981, %v986
        %v988 = vsub.s32 0, %v987
        %v989 = vsel %vm979, %v988, %v987
        %vm990 = vcmp.lt.s32.totalorder %v782, 0
        %v991 = vsub.s32 0, %v782
        %v992 = vsel %vm990, %v991, %v782
        %v993 = vmul.u32.u64.compose %v992, 2863311531
        %v994 = vextract.low.u32 %v993
        %v995 = vextract.high.u32 %v993
        %v996 = vshrl.u32 %v995, 4
        %v997 = vmul.u32 %v996, 24
        %v998 = vsub.s32 %v992, %v997
        %v999 = vsub.s32 0, %v998
        %v1000 = vsel %vm990, %v999, %v998
        %vm1001 = vcmp.lt.s32.totalorder %v783, 0
        %v1002 = vsub.s32 0, %v783
        %v1003 = vsel %vm1001, %v1002, %v783
        %v1004 = vmul.u32.u64.compose %v1003, 2863311531
        %v1005 = vextract.low.u32 %v1004
        %v1006 = vextract.high.u32 %v1004
        %v1007 = vshrl.u32 %v1006, 4
        %v1008 = vmul.u32 %v1007, 24
        %v1009 = vsub.s32 %v1003, %v1008
        %v1010 = vsub.s32 0, %v1009
        %v1011 = vsel %vm1001, %v1010, %v1009
        %vm1012 = vcmp.lt.s32.totalorder %v784, 0
        %v1013 = vsub.s32 0, %v784
        %v1014 = vsel %vm1012, %v1013, %v784
        %v1015 = vmul.u32.u64.compose %v1014, 2863311531
        %v1016 = vextract.low.u32 %v1015
        %v1017 = vextract.high.u32 %v1015
        %v1018 = vshrl.u32 %v1017, 4
        %v1019 = vmul.u32 %v1018, 24
        %v1020 = vsub.s32 %v1014, %v1019
        %v1021 = vsub.s32 0, %v1020
        %v1022 = vsel %vm1012, %v1021, %v1020
        %vm1023 = vcmp.lt.s32.totalorder %v785, 0
        %v1024 = vsub.s32 0, %v785
        %v1025 = vsel %vm1023, %v1024, %v785
        %v1026 = vmul.u32.u64.compose %v1025, 2863311531
        %v1027 = vextract.low.u32 %v1026
        %v1028 = vextract.high.u32 %v1026
        %v1029 = vshrl.u32 %v1028, 4
        %v1030 = vmul.u32 %v1029, 24
        %v1031 = vsub.s32 %v1025, %v1030
        %v1032 = vsub.s32 0, %v1031
        %v1033 = vsel %vm1023, %v1032, %v1031
        %vm1034 = vcmp.lt.s32.totalorder %v786, 0
        %v1035 = vsub.s32 0, %v786
        %v1036 = vsel %vm1034, %v1035, %v786
        %v1037 = vmul.u32.u64.compose %v1036, 2863311531
        %v1038 = vextract.low.u32 %v1037
        %v1039 = vextract.high.u32 %v1037
        %v1040 = vshrl.u32 %v1039, 4
        %v1041 = vmul.u32 %v1040, 24
        %v1042 = vsub.s32 %v1036, %v1041
        %v1043 = vsub.s32 0, %v1042
        %v1044 = vsel %vm1034, %v1043, %v1042
        %vm1045 = vcmp.lt.s32.totalorder %v787, 0
        %v1046 = vsub.s32 0, %v787
        %v1047 = vsel %vm1045, %v1046, %v787
        %v1048 = vmul.u32.u64.compose %v1047, 2863311531
        %v1049 = vextract.low.u32 %v1048
        %v1050 = vextract.high.u32 %v1048
        %v1051 = vshrl.u32 %v1050, 4
        %v1052 = vmul.u32 %v1051, 24
        %v1053 = vsub.s32 %v1047, %v1052
        %v1054 = vsub.s32 0, %v1053
        %v1055 = vsel %vm1045, %v1054, %v1053
        %vm1056 = vcmp.lt.s32.totalorder %v788, 0
        %v1057 = vsub.s32 0, %v788
        %v1058 = vsel %vm1056, %v1057, %v788
        %v1059 = vmul.u32.u64.compose %v1058, 2863311531
        %v1060 = vextract.low.u32 %v1059
        %v1061 = vextract.high.u32 %v1059
        %v1062 = vshrl.u32 %v1061, 4
        %v1063 = vmul.u32 %v1062, 24
        %v1064 = vsub.s32 %v1058, %v1063
        %v1065 = vsub.s32 0, %v1064
        %v1066 = vsel %vm1056, %v1065, %v1064
        %vm1067 = vcmp.lt.s32.totalorder %v789, 0
        %v1068 = vsub.s32 0, %v789
        %v1069 = vsel %vm1067, %v1068, %v789
        %v1070 = vmul.u32.u64.compose %v1069, 2863311531
        %v1071 = vextract.low.u32 %v1070
        %v1072 = vextract.high.u32 %v1070
        %v1073 = vshrl.u32 %v1072, 4
        %v1074 = vmul.u32 %v1073, 24
        %v1075 = vsub.s32 %v1069, %v1074
        %v1076 = vsub.s32 0, %v1075
        %v1077 = vsel %vm1067, %v1076, %v1075
        %vm1078 = vcmp.lt.s32.totalorder %v790, 0
        %v1079 = vsub.s32 0, %v790
        %v1080 = vsel %vm1078, %v1079, %v790
        %v1081 = vmul.u32.u64.compose %v1080, 2863311531
        %v1082 = vextract.low.u32 %v1081
        %v1083 = vextract.high.u32 %v1081
        %v1084 = vshrl.u32 %v1083, 4
        %v1085 = vmul.u32 %v1084, 24
        %v1086 = vsub.s32 %v1080, %v1085
        %v1087 = vsub.s32 0, %v1086
        %v1088 = vsel %vm1078, %v1087, %v1086
        %vm1089 = vcmp.lt.s32.totalorder %v791, 0
        %v1090 = vsub.s32 0, %v791
        %v1091 = vsel %vm1089, %v1090, %v791
        %v1092 = vmul.u32.u64.compose %v1091, 2863311531
        %v1093 = vextract.low.u32 %v1092
        %v1094 = vextract.high.u32 %v1092
        %v1095 = vshrl.u32 %v1094, 4
        %v1096 = vmul.u32 %v1095, 24
        %v1097 = vsub.s32 %v1091, %v1096
        %v1098 = vsub.s32 0, %v1097
        %v1099 = vsel %vm1089, %v1098, %v1097
        %vm1100 = vcmp.lt.s32.totalorder %v792, 0
        %v1101 = vsub.s32 0, %v792
        %v1102 = vsel %vm1100, %v1101, %v792
        %v1103 = vmul.u32.u64.compose %v1102, 2863311531
        %v1104 = vextract.low.u32 %v1103
        %v1105 = vextract.high.u32 %v1103
        %v1106 = vshrl.u32 %v1105, 4
        %v1107 = vmul.u32 %v1106, 24
        %v1108 = vsub.s32 %v1102, %v1107
        %v1109 = vsub.s32 0, %v1108
        %v1110 = vsel %vm1100, %v1109, %v1108
        %vm1111 = vcmp.lt.s32.totalorder %v793, 0
        %v1112 = vsub.s32 0, %v793
        %v1113 = vsel %vm1111, %v1112, %v793
        %v1114 = vmul.u32.u64.compose %v1113, 2863311531
        %v1115 = vextract.low.u32 %v1114
        %v1116 = vextract.high.u32 %v1114
        %v1117 = vshrl.u32 %v1116, 4
        %v1118 = vmul.u32 %v1117, 24
        %v1119 = vsub.s32 %v1113, %v1118
        %v1120 = vsub.s32 0, %v1119
        %v1121 = vsel %vm1111, %v1120, %v1119
        %vm1122 = vcmp.lt.s32.totalorder %v794, 0
        %v1123 = vsub.s32 0, %v794
        %v1124 = vsel %vm1122, %v1123, %v794
        %v1125 = vmul.u32.u64.compose %v1124, 2863311531
        %v1126 = vextract.low.u32 %v1125
        %v1127 = vextract.high.u32 %v1125
        %v1128 = vshrl.u32 %v1127, 4
        %v1129 = vmul.u32 %v1128, 24
        %v1130 = vsub.s32 %v1124, %v1129
        %v1131 = vsub.s32 0, %v1130
        %v1132 = vsel %vm1122, %v1131, %v1130
        %vm1133 = vcmp.lt.s32.totalorder %v795, 0
        %v1134 = vsub.s32 0, %v795
        %v1135 = vsel %vm1133, %v1134, %v795
        %v1136 = vmul.u32.u64.compose %v1135, 2863311531
        %v1137 = vextract.low.u32 %v1136
        %v1138 = vextract.high.u32 %v1136
        %v1139 = vshrl.u32 %v1138, 4
        %v1140 = vmul.u32 %v1139, 24
        %v1141 = vsub.s32 %v1135, %v1140
        %v1142 = vsub.s32 0, %v1141
        %v1143 = vsel %vm1133, %v1142, %v1141
        %vm1144 = vcmp.lt.s32.totalorder %v796, 0
        %v1145 = vsub.s32 0, %v796
        %v1146 = vsel %vm1144, %v1145, %v796
        %v1147 = vmul.u32.u64.compose %v1146, 2863311531
        %v1148 = vextract.low.u32 %v1147
        %v1149 = vextract.high.u32 %v1147
        %v1150 = vshrl.u32 %v1149, 4
        %v1151 = vmul.u32 %v1150, 24
        %v1152 = vsub.s32 %v1146, %v1151
        %v1153 = vsub.s32 0, %v1152
        %v1154 = vsel %vm1144, %v1153, %v1152
        %vm1155 = vcmp.lt.s32.totalorder %v797, 0
        %v1156 = vsub.s32 0, %v797
        %v1157 = vsel %vm1155, %v1156, %v797
        %v1158 = vmul.u32.u64.compose %v1157, 2863311531
        %v1159 = vextract.low.u32 %v1158
        %v1160 = vextract.high.u32 %v1158
        %v1161 = vshrl.u32 %v1160, 4
        %v1162 = vmul.u32 %v1161, 24
        %v1163 = vsub.s32 %v1157, %v1162
        %v1164 = vsub.s32 0, %v1163
        %v1165 = vsel %vm1155, %v1164, %v1163
        %vm1166 = vcmp.lt.s32.totalorder %v798, 0
        %v1167 = vsub.s32 0, %v798
        %v1168 = vsel %vm1166, %v1167, %v798
        %v1169 = vmul.u32.u64.compose %v1168, 2863311531
        %v1170 = vextract.low.u32 %v1169
        %v1171 = vextract.high.u32 %v1169
        %v1172 = vshrl.u32 %v1171, 4
        %v1173 = vmul.u32 %v1172, 24
        %v1174 = vsub.s32 %v1168, %v1173
        %v1175 = vsub.s32 0, %v1174
        %v1176 = vsel %vm1166, %v1175, %v1174
        %vm1177 = vcmp.lt.s32.totalorder %v799, 0
        %v1178 = vsub.s32 0, %v799
        %v1179 = vsel %vm1177, %v1178, %v799
        %v1180 = vmul.u32.u64.compose %v1179, 2863311531
        %v1181 = vextract.low.u32 %v1180
        %v1182 = vextract.high.u32 %v1180
        %v1183 = vshrl.u32 %v1182, 4
        %v1184 = vmul.u32 %v1183, 24
        %v1185 = vsub.s32 %v1179, %v1184
        %v1186 = vsub.s32 0, %v1185
        %v1187 = vsel %vm1177, %v1186, %v1185
        %vm1188 = vcmp.lt.s32.totalorder %v800, 0
        %v1189 = vsub.s32 0, %v800
        %v1190 = vsel %vm1188, %v1189, %v800
        %v1191 = vmul.u32.u64.compose %v1190, 2863311531
        %v1192 = vextract.low.u32 %v1191
        %v1193 = vextract.high.u32 %v1191
        %v1194 = vshrl.u32 %v1193, 4
        %v1195 = vmul.u32 %v1194, 24
        %v1196 = vsub.s32 %v1190, %v1195
        %v1197 = vsub.s32 0, %v1196
        %v1198 = vsel %vm1188, %v1197, %v1196
        %vm1199 = vcmp.lt.s32.totalorder %v801, 0
        %v1200 = vsub.s32 0, %v801
        %v1201 = vsel %vm1199, %v1200, %v801
        %v1202 = vmul.u32.u64.compose %v1201, 2863311531
        %v1203 = vextract.low.u32 %v1202
        %v1204 = vextract.high.u32 %v1202
        %v1205 = vshrl.u32 %v1204, 4
        %v1206 = vmul.u32 %v1205, 24
        %v1207 = vsub.s32 %v1201, %v1206
        %v1208 = vsub.s32 0, %v1207
        %v1209 = vsel %vm1199, %v1208, %v1207
        %vm1210 = vcmp.lt.s32.totalorder %v802, 0
        %v1211 = vsub.s32 0, %v802
        %v1212 = vsel %vm1210, %v1211, %v802
        %v1213 = vmul.u32.u64.compose %v1212, 2863311531
        %v1214 = vextract.low.u32 %v1213
        %v1215 = vextract.high.u32 %v1213
        %v1216 = vshrl.u32 %v1215, 4
        %v1217 = vmul.u32 %v1216, 24
        %v1218 = vsub.s32 %v1212, %v1217
        %v1219 = vsub.s32 0, %v1218
        %v1220 = vsel %vm1210, %v1219, %v1218
        %vm1221 = vcmp.lt.s32.totalorder %v803, 0
        %v1222 = vsub.s32 0, %v803
        %v1223 = vsel %vm1221, %v1222, %v803
        %v1224 = vmul.u32.u64.compose %v1223, 2863311531
        %v1225 = vextract.low.u32 %v1224
        %v1226 = vextract.high.u32 %v1224
        %v1227 = vshrl.u32 %v1226, 4
        %v1228 = vmul.u32 %v1227, 24
        %v1229 = vsub.s32 %v1223, %v1228
        %v1230 = vsub.s32 0, %v1229
        %v1231 = vsel %vm1221, %v1230, %v1229
        %vm1232 = vcmp.lt.s32.totalorder %v804, 0
        %v1233 = vsub.s32 0, %v804
        %v1234 = vsel %vm1232, %v1233, %v804
        %v1235 = vmul.u32.u64.compose %v1234, 2863311531
        %v1236 = vextract.low.u32 %v1235
        %v1237 = vextract.high.u32 %v1235
        %v1238 = vshrl.u32 %v1237, 4
        %v1239 = vmul.u32 %v1238, 24
        %v1240 = vsub.s32 %v1234, %v1239
        %v1241 = vsub.s32 0, %v1240
        %v1242 = vsel %vm1232, %v1241, %v1240
        %vm1243 = vcmp.lt.s32.totalorder %v805, 0
        %v1244 = vsub.s32 0, %v805
        %v1245 = vsel %vm1243, %v1244, %v805
        %v1246 = vmul.u32.u64.compose %v1245, 2863311531
        %v1247 = vextract.low.u32 %v1246
        %v1248 = vextract.high.u32 %v1246
        %v1249 = vshrl.u32 %v1248, 4
        %v1250 = vmul.u32 %v1249, 24
        %v1251 = vsub.s32 %v1245, %v1250
        %v1252 = vsub.s32 0, %v1251
        %v1253 = vsel %vm1243, %v1252, %v1251
        %vm1254 = vcmp.lt.s32.totalorder %v806, 0
        %v1255 = vsub.s32 0, %v806
        %v1256 = vsel %vm1254, %v1255, %v806
        %v1257 = vmul.u32.u64.compose %v1256, 2863311531
        %v1258 = vextract.low.u32 %v1257
        %v1259 = vextract.high.u32 %v1257
        %v1260 = vshrl.u32 %v1259, 4
        %v1261 = vmul.u32 %v1260, 24
        %v1262 = vsub.s32 %v1256, %v1261
        %v1263 = vsub.s32 0, %v1262
        %v1264 = vsel %vm1254, %v1263, %v1262
        %vm1265 = vcmp.lt.s32.totalorder %v807, 0
        %v1266 = vsub.s32 0, %v807
        %v1267 = vsel %vm1265, %v1266, %v807
        %v1268 = vmul.u32.u64.compose %v1267, 2863311531
        %v1269 = vextract.low.u32 %v1268
        %v1270 = vextract.high.u32 %v1268
        %v1271 = vshrl.u32 %v1270, 4
        %v1272 = vmul.u32 %v1271, 24
        %v1273 = vsub.s32 %v1267, %v1272
        %v1274 = vsub.s32 0, %v1273
        %v1275 = vsel %vm1265, %v1274, %v1273
        %vm1276 = vcmp.lt.s32.totalorder %v808, 0
        %v1277 = vsub.s32 0, %v808
        %v1278 = vsel %vm1276, %v1277, %v808
        %v1279 = vmul.u32.u64.compose %v1278, 2863311531
        %v1280 = vextract.low.u32 %v1279
        %v1281 = vextract.high.u32 %v1279
        %v1282 = vshrl.u32 %v1281, 4
        %v1283 = vmul.u32 %v1282, 24
        %v1284 = vsub.s32 %v1278, %v1283
        %v1285 = vsub.s32 0, %v1284
        %v1286 = vsel %vm1276, %v1285, %v1284
        %vm1287 = vcmp.lt.s32.totalorder %v809, 0
        %v1288 = vsub.s32 0, %v809
        %v1289 = vsel %vm1287, %v1288, %v809
        %v1290 = vmul.u32.u64.compose %v1289, 2863311531
        %v1291 = vextract.low.u32 %v1290
        %v1292 = vextract.high.u32 %v1290
        %v1293 = vshrl.u32 %v1292, 4
        %v1294 = vmul.u32 %v1293, 24
        %v1295 = vsub.s32 %v1289, %v1294
        %v1296 = vsub.s32 0, %v1295
        %v1297 = vsel %vm1287, %v1296, %v1295
        %vm1298 = vcmp.lt.s32.totalorder %v810, 0
        %v1299 = vsub.s32 0, %v810
        %v1300 = vsel %vm1298, %v1299, %v810
        %v1301 = vmul.u32.u64.compose %v1300, 2863311531
        %v1302 = vextract.low.u32 %v1301
        %v1303 = vextract.high.u32 %v1301
        %v1304 = vshrl.u32 %v1303, 4
        %v1305 = vmul.u32 %v1304, 24
        %v1306 = vsub.s32 %v1300, %v1305
        %v1307 = vsub.s32 0, %v1306
        %v1308 = vsel %vm1298, %v1307, %v1306
        %vm1309 = vcmp.lt.s32.totalorder %v811, 0
        %v1310 = vsub.s32 0, %v811
        %v1311 = vsel %vm1309, %v1310, %v811
        %v1312 = vmul.u32.u64.compose %v1311, 2863311531
        %v1313 = vextract.low.u32 %v1312
        %v1314 = vextract.high.u32 %v1312
        %v1315 = vshrl.u32 %v1314, 4
        %v1316 = vmul.u32 %v1315, 24
        %v1317 = vsub.s32 %v1311, %v1316
        %v1318 = vsub.s32 0, %v1317
        %v1319 = vsel %vm1309, %v1318, %v1317
        %vm1320 = vcmp.lt.s32.totalorder %v812, 0
        %v1321 = vsub.s32 0, %v812
        %v1322 = vsel %vm1320, %v1321, %v812
        %v1323 = vmul.u32.u64.compose %v1322, 2863311531
        %v1324 = vextract.low.u32 %v1323
        %v1325 = vextract.high.u32 %v1323
        %v1326 = vshrl.u32 %v1325, 4
        %v1327 = vmul.u32 %v1326, 24
        %v1328 = vsub.s32 %v1322, %v1327
        %v1329 = vsub.s32 0, %v1328
        %v1330 = vsel %vm1320, %v1329, %v1328
        %vm1331 = vcmp.lt.s32.totalorder %v813, 0
        %v1332 = vsub.s32 0, %v813
        %v1333 = vsel %vm1331, %v1332, %v813
        %v1334 = vmul.u32.u64.compose %v1333, 2863311531
        %v1335 = vextract.low.u32 %v1334
        %v1336 = vextract.high.u32 %v1334
        %v1337 = vshrl.u32 %v1336, 4
        %v1338 = vmul.u32 %v1337, 24
        %v1339 = vsub.s32 %v1333, %v1338
        %v1340 = vsub.s32 0, %v1339
        %v1341 = vsel %vm1331, %v1340, %v1339
        %vm1342 = vcmp.ne.s32.totalorder %v824, 0
        %vm1343 = vcmp.ne.s32.totalorder %v835, 0
        %vm1344 = vcmp.ne.s32.totalorder %v846, 0
        %vm1345 = vcmp.ne.s32.totalorder %v857, 0
        %vm1346 = vcmp.ne.s32.totalorder %v868, 0
        %vm1347 = vcmp.ne.s32.totalorder %v879, 0
        %vm1348 = vcmp.ne.s32.totalorder %v890, 0
        %vm1349 = vcmp.ne.s32.totalorder %v901, 0
        %vm1350 = vcmp.ne.s32.totalorder %v912, 0
        %vm1351 = vcmp.ne.s32.totalorder %v923, 0
        %vm1352 = vcmp.ne.s32.totalorder %v934, 0
        %vm1353 = vcmp.ne.s32.totalorder %v945, 0
        %vm1354 = vcmp.ne.s32.totalorder %v956, 0
        %vm1355 = vcmp.ne.s32.totalorder %v967, 0
        %vm1356 = vcmp.ne.s32.totalorder %v978, 0
        %vm1357 = vcmp.ne.s32.totalorder %v989, 0
        %vm1358 = vcmp.ne.s32.totalorder %v1000, 0
        %vm1359 = vcmp.ne.s32.totalorder %v1011, 0
        %vm1360 = vcmp.ne.s32.totalorder %v1022, 0
        %vm1361 = vcmp.ne.s32.totalorder %v1033, 0
        %vm1362 = vcmp.ne.s32.totalorder %v1044, 0
        %vm1363 = vcmp.ne.s32.totalorder %v1055, 0
        %vm1364 = vcmp.ne.s32.totalorder %v1066, 0
        %vm1365 = vcmp.ne.s32.totalorder %v1077, 0
        %vm1366 = vcmp.ne.s32.totalorder %v1088, 0
        %vm1367 = vcmp.ne.s32.totalorder %v1099, 0
        %vm1368 = vcmp.ne.s32.totalorder %v1110, 0
        %vm1369 = vcmp.ne.s32.totalorder %v1121, 0
        %vm1370 = vcmp.ne.s32.totalorder %v1132, 0
        %vm1371 = vcmp.ne.s32.totalorder %v1143, 0
        %vm1372 = vcmp.ne.s32.totalorder %v1154, 0
        %vm1373 = vcmp.ne.s32.totalorder %v1165, 0
        %vm1374 = vcmp.ne.s32.totalorder %v1176, 0
        %vm1375 = vcmp.ne.s32.totalorder %v1187, 0
        %vm1376 = vcmp.ne.s32.totalorder %v1198, 0
        %vm1377 = vcmp.ne.s32.totalorder %v1209, 0
        %vm1378 = vcmp.ne.s32.totalorder %v1220, 0
        %vm1379 = vcmp.ne.s32.totalorder %v1231, 0
        %vm1380 = vcmp.ne.s32.totalorder %v1242, 0
        %vm1381 = vcmp.ne.s32.totalorder %v1253, 0
        %vm1382 = vcmp.ne.s32.totalorder %v1264, 0
        %vm1383 = vcmp.ne.s32.totalorder %v1275, 0
        %vm1384 = vcmp.ne.s32.totalorder %v1286, 0
        %vm1385 = vcmp.ne.s32.totalorder %v1297, 0
        %vm1386 = vcmp.ne.s32.totalorder %v1308, 0
        %vm1387 = vcmp.ne.s32.totalorder %v1319, 0
        %vm1388 = vcmp.ne.s32.totalorder %v1330, 0
        %vm1389 = vcmp.ne.s32.totalorder %v1341, 0
        %vm1390 = vcmp.lt.s32.totalorder %v824, 0
        %vm1391 = vcmp.lt.s32.totalorder %v835, 0
        %vm1392 = vcmp.lt.s32.totalorder %v846, 0
        %vm1393 = vcmp.lt.s32.totalorder %v857, 0
        %vm1394 = vcmp.lt.s32.totalorder %v868, 0
        %vm1395 = vcmp.lt.s32.totalorder %v879, 0
        %vm1396 = vcmp.lt.s32.totalorder %v890, 0
        %vm1397 = vcmp.lt.s32.totalorder %v901, 0
        %vm1398 = vcmp.lt.s32.totalorder %v912, 0
        %vm1399 = vcmp.lt.s32.totalorder %v923, 0
        %vm1400 = vcmp.lt.s32.totalorder %v934, 0
        %vm1401 = vcmp.lt.s32.totalorder %v945, 0
        %vm1402 = vcmp.lt.s32.totalorder %v956, 0
        %vm1403 = vcmp.lt.s32.totalorder %v967, 0
        %vm1404 = vcmp.lt.s32.totalorder %v978, 0
        %vm1405 = vcmp.lt.s32.totalorder %v989, 0
        %vm1406 = vcmp.lt.s32.totalorder %v1000, 0
        %vm1407 = vcmp.lt.s32.totalorder %v1011, 0
        %vm1408 = vcmp.lt.s32.totalorder %v1022, 0
        %vm1409 = vcmp.lt.s32.totalorder %v1033, 0
        %vm1410 = vcmp.lt.s32.totalorder %v1044, 0
        %vm1411 = vcmp.lt.s32.totalorder %v1055, 0
        %vm1412 = vcmp.lt.s32.totalorder %v1066, 0
        %vm1413 = vcmp.lt.s32.totalorder %v1077, 0
        %vm1414 = vcmp.lt.s32.totalorder %v1088, 0
        %vm1415 = vcmp.lt.s32.totalorder %v1099, 0
        %vm1416 = vcmp.lt.s32.totalorder %v1110, 0
        %vm1417 = vcmp.lt.s32.totalorder %v1121, 0
        %vm1418 = vcmp.lt.s32.totalorder %v1132, 0
        %vm1419 = vcmp.lt.s32.totalorder %v1143, 0
        %vm1420 = vcmp.lt.s32.totalorder %v1154, 0
        %vm1421 = vcmp.lt.s32.totalorder %v1165, 0
        %vm1422 = vcmp.lt.s32.totalorder %v1176, 0
        %vm1423 = vcmp.lt.s32.totalorder %v1187, 0
        %vm1424 = vcmp.lt.s32.totalorder %v1198, 0
        %vm1425 = vcmp.lt.s32.totalorder %v1209, 0
        %vm1426 = vcmp.lt.s32.totalorder %v1220, 0
        %vm1427 = vcmp.lt.s32.totalorder %v1231, 0
        %vm1428 = vcmp.lt.s32.totalorder %v1242, 0
        %vm1429 = vcmp.lt.s32.totalorder %v1253, 0
        %vm1430 = vcmp.lt.s32.totalorder %v1264, 0
        %vm1431 = vcmp.lt.s32.totalorder %v1275, 0
        %vm1432 = vcmp.lt.s32.totalorder %v1286, 0
        %vm1433 = vcmp.lt.s32.totalorder %v1297, 0
        %vm1434 = vcmp.lt.s32.totalorder %v1308, 0
        %vm1435 = vcmp.lt.s32.totalorder %v1319, 0
        %vm1436 = vcmp.lt.s32.totalorder %v1330, 0
        %vm1437 = vcmp.lt.s32.totalorder %v1341, 0
        %vm1438 = vmand %vm1390, %vm1342
        %vm1439 = vmand %vm1391, %vm1343
        %vm1440 = vmand %vm1392, %vm1344
        %vm1441 = vmand %vm1393, %vm1345
        %vm1442 = vmand %vm1394, %vm1346
        %vm1443 = vmand %vm1395, %vm1347
        %vm1444 = vmand %vm1396, %vm1348
        %vm1445 = vmand %vm1397, %vm1349
        %vm1446 = vmand %vm1398, %vm1350
        %vm1447 = vmand %vm1399, %vm1351
        %vm1448 = vmand %vm1400, %vm1352
        %vm1449 = vmand %vm1401, %vm1353
        %vm1450 = vmand %vm1402, %vm1354
        %vm1451 = vmand %vm1403, %vm1355
        %vm1452 = vmand %vm1404, %vm1356
        %vm1453 = vmand %vm1405, %vm1357
        %vm1454 = vmand %vm1406, %vm1358
        %vm1455 = vmand %vm1407, %vm1359
        %vm1456 = vmand %vm1408, %vm1360
        %vm1457 = vmand %vm1409, %vm1361
        %vm1458 = vmand %vm1410, %vm1362
        %vm1459 = vmand %vm1411, %vm1363
        %vm1460 = vmand %vm1412, %vm1364
        %vm1461 = vmand %vm1413, %vm1365
        %vm1462 = vmand %vm1414, %vm1366
        %vm1463 = vmand %vm1415, %vm1367
        %vm1464 = vmand %vm1416, %vm1368
        %vm1465 = vmand %vm1417, %vm1369
        %vm1466 = vmand %vm1418, %vm1370
        %vm1467 = vmand %vm1419, %vm1371
        %vm1468 = vmand %vm1420, %vm1372
        %vm1469 = vmand %vm1421, %vm1373
        %vm1470 = vmand %vm1422, %vm1374
        %vm1471 = vmand %vm1423, %vm1375
        %vm1472 = vmand %vm1424, %vm1376
        %vm1473 = vmand %vm1425, %vm1377
        %vm1474 = vmand %vm1426, %vm1378
        %vm1475 = vmand %vm1427, %vm1379
        %vm1476 = vmand %vm1428, %vm1380
        %vm1477 = vmand %vm1429, %vm1381
        %vm1478 = vmand %vm1430, %vm1382
        %vm1479 = vmand %vm1431, %vm1383
        %vm1480 = vmand %vm1432, %vm1384
        %vm1481 = vmand %vm1433, %vm1385
        %vm1482 = vmand %vm1434, %vm1386
        %vm1483 = vmand %vm1435, %vm1387
        %vm1484 = vmand %vm1436, %vm1388
        %vm1485 = vmand %vm1437, %vm1389
        %v1486 = vadd.s32 %v824, 24
        %v1487 = vadd.s32 %v835, 24
        %v1488 = vadd.s32 %v846, 24
        %v1489 = vadd.s32 %v857, 24
        %v1490 = vadd.s32 %v868, 24
        %v1491 = vadd.s32 %v879, 24
        %v1492 = vadd.s32 %v890, 24
        %v1493 = vadd.s32 %v901, 24
        %v1494 = vadd.s32 %v912, 24
        %v1495 = vadd.s32 %v923, 24
        %v1496 = vadd.s32 %v934, 24
        %v1497 = vadd.s32 %v945, 24
        %v1498 = vadd.s32 %v956, 24
        %v1499 = vadd.s32 %v967, 24
        %v1500 = vadd.s32 %v978, 24
        %v1501 = vadd.s32 %v989, 24
        %v1502 = vadd.s32 %v1000, 24
        %v1503 = vadd.s32 %v1011, 24
        %v1504 = vadd.s32 %v1022, 24
        %v1505 = vadd.s32 %v1033, 24
        %v1506 = vadd.s32 %v1044, 24
        %v1507 = vadd.s32 %v1055, 24
        %v1508 = vadd.s32 %v1066, 24
        %v1509 = vadd.s32 %v1077, 24
        %v1510 = vadd.s32 %v1088, 24
        %v1511 = vadd.s32 %v1099, 24
        %v1512 = vadd.s32 %v1110, 24
        %v1513 = vadd.s32 %v1121, 24
        %v1514 = vadd.s32 %v1132, 24
        %v1515 = vadd.s32 %v1143, 24
        %v1516 = vadd.s32 %v1154, 24
        %v1517 = vadd.s32 %v1165, 24
        %v1518 = vadd.s32 %v1176, 24
        %v1519 = vadd.s32 %v1187, 24
        %v1520 = vadd.s32 %v1198, 24
        %v1521 = vadd.s32 %v1209, 24
        %v1522 = vadd.s32 %v1220, 24
        %v1523 = vadd.s32 %v1231, 24
        %v1524 = vadd.s32 %v1242, 24
        %v1525 = vadd.s32 %v1253, 24
        %v1526 = vadd.s32 %v1264, 24
        %v1527 = vadd.s32 %v1275, 24
        %v1528 = vadd.s32 %v1286, 24
        %v1529 = vadd.s32 %v1297, 24
        %v1530 = vadd.s32 %v1308, 24
        %v1531 = vadd.s32 %v1319, 24
        %v1532 = vadd.s32 %v1330, 24
        %v1533 = vadd.s32 %v1341, 24
        %v1534 = vsel %vm1438, %v1486, %v824
        %v1535 = vsel %vm1439, %v1487, %v835
        %v1536 = vsel %vm1440, %v1488, %v846
        %v1537 = vsel %vm1441, %v1489, %v857
        %v1538 = vsel %vm1442, %v1490, %v868
        %v1539 = vsel %vm1443, %v1491, %v879
        %v1540 = vsel %vm1444, %v1492, %v890
        %v1541 = vsel %vm1445, %v1493, %v901
        %v1542 = vsel %vm1446, %v1494, %v912
        %v1543 = vsel %vm1447, %v1495, %v923
        %v1544 = vsel %vm1448, %v1496, %v934
        %v1545 = vsel %vm1449, %v1497, %v945
        %v1546 = vsel %vm1450, %v1498, %v956
        %v1547 = vsel %vm1451, %v1499, %v967
        %v1548 = vsel %vm1452, %v1500, %v978
        %v1549 = vsel %vm1453, %v1501, %v989
        %v1550 = vsel %vm1454, %v1502, %v1000
        %v1551 = vsel %vm1455, %v1503, %v1011
        %v1552 = vsel %vm1456, %v1504, %v1022
        %v1553 = vsel %vm1457, %v1505, %v1033
        %v1554 = vsel %vm1458, %v1506, %v1044
        %v1555 = vsel %vm1459, %v1507, %v1055
        %v1556 = vsel %vm1460, %v1508, %v1066
        %v1557 = vsel %vm1461, %v1509, %v1077
        %v1558 = vsel %vm1462, %v1510, %v1088
        %v1559 = vsel %vm1463, %v1511, %v1099
        %v1560 = vsel %vm1464, %v1512, %v1110
        %v1561 = vsel %vm1465, %v1513, %v1121
        %v1562 = vsel %vm1466, %v1514, %v1132
        %v1563 = vsel %vm1467, %v1515, %v1143
        %v1564 = vsel %vm1468, %v1516, %v1154
        %v1565 = vsel %vm1469, %v1517, %v1165
        %v1566 = vsel %vm1470, %v1518, %v1176
        %v1567 = vsel %vm1471, %v1519, %v1187
        %v1568 = vsel %vm1472, %v1520, %v1198
        %v1569 = vsel %vm1473, %v1521, %v1209
        %v1570 = vsel %vm1474, %v1522, %v1220
        %v1571 = vsel %vm1475, %v1523, %v1231
        %v1572 = vsel %vm1476, %v1524, %v1242
        %v1573 = vsel %vm1477, %v1525, %v1253
        %v1574 = vsel %vm1478, %v1526, %v1264
        %v1575 = vsel %vm1479, %v1527, %v1275
        %v1576 = vsel %vm1480, %v1528, %v1286
        %v1577 = vsel %vm1481, %v1529, %v1297
        %v1578 = vsel %vm1482, %v1530, %v1308
        %v1579 = vsel %vm1483, %v1531, %v1319
        %v1580 = vsel %vm1484, %v1532, %v1330
        %v1581 = vsel %vm1485, %v1533, %v1341
        %vm1582 = vcmp.lt.s32.totalorder %v1534, 16
        %vm1583 = vcmp.lt.s32.totalorder %v1535, 16
        %vm1584 = vcmp.lt.s32.totalorder %v1536, 16
        %vm1585 = vcmp.lt.s32.totalorder %v1537, 16
        %vm1586 = vcmp.lt.s32.totalorder %v1538, 16
        %vm1587 = vcmp.lt.s32.totalorder %v1539, 16
        %vm1588 = vcmp.lt.s32.totalorder %v1540, 16
        %vm1589 = vcmp.lt.s32.totalorder %v1541, 16
        %vm1590 = vcmp.lt.s32.totalorder %v1542, 16
        %vm1591 = vcmp.lt.s32.totalorder %v1543, 16
        %vm1592 = vcmp.lt.s32.totalorder %v1544, 16
        %vm1593 = vcmp.lt.s32.totalorder %v1545, 16
        %vm1594 = vcmp.lt.s32.totalorder %v1546, 16
        %vm1595 = vcmp.lt.s32.totalorder %v1547, 16
        %vm1596 = vcmp.lt.s32.totalorder %v1548, 16
        %vm1597 = vcmp.lt.s32.totalorder %v1549, 16
        %vm1598 = vcmp.lt.s32.totalorder %v1550, 16
        %vm1599 = vcmp.lt.s32.totalorder %v1551, 16
        %vm1600 = vcmp.lt.s32.totalorder %v1552, 16
        %vm1601 = vcmp.lt.s32.totalorder %v1553, 16
        %vm1602 = vcmp.lt.s32.totalorder %v1554, 16
        %vm1603 = vcmp.lt.s32.totalorder %v1555, 16
        %vm1604 = vcmp.lt.s32.totalorder %v1556, 16
        %vm1605 = vcmp.lt.s32.totalorder %v1557, 16
        %vm1606 = vcmp.lt.s32.totalorder %v1558, 16
        %vm1607 = vcmp.lt.s32.totalorder %v1559, 16
        %vm1608 = vcmp.lt.s32.totalorder %v1560, 16
        %vm1609 = vcmp.lt.s32.totalorder %v1561, 16
        %vm1610 = vcmp.lt.s32.totalorder %v1562, 16
        %vm1611 = vcmp.lt.s32.totalorder %v1563, 16
        %vm1612 = vcmp.lt.s32.totalorder %v1564, 16
        %vm1613 = vcmp.lt.s32.totalorder %v1565, 16
        %vm1614 = vcmp.lt.s32.totalorder %v1566, 16
        %vm1615 = vcmp.lt.s32.totalorder %v1567, 16
        %vm1616 = vcmp.lt.s32.totalorder %v1568, 16
        %vm1617 = vcmp.lt.s32.totalorder %v1569, 16
        %vm1618 = vcmp.lt.s32.totalorder %v1570, 16
        %vm1619 = vcmp.lt.s32.totalorder %v1571, 16
        %vm1620 = vcmp.lt.s32.totalorder %v1572, 16
        %vm1621 = vcmp.lt.s32.totalorder %v1573, 16
        %vm1622 = vcmp.lt.s32.totalorder %v1574, 16
        %vm1623 = vcmp.lt.s32.totalorder %v1575, 16
        %vm1624 = vcmp.lt.s32.totalorder %v1576, 16
        %vm1625 = vcmp.lt.s32.totalorder %v1577, 16
        %vm1626 = vcmp.lt.s32.totalorder %v1578, 16
        %vm1627 = vcmp.lt.s32.totalorder %v1579, 16
        %vm1628 = vcmp.lt.s32.totalorder %v1580, 16
        %vm1629 = vcmp.lt.s32.totalorder %v1581, 16
        %v1630 = vsel %vm1582, 1, 0
        %v1631 = vsel %vm1583, 1, 0
        %v1632 = vsel %vm1584, 1, 0
        %v1633 = vsel %vm1585, 1, 0
        %v1634 = vsel %vm1586, 1, 0
        %v1635 = vsel %vm1587, 1, 0
        %v1636 = vsel %vm1588, 1, 0
        %v1637 = vsel %vm1589, 1, 0
        %v1638 = vsel %vm1590, 1, 0
        %v1639 = vsel %vm1591, 1, 0
        %v1640 = vsel %vm1592, 1, 0
        %v1641 = vsel %vm1593, 1, 0
        %v1642 = vsel %vm1594, 1, 0
        %v1643 = vsel %vm1595, 1, 0
        %v1644 = vsel %vm1596, 1, 0
        %v1645 = vsel %vm1597, 1, 0
        %v1646 = vsel %vm1598, 1, 0
        %v1647 = vsel %vm1599, 1, 0
        %v1648 = vsel %vm1600, 1, 0
        %v1649 = vsel %vm1601, 1, 0
        %v1650 = vsel %vm1602, 1, 0
        %v1651 = vsel %vm1603, 1, 0
        %v1652 = vsel %vm1604, 1, 0
        %v1653 = vsel %vm1605, 1, 0
        %v1654 = vsel %vm1606, 1, 0
        %v1655 = vsel %vm1607, 1, 0
        %v1656 = vsel %vm1608, 1, 0
        %v1657 = vsel %vm1609, 1, 0
        %v1658 = vsel %vm1610, 1, 0
        %v1659 = vsel %vm1611, 1, 0
        %v1660 = vsel %vm1612, 1, 0
        %v1661 = vsel %vm1613, 1, 0
        %v1662 = vsel %vm1614, 1, 0
        %v1663 = vsel %vm1615, 1, 0
        %v1664 = vsel %vm1616, 1, 0
        %v1665 = vsel %vm1617, 1, 0
        %v1666 = vsel %vm1618, 1, 0
        %v1667 = vsel %vm1619, 1, 0
        %v1668 = vsel %vm1620, 1, 0
        %v1669 = vsel %vm1621, 1, 0
        %v1670 = vsel %vm1622, 1, 0
        %v1671 = vsel %vm1623, 1, 0
        %v1672 = vsel %vm1624, 1, 0
        %v1673 = vsel %vm1625, 1, 0
        %v1674 = vsel %vm1626, 1, 0
        %v1675 = vsel %vm1627, 1, 0
        %v1676 = vsel %vm1628, 1, 0
        %v1677 = vsel %vm1629, 1, 0
        %v1678 = vcvt.s32.f32 %v1630
        %v1679 = vcvt.s32.f32 %v1631
        %v1680 = vcvt.s32.f32 %v1632
        %v1681 = vcvt.s32.f32 %v1633
        %v1682 = vcvt.s32.f32 %v1634
        %v1683 = vcvt.s32.f32 %v1635
        %v1684 = vcvt.s32.f32 %v1636
        %v1685 = vcvt.s32.f32 %v1637
        %v1686 = vcvt.s32.f32 %v1638
        %v1687 = vcvt.s32.f32 %v1639
        %v1688 = vcvt.s32.f32 %v1640
        %v1689 = vcvt.s32.f32 %v1641
        %v1690 = vcvt.s32.f32 %v1642
        %v1691 = vcvt.s32.f32 %v1643
        %v1692 = vcvt.s32.f32 %v1644
        %v1693 = vcvt.s32.f32 %v1645
        %v1694 = vcvt.s32.f32 %v1646
        %v1695 = vcvt.s32.f32 %v1647
        %v1696 = vcvt.s32.f32 %v1648
        %v1697 = vcvt.s32.f32 %v1649
        %v1698 = vcvt.s32.f32 %v1650
        %v1699 = vcvt.s32.f32 %v1651
        %v1700 = vcvt.s32.f32 %v1652
        %v1701 = vcvt.s32.f32 %v1653
        %v1702 = vcvt.s32.f32 %v1654
        %v1703 = vcvt.s32.f32 %v1655
        %v1704 = vcvt.s32.f32 %v1656
        %v1705 = vcvt.s32.f32 %v1657
        %v1706 = vcvt.s32.f32 %v1658
        %v1707 = vcvt.s32.f32 %v1659
        %v1708 = vcvt.s32.f32 %v1660
        %v1709 = vcvt.s32.f32 %v1661
        %v1710 = vcvt.s32.f32 %v1662
        %v1711 = vcvt.s32.f32 %v1663
        %v1712 = vcvt.s32.f32 %v1664
        %v1713 = vcvt.s32.f32 %v1665
        %v1714 = vcvt.s32.f32 %v1666
        %v1715 = vcvt.s32.f32 %v1667
        %v1716 = vcvt.s32.f32 %v1668
        %v1717 = vcvt.s32.f32 %v1669
        %v1718 = vcvt.s32.f32 %v1670
        %v1719 = vcvt.s32.f32 %v1671
        %v1720 = vcvt.s32.f32 %v1672
        %v1721 = vcvt.s32.f32 %v1673
        %v1722 = vcvt.s32.f32 %v1674
        %v1723 = vcvt.s32.f32 %v1675
        %v1724 = vcvt.s32.f32 %v1676
        %v1725 = vcvt.s32.f32 %v1677
        %v1726 = vld [vmem:[%s707] sm:$0xff]
        %v1727 = vld [vmem:[%s707 + $0x8] sm:$0xff]
        %v1728 = vld [vmem:[%s707 + $0x10] sm:$0xff]
        %v1729 = vld [vmem:[%s707 + $0x18] sm:$0xff]
        %v1730 = vld [vmem:[%s707 + $0x20] sm:$0xff]
        %v1731 = vld [vmem:[%s707 + $0x28] sm:$0xff]
        %v1732 = vld [vmem:[%s707 + $0x30] sm:$0xff]
        %v1733 = vld [vmem:[%s707 + $0x38] sm:$0xff]
        %v1734 = vld [vmem:[%s707 + $0x40] sm:$0xff]
        %v1735 = vld [vmem:[%s707 + $0x48] sm:$0xff]
        %v1736 = vld [vmem:[%s707 + $0x50] sm:$0xff]
        %v1737 = vld [vmem:[%s707 + $0x58] sm:$0xff]
        %v1738 = vld [vmem:[%s707 + $0x60] sm:$0xff]
        %v1739 = vld [vmem:[%s707 + $0x68] sm:$0xff]
        %v1740 = vld [vmem:[%s707 + $0x70] sm:$0xff]
        %v1741 = vld [vmem:[%s707 + $0x78] sm:$0xff]
        %v1742 = vld [vmem:[%s707 + $0x80] sm:$0xff]
        %v1743 = vld [vmem:[%s707 + $0x88] sm:$0xff]
        %v1744 = vld [vmem:[%s707 + $0x90] sm:$0xff]
        %v1745 = vld [vmem:[%s707 + $0x98] sm:$0xff]
        %v1746 = vld [vmem:[%s707 + $0xa0] sm:$0xff]
        %v1747 = vld [vmem:[%s707 + $0xa8] sm:$0xff]
        %v1748 = vld [vmem:[%s707 + $0xb0] sm:$0xff]
        %v1749 = vld [vmem:[%s707 + $0xb8] sm:$0xff]
        %v1750 = vld [vmem:[%s707 + $0xc0] sm:$0xff]
        %v1751 = vld [vmem:[%s707 + $0xc8] sm:$0xff]
        %v1752 = vld [vmem:[%s707 + $0xd0] sm:$0xff]
        %v1753 = vld [vmem:[%s707 + $0xd8] sm:$0xff]
        %v1754 = vld [vmem:[%s707 + $0xe0] sm:$0xff]
        %v1755 = vld [vmem:[%s707 + $0xe8] sm:$0xff]
        %v1756 = vld [vmem:[%s707 + $0xf0] sm:$0xff]
        %v1757 = vld [vmem:[%s707 + $0xf8] sm:$0xff]
        %v1758 = vld [vmem:[%s707 + $0x100] sm:$0xff]
        %v1759 = vld [vmem:[%s707 + $0x108] sm:$0xff]
        %v1760 = vld [vmem:[%s707 + $0x110] sm:$0xff]
        %v1761 = vld [vmem:[%s707 + $0x118] sm:$0xff]
        %v1762 = vld [vmem:[%s707 + $0x120] sm:$0xff]
        %v1763 = vld [vmem:[%s707 + $0x128] sm:$0xff]
        %v1764 = vld [vmem:[%s707 + $0x130] sm:$0xff]
        %v1765 = vld [vmem:[%s707 + $0x138] sm:$0xff]
        %v1766 = vld [vmem:[%s707 + $0x140] sm:$0xff]
        %v1767 = vld [vmem:[%s707 + $0x148] sm:$0xff]
        %v1768 = vld [vmem:[%s707 + $0x150] sm:$0xff]
        %v1769 = vld [vmem:[%s707 + $0x158] sm:$0xff]
        %v1770 = vld [vmem:[%s707 + $0x160] sm:$0xff]
        %v1771 = vld [vmem:[%s707 + $0x168] sm:$0xff]
        %v1772 = vld [vmem:[%s707 + $0x170] sm:$0xff]
        %v1773 = vld [vmem:[%s707 + $0x178] sm:$0xff]
        %v1774 = vld [vmem:[%s1] sm:$0xf]
        %v1775 = vld [vmem:[%s2] sm:$0x1]
        %v1777 = vlaneseq
        %v1778 = vshrl.u32 %v1777, 7
        %v1779 = vsub.s32 0, %v1778
        %v1780 = vrot.slane %v1775, %v1779
        %v1783 = vsel %vm708, %v1726, 0
        %v1786 = vsel %vm708, %v1727, 0
        %v1789 = vsel %vm708, %v1728, 0
        %v1792 = vsel %vm708, %v1729, 0
        %v1795 = vsel %vm708, %v1730, 0
        %v1798 = vsel %vm708, %v1731, 0
        %v1801 = vsel %vm708, %v1732, 0
        %v1804 = vsel %vm708, %v1733, 0
        %v1807 = vsel %vm708, %v1734, 0
        %v1810 = vsel %vm708, %v1735, 0
        %v1813 = vsel %vm708, %v1736, 0
        %v1816 = vsel %vm708, %v1737, 0
        %v1819 = vsel %vm708, %v1738, 0
        %v1822 = vsel %vm708, %v1739, 0
        %v1825 = vsel %vm708, %v1740, 0
        %v1828 = vsel %vm708, %v1741, 0
        %v1831 = vsel %vm708, %v1742, 0
        %v1834 = vsel %vm708, %v1743, 0
        %v1837 = vsel %vm708, %v1744, 0
        %v1840 = vsel %vm708, %v1745, 0
        %v1843 = vsel %vm708, %v1746, 0
        %v1846 = vsel %vm708, %v1747, 0
        %v1849 = vsel %vm708, %v1748, 0
        %v1852 = vsel %vm708, %v1749, 0
        %v1855 = vsel %vm708, %v1750, 0
        %v1858 = vsel %vm708, %v1751, 0
        %v1861 = vsel %vm708, %v1752, 0
        %v1864 = vsel %vm708, %v1753, 0
        %v1867 = vsel %vm708, %v1754, 0
        %v1870 = vsel %vm708, %v1755, 0
        %v1873 = vsel %vm708, %v1756, 0
        %v1876 = vsel %vm708, %v1757, 0
        %v1879 = vsel %vm708, %v1758, 0
        %v1882 = vsel %vm708, %v1759, 0
        %v1885 = vsel %vm708, %v1760, 0
        %v1888 = vsel %vm708, %v1761, 0
        %v1891 = vsel %vm708, %v1762, 0
        %v1894 = vsel %vm708, %v1763, 0
        %v1897 = vsel %vm708, %v1764, 0
        %v1900 = vsel %vm708, %v1765, 0
        %v1903 = vsel %vm708, %v1766, 0
        %v1906 = vsel %vm708, %v1767, 0
        %v1909 = vsel %vm708, %v1768, 0
        %v1912 = vsel %vm708, %v1769, 0
        %v1915 = vsel %vm708, %v1770, 0
        %v1918 = vsel %vm708, %v1771, 0
        %v1921 = vsel %vm708, %v1772, 0
        %v1924 = vsel %vm708, %v1773, 0
        %vm1926 = vcmask 1043456
        %v1928 = vsel %vm1926, %v1774, 0
        %1930 = vmatprep.subr.mxu0 0.0
        %1931 = vmatpush1.msra.mxu0 %v1928
        %1932 = vmatprep.subr.mxu0 0.0
        %1933 = vmatpush1.msra.mxu0 0.0
        %1934 = vmatprep.subr.mxu0 0.0
        %1935 = vmatpush1.msra.mxu0 0.0
        %1936 = vmatprep.subr.mxu0 0.0
        %1937 = vmatpush1.msra.mxu0 0.0
        %1938 = vmatprep.subr.mxu0 0.0
        %1939 = vmatpush1.msra.mxu0 0.0
        %1940 = vmatprep.subr.mxu0 0.0
        %1941 = vmatpush1.msra.mxu0 0.0
        %1942 = vmatprep.subr.mxu0 0.0
        %1943 = vmatpush1.msra.mxu0 0.0
        %1944 = vmatprep.subr.mxu0 0.0
        %1945 = vmatpush1.msra.mxu0 0.0
        %1946 = vmatprep.subr.mxu0 0.0
        %1947 = vmatpush1.msra.mxu0 0.0
        %1948 = vmatprep.subr.mxu0 0.0
        %1949 = vmatpush1.msra.mxu0 0.0
        %1950 = vmatprep.subr.mxu0 0.0
        %1951 = vmatpush1.msra.mxu0 0.0
        %1952 = vmatprep.subr.mxu0 0.0
        %1953 = vmatpush1.msra.mxu0 0.0
        %1954 = vmatprep.subr.mxu0 0.0
        %1955 = vmatpush1.msra.mxu0 0.0
        %1956 = vmatprep.subr.mxu0 0.0
        %1957 = vmatpush1.msra.mxu0 0.0
        %1958 = vmatprep.subr.mxu0 0.0
        %1959 = vmatpush1.msra.mxu0 0.0
        %1960 = vmatprep.subr.mxu0 0.0
        %1961 = vmatpush1.msra.mxu0 0.0
        %1962 = vmatprep.subr.mxu0 0.0
        %1963 = vmatpush1.msra.mxu0 0.0
        %1964 = vmatprep.subr.mxu0 0.0
        %1965 = vmatpush1.msra.mxu0 0.0
        %1966 = vmatprep.subr.mxu0 0.0
        %1967 = vmatpush1.msra.mxu0 0.0
        %1968 = vmatprep.subr.mxu0 0.0
        %1969 = vmatpush1.msra.mxu0 0.0
        %1970 = vmatprep.subr.mxu0 0.0
        %1971 = vmatpush1.msra.mxu0 0.0
        %1972 = vmatprep.subr.mxu0 0.0
        %1973 = vmatpush1.msra.mxu0 0.0
        %1974 = vmatprep.subr.mxu0 0.0
        %1975 = vmatpush1.msra.mxu0 0.0
        %1976 = vmatprep.subr.mxu0 0.0
        %1977 = vmatpush1.msra.mxu0 0.0
        %1978 = vmatprep.subr.mxu0 0.0
        %1979 = vmatpush1.msra.mxu0 0.0
        %1980 = vmatprep.subr.mxu0 0.0
        %1981 = vmatpush1.msra.mxu0 0.0
        %1982 = vmatprep.subr.mxu0 0.0
        %1983 = vmatpush1.msra.mxu0 0.0
        %1984 = vmatprep.subr.mxu0 0.0
        %1985 = vmatpush1.msra.mxu0 0.0
        %1986 = vmatprep.subr.mxu0 0.0
        %1987 = vmatpush1.msra.mxu0 0.0
        %1988 = vmatprep.subr.mxu0 0.0
        %1989 = vmatpush1.msra.mxu0 0.0
        %1990 = vmatprep.subr.mxu0 0.0
        %1991 = vmatpush1.msra.mxu0 0.0
        %1992 = vmatprep.subr.mxu0 0.0
        %1993 = vmatpush1.msra.mxu0 0.0
        %1994 = vmatprep.mubr.f32.mxu0 0.0
        %1995 = vmatmul.mubr.f32.gmra.mrb[0].mxu0 %v1783
        %v1996 = vpop.f32.mrb[0].mxu0
        %v1997 = vadd.f32 %v1780, %v1996
        %v1998 = vpop.f32.mrb[0].mxu0
        %1999 = vmatprep.mubr.f32.mxu0 0.0
        %2000 = vmatmul.mubr.f32.gmra.mrb[0].mxu0 %v1786
        %v2001 = vpop.f32.mrb[0].mxu0
        %v2002 = vadd.f32 %v1780, %v2001
        %v2003 = vpop.f32.mrb[0].mxu0
        %2004 = vmatprep.mubr.f32.mxu0 0.0
        %2005 = vmatmul.mubr.f32.gmra.mrb[0].mxu0 %v1789
        %v2006 = vpop.f32.mrb[0].mxu0
        %v2007 = vadd.f32 %v1780, %v2006
        %v2008 = vpop.f32.mrb[0].mxu0
        %2009 = vmatprep.mubr.f32.mxu0 0.0
        %2010 = vmatmul.mubr.f32.gmra.mrb[0].mxu0 %v1792
        %v2011 = vpop.f32.mrb[0].mxu0
        %v2012 = vadd.f32 %v1780, %v2011
        %v2013 = vpop.f32.mrb[0].mxu0
        %2014 = vmatprep.mubr.f32.mxu0 0.0
        %2015 = vmatmul.mubr.f32.gmra.mrb[0].mxu0 %v1795
        %v2016 = vpop.f32.mrb[0].mxu0
        %v2017 = vadd.f32 %v1780, %v2016
        %v2018 = vpop.f32.mrb[0].mxu0
        %2019 = vmatprep.mubr.f32.mxu0 0.0
        %2020 = vmatmul.mubr.f32.gmra.mrb[0].mxu0 %v1798
        %v2021 = vpop.f32.mrb[0].mxu0
        %v2022 = vadd.f32 %v1780, %v2021
        %v2023 = vpop.f32.mrb[0].mxu0
        %2024 = vmatprep.mubr.f32.mxu0 0.0
        %2025 = vmatmul.mubr.f32.gmra.mrb[0].mxu0 %v1801
        %v2026 = vpop.f32.mrb[0].mxu0
        %v2027 = vadd.f32 %v1780, %v2026
        %v2028 = vpop.f32.mrb[0].mxu0
        %2029 = vmatprep.mubr.f32.mxu0 0.0
        %2030 = vmatmul.mubr.f32.gmra.mrb[0].mxu0 %v1804
        %v2031 = vpop.f32.mrb[0].mxu0
        %v2032 = vadd.f32 %v1780, %v2031
        %v2033 = vpop.f32.mrb[0].mxu0
        %2034 = vmatprep.mubr.f32.mxu0 0.0
        %2035 = vmatmul.mubr.f32.gmra.mrb[0].mxu0 %v1807
        %v2036 = vpop.f32.mrb[0].mxu0
        %v2037 = vadd.f32 %v1780, %v2036
        %v2038 = vpop.f32.mrb[0].mxu0
        %2039 = vmatprep.mubr.f32.mxu0 0.0
        %2040 = vmatmul.mubr.f32.gmra.mrb[0].mxu0 %v1810
        %v2041 = vpop.f32.mrb[0].mxu0
        %v2042 = vadd.f32 %v1780, %v2041
        %v2043 = vpop.f32.mrb[0].mxu0
        %2044 = vmatprep.mubr.f32.mxu0 0.0
        %2045 = vmatmul.mubr.f32.gmra.mrb[0].mxu0 %v1813
        %v2046 = vpop.f32.mrb[0].mxu0
        %v2047 = vadd.f32 %v1780, %v2046
        %v2048 = vpop.f32.mrb[0].mxu0
        %2049 = vmatprep.mubr.f32.mxu0 0.0
        %2050 = vmatmul.mubr.f32.gmra.mrb[0].mxu0 %v1816
        %v2051 = vpop.f32.mrb[0].mxu0
        %v2052 = vadd.f32 %v1780, %v2051
        %v2053 = vpop.f32.mrb[0].mxu0
        %2054 = vmatprep.mubr.f32.mxu0 0.0
        %2055 = vmatmul.mubr.f32.gmra.mrb[0].mxu0 %v1819
        %v2056 = vpop.f32.mrb[0].mxu0
        %v2057 = vadd.f32 %v1780, %v2056
        %v2058 = vpop.f32.mrb[0].mxu0
        %2059 = vmatprep.mubr.f32.mxu0 0.0
        %2060 = vmatmul.mubr.f32.gmra.mrb[0].mxu0 %v1822
        %v2061 = vpop.f32.mrb[0].mxu0
        %v2062 = vadd.f32 %v1780, %v2061
        %v2063 = vpop.f32.mrb[0].mxu0
        %2064 = vmatprep.mubr.f32.mxu0 0.0
        %2065 = vmatmul.mubr.f32.gmra.mrb[0].mxu0 %v1825
        %v2066 = vpop.f32.mrb[0].mxu0
        %v2067 = vadd.f32 %v1780, %v2066
        %v2068 = vpop.f32.mrb[0].mxu0
        %2069 = vmatprep.mubr.f32.mxu0 0.0
        %2070 = vmatmul.mubr.f32.gmra.mrb[0].mxu0 %v1828
        %v2071 = vpop.f32.mrb[0].mxu0
        %v2072 = vadd.f32 %v1780, %v2071
        %v2073 = vpop.f32.mrb[0].mxu0
        %2074 = vmatprep.mubr.f32.mxu0 0.0
        %2075 = vmatmul.mubr.f32.gmra.mrb[0].mxu0 %v1831
        %v2076 = vpop.f32.mrb[0].mxu0
        %v2077 = vadd.f32 %v1780, %v2076
        %v2078 = vpop.f32.mrb[0].mxu0
        %2079 = vmatprep.mubr.f32.mxu0 0.0
        %2080 = vmatmul.mubr.f32.gmra.mrb[0].mxu0 %v1834
        %v2081 = vpop.f32.mrb[0].mxu0
        %v2082 = vadd.f32 %v1780, %v2081
        %v2083 = vpop.f32.mrb[0].mxu0
        %2084 = vmatprep.mubr.f32.mxu0 0.0
        %2085 = vmatmul.mubr.f32.gmra.mrb[0].mxu0 %v1837
        %v2086 = vpop.f32.mrb[0].mxu0
        %v2087 = vadd.f32 %v1780, %v2086
        %v2088 = vpop.f32.mrb[0].mxu0
        %2089 = vmatprep.mubr.f32.mxu0 0.0
        %2090 = vmatmul.mubr.f32.gmra.mrb[0].mxu0 %v1840
        %v2091 = vpop.f32.mrb[0].mxu0
        %v2092 = vadd.f32 %v1780, %v2091
        %v2093 = vpop.f32.mrb[0].mxu0
        %2094 = vmatprep.mubr.f32.mxu0 0.0
        %2095 = vmatmul.mubr.f32.gmra.mrb[0].mxu0 %v1843
        %v2096 = vpop.f32.mrb[0].mxu0
        %v2097 = vadd.f32 %v1780, %v2096
        %v2098 = vpop.f32.mrb[0].mxu0
        %2099 = vmatprep.mubr.f32.mxu0 0.0
        %2100 = vmatmul.mubr.f32.gmra.mrb[0].mxu0 %v1846
        %v2101 = vpop.f32.mrb[0].mxu0
        %v2102 = vadd.f32 %v1780, %v2101
        %v2103 = vpop.f32.mrb[0].mxu0
        %2104 = vmatprep.mubr.f32.mxu0 0.0
        %2105 = vmatmul.mubr.f32.gmra.mrb[0].mxu0 %v1849
        %v2106 = vpop.f32.mrb[0].mxu0
        %v2107 = vadd.f32 %v1780, %v2106
        %v2108 = vpop.f32.mrb[0].mxu0
        %2109 = vmatprep.mubr.f32.mxu0 0.0
        %2110 = vmatmul.mubr.f32.gmra.mrb[0].mxu0 %v1852
        %v2111 = vpop.f32.mrb[0].mxu0
        %v2112 = vadd.f32 %v1780, %v2111
        %v2113 = vpop.f32.mrb[0].mxu0
        %2114 = vmatprep.mubr.f32.mxu0 0.0
        %2115 = vmatmul.mubr.f32.gmra.mrb[0].mxu0 %v1855
        %v2116 = vpop.f32.mrb[0].mxu0
        %v2117 = vadd.f32 %v1780, %v2116
        %v2118 = vpop.f32.mrb[0].mxu0
        %2119 = vmatprep.mubr.f32.mxu0 0.0
        %2120 = vmatmul.mubr.f32.gmra.mrb[0].mxu0 %v1858
        %v2121 = vpop.f32.mrb[0].mxu0
        %v2122 = vadd.f32 %v1780, %v2121
        %v2123 = vpop.f32.mrb[0].mxu0
        %2124 = vmatprep.mubr.f32.mxu0 0.0
        %2125 = vmatmul.mubr.f32.gmra.mrb[0].mxu0 %v1861
        %v2126 = vpop.f32.mrb[0].mxu0
        %v2127 = vadd.f32 %v1780, %v2126
        %v2128 = vpop.f32.mrb[0].mxu0
        %2129 = vmatprep.mubr.f32.mxu0 0.0
        %2130 = vmatmul.mubr.f32.gmra.mrb[0].mxu0 %v1864
        %v2131 = vpop.f32.mrb[0].mxu0
        %v2132 = vadd.f32 %v1780, %v2131
        %v2133 = vpop.f32.mrb[0].mxu0
        %2134 = vmatprep.mubr.f32.mxu0 0.0
        %2135 = vmatmul.mubr.f32.gmra.mrb[0].mxu0 %v1867
        %v2136 = vpop.f32.mrb[0].mxu0
        %v2137 = vadd.f32 %v1780, %v2136
        %v2138 = vpop.f32.mrb[0].mxu0
        %2139 = vmatprep.mubr.f32.mxu0 0.0
        %2140 = vmatmul.mubr.f32.gmra.mrb[0].mxu0 %v1870
        %v2141 = vpop.f32.mrb[0].mxu0
        %v2142 = vadd.f32 %v1780, %v2141
        %v2143 = vpop.f32.mrb[0].mxu0
        %2144 = vmatprep.mubr.f32.mxu0 0.0
        %2145 = vmatmul.mubr.f32.gmra.mrb[0].mxu0 %v1873
        %v2146 = vpop.f32.mrb[0].mxu0
        %v2147 = vadd.f32 %v1780, %v2146
        %v2148 = vpop.f32.mrb[0].mxu0
        %2149 = vmatprep.mubr.f32.mxu0 0.0
        %2150 = vmatmul.mubr.f32.gmra.mrb[0].mxu0 %v1876
        %v2151 = vpop.f32.mrb[0].mxu0
        %v2152 = vadd.f32 %v1780, %v2151
        %v2153 = vpop.f32.mrb[0].mxu0
        %2154 = vmatprep.mubr.f32.mxu0 0.0
        %2155 = vmatmul.mubr.f32.gmra.mrb[0].mxu0 %v1879
        %v2156 = vpop.f32.mrb[0].mxu0
        %v2157 = vadd.f32 %v1780, %v2156
        %v2158 = vpop.f32.mrb[0].mxu0
        %2159 = vmatprep.mubr.f32.mxu0 0.0
        %2160 = vmatmul.mubr.f32.gmra.mrb[0].mxu0 %v1882
        %v2161 = vpop.f32.mrb[0].mxu0
        %v2162 = vadd.f32 %v1780, %v2161
        %v2163 = vpop.f32.mrb[0].mxu0
        %2164 = vmatprep.mubr.f32.mxu0 0.0
        %2165 = vmatmul.mubr.f32.gmra.mrb[0].mxu0 %v1885
        %v2166 = vpop.f32.mrb[0].mxu0
        %v2167 = vadd.f32 %v1780, %v2166
        %v2168 = vpop.f32.mrb[0].mxu0
        %2169 = vmatprep.mubr.f32.mxu0 0.0
        %2170 = vmatmul.mubr.f32.gmra.mrb[0].mxu0 %v1888
        %v2171 = vpop.f32.mrb[0].mxu0
        %v2172 = vadd.f32 %v1780, %v2171
        %v2173 = vpop.f32.mrb[0].mxu0
        %2174 = vmatprep.mubr.f32.mxu0 0.0
        %2175 = vmatmul.mubr.f32.gmra.mrb[0].mxu0 %v1891
        %v2176 = vpop.f32.mrb[0].mxu0
        %v2177 = vadd.f32 %v1780, %v2176
        %v2178 = vpop.f32.mrb[0].mxu0
        %2179 = vmatprep.mubr.f32.mxu0 0.0
        %2180 = vmatmul.mubr.f32.gmra.mrb[0].mxu0 %v1894
        %v2181 = vpop.f32.mrb[0].mxu0
        %v2182 = vadd.f32 %v1780, %v2181
        %v2183 = vpop.f32.mrb[0].mxu0
        %2184 = vmatprep.mubr.f32.mxu0 0.0
        %2185 = vmatmul.mubr.f32.gmra.mrb[0].mxu0 %v1897
        %v2186 = vpop.f32.mrb[0].mxu0
        %v2187 = vadd.f32 %v1780, %v2186
        %v2188 = vpop.f32.mrb[0].mxu0
        %2189 = vmatprep.mubr.f32.mxu0 0.0
        %2190 = vmatmul.mubr.f32.gmra.mrb[0].mxu0 %v1900
        %v2191 = vpop.f32.mrb[0].mxu0
        %v2192 = vadd.f32 %v1780, %v2191
        %v2193 = vpop.f32.mrb[0].mxu0
        %2194 = vmatprep.mubr.f32.mxu0 0.0
        %2195 = vmatmul.mubr.f32.gmra.mrb[0].mxu0 %v1903
        %v2196 = vpop.f32.mrb[0].mxu0
        %v2197 = vadd.f32 %v1780, %v2196
        %v2198 = vpop.f32.mrb[0].mxu0
        %2199 = vmatprep.mubr.f32.mxu0 0.0
        %2200 = vmatmul.mubr.f32.gmra.mrb[0].mxu0 %v1906
        %v2201 = vpop.f32.mrb[0].mxu0
        %v2202 = vadd.f32 %v1780, %v2201
        %v2203 = vpop.f32.mrb[0].mxu0
        %2204 = vmatprep.mubr.f32.mxu0 0.0
        %2205 = vmatmul.mubr.f32.gmra.mrb[0].mxu0 %v1909
        %v2206 = vpop.f32.mrb[0].mxu0
        %v2207 = vadd.f32 %v1780, %v2206
        %v2208 = vpop.f32.mrb[0].mxu0
        %2209 = vmatprep.mubr.f32.mxu0 0.0
        %2210 = vmatmul.mubr.f32.gmra.mrb[0].mxu0 %v1912
        %v2211 = vpop.f32.mrb[0].mxu0
        %v2212 = vadd.f32 %v1780, %v2211
        %v2213 = vpop.f32.mrb[0].mxu0
        %2214 = vmatprep.mubr.f32.mxu0 0.0
        %2215 = vmatmul.mubr.f32.gmra.mrb[0].mxu0 %v1915
        %v2216 = vpop.f32.mrb[0].mxu0
        %v2217 = vadd.f32 %v1780, %v2216
        %v2218 = vpop.f32.mrb[0].mxu0
        %2219 = vmatprep.mubr.f32.mxu0 0.0
        %2220 = vmatmul.mubr.f32.gmra.mrb[0].mxu0 %v1918
        %v2221 = vpop.f32.mrb[0].mxu0
        %v2222 = vadd.f32 %v1780, %v2221
        %v2223 = vpop.f32.mrb[0].mxu0
        %2224 = vmatprep.mubr.f32.mxu0 0.0
        %2225 = vmatmul.mubr.f32.gmra.mrb[0].mxu0 %v1921
        %v2226 = vpop.f32.mrb[0].mxu0
        %v2227 = vadd.f32 %v1780, %v2226
        %v2228 = vpop.f32.mrb[0].mxu0
        %2229 = vmatprep.mubr.f32.mxu0 0.0
        %2230 = vmatmul.mubr.f32.gmra.mrb[0].mxu0 %v1924
        %v2231 = vpop.f32.mrb[0].mxu0
        %v2232 = vadd.f32 %v1780, %v2231
        %v2233 = vpop.f32.mrb[0].mxu0
        %2234 = vdwg.mxu0
        %v2235 = vld [vmem:[%s3] sm:$0xf]
        %v2236 = vld [vmem:[%s4] sm:$0x1]
        %v2238 = vlaneseq
        %v2239 = vshrl.u32 %v2238, 7
        %v2240 = vsub.s32 0, %v2239
        %v2241 = vrot.slane %v2236, %v2240
        %v2244 = vsel %vm708, %v1997, 0
        %v2247 = vsel %vm708, %v2002, 0
        %v2250 = vsel %vm708, %v2007, 0
        %v2253 = vsel %vm708, %v2012, 0
        %v2256 = vsel %vm708, %v2017, 0
        %v2259 = vsel %vm708, %v2022, 0
        %v2262 = vsel %vm708, %v2027, 0
        %v2265 = vsel %vm708, %v2032, 0
        %v2268 = vsel %vm708, %v2037, 0
        %v2271 = vsel %vm708, %v2042, 0
        %v2274 = vsel %vm708, %v2047, 0
        %v2277 = vsel %vm708, %v2052, 0
        %v2280 = vsel %vm708, %v2057, 0
        %v2283 = vsel %vm708, %v2062, 0
        %v2286 = vsel %vm708, %v2067, 0
        %v2289 = vsel %vm708, %v2072, 0
        %v2292 = vsel %vm708, %v2077, 0
        %v2295 = vsel %vm708, %v2082, 0
        %v2298 = vsel %vm708, %v2087, 0
        %v2301 = vsel %vm708, %v2092, 0
        %v2304 = vsel %vm708, %v2097, 0
        %v2307 = vsel %vm708, %v2102, 0
        %v2310 = vsel %vm708, %v2107, 0
        %v2313 = vsel %vm708, %v2112, 0
        %v2316 = vsel %vm708, %v2117, 0
        %v2319 = vsel %vm708, %v2122, 0
        %v2322 = vsel %vm708, %v2127, 0
        %v2325 = vsel %vm708, %v2132, 0
        %v2328 = vsel %vm708, %v2137, 0
        %v2331 = vsel %vm708, %v2142, 0
        %v2334 = vsel %vm708, %v2147, 0
        %v2337 = vsel %vm708, %v2152, 0
        %v2340 = vsel %vm708, %v2157, 0
        %v2343 = vsel %vm708, %v2162, 0
        %v2346 = vsel %vm708, %v2167, 0
        %v2349 = vsel %vm708, %v2172, 0
        %v2352 = vsel %vm708, %v2177, 0
        %v2355 = vsel %vm708, %v2182, 0
        %v2358 = vsel %vm708, %v2187, 0
        %v2361 = vsel %vm708, %v2192, 0
        %v2364 = vsel %vm708, %v2197, 0
        %v2367 = vsel %vm708, %v2202, 0
        %v2370 = vsel %vm708, %v2207, 0
        %v2373 = vsel %vm708, %v2212, 0
        %v2376 = vsel %vm708, %v2217, 0
        %v2379 = vsel %vm708, %v2222, 0
        %v2382 = vsel %vm708, %v2227, 0
        %v2385 = vsel %vm708, %v2232, 0
        %v2388 = vsel %vm1926, %v2235, 0
        %2390 = vmatprep.subr.mxu0 0.0
        %2391 = vmatpush1.msra.mxu0 %v2388
        %2392 = vmatprep.subr.mxu0 0.0
        %2393 = vmatpush1.msra.mxu0 0.0
        %2394 = vmatprep.subr.mxu0 0.0
        %2395 = vmatpush1.msra.mxu0 0.0
        %2396 = vmatprep.subr.mxu0 0.0
        %2397 = vmatpush1.msra.mxu0 0.0
        %2398 = vmatprep.subr.mxu0 0.0
        %2399 = vmatpush1.msra.mxu0 0.0
        %2400 = vmatprep.subr.mxu0 0.0
        %2401 = vmatpush1.msra.mxu0 0.0
        %2402 = vmatprep.subr.mxu0 0.0
        %2403 = vmatpush1.msra.mxu0 0.0
        %2404 = vmatprep.subr.mxu0 0.0
        %2405 = vmatpush1.msra.mxu0 0.0
        %2406 = vmatprep.subr.mxu0 0.0
        %2407 = vmatpush1.msra.mxu0 0.0
        %2408 = vmatprep.subr.mxu0 0.0
        %2409 = vmatpush1.msra.mxu0 0.0
        %2410 = vmatprep.subr.mxu0 0.0
        %2411 = vmatpush1.msra.mxu0 0.0
        %2412 = vmatprep.subr.mxu0 0.0
        %2413 = vmatpush1.msra.mxu0 0.0
        %2414 = vmatprep.subr.mxu0 0.0
        %2415 = vmatpush1.msra.mxu0 0.0
        %2416 = vmatprep.subr.mxu0 0.0
        %2417 = vmatpush1.msra.mxu0 0.0
        %2418 = vmatprep.subr.mxu0 0.0
        %2419 = vmatpush1.msra.mxu0 0.0
        %2420 = vmatprep.subr.mxu0 0.0
        %2421 = vmatpush1.msra.mxu0 0.0
        %2422 = vmatprep.subr.mxu0 0.0
        %2423 = vmatpush1.msra.mxu0 0.0
        %2424 = vmatprep.subr.mxu0 0.0
        %2425 = vmatpush1.msra.mxu0 0.0
        %2426 = vmatprep.subr.mxu0 0.0
        %2427 = vmatpush1.msra.mxu0 0.0
        %2428 = vmatprep.subr.mxu0 0.0
        %2429 = vmatpush1.msra.mxu0 0.0
        %2430 = vmatprep.subr.mxu0 0.0
        %2431 = vmatpush1.msra.mxu0 0.0
        %2432 = vmatprep.subr.mxu0 0.0
        %2433 = vmatpush1.msra.mxu0 0.0
        %2434 = vmatprep.subr.mxu0 0.0
        %2435 = vmatpush1.msra.mxu0 0.0
        %2436 = vmatprep.subr.mxu0 0.0
        %2437 = vmatpush1.msra.mxu0 0.0
        %2438 = vmatprep.subr.mxu0 0.0
        %2439 = vmatpush1.msra.mxu0 0.0
        %2440 = vmatprep.subr.mxu0 0.0
        %2441 = vmatpush1.msra.mxu0 0.0
        %2442 = vmatprep.subr.mxu0 0.0
        %2443 = vmatpush1.msra.mxu0 0.0
        %2444 = vmatprep.subr.mxu0 0.0
        %2445 = vmatpush1.msra.mxu0 0.0
        %2446 = vmatprep.subr.mxu0 0.0
        %2447 = vmatpush1.msra.mxu0 0.0
        %2448 = vmatprep.subr.mxu0 0.0
        %2449 = vmatpush1.msra.mxu0 0.0
        %2450 = vmatprep.subr.mxu0 0.0
        %2451 = vmatpush1.msra.mxu0 0.0
        %2452 = vmatprep.subr.mxu0 0.0
        %2453 = vmatpush1.msra.mxu0 0.0
        %2454 = vmatprep.mubr.f32.mxu0 0.0
        %2455 = vmatmul.mubr.f32.gmra.mrb[0].mxu0 %v2244
        %v2456 = vpop.f32.mrb[0].mxu0
        %v2457 = vadd.f32 %v2241, %v2456
        %v2458 = vpop.f32.mrb[0].mxu0
        %2459 = vmatprep.mubr.f32.mxu0 0.0
        %2460 = vmatmul.mubr.f32.gmra.mrb[0].mxu0 %v2247
        %v2461 = vpop.f32.mrb[0].mxu0
        %v2462 = vadd.f32 %v2241, %v2461
        %v2463 = vpop.f32.mrb[0].mxu0
        %2464 = vmatprep.mubr.f32.mxu0 0.0
        %2465 = vmatmul.mubr.f32.gmra.mrb[0].mxu0 %v2250
        %v2466 = vpop.f32.mrb[0].mxu0
        %v2467 = vadd.f32 %v2241, %v2466
        %v2468 = vpop.f32.mrb[0].mxu0
        %2469 = vmatprep.mubr.f32.mxu0 0.0
        %2470 = vmatmul.mubr.f32.gmra.mrb[0].mxu0 %v2253
        %v2471 = vpop.f32.mrb[0].mxu0
        %v2472 = vadd.f32 %v2241, %v2471
        %v2473 = vpop.f32.mrb[0].mxu0
        %2474 = vmatprep.mubr.f32.mxu0 0.0
        %2475 = vmatmul.mubr.f32.gmra.mrb[0].mxu0 %v2256
        %v2476 = vpop.f32.mrb[0].mxu0
        %v2477 = vadd.f32 %v2241, %v2476
        %v2478 = vpop.f32.mrb[0].mxu0
        %2479 = vmatprep.mubr.f32.mxu0 0.0
        %2480 = vmatmul.mubr.f32.gmra.mrb[0].mxu0 %v2259
        %v2481 = vpop.f32.mrb[0].mxu0
        %v2482 = vadd.f32 %v2241, %v2481
        %v2483 = vpop.f32.mrb[0].mxu0
        %2484 = vmatprep.mubr.f32.mxu0 0.0
        %2485 = vmatmul.mubr.f32.gmra.mrb[0].mxu0 %v2262
        %v2486 = vpop.f32.mrb[0].mxu0
        %v2487 = vadd.f32 %v2241, %v2486
        %v2488 = vpop.f32.mrb[0].mxu0
        %2489 = vmatprep.mubr.f32.mxu0 0.0
        %2490 = vmatmul.mubr.f32.gmra.mrb[0].mxu0 %v2265
        %v2491 = vpop.f32.mrb[0].mxu0
        %v2492 = vadd.f32 %v2241, %v2491
        %v2493 = vpop.f32.mrb[0].mxu0
        %2494 = vmatprep.mubr.f32.mxu0 0.0
        %2495 = vmatmul.mubr.f32.gmra.mrb[0].mxu0 %v2268
        %v2496 = vpop.f32.mrb[0].mxu0
        %v2497 = vadd.f32 %v2241, %v2496
        %v2498 = vpop.f32.mrb[0].mxu0
        %2499 = vmatprep.mubr.f32.mxu0 0.0
        %2500 = vmatmul.mubr.f32.gmra.mrb[0].mxu0 %v2271
        %v2501 = vpop.f32.mrb[0].mxu0
        %v2502 = vadd.f32 %v2241, %v2501
        %v2503 = vpop.f32.mrb[0].mxu0
        %2504 = vmatprep.mubr.f32.mxu0 0.0
        %2505 = vmatmul.mubr.f32.gmra.mrb[0].mxu0 %v2274
        %v2506 = vpop.f32.mrb[0].mxu0
        %v2507 = vadd.f32 %v2241, %v2506
        %v2508 = vpop.f32.mrb[0].mxu0
        %2509 = vmatprep.mubr.f32.mxu0 0.0
        %2510 = vmatmul.mubr.f32.gmra.mrb[0].mxu0 %v2277
        %v2511 = vpop.f32.mrb[0].mxu0
        %v2512 = vadd.f32 %v2241, %v2511
        %v2513 = vpop.f32.mrb[0].mxu0
        %2514 = vmatprep.mubr.f32.mxu0 0.0
        %2515 = vmatmul.mubr.f32.gmra.mrb[0].mxu0 %v2280
        %v2516 = vpop.f32.mrb[0].mxu0
        %v2517 = vadd.f32 %v2241, %v2516
        %v2518 = vpop.f32.mrb[0].mxu0
        %2519 = vmatprep.mubr.f32.mxu0 0.0
        %2520 = vmatmul.mubr.f32.gmra.mrb[0].mxu0 %v2283
        %v2521 = vpop.f32.mrb[0].mxu0
        %v2522 = vadd.f32 %v2241, %v2521
        %v2523 = vpop.f32.mrb[0].mxu0
        %2524 = vmatprep.mubr.f32.mxu0 0.0
        %2525 = vmatmul.mubr.f32.gmra.mrb[0].mxu0 %v2286
        %v2526 = vpop.f32.mrb[0].mxu0
        %v2527 = vadd.f32 %v2241, %v2526
        %v2528 = vpop.f32.mrb[0].mxu0
        %2529 = vmatprep.mubr.f32.mxu0 0.0
        %2530 = vmatmul.mubr.f32.gmra.mrb[0].mxu0 %v2289
        %v2531 = vpop.f32.mrb[0].mxu0
        %v2532 = vadd.f32 %v2241, %v2531
        %v2533 = vpop.f32.mrb[0].mxu0
        %2534 = vmatprep.mubr.f32.mxu0 0.0
        %2535 = vmatmul.mubr.f32.gmra.mrb[0].mxu0 %v2292
        %v2536 = vpop.f32.mrb[0].mxu0
        %v2537 = vadd.f32 %v2241, %v2536
        %v2538 = vpop.f32.mrb[0].mxu0
        %2539 = vmatprep.mubr.f32.mxu0 0.0
        %2540 = vmatmul.mubr.f32.gmra.mrb[0].mxu0 %v2295
        %v2541 = vpop.f32.mrb[0].mxu0
        %v2542 = vadd.f32 %v2241, %v2541
        %v2543 = vpop.f32.mrb[0].mxu0
        %2544 = vmatprep.mubr.f32.mxu0 0.0
        %2545 = vmatmul.mubr.f32.gmra.mrb[0].mxu0 %v2298
        %v2546 = vpop.f32.mrb[0].mxu0
        %v2547 = vadd.f32 %v2241, %v2546
        %v2548 = vpop.f32.mrb[0].mxu0
        %2549 = vmatprep.mubr.f32.mxu0 0.0
        %2550 = vmatmul.mubr.f32.gmra.mrb[0].mxu0 %v2301
        %v2551 = vpop.f32.mrb[0].mxu0
        %v2552 = vadd.f32 %v2241, %v2551
        %v2553 = vpop.f32.mrb[0].mxu0
        %2554 = vmatprep.mubr.f32.mxu0 0.0
        %2555 = vmatmul.mubr.f32.gmra.mrb[0].mxu0 %v2304
        %v2556 = vpop.f32.mrb[0].mxu0
        %v2557 = vadd.f32 %v2241, %v2556
        %v2558 = vpop.f32.mrb[0].mxu0
        %2559 = vmatprep.mubr.f32.mxu0 0.0
        %2560 = vmatmul.mubr.f32.gmra.mrb[0].mxu0 %v2307
        %v2561 = vpop.f32.mrb[0].mxu0
        %v2562 = vadd.f32 %v2241, %v2561
        %v2563 = vpop.f32.mrb[0].mxu0
        %2564 = vmatprep.mubr.f32.mxu0 0.0
        %2565 = vmatmul.mubr.f32.gmra.mrb[0].mxu0 %v2310
        %v2566 = vpop.f32.mrb[0].mxu0
        %v2567 = vadd.f32 %v2241, %v2566
        %v2568 = vpop.f32.mrb[0].mxu0
        %2569 = vmatprep.mubr.f32.mxu0 0.0
        %2570 = vmatmul.mubr.f32.gmra.mrb[0].mxu0 %v2313
        %v2571 = vpop.f32.mrb[0].mxu0
        %v2572 = vadd.f32 %v2241, %v2571
        %v2573 = vpop.f32.mrb[0].mxu0
        %2574 = vmatprep.mubr.f32.mxu0 0.0
        %2575 = vmatmul.mubr.f32.gmra.mrb[0].mxu0 %v2316
        %v2576 = vpop.f32.mrb[0].mxu0
        %v2577 = vadd.f32 %v2241, %v2576
        %v2578 = vpop.f32.mrb[0].mxu0
        %2579 = vmatprep.mubr.f32.mxu0 0.0
        %2580 = vmatmul.mubr.f32.gmra.mrb[0].mxu0 %v2319
        %v2581 = vpop.f32.mrb[0].mxu0
        %v2582 = vadd.f32 %v2241, %v2581
        %v2583 = vpop.f32.mrb[0].mxu0
        %2584 = vmatprep.mubr.f32.mxu0 0.0
        %2585 = vmatmul.mubr.f32.gmra.mrb[0].mxu0 %v2322
        %v2586 = vpop.f32.mrb[0].mxu0
        %v2587 = vadd.f32 %v2241, %v2586
        %v2588 = vpop.f32.mrb[0].mxu0
        %2589 = vmatprep.mubr.f32.mxu0 0.0
        %2590 = vmatmul.mubr.f32.gmra.mrb[0].mxu0 %v2325
        %v2591 = vpop.f32.mrb[0].mxu0
        %v2592 = vadd.f32 %v2241, %v2591
        %v2593 = vpop.f32.mrb[0].mxu0
        %2594 = vmatprep.mubr.f32.mxu0 0.0
        %2595 = vmatmul.mubr.f32.gmra.mrb[0].mxu0 %v2328
        %v2596 = vpop.f32.mrb[0].mxu0
        %v2597 = vadd.f32 %v2241, %v2596
        %v2598 = vpop.f32.mrb[0].mxu0
        %2599 = vmatprep.mubr.f32.mxu0 0.0
        %2600 = vmatmul.mubr.f32.gmra.mrb[0].mxu0 %v2331
        %v2601 = vpop.f32.mrb[0].mxu0
        %v2602 = vadd.f32 %v2241, %v2601
        %v2603 = vpop.f32.mrb[0].mxu0
        %2604 = vmatprep.mubr.f32.mxu0 0.0
        %2605 = vmatmul.mubr.f32.gmra.mrb[0].mxu0 %v2334
        %v2606 = vpop.f32.mrb[0].mxu0
        %v2607 = vadd.f32 %v2241, %v2606
        %v2608 = vpop.f32.mrb[0].mxu0
        %2609 = vmatprep.mubr.f32.mxu0 0.0
        %2610 = vmatmul.mubr.f32.gmra.mrb[0].mxu0 %v2337
        %v2611 = vpop.f32.mrb[0].mxu0
        %v2612 = vadd.f32 %v2241, %v2611
        %v2613 = vpop.f32.mrb[0].mxu0
        %2614 = vmatprep.mubr.f32.mxu0 0.0
        %2615 = vmatmul.mubr.f32.gmra.mrb[0].mxu0 %v2340
        %v2616 = vpop.f32.mrb[0].mxu0
        %v2617 = vadd.f32 %v2241, %v2616
        %v2618 = vpop.f32.mrb[0].mxu0
        %2619 = vmatprep.mubr.f32.mxu0 0.0
        %2620 = vmatmul.mubr.f32.gmra.mrb[0].mxu0 %v2343
        %v2621 = vpop.f32.mrb[0].mxu0
        %v2622 = vadd.f32 %v2241, %v2621
        %v2623 = vpop.f32.mrb[0].mxu0
        %2624 = vmatprep.mubr.f32.mxu0 0.0
        %2625 = vmatmul.mubr.f32.gmra.mrb[0].mxu0 %v2346
        %v2626 = vpop.f32.mrb[0].mxu0
        %v2627 = vadd.f32 %v2241, %v2626
        %v2628 = vpop.f32.mrb[0].mxu0
        %2629 = vmatprep.mubr.f32.mxu0 0.0
        %2630 = vmatmul.mubr.f32.gmra.mrb[0].mxu0 %v2349
        %v2631 = vpop.f32.mrb[0].mxu0
        %v2632 = vadd.f32 %v2241, %v2631
        %v2633 = vpop.f32.mrb[0].mxu0
        %2634 = vmatprep.mubr.f32.mxu0 0.0
        %2635 = vmatmul.mubr.f32.gmra.mrb[0].mxu0 %v2352
        %v2636 = vpop.f32.mrb[0].mxu0
        %v2637 = vadd.f32 %v2241, %v2636
        %v2638 = vpop.f32.mrb[0].mxu0
        %2639 = vmatprep.mubr.f32.mxu0 0.0
        %2640 = vmatmul.mubr.f32.gmra.mrb[0].mxu0 %v2355
        %v2641 = vpop.f32.mrb[0].mxu0
        %v2642 = vadd.f32 %v2241, %v2641
        %v2643 = vpop.f32.mrb[0].mxu0
        %2644 = vmatprep.mubr.f32.mxu0 0.0
        %2645 = vmatmul.mubr.f32.gmra.mrb[0].mxu0 %v2358
        %v2646 = vpop.f32.mrb[0].mxu0
        %v2647 = vadd.f32 %v2241, %v2646
        %v2648 = vpop.f32.mrb[0].mxu0
        %2649 = vmatprep.mubr.f32.mxu0 0.0
        %2650 = vmatmul.mubr.f32.gmra.mrb[0].mxu0 %v2361
        %v2651 = vpop.f32.mrb[0].mxu0
        %v2652 = vadd.f32 %v2241, %v2651
        %v2653 = vpop.f32.mrb[0].mxu0
        %2654 = vmatprep.mubr.f32.mxu0 0.0
        %2655 = vmatmul.mubr.f32.gmra.mrb[0].mxu0 %v2364
        %v2656 = vpop.f32.mrb[0].mxu0
        %v2657 = vadd.f32 %v2241, %v2656
        %v2658 = vpop.f32.mrb[0].mxu0
        %2659 = vmatprep.mubr.f32.mxu0 0.0
        %2660 = vmatmul.mubr.f32.gmra.mrb[0].mxu0 %v2367
        %v2661 = vpop.f32.mrb[0].mxu0
        %v2662 = vadd.f32 %v2241, %v2661
        %v2663 = vpop.f32.mrb[0].mxu0
        %2664 = vmatprep.mubr.f32.mxu0 0.0
        %2665 = vmatmul.mubr.f32.gmra.mrb[0].mxu0 %v2370
        %v2666 = vpop.f32.mrb[0].mxu0
        %v2667 = vadd.f32 %v2241, %v2666
        %v2668 = vpop.f32.mrb[0].mxu0
        %2669 = vmatprep.mubr.f32.mxu0 0.0
        %2670 = vmatmul.mubr.f32.gmra.mrb[0].mxu0 %v2373
        %v2671 = vpop.f32.mrb[0].mxu0
        %v2672 = vadd.f32 %v2241, %v2671
        %v2673 = vpop.f32.mrb[0].mxu0
        %2674 = vmatprep.mubr.f32.mxu0 0.0
        %2675 = vmatmul.mubr.f32.gmra.mrb[0].mxu0 %v2376
        %v2676 = vpop.f32.mrb[0].mxu0
        %v2677 = vadd.f32 %v2241, %v2676
        %v2678 = vpop.f32.mrb[0].mxu0
        %2679 = vmatprep.mubr.f32.mxu0 0.0
        %2680 = vmatmul.mubr.f32.gmra.mrb[0].mxu0 %v2379
        %v2681 = vpop.f32.mrb[0].mxu0
        %v2682 = vadd.f32 %v2241, %v2681
        %v2683 = vpop.f32.mrb[0].mxu0
        %2684 = vmatprep.mubr.f32.mxu0 0.0
        %2685 = vmatmul.mubr.f32.gmra.mrb[0].mxu0 %v2382
        %v2686 = vpop.f32.mrb[0].mxu0
        %v2687 = vadd.f32 %v2241, %v2686
        %v2688 = vpop.f32.mrb[0].mxu0
        %2689 = vmatprep.mubr.f32.mxu0 0.0
        %2690 = vmatmul.mubr.f32.gmra.mrb[0].mxu0 %v2385
        %v2691 = vpop.f32.mrb[0].mxu0
        %v2692 = vadd.f32 %v2241, %v2691
        %v2693 = vpop.f32.mrb[0].mxu0
        %2694 = vdwg.mxu0
        %v2695 = vmax.f32 %v2457, 0.0
        %v2696 = vmax.f32 %v2462, 0.0
        %v2697 = vmax.f32 %v2467, 0.0
        %v2698 = vmax.f32 %v2472, 0.0
        %v2699 = vmax.f32 %v2477, 0.0
        %v2700 = vmax.f32 %v2482, 0.0
        %v2701 = vmax.f32 %v2487, 0.0
        %v2702 = vmax.f32 %v2492, 0.0
        %v2703 = vmax.f32 %v2497, 0.0
        %v2704 = vmax.f32 %v2502, 0.0
        %v2705 = vmax.f32 %v2507, 0.0
        %v2706 = vmax.f32 %v2512, 0.0
        %v2707 = vmax.f32 %v2517, 0.0
        %v2708 = vmax.f32 %v2522, 0.0
        %v2709 = vmax.f32 %v2527, 0.0
        %v2710 = vmax.f32 %v2532, 0.0
        %v2711 = vmax.f32 %v2537, 0.0
        %v2712 = vmax.f32 %v2542, 0.0
        %v2713 = vmax.f32 %v2547, 0.0
        %v2714 = vmax.f32 %v2552, 0.0
        %v2715 = vmax.f32 %v2557, 0.0
        %v2716 = vmax.f32 %v2562, 0.0
        %v2717 = vmax.f32 %v2567, 0.0
        %v2718 = vmax.f32 %v2572, 0.0
        %v2719 = vmax.f32 %v2577, 0.0
        %v2720 = vmax.f32 %v2582, 0.0
        %v2721 = vmax.f32 %v2587, 0.0
        %v2722 = vmax.f32 %v2592, 0.0
        %v2723 = vmax.f32 %v2597, 0.0
        %v2724 = vmax.f32 %v2602, 0.0
        %v2725 = vmax.f32 %v2607, 0.0
        %v2726 = vmax.f32 %v2612, 0.0
        %v2727 = vmax.f32 %v2617, 0.0
        %v2728 = vmax.f32 %v2622, 0.0
        %v2729 = vmax.f32 %v2627, 0.0
        %v2730 = vmax.f32 %v2632, 0.0
        %v2731 = vmax.f32 %v2637, 0.0
        %v2732 = vmax.f32 %v2642, 0.0
        %v2733 = vmax.f32 %v2647, 0.0
        %v2734 = vmax.f32 %v2652, 0.0
        %v2735 = vmax.f32 %v2657, 0.0
        %v2736 = vmax.f32 %v2662, 0.0
        %v2737 = vmax.f32 %v2667, 0.0
        %v2738 = vmax.f32 %v2672, 0.0
        %v2739 = vmax.f32 %v2677, 0.0
        %v2740 = vmax.f32 %v2682, 0.0
        %v2741 = vmax.f32 %v2687, 0.0
        %v2742 = vmax.f32 %v2692, 0.0
        %v2743 = vld [vmem:[%s5] sm:$0x1]
        %v2745 = vlaneseq
        %v2746 = vshrl.u32 %v2745, 7
        %v2747 = vsub.s32 0, %v2746
        %v2748 = vrot.slane %v2743, %v2747
        %v2750 = vmul.f32 %v2695, %v2748
        %v2751 = vmul.f32 %v2696, %v2748
        %v2752 = vmul.f32 %v2697, %v2748
        %v2753 = vmul.f32 %v2698, %v2748
        %v2754 = vmul.f32 %v2699, %v2748
        %v2755 = vmul.f32 %v2700, %v2748
        %v2756 = vmul.f32 %v2701, %v2748
        %v2757 = vmul.f32 %v2702, %v2748
        %v2758 = vmul.f32 %v2703, %v2748
        %v2759 = vmul.f32 %v2704, %v2748
        %v2760 = vmul.f32 %v2705, %v2748
        %v2761 = vmul.f32 %v2706, %v2748
        %v2762 = vmul.f32 %v2707, %v2748
        %v2763 = vmul.f32 %v2708, %v2748
        %v2764 = vmul.f32 %v2709, %v2748
        %v2765 = vmul.f32 %v2710, %v2748
        %v2766 = vmul.f32 %v2711, %v2748
        %v2767 = vmul.f32 %v2712, %v2748
        %v2768 = vmul.f32 %v2713, %v2748
        %v2769 = vmul.f32 %v2714, %v2748
        %v2770 = vmul.f32 %v2715, %v2748
        %v2771 = vmul.f32 %v2716, %v2748
        %v2772 = vmul.f32 %v2717, %v2748
        %v2773 = vmul.f32 %v2718, %v2748
        %v2774 = vmul.f32 %v2719, %v2748
        %v2775 = vmul.f32 %v2720, %v2748
        %v2776 = vmul.f32 %v2721, %v2748
        %v2777 = vmul.f32 %v2722, %v2748
        %v2778 = vmul.f32 %v2723, %v2748
        %v2779 = vmul.f32 %v2724, %v2748
        %v2780 = vmul.f32 %v2725, %v2748
        %v2781 = vmul.f32 %v2726, %v2748
        %v2782 = vmul.f32 %v2727, %v2748
        %v2783 = vmul.f32 %v2728, %v2748
        %v2784 = vmul.f32 %v2729, %v2748
        %v2785 = vmul.f32 %v2730, %v2748
        %v2786 = vmul.f32 %v2731, %v2748
        %v2787 = vmul.f32 %v2732, %v2748
        %v2788 = vmul.f32 %v2733, %v2748
        %v2789 = vmul.f32 %v2734, %v2748
        %v2790 = vmul.f32 %v2735, %v2748
        %v2791 = vmul.f32 %v2736, %v2748
        %v2792 = vmul.f32 %v2737, %v2748
        %v2793 = vmul.f32 %v2738, %v2748
        %v2794 = vmul.f32 %v2739, %v2748
        %v2795 = vmul.f32 %v2740, %v2748
        %v2796 = vmul.f32 %v2741, %v2748
        %v2797 = vmul.f32 %v2742, %v2748
        %v2798 = vld [vmem:[%s6] sm:$0x1]
        %v2800 = vlaneseq
        %v2801 = vshrl.u32 %v2800, 7
        %v2802 = vsub.s32 0, %v2801
        %v2803 = vrot.slane %v2798, %v2802
        %v2805 = vadd.f32 %v2750, %v2803
        %v2806 = vadd.f32 %v2751, %v2803
        %v2807 = vadd.f32 %v2752, %v2803
        %v2808 = vadd.f32 %v2753, %v2803
        %v2809 = vadd.f32 %v2754, %v2803
        %v2810 = vadd.f32 %v2755, %v2803
        %v2811 = vadd.f32 %v2756, %v2803
        %v2812 = vadd.f32 %v2757, %v2803
        %v2813 = vadd.f32 %v2758, %v2803
        %v2814 = vadd.f32 %v2759, %v2803
        %v2815 = vadd.f32 %v2760, %v2803
        %v2816 = vadd.f32 %v2761, %v2803
        %v2817 = vadd.f32 %v2762, %v2803
        %v2818 = vadd.f32 %v2763, %v2803
        %v2819 = vadd.f32 %v2764, %v2803
        %v2820 = vadd.f32 %v2765, %v2803
        %v2821 = vadd.f32 %v2766, %v2803
        %v2822 = vadd.f32 %v2767, %v2803
        %v2823 = vadd.f32 %v2768, %v2803
        %v2824 = vadd.f32 %v2769, %v2803
        %v2825 = vadd.f32 %v2770, %v2803
        %v2826 = vadd.f32 %v2771, %v2803
        %v2827 = vadd.f32 %v2772, %v2803
        %v2828 = vadd.f32 %v2773, %v2803
        %v2829 = vadd.f32 %v2774, %v2803
        %v2830 = vadd.f32 %v2775, %v2803
        %v2831 = vadd.f32 %v2776, %v2803
        %v2832 = vadd.f32 %v2777, %v2803
        %v2833 = vadd.f32 %v2778, %v2803
        %v2834 = vadd.f32 %v2779, %v2803
        %v2835 = vadd.f32 %v2780, %v2803
        %v2836 = vadd.f32 %v2781, %v2803
        %v2837 = vadd.f32 %v2782, %v2803
        %v2838 = vadd.f32 %v2783, %v2803
        %v2839 = vadd.f32 %v2784, %v2803
        %v2840 = vadd.f32 %v2785, %v2803
        %v2841 = vadd.f32 %v2786, %v2803
        %v2842 = vadd.f32 %v2787, %v2803
        %v2843 = vadd.f32 %v2788, %v2803
        %v2844 = vadd.f32 %v2789, %v2803
        %v2845 = vadd.f32 %v2790, %v2803
        %v2846 = vadd.f32 %v2791, %v2803
        %v2847 = vadd.f32 %v2792, %v2803
        %v2848 = vadd.f32 %v2793, %v2803
        %v2849 = vadd.f32 %v2794, %v2803
        %v2850 = vadd.f32 %v2795, %v2803
        %v2851 = vadd.f32 %v2796, %v2803
        %v2852 = vadd.f32 %v2797, %v2803
        %v2853 = vmul.f32 %v2805, %v1678
        %v2854 = vmul.f32 %v2806, %v1679
        %v2855 = vmul.f32 %v2807, %v1680
        %v2856 = vmul.f32 %v2808, %v1681
        %v2857 = vmul.f32 %v2809, %v1682
        %v2858 = vmul.f32 %v2810, %v1683
        %v2859 = vmul.f32 %v2811, %v1684
        %v2860 = vmul.f32 %v2812, %v1685
        %v2861 = vmul.f32 %v2813, %v1686
        %v2862 = vmul.f32 %v2814, %v1687
        %v2863 = vmul.f32 %v2815, %v1688
        %v2864 = vmul.f32 %v2816, %v1689
        %v2865 = vmul.f32 %v2817, %v1690
        %v2866 = vmul.f32 %v2818, %v1691
        %v2867 = vmul.f32 %v2819, %v1692
        %v2868 = vmul.f32 %v2820, %v1693
        %v2869 = vmul.f32 %v2821, %v1694
        %v2870 = vmul.f32 %v2822, %v1695
        %v2871 = vmul.f32 %v2823, %v1696
        %v2872 = vmul.f32 %v2824, %v1697
        %v2873 = vmul.f32 %v2825, %v1698
        %v2874 = vmul.f32 %v2826, %v1699
        %v2875 = vmul.f32 %v2827, %v1700
        %v2876 = vmul.f32 %v2828, %v1701
        %v2877 = vmul.f32 %v2829, %v1702
        %v2878 = vmul.f32 %v2830, %v1703
        %v2879 = vmul.f32 %v2831, %v1704
        %v2880 = vmul.f32 %v2832, %v1705
        %v2881 = vmul.f32 %v2833, %v1706
        %v2882 = vmul.f32 %v2834, %v1707
        %v2883 = vmul.f32 %v2835, %v1708
        %v2884 = vmul.f32 %v2836, %v1709
        %v2885 = vmul.f32 %v2837, %v1710
        %v2886 = vmul.f32 %v2838, %v1711
        %v2887 = vmul.f32 %v2839, %v1712
        %v2888 = vmul.f32 %v2840, %v1713
        %v2889 = vmul.f32 %v2841, %v1714
        %v2890 = vmul.f32 %v2842, %v1715
        %v2891 = vmul.f32 %v2843, %v1716
        %v2892 = vmul.f32 %v2844, %v1717
        %v2893 = vmul.f32 %v2845, %v1718
        %v2894 = vmul.f32 %v2846, %v1719
        %v2895 = vmul.f32 %v2847, %v1720
        %v2896 = vmul.f32 %v2848, %v1721
        %v2897 = vmul.f32 %v2849, %v1722
        %v2898 = vmul.f32 %v2850, %v1723
        %v2899 = vmul.f32 %v2851, %v1724
        %v2900 = vmul.f32 %v2852, %v1725
        %2901 = vst.msk [vmem:[#allocation2 + $0x20] sm:$0xff] %vm708, %v2853
        %2902 = vst.msk [vmem:[#allocation2 + $0x28] sm:$0xff] %vm708, %v2854
        %2903 = vst.msk [vmem:[#allocation2 + $0x30] sm:$0xff] %vm708, %v2855
        %2904 = vst.msk [vmem:[#allocation2 + $0x38] sm:$0xff] %vm708, %v2856
        %2905 = vst.msk [vmem:[#allocation2 + $0x40] sm:$0xff] %vm708, %v2857
        %2906 = vst.msk [vmem:[#allocation2 + $0x48] sm:$0xff] %vm708, %v2858
        %2907 = vst.msk [vmem:[#allocation2 + $0x50] sm:$0xff] %vm708, %v2859
        %2908 = vst.msk [vmem:[#allocation2 + $0x58] sm:$0xff] %vm708, %v2860
        %2909 = vst.msk [vmem:[#allocation2 + $0x60] sm:$0xff] %vm708, %v2861
        %2910 = vst.msk [vmem:[#allocation2 + $0x68] sm:$0xff] %vm708, %v2862
        %2911 = vst.msk [vmem:[#allocation2 + $0x70] sm:$0xff] %vm708, %v2863
        %2912 = vst.msk [vmem:[#allocation2 + $0x78] sm:$0xff] %vm708, %v2864
        %2913 = vst.msk [vmem:[#allocation2 + $0x80] sm:$0xff] %vm708, %v2865
        %2914 = vst.msk [vmem:[#allocation2 + $0x88] sm:$0xff] %vm708, %v2866
        %2915 = vst.msk [vmem:[#allocation2 + $0x90] sm:$0xff] %vm708, %v2867
        %2916 = vst.msk [vmem:[#allocation2 + $0x98] sm:$0xff] %vm708, %v2868
        %2917 = vst.msk [vmem:[#allocation2 + $0xa0] sm:$0xff] %vm708, %v2869
        %2918 = vst.msk [vmem:[#allocation2 + $0xa8] sm:$0xff] %vm708, %v2870
        %2919 = vst.msk [vmem:[#allocation2 + $0xb0] sm:$0xff] %vm708, %v2871
        %2920 = vst.msk [vmem:[#allocation2 + $0xb8] sm:$0xff] %vm708, %v2872
        %2921 = vst.msk [vmem:[#allocation2 + $0xc0] sm:$0xff] %vm708, %v2873
        %2922 = vst.msk [vmem:[#allocation2 + $0xc8] sm:$0xff] %vm708, %v2874
        %2923 = vst.msk [vmem:[#allocation2 + $0xd0] sm:$0xff] %vm708, %v2875
        %2924 = vst.msk [vmem:[#allocation2 + $0xd8] sm:$0xff] %vm708, %v2876
        %2925 = vst.msk [vmem:[#allocation2 + $0xe0] sm:$0xff] %vm708, %v2877
        %2926 = vst.msk [vmem:[#allocation2 + $0xe8] sm:$0xff] %vm708, %v2878
        %2927 = vst.msk [vmem:[#allocation2 + $0xf0] sm:$0xff] %vm708, %v2879
        %2928 = vst.msk [vmem:[#allocation2 + $0xf8] sm:$0xff] %vm708, %v2880
        %2929 = vst.msk [vmem:[#allocation2 + $0x100] sm:$0xff] %vm708, %v2881
        %2930 = vst.msk [vmem:[#allocation2 + $0x108] sm:$0xff] %vm708, %v2882
        %2931 = vst.msk [vmem:[#allocation2 + $0x110] sm:$0xff] %vm708, %v2883
        %2932 = vst.msk [vmem:[#allocation2 + $0x118] sm:$0xff] %vm708, %v2884
        %2933 = vst.msk [vmem:[#allocation2 + $0x120] sm:$0xff] %vm708, %v2885
        %2934 = vst.msk [vmem:[#allocation2 + $0x128] sm:$0xff] %vm708, %v2886
        %2935 = vst.msk [vmem:[#allocation2 + $0x130] sm:$0xff] %vm708, %v2887
        %2936 = vst.msk [vmem:[#allocation2 + $0x138] sm:$0xff] %vm708, %v2888
        %2937 = vst.msk [vmem:[#allocation2 + $0x140] sm:$0xff] %vm708, %v2889
        %2938 = vst.msk [vmem:[#allocation2 + $0x148] sm:$0xff] %vm708, %v2890
        %2939 = vst.msk [vmem:[#allocation2 + $0x150] sm:$0xff] %vm708, %v2891
        %2940 = vst.msk [vmem:[#allocation2 + $0x158] sm:$0xff] %vm708, %v2892
        %2941 = vst.msk [vmem:[#allocation2 + $0x160] sm:$0xff] %vm708, %v2893
        %2942 = vst.msk [vmem:[#allocation2 + $0x168] sm:$0xff] %vm708, %v2894
        %2943 = vst.msk [vmem:[#allocation2 + $0x170] sm:$0xff] %vm708, %v2895
        %2944 = vst.msk [vmem:[#allocation2 + $0x178] sm:$0xff] %vm708, %v2896
        %2945 = vst.msk [vmem:[#allocation2 + $0x180] sm:$0xff] %vm708, %v2897
        %2946 = vst.msk [vmem:[#allocation2 + $0x188] sm:$0xff] %vm708, %v2898
        %2947 = vst.msk [vmem:[#allocation2 + $0x190] sm:$0xff] %vm708, %v2899
        %2948 = vst.msk [vmem:[#allocation2 + $0x198] sm:$0xff] %vm708, %v2900
        %v2949 = vld [vmem:[#allocation2 + $0x7] sm:$0xff]
        %v2950 = vld [vmem:[#allocation2 + $0xf] sm:$0xff]
        %v2951 = vld [vmem:[#allocation2 + $0x17] sm:$0xff]
        %v2952 = vld [vmem:[#allocation2 + $0x1f] sm:$0xff]
        %v2953 = vld [vmem:[#allocation2 + $0x27] sm:$0xff]
        %v2954 = vld [vmem:[#allocation2 + $0x2f] sm:$0xff]
        %v2955 = vld [vmem:[#allocation2 + $0x37] sm:$0xff]
        %v2956 = vld [vmem:[#allocation2 + $0x3f] sm:$0xff]
        %v2957 = vld [vmem:[#allocation2 + $0x47] sm:$0xff]
        %v2958 = vld [vmem:[#allocation2 + $0x4f] sm:$0xff]
        %v2959 = vld [vmem:[#allocation2 + $0x57] sm:$0xff]
        %v2960 = vld [vmem:[#allocation2 + $0x5f] sm:$0xff]
        %v2961 = vld [vmem:[#allocation2 + $0x67] sm:$0xff]
        %v2962 = vld [vmem:[#allocation2 + $0x6f] sm:$0xff]
        %v2963 = vld [vmem:[#allocation2 + $0x77] sm:$0xff]
        %v2964 = vld [vmem:[#allocation2 + $0x7f] sm:$0xff]
        %v2965 = vld [vmem:[#allocation2 + $0x87] sm:$0xff]
        %v2966 = vld [vmem:[#allocation2 + $0x8f] sm:$0xff]
        %v2967 = vld [vmem:[#allocation2 + $0x97] sm:$0xff]
        %v2968 = vld [vmem:[#allocation2 + $0x9f] sm:$0xff]
        %v2969 = vld [vmem:[#allocation2 + $0xa7] sm:$0xff]
        %v2970 = vld [vmem:[#allocation2 + $0xaf] sm:$0xff]
        %v2971 = vld [vmem:[#allocation2 + $0xb7] sm:$0xff]
        %v2972 = vld [vmem:[#allocation2 + $0xbf] sm:$0xff]
        %v2973 = vld [vmem:[#allocation2 + $0xc7] sm:$0xff]
        %v2974 = vld [vmem:[#allocation2 + $0xcf] sm:$0xff]
        %v2975 = vld [vmem:[#allocation2 + $0xd7] sm:$0xff]
        %v2976 = vld [vmem:[#allocation2 + $0xdf] sm:$0xff]
        %v2977 = vld [vmem:[#allocation2 + $0xe7] sm:$0xff]
        %v2978 = vld [vmem:[#allocation2 + $0xef] sm:$0xff]
        %v2979 = vld [vmem:[#allocation2 + $0xf7] sm:$0xff]
        %v2980 = vld [vmem:[#allocation2 + $0xff] sm:$0xff]
        %v2981 = vld [vmem:[#allocation2 + $0x107] sm:$0xff]
        %v2982 = vld [vmem:[#allocation2 + $0x10f] sm:$0xff]
        %v2983 = vld [vmem:[#allocation2 + $0x117] sm:$0xff]
        %v2984 = vld [vmem:[#allocation2 + $0x11f] sm:$0xff]
        %v2985 = vld [vmem:[#allocation2 + $0x127] sm:$0xff]
        %v2986 = vld [vmem:[#allocation2 + $0x12f] sm:$0xff]
        %v2987 = vld [vmem:[#allocation2 + $0x137] sm:$0xff]
        %v2988 = vld [vmem:[#allocation2 + $0x13f] sm:$0xff]
        %v2989 = vld [vmem:[#allocation2 + $0x147] sm:$0xff]
        %v2990 = vld [vmem:[#allocation2 + $0x14f] sm:$0xff]
        %v2991 = vld [vmem:[#allocation2 + $0x157] sm:$0xff]
        %v2992 = vld [vmem:[#allocation2 + $0x15f] sm:$0xff]
        %v2993 = vld [vmem:[#allocation2 + $0x167] sm:$0xff]
        %v2994 = vld [vmem:[#allocation2 + $0x16f] sm:$0xff]
        %v2995 = vld [vmem:[#allocation2 + $0x177] sm:$0xff]
        %v2996 = vld [vmem:[#allocation2 + $0x17f] sm:$0xff]
        %v2997 = vld [vmem:[#allocation2 + $0x8] sm:$0xff]
        %v2998 = vld [vmem:[#allocation2 + $0x10] sm:$0xff]
        %v2999 = vld [vmem:[#allocation2 + $0x18] sm:$0xff]
        %v3000 = vld [vmem:[#allocation2 + $0x20] sm:$0xff]
        %v3001 = vld [vmem:[#allocation2 + $0x28] sm:$0xff]
        %v3002 = vld [vmem:[#allocation2 + $0x30] sm:$0xff]
        %v3003 = vld [vmem:[#allocation2 + $0x38] sm:$0xff]
        %v3004 = vld [vmem:[#allocation2 + $0x40] sm:$0xff]
        %v3005 = vld [vmem:[#allocation2 + $0x48] sm:$0xff]
        %v3006 = vld [vmem:[#allocation2 + $0x50] sm:$0xff]
        %v3007 = vld [vmem:[#allocation2 + $0x58] sm:$0xff]
        %v3008 = vld [vmem:[#allocation2 + $0x60] sm:$0xff]
        %v3009 = vld [vmem:[#allocation2 + $0x68] sm:$0xff]
        %v3010 = vld [vmem:[#allocation2 + $0x70] sm:$0xff]
        %v3011 = vld [vmem:[#allocation2 + $0x78] sm:$0xff]
        %v3012 = vld [vmem:[#allocation2 + $0x80] sm:$0xff]
        %v3013 = vld [vmem:[#allocation2 + $0x88] sm:$0xff]
        %v3014 = vld [vmem:[#allocation2 + $0x90] sm:$0xff]
        %v3015 = vld [vmem:[#allocation2 + $0x98] sm:$0xff]
        %v3016 = vld [vmem:[#allocation2 + $0xa0] sm:$0xff]
        %v3017 = vld [vmem:[#allocation2 + $0xa8] sm:$0xff]
        %v3018 = vld [vmem:[#allocation2 + $0xb0] sm:$0xff]
        %v3019 = vld [vmem:[#allocation2 + $0xb8] sm:$0xff]
        %v3020 = vld [vmem:[#allocation2 + $0xc0] sm:$0xff]
        %v3021 = vld [vmem:[#allocation2 + $0xc8] sm:$0xff]
        %v3022 = vld [vmem:[#allocation2 + $0xd0] sm:$0xff]
        %v3023 = vld [vmem:[#allocation2 + $0xd8] sm:$0xff]
        %v3024 = vld [vmem:[#allocation2 + $0xe0] sm:$0xff]
        %v3025 = vld [vmem:[#allocation2 + $0xe8] sm:$0xff]
        %v3026 = vld [vmem:[#allocation2 + $0xf0] sm:$0xff]
        %v3027 = vld [vmem:[#allocation2 + $0xf8] sm:$0xff]
        %v3028 = vld [vmem:[#allocation2 + $0x100] sm:$0xff]
        %v3029 = vld [vmem:[#allocation2 + $0x108] sm:$0xff]
        %v3030 = vld [vmem:[#allocation2 + $0x110] sm:$0xff]
        %v3031 = vld [vmem:[#allocation2 + $0x118] sm:$0xff]
        %v3032 = vld [vmem:[#allocation2 + $0x120] sm:$0xff]
        %v3033 = vld [vmem:[#allocation2 + $0x128] sm:$0xff]
        %v3034 = vld [vmem:[#allocation2 + $0x130] sm:$0xff]
        %v3035 = vld [vmem:[#allocation2 + $0x138] sm:$0xff]
        %v3036 = vld [vmem:[#allocation2 + $0x140] sm:$0xff]
        %v3037 = vld [vmem:[#allocation2 + $0x148] sm:$0xff]
        %v3038 = vld [vmem:[#allocation2 + $0x150] sm:$0xff]
        %v3039 = vld [vmem:[#allocation2 + $0x158] sm:$0xff]
        %v3040 = vld [vmem:[#allocation2 + $0x160] sm:$0xff]
        %v3041 = vld [vmem:[#allocation2 + $0x168] sm:$0xff]
        %v3042 = vld [vmem:[#allocation2 + $0x170] sm:$0xff]
        %v3043 = vld [vmem:[#allocation2 + $0x178] sm:$0xff]
        %v3044 = vld [vmem:[#allocation2 + $0x180] sm:$0xff]
        %v3045 = vld [vmem:[#allocation2 + $0x9] sm:$0xff]
        %v3046 = vld [vmem:[#allocation2 + $0x11] sm:$0xff]
        %v3047 = vld [vmem:[#allocation2 + $0x19] sm:$0xff]
        %v3048 = vld [vmem:[#allocation2 + $0x21] sm:$0xff]
        %v3049 = vld [vmem:[#allocation2 + $0x29] sm:$0xff]
        %v3050 = vld [vmem:[#allocation2 + $0x31] sm:$0xff]
        %v3051 = vld [vmem:[#allocation2 + $0x39] sm:$0xff]
        %v3052 = vld [vmem:[#allocation2 + $0x41] sm:$0xff]
        %v3053 = vld [vmem:[#allocation2 + $0x49] sm:$0xff]
        %v3054 = vld [vmem:[#allocation2 + $0x51] sm:$0xff]
        %v3055 = vld [vmem:[#allocation2 + $0x59] sm:$0xff]
        %v3056 = vld [vmem:[#allocation2 + $0x61] sm:$0xff]
        %v3057 = vld [vmem:[#allocation2 + $0x69] sm:$0xff]
        %v3058 = vld [vmem:[#allocation2 + $0x71] sm:$0xff]
        %v3059 = vld [vmem:[#allocation2 + $0x79] sm:$0xff]
        %v3060 = vld [vmem:[#allocation2 + $0x81] sm:$0xff]
        %v3061 = vld [vmem:[#allocation2 + $0x89] sm:$0xff]
        %v3062 = vld [vmem:[#allocation2 + $0x91] sm:$0xff]
        %v3063 = vld [vmem:[#allocation2 + $0x99] sm:$0xff]
        %v3064 = vld [vmem:[#allocation2 + $0xa1] sm:$0xff]
        %v3065 = vld [vmem:[#allocation2 + $0xa9] sm:$0xff]
        %v3066 = vld [vmem:[#allocation2 + $0xb1] sm:$0xff]
        %v3067 = vld [vmem:[#allocation2 + $0xb9] sm:$0xff]
        %v3068 = vld [vmem:[#allocation2 + $0xc1] sm:$0xff]
        %v3069 = vld [vmem:[#allocation2 + $0xc9] sm:$0xff]
        %v3070 = vld [vmem:[#allocation2 + $0xd1] sm:$0xff]
        %v3071 = vld [vmem:[#allocation2 + $0xd9] sm:$0xff]
        %v3072 = vld [vmem:[#allocation2 + $0xe1] sm:$0xff]
        %v3073 = vld [vmem:[#allocation2 + $0xe9] sm:$0xff]
        %v3074 = vld [vmem:[#allocation2 + $0xf1] sm:$0xff]
        %v3075 = vld [vmem:[#allocation2 + $0xf9] sm:$0xff]
        %v3076 = vld [vmem:[#allocation2 + $0x101] sm:$0xff]
        %v3077 = vld [vmem:[#allocation2 + $0x109] sm:$0xff]
        %v3078 = vld [vmem:[#allocation2 + $0x111] sm:$0xff]
        %v3079 = vld [vmem:[#allocation2 + $0x119] sm:$0xff]
        %v3080 = vld [vmem:[#allocation2 + $0x121] sm:$0xff]
        %v3081 = vld [vmem:[#allocation2 + $0x129] sm:$0xff]
        %v3082 = vld [vmem:[#allocation2 + $0x131] sm:$0xff]
        %v3083 = vld [vmem:[#allocation2 + $0x139] sm:$0xff]
        %v3084 = vld [vmem:[#allocation2 + $0x141] sm:$0xff]
        %v3085 = vld [vmem:[#allocation2 + $0x149] sm:$0xff]
        %v3086 = vld [vmem:[#allocation2 + $0x151] sm:$0xff]
        %v3087 = vld [vmem:[#allocation2 + $0x159] sm:$0xff]
        %v3088 = vld [vmem:[#allocation2 + $0x161] sm:$0xff]
        %v3089 = vld [vmem:[#allocation2 + $0x169] sm:$0xff]
        %v3090 = vld [vmem:[#allocation2 + $0x171] sm:$0xff]
        %v3091 = vld [vmem:[#allocation2 + $0x179] sm:$0xff]
        %v3092 = vld [vmem:[#allocation2 + $0x181] sm:$0xff]
        %v3093 = vld [vmem:[#allocation2 + $0x187] sm:$0xff]
        %v3094 = vld [vmem:[#allocation2 + $0x18f] sm:$0xff]
        %v3095 = vld [vmem:[#allocation2 + $0x197] sm:$0xff]
        %v3096 = vld [vmem:[#allocation2 + $0x188] sm:$0xff]
        %v3097 = vld [vmem:[#allocation2 + $0x190] sm:$0xff]
        %v3098 = vld [vmem:[#allocation2 + $0x198] sm:$0xff]
        %v3099 = vld [vmem:[#allocation2 + $0x189] sm:$0xff]
        %v3100 = vld [vmem:[#allocation2 + $0x191] sm:$0xff]
        %v3101 = vld [vmem:[#allocation2 + $0x199] sm:$0xff]
        %v3102 = vld [vmem:[#allocation2 + $0x19f] sm:$0xff]
        %v3103 = vld [vmem:[#allocation2 + $0x1a7] sm:$0xff]
        %v3104 = vld [vmem:[#allocation2 + $0x1af] sm:$0xff]
        %v3105 = vld [vmem:[#allocation2 + $0x1a0] sm:$0xff]
        %v3106 = vld [vmem:[#allocation2 + $0x1a8] sm:$0xff]
        %v3107 = vld [vmem:[#allocation2 + $0x1b0] sm:$0xff]
        %v3108 = vld [vmem:[#allocation2 + $0x1a1] sm:$0xff]
        %v3109 = vld [vmem:[#allocation2 + $0x1a9] sm:$0xff]
        %v3110 = vld [vmem:[#allocation2 + $0x1b1] sm:$0xff]
        %3159 = vrot.lane.b32.xlu0 %v2997, 4
        %v3160 = vpop.permute.xlu0 %3159
        %3161 = vrot.lane.b32.xlu0 %v2998, 4
        %v3162 = vpop.permute.xlu0 %3161
        %3163 = vrot.lane.b32.xlu0 %v2999, 4
        %v3164 = vpop.permute.xlu0 %3163
        %3165 = vrot.lane.b32.xlu0 %v3000, 4
        %v3166 = vpop.permute.xlu0 %3165
        %3167 = vrot.lane.b32.xlu0 %v3001, 4
        %v3168 = vpop.permute.xlu0 %3167
        %3169 = vrot.lane.b32.xlu0 %v3002, 4
        %v3170 = vpop.permute.xlu0 %3169
        %3171 = vrot.lane.b32.xlu0 %v3003, 4
        %v3172 = vpop.permute.xlu0 %3171
        %3173 = vrot.lane.b32.xlu0 %v3004, 4
        %v3174 = vpop.permute.xlu0 %3173
        %3175 = vrot.lane.b32.xlu0 %v3005, 4
        %v3176 = vpop.permute.xlu0 %3175
        %3177 = vrot.lane.b32.xlu0 %v3006, 4
        %v3178 = vpop.permute.xlu0 %3177
        %3179 = vrot.lane.b32.xlu0 %v3007, 4
        %v3180 = vpop.permute.xlu0 %3179
        %3181 = vrot.lane.b32.xlu0 %v3008, 4
        %v3182 = vpop.permute.xlu0 %3181
        %3183 = vrot.lane.b32.xlu0 %v3009, 4
        %v3184 = vpop.permute.xlu0 %3183
        %3185 = vrot.lane.b32.xlu0 %v3010, 4
        %v3186 = vpop.permute.xlu0 %3185
        %3187 = vrot.lane.b32.xlu0 %v3011, 4
        %v3188 = vpop.permute.xlu0 %3187
        %3189 = vrot.lane.b32.xlu0 %v3012, 4
        %v3190 = vpop.permute.xlu0 %3189
        %3191 = vrot.lane.b32.xlu0 %v3013, 4
        %v3192 = vpop.permute.xlu0 %3191
        %3193 = vrot.lane.b32.xlu0 %v3014, 4
        %v3194 = vpop.permute.xlu0 %3193
        %3195 = vrot.lane.b32.xlu0 %v3015, 4
        %v3196 = vpop.permute.xlu0 %3195
        %3197 = vrot.lane.b32.xlu0 %v3016, 4
        %v3198 = vpop.permute.xlu0 %3197
        %3199 = vrot.lane.b32.xlu0 %v3017, 4
        %v3200 = vpop.permute.xlu0 %3199
        %3201 = vrot.lane.b32.xlu0 %v3018, 4
        %v3202 = vpop.permute.xlu0 %3201
        %3203 = vrot.lane.b32.xlu0 %v3019, 4
        %v3204 = vpop.permute.xlu0 %3203
        %3205 = vrot.lane.b32.xlu0 %v3020, 4
        %v3206 = vpop.permute.xlu0 %3205
        %3207 = vrot.lane.b32.xlu0 %v3021, 4
        %v3208 = vpop.permute.xlu0 %3207
        %3209 = vrot.lane.b32.xlu0 %v3022, 4
        %v3210 = vpop.permute.xlu0 %3209
        %3211 = vrot.lane.b32.xlu0 %v3023, 4
        %v3212 = vpop.permute.xlu0 %3211
        %3213 = vrot.lane.b32.xlu0 %v3024, 4
        %v3214 = vpop.permute.xlu0 %3213
        %3215 = vrot.lane.b32.xlu0 %v3025, 4
        %v3216 = vpop.permute.xlu0 %3215
        %3217 = vrot.lane.b32.xlu0 %v3026, 4
        %v3218 = vpop.permute.xlu0 %3217
        %3219 = vrot.lane.b32.xlu0 %v3027, 4
        %v3220 = vpop.permute.xlu0 %3219
        %3221 = vrot.lane.b32.xlu0 %v3028, 4
        %v3222 = vpop.permute.xlu0 %3221
        %3223 = vrot.lane.b32.xlu0 %v3029, 4
        %v3224 = vpop.permute.xlu0 %3223
        %3225 = vrot.lane.b32.xlu0 %v3030, 4
        %v3226 = vpop.permute.xlu0 %3225
        %3227 = vrot.lane.b32.xlu0 %v3031, 4
        %v3228 = vpop.permute.xlu0 %3227
        %3229 = vrot.lane.b32.xlu0 %v3032, 4
        %v3230 = vpop.permute.xlu0 %3229
        %3231 = vrot.lane.b32.xlu0 %v3033, 4
        %v3232 = vpop.permute.xlu0 %3231
        %3233 = vrot.lane.b32.xlu0 %v3034, 4
        %v3234 = vpop.permute.xlu0 %3233
        %3235 = vrot.lane.b32.xlu0 %v3035, 4
        %v3236 = vpop.permute.xlu0 %3235
        %3237 = vrot.lane.b32.xlu0 %v3036, 4
        %v3238 = vpop.permute.xlu0 %3237
        %3239 = vrot.lane.b32.xlu0 %v3037, 4
        %v3240 = vpop.permute.xlu0 %3239
        %3241 = vrot.lane.b32.xlu0 %v3038, 4
        %v3242 = vpop.permute.xlu0 %3241
        %3243 = vrot.lane.b32.xlu0 %v3039, 4
        %v3244 = vpop.permute.xlu0 %3243
        %3245 = vrot.lane.b32.xlu0 %v3040, 4
        %v3246 = vpop.permute.xlu0 %3245
        %3247 = vrot.lane.b32.xlu0 %v3041, 4
        %v3248 = vpop.permute.xlu0 %3247
        %3249 = vrot.lane.b32.xlu0 %v3042, 4
        %v3250 = vpop.permute.xlu0 %3249
        %3251 = vrot.lane.b32.xlu0 %v3043, 4
        %v3252 = vpop.permute.xlu0 %3251
        %3253 = vrot.lane.b32.xlu0 %v3044, 4
        %v3254 = vpop.permute.xlu0 %3253
        %3351 = vrot.lane.b32.xlu0 %v3045, 8
        %v3352 = vpop.permute.xlu0 %3351
        %3353 = vrot.lane.b32.xlu0 %v3046, 8
        %v3354 = vpop.permute.xlu0 %3353
        %3355 = vrot.lane.b32.xlu0 %v3047, 8
        %v3356 = vpop.permute.xlu0 %3355
        %3357 = vrot.lane.b32.xlu0 %v3048, 8
        %v3358 = vpop.permute.xlu0 %3357
        %3359 = vrot.lane.b32.xlu0 %v3049, 8
        %v3360 = vpop.permute.xlu0 %3359
        %3361 = vrot.lane.b32.xlu0 %v3050, 8
        %v3362 = vpop.permute.xlu0 %3361
        %3363 = vrot.lane.b32.xlu0 %v3051, 8
        %v3364 = vpop.permute.xlu0 %3363
        %3365 = vrot.lane.b32.xlu0 %v3052, 8
        %v3366 = vpop.permute.xlu0 %3365
        %3367 = vrot.lane.b32.xlu0 %v3053, 8
        %v3368 = vpop.permute.xlu0 %3367
        %3369 = vrot.lane.b32.xlu0 %v3054, 8
        %v3370 = vpop.permute.xlu0 %3369
        %3371 = vrot.lane.b32.xlu0 %v3055, 8
        %v3372 = vpop.permute.xlu0 %3371
        %3373 = vrot.lane.b32.xlu0 %v3056, 8
        %v3374 = vpop.permute.xlu0 %3373
        %3375 = vrot.lane.b32.xlu0 %v3057, 8
        %v3376 = vpop.permute.xlu0 %3375
        %3377 = vrot.lane.b32.xlu0 %v3058, 8
        %v3378 = vpop.permute.xlu0 %3377
        %3379 = vrot.lane.b32.xlu0 %v3059, 8
        %v3380 = vpop.permute.xlu0 %3379
        %3381 = vrot.lane.b32.xlu0 %v3060, 8
        %v3382 = vpop.permute.xlu0 %3381
        %3383 = vrot.lane.b32.xlu0 %v3061, 8
        %v3384 = vpop.permute.xlu0 %3383
        %3385 = vrot.lane.b32.xlu0 %v3062, 8
        %v3386 = vpop.permute.xlu0 %3385
        %3387 = vrot.lane.b32.xlu0 %v3063, 8
        %v3388 = vpop.permute.xlu0 %3387
        %3389 = vrot.lane.b32.xlu0 %v3064, 8
        %v3390 = vpop.permute.xlu0 %3389
        %3391 = vrot.lane.b32.xlu0 %v3065, 8
        %v3392 = vpop.permute.xlu0 %3391
        %3393 = vrot.lane.b32.xlu0 %v3066, 8
        %v3394 = vpop.permute.xlu0 %3393
        %3395 = vrot.lane.b32.xlu0 %v3067, 8
        %v3396 = vpop.permute.xlu0 %3395
        %3397 = vrot.lane.b32.xlu0 %v3068, 8
        %v3398 = vpop.permute.xlu0 %3397
        %3399 = vrot.lane.b32.xlu0 %v3069, 8
        %v3400 = vpop.permute.xlu0 %3399
        %3401 = vrot.lane.b32.xlu0 %v3070, 8
        %v3402 = vpop.permute.xlu0 %3401
        %3403 = vrot.lane.b32.xlu0 %v3071, 8
        %v3404 = vpop.permute.xlu0 %3403
        %3405 = vrot.lane.b32.xlu0 %v3072, 8
        %v3406 = vpop.permute.xlu0 %3405
        %3407 = vrot.lane.b32.xlu0 %v3073, 8
        %v3408 = vpop.permute.xlu0 %3407
        %3409 = vrot.lane.b32.xlu0 %v3074, 8
        %v3410 = vpop.permute.xlu0 %3409
        %3411 = vrot.lane.b32.xlu0 %v3075, 8
        %v3412 = vpop.permute.xlu0 %3411
        %3413 = vrot.lane.b32.xlu0 %v3076, 8
        %v3414 = vpop.permute.xlu0 %3413
        %3415 = vrot.lane.b32.xlu0 %v3077, 8
        %v3416 = vpop.permute.xlu0 %3415
        %3417 = vrot.lane.b32.xlu0 %v3078, 8
        %v3418 = vpop.permute.xlu0 %3417
        %3419 = vrot.lane.b32.xlu0 %v3079, 8
        %v3420 = vpop.permute.xlu0 %3419
        %3421 = vrot.lane.b32.xlu0 %v3080, 8
        %v3422 = vpop.permute.xlu0 %3421
        %3423 = vrot.lane.b32.xlu0 %v3081, 8
        %v3424 = vpop.permute.xlu0 %3423
        %3425 = vrot.lane.b32.xlu0 %v3082, 8
        %v3426 = vpop.permute.xlu0 %3425
        %3427 = vrot.lane.b32.xlu0 %v3083, 8
        %v3428 = vpop.permute.xlu0 %3427
        %3429 = vrot.lane.b32.xlu0 %v3084, 8
        %v3430 = vpop.permute.xlu0 %3429
        %3431 = vrot.lane.b32.xlu0 %v3085, 8
        %v3432 = vpop.permute.xlu0 %3431
        %3433 = vrot.lane.b32.xlu0 %v3086, 8
        %v3434 = vpop.permute.xlu0 %3433
        %3435 = vrot.lane.b32.xlu0 %v3087, 8
        %v3436 = vpop.permute.xlu0 %3435
        %3437 = vrot.lane.b32.xlu0 %v3088, 8
        %v3438 = vpop.permute.xlu0 %3437
        %3439 = vrot.lane.b32.xlu0 %v3089, 8
        %v3440 = vpop.permute.xlu0 %3439
        %3441 = vrot.lane.b32.xlu0 %v3090, 8
        %v3442 = vpop.permute.xlu0 %3441
        %3443 = vrot.lane.b32.xlu0 %v3091, 8
        %v3444 = vpop.permute.xlu0 %3443
        %3445 = vrot.lane.b32.xlu0 %v3092, 8
        %v3446 = vpop.permute.xlu0 %3445
        %3543 = vrot.lane.b32.xlu0 %v2952, 12
        %v3544 = vpop.permute.xlu0 %3543
        %3545 = vrot.lane.b32.xlu0 %v2953, 12
        %v3546 = vpop.permute.xlu0 %3545
        %3547 = vrot.lane.b32.xlu0 %v2954, 12
        %v3548 = vpop.permute.xlu0 %3547
        %3549 = vrot.lane.b32.xlu0 %v2955, 12
        %v3550 = vpop.permute.xlu0 %3549
        %3551 = vrot.lane.b32.xlu0 %v2956, 12
        %v3552 = vpop.permute.xlu0 %3551
        %3553 = vrot.lane.b32.xlu0 %v2957, 12
        %v3554 = vpop.permute.xlu0 %3553
        %3555 = vrot.lane.b32.xlu0 %v2958, 12
        %v3556 = vpop.permute.xlu0 %3555
        %3557 = vrot.lane.b32.xlu0 %v2959, 12
        %v3558 = vpop.permute.xlu0 %3557
        %3559 = vrot.lane.b32.xlu0 %v2960, 12
        %v3560 = vpop.permute.xlu0 %3559
        %3561 = vrot.lane.b32.xlu0 %v2961, 12
        %v3562 = vpop.permute.xlu0 %3561
        %3563 = vrot.lane.b32.xlu0 %v2962, 12
        %v3564 = vpop.permute.xlu0 %3563
        %3565 = vrot.lane.b32.xlu0 %v2963, 12
        %v3566 = vpop.permute.xlu0 %3565
        %3567 = vrot.lane.b32.xlu0 %v2964, 12
        %v3568 = vpop.permute.xlu0 %3567
        %3569 = vrot.lane.b32.xlu0 %v2965, 12
        %v3570 = vpop.permute.xlu0 %3569
        %3571 = vrot.lane.b32.xlu0 %v2966, 12
        %v3572 = vpop.permute.xlu0 %3571
        %3573 = vrot.lane.b32.xlu0 %v2967, 12
        %v3574 = vpop.permute.xlu0 %3573
        %3575 = vrot.lane.b32.xlu0 %v2968, 12
        %v3576 = vpop.permute.xlu0 %3575
        %3577 = vrot.lane.b32.xlu0 %v2969, 12
        %v3578 = vpop.permute.xlu0 %3577
        %3579 = vrot.lane.b32.xlu0 %v2970, 12
        %v3580 = vpop.permute.xlu0 %3579
        %3581 = vrot.lane.b32.xlu0 %v2971, 12
        %v3582 = vpop.permute.xlu0 %3581
        %3583 = vrot.lane.b32.xlu0 %v2972, 12
        %v3584 = vpop.permute.xlu0 %3583
        %3585 = vrot.lane.b32.xlu0 %v2973, 12
        %v3586 = vpop.permute.xlu0 %3585
        %3587 = vrot.lane.b32.xlu0 %v2974, 12
        %v3588 = vpop.permute.xlu0 %3587
        %3589 = vrot.lane.b32.xlu0 %v2975, 12
        %v3590 = vpop.permute.xlu0 %3589
        %3591 = vrot.lane.b32.xlu0 %v2976, 12
        %v3592 = vpop.permute.xlu0 %3591
        %3593 = vrot.lane.b32.xlu0 %v2977, 12
        %v3594 = vpop.permute.xlu0 %3593
        %3595 = vrot.lane.b32.xlu0 %v2978, 12
        %v3596 = vpop.permute.xlu0 %3595
        %3597 = vrot.lane.b32.xlu0 %v2979, 12
        %v3598 = vpop.permute.xlu0 %3597
        %3599 = vrot.lane.b32.xlu0 %v2980, 12
        %v3600 = vpop.permute.xlu0 %3599
        %3601 = vrot.lane.b32.xlu0 %v2981, 12
        %v3602 = vpop.permute.xlu0 %3601
        %3603 = vrot.lane.b32.xlu0 %v2982, 12
        %v3604 = vpop.permute.xlu0 %3603
        %3605 = vrot.lane.b32.xlu0 %v2983, 12
        %v3606 = vpop.permute.xlu0 %3605
        %3607 = vrot.lane.b32.xlu0 %v2984, 12
        %v3608 = vpop.permute.xlu0 %3607
        %3609 = vrot.lane.b32.xlu0 %v2985, 12
        %v3610 = vpop.permute.xlu0 %3609
        %3611 = vrot.lane.b32.xlu0 %v2986, 12
        %v3612 = vpop.permute.xlu0 %3611
        %3613 = vrot.lane.b32.xlu0 %v2987, 12
        %v3614 = vpop.permute.xlu0 %3613
        %3615 = vrot.lane.b32.xlu0 %v2988, 12
        %v3616 = vpop.permute.xlu0 %3615
        %3617 = vrot.lane.b32.xlu0 %v2989, 12
        %v3618 = vpop.permute.xlu0 %3617
        %3619 = vrot.lane.b32.xlu0 %v2990, 12
        %v3620 = vpop.permute.xlu0 %3619
        %3621 = vrot.lane.b32.xlu0 %v2991, 12
        %v3622 = vpop.permute.xlu0 %3621
        %3623 = vrot.lane.b32.xlu0 %v2992, 12
        %v3624 = vpop.permute.xlu0 %3623
        %3625 = vrot.lane.b32.xlu0 %v2993, 12
        %v3626 = vpop.permute.xlu0 %3625
        %3627 = vrot.lane.b32.xlu0 %v2994, 12
        %v3628 = vpop.permute.xlu0 %3627
        %3629 = vrot.lane.b32.xlu0 %v2995, 12
        %v3630 = vpop.permute.xlu0 %3629
        %3631 = vrot.lane.b32.xlu0 %v2996, 12
        %v3632 = vpop.permute.xlu0 %3631
        %3633 = vrot.lane.b32.xlu0 %v3093, 12
        %v3634 = vpop.permute.xlu0 %3633
        %3635 = vrot.lane.b32.xlu0 %v3094, 12
        %v3636 = vpop.permute.xlu0 %3635
        %3637 = vrot.lane.b32.xlu0 %v3095, 12
        %v3638 = vpop.permute.xlu0 %3637
        %3690 = vrot.lane.b32.xlu0 %v3000, 16
        %v3691 = vpop.permute.xlu0 %3690
        %3692 = vrot.lane.b32.xlu0 %v3001, 16
        %v3693 = vpop.permute.xlu0 %3692
        %3694 = vrot.lane.b32.xlu0 %v3002, 16
        %v3695 = vpop.permute.xlu0 %3694
        %3696 = vrot.lane.b32.xlu0 %v3003, 16
        %v3697 = vpop.permute.xlu0 %3696
        %3698 = vrot.lane.b32.xlu0 %v3004, 16
        %v3699 = vpop.permute.xlu0 %3698
        %3700 = vrot.lane.b32.xlu0 %v3005, 16
        %v3701 = vpop.permute.xlu0 %3700
        %3702 = vrot.lane.b32.xlu0 %v3006, 16
        %v3703 = vpop.permute.xlu0 %3702
        %3704 = vrot.lane.b32.xlu0 %v3007, 16
        %v3705 = vpop.permute.xlu0 %3704
        %3706 = vrot.lane.b32.xlu0 %v3008, 16
        %v3707 = vpop.permute.xlu0 %3706
        %3708 = vrot.lane.b32.xlu0 %v3009, 16
        %v3709 = vpop.permute.xlu0 %3708
        %3710 = vrot.lane.b32.xlu0 %v3010, 16
        %v3711 = vpop.permute.xlu0 %3710
        %3712 = vrot.lane.b32.xlu0 %v3011, 16
        %v3713 = vpop.permute.xlu0 %3712
        %3714 = vrot.lane.b32.xlu0 %v3012, 16
        %v3715 = vpop.permute.xlu0 %3714
        %3716 = vrot.lane.b32.xlu0 %v3013, 16
        %v3717 = vpop.permute.xlu0 %3716
        %3718 = vrot.lane.b32.xlu0 %v3014, 16
        %v3719 = vpop.permute.xlu0 %3718
        %3720 = vrot.lane.b32.xlu0 %v3015, 16
        %v3721 = vpop.permute.xlu0 %3720
        %3722 = vrot.lane.b32.xlu0 %v3016, 16
        %v3723 = vpop.permute.xlu0 %3722
        %3724 = vrot.lane.b32.xlu0 %v3017, 16
        %v3725 = vpop.permute.xlu0 %3724
        %3726 = vrot.lane.b32.xlu0 %v3018, 16
        %v3727 = vpop.permute.xlu0 %3726
        %3728 = vrot.lane.b32.xlu0 %v3019, 16
        %v3729 = vpop.permute.xlu0 %3728
        %3730 = vrot.lane.b32.xlu0 %v3020, 16
        %v3731 = vpop.permute.xlu0 %3730
        %3732 = vrot.lane.b32.xlu0 %v3021, 16
        %v3733 = vpop.permute.xlu0 %3732
        %3734 = vrot.lane.b32.xlu0 %v3022, 16
        %v3735 = vpop.permute.xlu0 %3734
        %3736 = vrot.lane.b32.xlu0 %v3023, 16
        %v3737 = vpop.permute.xlu0 %3736
        %3738 = vrot.lane.b32.xlu0 %v3024, 16
        %v3739 = vpop.permute.xlu0 %3738
        %3740 = vrot.lane.b32.xlu0 %v3025, 16
        %v3741 = vpop.permute.xlu0 %3740
        %3742 = vrot.lane.b32.xlu0 %v3026, 16
        %v3743 = vpop.permute.xlu0 %3742
        %3744 = vrot.lane.b32.xlu0 %v3027, 16
        %v3745 = vpop.permute.xlu0 %3744
        %3746 = vrot.lane.b32.xlu0 %v3028, 16
        %v3747 = vpop.permute.xlu0 %3746
        %3748 = vrot.lane.b32.xlu0 %v3029, 16
        %v3749 = vpop.permute.xlu0 %3748
        %3750 = vrot.lane.b32.xlu0 %v3030, 16
        %v3751 = vpop.permute.xlu0 %3750
        %3752 = vrot.lane.b32.xlu0 %v3031, 16
        %v3753 = vpop.permute.xlu0 %3752
        %3754 = vrot.lane.b32.xlu0 %v3032, 16
        %v3755 = vpop.permute.xlu0 %3754
        %3756 = vrot.lane.b32.xlu0 %v3033, 16
        %v3757 = vpop.permute.xlu0 %3756
        %3758 = vrot.lane.b32.xlu0 %v3034, 16
        %v3759 = vpop.permute.xlu0 %3758
        %3760 = vrot.lane.b32.xlu0 %v3035, 16
        %v3761 = vpop.permute.xlu0 %3760
        %3762 = vrot.lane.b32.xlu0 %v3036, 16
        %v3763 = vpop.permute.xlu0 %3762
        %3764 = vrot.lane.b32.xlu0 %v3037, 16
        %v3765 = vpop.permute.xlu0 %3764
        %3766 = vrot.lane.b32.xlu0 %v3038, 16
        %v3767 = vpop.permute.xlu0 %3766
        %3768 = vrot.lane.b32.xlu0 %v3039, 16
        %v3769 = vpop.permute.xlu0 %3768
        %3770 = vrot.lane.b32.xlu0 %v3040, 16
        %v3771 = vpop.permute.xlu0 %3770
        %3772 = vrot.lane.b32.xlu0 %v3041, 16
        %v3773 = vpop.permute.xlu0 %3772
        %3774 = vrot.lane.b32.xlu0 %v3042, 16
        %v3775 = vpop.permute.xlu0 %3774
        %3776 = vrot.lane.b32.xlu0 %v3043, 16
        %v3777 = vpop.permute.xlu0 %3776
        %3778 = vrot.lane.b32.xlu0 %v3044, 16
        %v3779 = vpop.permute.xlu0 %3778
        %3780 = vrot.lane.b32.xlu0 %v3096, 16
        %v3781 = vpop.permute.xlu0 %3780
        %3782 = vrot.lane.b32.xlu0 %v3097, 16
        %v3783 = vpop.permute.xlu0 %3782
        %3784 = vrot.lane.b32.xlu0 %v3098, 16
        %v3785 = vpop.permute.xlu0 %3784
        %3837 = vrot.lane.b32.xlu0 %v3048, 20
        %v3838 = vpop.permute.xlu0 %3837
        %3839 = vrot.lane.b32.xlu0 %v3049, 20
        %v3840 = vpop.permute.xlu0 %3839
        %3841 = vrot.lane.b32.xlu0 %v3050, 20
        %v3842 = vpop.permute.xlu0 %3841
        %3843 = vrot.lane.b32.xlu0 %v3051, 20
        %v3844 = vpop.permute.xlu0 %3843
        %3845 = vrot.lane.b32.xlu0 %v3052, 20
        %v3846 = vpop.permute.xlu0 %3845
        %3847 = vrot.lane.b32.xlu0 %v3053, 20
        %v3848 = vpop.permute.xlu0 %3847
        %3849 = vrot.lane.b32.xlu0 %v3054, 20
        %v3850 = vpop.permute.xlu0 %3849
        %3851 = vrot.lane.b32.xlu0 %v3055, 20
        %v3852 = vpop.permute.xlu0 %3851
        %3853 = vrot.lane.b32.xlu0 %v3056, 20
        %v3854 = vpop.permute.xlu0 %3853
        %3855 = vrot.lane.b32.xlu0 %v3057, 20
        %v3856 = vpop.permute.xlu0 %3855
        %3857 = vrot.lane.b32.xlu0 %v3058, 20
        %v3858 = vpop.permute.xlu0 %3857
        %3859 = vrot.lane.b32.xlu0 %v3059, 20
        %v3860 = vpop.permute.xlu0 %3859
        %3861 = vrot.lane.b32.xlu0 %v3060, 20
        %v3862 = vpop.permute.xlu0 %3861
        %3863 = vrot.lane.b32.xlu0 %v3061, 20
        %v3864 = vpop.permute.xlu0 %3863
        %3865 = vrot.lane.b32.xlu0 %v3062, 20
        %v3866 = vpop.permute.xlu0 %3865
        %3867 = vrot.lane.b32.xlu0 %v3063, 20
        %v3868 = vpop.permute.xlu0 %3867
        %3869 = vrot.lane.b32.xlu0 %v3064, 20
        %v3870 = vpop.permute.xlu0 %3869
        %3871 = vrot.lane.b32.xlu0 %v3065, 20
        %v3872 = vpop.permute.xlu0 %3871
        %3873 = vrot.lane.b32.xlu0 %v3066, 20
        %v3874 = vpop.permute.xlu0 %3873
        %3875 = vrot.lane.b32.xlu0 %v3067, 20
        %v3876 = vpop.permute.xlu0 %3875
        %3877 = vrot.lane.b32.xlu0 %v3068, 20
        %v3878 = vpop.permute.xlu0 %3877
        %3879 = vrot.lane.b32.xlu0 %v3069, 20
        %v3880 = vpop.permute.xlu0 %3879
        %3881 = vrot.lane.b32.xlu0 %v3070, 20
        %v3882 = vpop.permute.xlu0 %3881
        %3883 = vrot.lane.b32.xlu0 %v3071, 20
        %v3884 = vpop.permute.xlu0 %3883
        %3885 = vrot.lane.b32.xlu0 %v3072, 20
        %v3886 = vpop.permute.xlu0 %3885
        %3887 = vrot.lane.b32.xlu0 %v3073, 20
        %v3888 = vpop.permute.xlu0 %3887
        %3889 = vrot.lane.b32.xlu0 %v3074, 20
        %v3890 = vpop.permute.xlu0 %3889
        %3891 = vrot.lane.b32.xlu0 %v3075, 20
        %v3892 = vpop.permute.xlu0 %3891
        %3893 = vrot.lane.b32.xlu0 %v3076, 20
        %v3894 = vpop.permute.xlu0 %3893
        %3895 = vrot.lane.b32.xlu0 %v3077, 20
        %v3896 = vpop.permute.xlu0 %3895
        %3897 = vrot.lane.b32.xlu0 %v3078, 20
        %v3898 = vpop.permute.xlu0 %3897
        %3899 = vrot.lane.b32.xlu0 %v3079, 20
        %v3900 = vpop.permute.xlu0 %3899
        %3901 = vrot.lane.b32.xlu0 %v3080, 20
        %v3902 = vpop.permute.xlu0 %3901
        %3903 = vrot.lane.b32.xlu0 %v3081, 20
        %v3904 = vpop.permute.xlu0 %3903
        %3905 = vrot.lane.b32.xlu0 %v3082, 20
        %v3906 = vpop.permute.xlu0 %3905
        %3907 = vrot.lane.b32.xlu0 %v3083, 20
        %v3908 = vpop.permute.xlu0 %3907
        %3909 = vrot.lane.b32.xlu0 %v3084, 20
        %v3910 = vpop.permute.xlu0 %3909
        %3911 = vrot.lane.b32.xlu0 %v3085, 20
        %v3912 = vpop.permute.xlu0 %3911
        %3913 = vrot.lane.b32.xlu0 %v3086, 20
        %v3914 = vpop.permute.xlu0 %3913
        %3915 = vrot.lane.b32.xlu0 %v3087, 20
        %v3916 = vpop.permute.xlu0 %3915
        %3917 = vrot.lane.b32.xlu0 %v3088, 20
        %v3918 = vpop.permute.xlu0 %3917
        %3919 = vrot.lane.b32.xlu0 %v3089, 20
        %v3920 = vpop.permute.xlu0 %3919
        %3921 = vrot.lane.b32.xlu0 %v3090, 20
        %v3922 = vpop.permute.xlu0 %3921
        %3923 = vrot.lane.b32.xlu0 %v3091, 20
        %v3924 = vpop.permute.xlu0 %3923
        %3925 = vrot.lane.b32.xlu0 %v3092, 20
        %v3926 = vpop.permute.xlu0 %3925
        %3927 = vrot.lane.b32.xlu0 %v3099, 20
        %v3928 = vpop.permute.xlu0 %3927
        %3929 = vrot.lane.b32.xlu0 %v3100, 20
        %v3930 = vpop.permute.xlu0 %3929
        %3931 = vrot.lane.b32.xlu0 %v3101, 20
        %v3932 = vpop.permute.xlu0 %3931
        %3984 = vrot.lane.b32.xlu0 %v2955, 24
        %v3985 = vpop.permute.xlu0 %3984
        %3986 = vrot.lane.b32.xlu0 %v2956, 24
        %v3987 = vpop.permute.xlu0 %3986
        %3988 = vrot.lane.b32.xlu0 %v2957, 24
        %v3989 = vpop.permute.xlu0 %3988
        %3990 = vrot.lane.b32.xlu0 %v2958, 24
        %v3991 = vpop.permute.xlu0 %3990
        %3992 = vrot.lane.b32.xlu0 %v2959, 24
        %v3993 = vpop.permute.xlu0 %3992
        %3994 = vrot.lane.b32.xlu0 %v2960, 24
        %v3995 = vpop.permute.xlu0 %3994
        %3996 = vrot.lane.b32.xlu0 %v2961, 24
        %v3997 = vpop.permute.xlu0 %3996
        %3998 = vrot.lane.b32.xlu0 %v2962, 24
        %v3999 = vpop.permute.xlu0 %3998
        %4000 = vrot.lane.b32.xlu0 %v2963, 24
        %v4001 = vpop.permute.xlu0 %4000
        %4002 = vrot.lane.b32.xlu0 %v2964, 24
        %v4003 = vpop.permute.xlu0 %4002
        %4004 = vrot.lane.b32.xlu0 %v2965, 24
        %v4005 = vpop.permute.xlu0 %4004
        %4006 = vrot.lane.b32.xlu0 %v2966, 24
        %v4007 = vpop.permute.xlu0 %4006
        %4008 = vrot.lane.b32.xlu0 %v2967, 24
        %v4009 = vpop.permute.xlu0 %4008
        %4010 = vrot.lane.b32.xlu0 %v2968, 24
        %v4011 = vpop.permute.xlu0 %4010
        %4012 = vrot.lane.b32.xlu0 %v2969, 24
        %v4013 = vpop.permute.xlu0 %4012
        %4014 = vrot.lane.b32.xlu0 %v2970, 24
        %v4015 = vpop.permute.xlu0 %4014
        %4016 = vrot.lane.b32.xlu0 %v2971, 24
        %v4017 = vpop.permute.xlu0 %4016
        %4018 = vrot.lane.b32.xlu0 %v2972, 24
        %v4019 = vpop.permute.xlu0 %4018
        %4020 = vrot.lane.b32.xlu0 %v2973, 24
        %v4021 = vpop.permute.xlu0 %4020
        %4022 = vrot.lane.b32.xlu0 %v2974, 24
        %v4023 = vpop.permute.xlu0 %4022
        %4024 = vrot.lane.b32.xlu0 %v2975, 24
        %v4025 = vpop.permute.xlu0 %4024
        %4026 = vrot.lane.b32.xlu0 %v2976, 24
        %v4027 = vpop.permute.xlu0 %4026
        %4028 = vrot.lane.b32.xlu0 %v2977, 24
        %v4029 = vpop.permute.xlu0 %4028
        %4030 = vrot.lane.b32.xlu0 %v2978, 24
        %v4031 = vpop.permute.xlu0 %4030
        %4032 = vrot.lane.b32.xlu0 %v2979, 24
        %v4033 = vpop.permute.xlu0 %4032
        %4034 = vrot.lane.b32.xlu0 %v2980, 24
        %v4035 = vpop.permute.xlu0 %4034
        %4036 = vrot.lane.b32.xlu0 %v2981, 24
        %v4037 = vpop.permute.xlu0 %4036
        %4038 = vrot.lane.b32.xlu0 %v2982, 24
        %v4039 = vpop.permute.xlu0 %4038
        %4040 = vrot.lane.b32.xlu0 %v2983, 24
        %v4041 = vpop.permute.xlu0 %4040
        %4042 = vrot.lane.b32.xlu0 %v2984, 24
        %v4043 = vpop.permute.xlu0 %4042
        %4044 = vrot.lane.b32.xlu0 %v2985, 24
        %v4045 = vpop.permute.xlu0 %4044
        %4046 = vrot.lane.b32.xlu0 %v2986, 24
        %v4047 = vpop.permute.xlu0 %4046
        %4048 = vrot.lane.b32.xlu0 %v2987, 24
        %v4049 = vpop.permute.xlu0 %4048
        %4050 = vrot.lane.b32.xlu0 %v2988, 24
        %v4051 = vpop.permute.xlu0 %4050
        %4052 = vrot.lane.b32.xlu0 %v2989, 24
        %v4053 = vpop.permute.xlu0 %4052
        %4054 = vrot.lane.b32.xlu0 %v2990, 24
        %v4055 = vpop.permute.xlu0 %4054
        %4056 = vrot.lane.b32.xlu0 %v2991, 24
        %v4057 = vpop.permute.xlu0 %4056
        %4058 = vrot.lane.b32.xlu0 %v2992, 24
        %v4059 = vpop.permute.xlu0 %4058
        %4060 = vrot.lane.b32.xlu0 %v2993, 24
        %v4061 = vpop.permute.xlu0 %4060
        %4062 = vrot.lane.b32.xlu0 %v2994, 24
        %v4063 = vpop.permute.xlu0 %4062
        %4064 = vrot.lane.b32.xlu0 %v2995, 24
        %v4065 = vpop.permute.xlu0 %4064
        %4066 = vrot.lane.b32.xlu0 %v2996, 24
        %v4067 = vpop.permute.xlu0 %4066
        %4068 = vrot.lane.b32.xlu0 %v3093, 24
        %v4069 = vpop.permute.xlu0 %4068
        %4070 = vrot.lane.b32.xlu0 %v3094, 24
        %v4071 = vpop.permute.xlu0 %4070
        %4072 = vrot.lane.b32.xlu0 %v3095, 24
        %v4073 = vpop.permute.xlu0 %4072
        %4074 = vrot.lane.b32.xlu0 %v3102, 24
        %v4075 = vpop.permute.xlu0 %4074
        %4076 = vrot.lane.b32.xlu0 %v3103, 24
        %v4077 = vpop.permute.xlu0 %4076
        %4078 = vrot.lane.b32.xlu0 %v3104, 24
        %v4079 = vpop.permute.xlu0 %4078
        %4131 = vrot.lane.b32.xlu0 %v3003, 28
        %v4132 = vpop.permute.xlu0 %4131
        %4133 = vrot.lane.b32.xlu0 %v3004, 28
        %v4134 = vpop.permute.xlu0 %4133
        %4135 = vrot.lane.b32.xlu0 %v3005, 28
        %v4136 = vpop.permute.xlu0 %4135
        %4137 = vrot.lane.b32.xlu0 %v3006, 28
        %v4138 = vpop.permute.xlu0 %4137
        %4139 = vrot.lane.b32.xlu0 %v3007, 28
        %v4140 = vpop.permute.xlu0 %4139
        %4141 = vrot.lane.b32.xlu0 %v3008, 28
        %v4142 = vpop.permute.xlu0 %4141
        %4143 = vrot.lane.b32.xlu0 %v3009, 28
        %v4144 = vpop.permute.xlu0 %4143
        %4145 = vrot.lane.b32.xlu0 %v3010, 28
        %v4146 = vpop.permute.xlu0 %4145
        %4147 = vrot.lane.b32.xlu0 %v3011, 28
        %v4148 = vpop.permute.xlu0 %4147
        %4149 = vrot.lane.b32.xlu0 %v3012, 28
        %v4150 = vpop.permute.xlu0 %4149
        %4151 = vrot.lane.b32.xlu0 %v3013, 28
        %v4152 = vpop.permute.xlu0 %4151
        %4153 = vrot.lane.b32.xlu0 %v3014, 28
        %v4154 = vpop.permute.xlu0 %4153
        %4155 = vrot.lane.b32.xlu0 %v3015, 28
        %v4156 = vpop.permute.xlu0 %4155
        %4157 = vrot.lane.b32.xlu0 %v3016, 28
        %v4158 = vpop.permute.xlu0 %4157
        %4159 = vrot.lane.b32.xlu0 %v3017, 28
        %v4160 = vpop.permute.xlu0 %4159
        %4161 = vrot.lane.b32.xlu0 %v3018, 28
        %v4162 = vpop.permute.xlu0 %4161
        %4163 = vrot.lane.b32.xlu0 %v3019, 28
        %v4164 = vpop.permute.xlu0 %4163
        %4165 = vrot.lane.b32.xlu0 %v3020, 28
        %v4166 = vpop.permute.xlu0 %4165
        %4167 = vrot.lane.b32.xlu0 %v3021, 28
        %v4168 = vpop.permute.xlu0 %4167
        %4169 = vrot.lane.b32.xlu0 %v3022, 28
        %v4170 = vpop.permute.xlu0 %4169
        %4171 = vrot.lane.b32.xlu0 %v3023, 28
        %v4172 = vpop.permute.xlu0 %4171
        %4173 = vrot.lane.b32.xlu0 %v3024, 28
        %v4174 = vpop.permute.xlu0 %4173
        %4175 = vrot.lane.b32.xlu0 %v3025, 28
        %v4176 = vpop.permute.xlu0 %4175
        %4177 = vrot.lane.b32.xlu0 %v3026, 28
        %v4178 = vpop.permute.xlu0 %4177
        %4179 = vrot.lane.b32.xlu0 %v3027, 28
        %v4180 = vpop.permute.xlu0 %4179
        %4181 = vrot.lane.b32.xlu0 %v3028, 28
        %v4182 = vpop.permute.xlu0 %4181
        %4183 = vrot.lane.b32.xlu0 %v3029, 28
        %v4184 = vpop.permute.xlu0 %4183
        %4185 = vrot.lane.b32.xlu0 %v3030, 28
        %v4186 = vpop.permute.xlu0 %4185
        %4187 = vrot.lane.b32.xlu0 %v3031, 28
        %v4188 = vpop.permute.xlu0 %4187
        %4189 = vrot.lane.b32.xlu0 %v3032, 28
        %v4190 = vpop.permute.xlu0 %4189
        %4191 = vrot.lane.b32.xlu0 %v3033, 28
        %v4192 = vpop.permute.xlu0 %4191
        %4193 = vrot.lane.b32.xlu0 %v3034, 28
        %v4194 = vpop.permute.xlu0 %4193
        %4195 = vrot.lane.b32.xlu0 %v3035, 28
        %v4196 = vpop.permute.xlu0 %4195
        %4197 = vrot.lane.b32.xlu0 %v3036, 28
        %v4198 = vpop.permute.xlu0 %4197
        %4199 = vrot.lane.b32.xlu0 %v3037, 28
        %v4200 = vpop.permute.xlu0 %4199
        %4201 = vrot.lane.b32.xlu0 %v3038, 28
        %v4202 = vpop.permute.xlu0 %4201
        %4203 = vrot.lane.b32.xlu0 %v3039, 28
        %v4204 = vpop.permute.xlu0 %4203
        %4205 = vrot.lane.b32.xlu0 %v3040, 28
        %v4206 = vpop.permute.xlu0 %4205
        %4207 = vrot.lane.b32.xlu0 %v3041, 28
        %v4208 = vpop.permute.xlu0 %4207
        %4209 = vrot.lane.b32.xlu0 %v3042, 28
        %v4210 = vpop.permute.xlu0 %4209
        %4211 = vrot.lane.b32.xlu0 %v3043, 28
        %v4212 = vpop.permute.xlu0 %4211
        %4213 = vrot.lane.b32.xlu0 %v3044, 28
        %v4214 = vpop.permute.xlu0 %4213
        %4215 = vrot.lane.b32.xlu0 %v3096, 28
        %v4216 = vpop.permute.xlu0 %4215
        %4217 = vrot.lane.b32.xlu0 %v3097, 28
        %v4218 = vpop.permute.xlu0 %4217
        %4219 = vrot.lane.b32.xlu0 %v3098, 28
        %v4220 = vpop.permute.xlu0 %4219
        %4221 = vrot.lane.b32.xlu0 %v3105, 28
        %v4222 = vpop.permute.xlu0 %4221
        %4223 = vrot.lane.b32.xlu0 %v3106, 28
        %v4224 = vpop.permute.xlu0 %4223
        %4225 = vrot.lane.b32.xlu0 %v3107, 28
        %v4226 = vpop.permute.xlu0 %4225
        %4278 = vrot.lane.b32.xlu0 %v3051, 32
        %v4279 = vpop.permute.xlu0 %4278
        %4280 = vrot.lane.b32.xlu0 %v3052, 32
        %v4281 = vpop.permute.xlu0 %4280
        %4282 = vrot.lane.b32.xlu0 %v3053, 32
        %v4283 = vpop.permute.xlu0 %4282
        %4284 = vrot.lane.b32.xlu0 %v3054, 32
        %v4285 = vpop.permute.xlu0 %4284
        %4286 = vrot.lane.b32.xlu0 %v3055, 32
        %v4287 = vpop.permute.xlu0 %4286
        %4288 = vrot.lane.b32.xlu0 %v3056, 32
        %v4289 = vpop.permute.xlu0 %4288
        %4290 = vrot.lane.b32.xlu0 %v3057, 32
        %v4291 = vpop.permute.xlu0 %4290
        %4292 = vrot.lane.b32.xlu0 %v3058, 32
        %v4293 = vpop.permute.xlu0 %4292
        %4294 = vrot.lane.b32.xlu0 %v3059, 32
        %v4295 = vpop.permute.xlu0 %4294
        %4296 = vrot.lane.b32.xlu0 %v3060, 32
        %v4297 = vpop.permute.xlu0 %4296
        %4298 = vrot.lane.b32.xlu0 %v3061, 32
        %v4299 = vpop.permute.xlu0 %4298
        %4300 = vrot.lane.b32.xlu0 %v3062, 32
        %v4301 = vpop.permute.xlu0 %4300
        %4302 = vrot.lane.b32.xlu0 %v3063, 32
        %v4303 = vpop.permute.xlu0 %4302
        %4304 = vrot.lane.b32.xlu0 %v3064, 32
        %v4305 = vpop.permute.xlu0 %4304
        %4306 = vrot.lane.b32.xlu0 %v3065, 32
        %v4307 = vpop.permute.xlu0 %4306
        %4308 = vrot.lane.b32.xlu0 %v3066, 32
        %v4309 = vpop.permute.xlu0 %4308
        %4310 = vrot.lane.b32.xlu0 %v3067, 32
        %v4311 = vpop.permute.xlu0 %4310
        %4312 = vrot.lane.b32.xlu0 %v3068, 32
        %v4313 = vpop.permute.xlu0 %4312
        %4314 = vrot.lane.b32.xlu0 %v3069, 32
        %v4315 = vpop.permute.xlu0 %4314
        %4316 = vrot.lane.b32.xlu0 %v3070, 32
        %v4317 = vpop.permute.xlu0 %4316
        %4318 = vrot.lane.b32.xlu0 %v3071, 32
        %v4319 = vpop.permute.xlu0 %4318
        %4320 = vrot.lane.b32.xlu0 %v3072, 32
        %v4321 = vpop.permute.xlu0 %4320
        %4322 = vrot.lane.b32.xlu0 %v3073, 32
        %v4323 = vpop.permute.xlu0 %4322
        %4324 = vrot.lane.b32.xlu0 %v3074, 32
        %v4325 = vpop.permute.xlu0 %4324
        %4326 = vrot.lane.b32.xlu0 %v3075, 32
        %v4327 = vpop.permute.xlu0 %4326
        %4328 = vrot.lane.b32.xlu0 %v3076, 32
        %v4329 = vpop.permute.xlu0 %4328
        %4330 = vrot.lane.b32.xlu0 %v3077, 32
        %v4331 = vpop.permute.xlu0 %4330
        %4332 = vrot.lane.b32.xlu0 %v3078, 32
        %v4333 = vpop.permute.xlu0 %4332
        %4334 = vrot.lane.b32.xlu0 %v3079, 32
        %v4335 = vpop.permute.xlu0 %4334
        %4336 = vrot.lane.b32.xlu0 %v3080, 32
        %v4337 = vpop.permute.xlu0 %4336
        %4338 = vrot.lane.b32.xlu0 %v3081, 32
        %v4339 = vpop.permute.xlu0 %4338
        %4340 = vrot.lane.b32.xlu0 %v3082, 32
        %v4341 = vpop.permute.xlu0 %4340
        %4342 = vrot.lane.b32.xlu0 %v3083, 32
        %v4343 = vpop.permute.xlu0 %4342
        %4344 = vrot.lane.b32.xlu0 %v3084, 32
        %v4345 = vpop.permute.xlu0 %4344
        %4346 = vrot.lane.b32.xlu0 %v3085, 32
        %v4347 = vpop.permute.xlu0 %4346
        %4348 = vrot.lane.b32.xlu0 %v3086, 32
        %v4349 = vpop.permute.xlu0 %4348
        %4350 = vrot.lane.b32.xlu0 %v3087, 32
        %v4351 = vpop.permute.xlu0 %4350
        %4352 = vrot.lane.b32.xlu0 %v3088, 32
        %v4353 = vpop.permute.xlu0 %4352
        %4354 = vrot.lane.b32.xlu0 %v3089, 32
        %v4355 = vpop.permute.xlu0 %4354
        %4356 = vrot.lane.b32.xlu0 %v3090, 32
        %v4357 = vpop.permute.xlu0 %4356
        %4358 = vrot.lane.b32.xlu0 %v3091, 32
        %v4359 = vpop.permute.xlu0 %4358
        %4360 = vrot.lane.b32.xlu0 %v3092, 32
        %v4361 = vpop.permute.xlu0 %4360
        %4362 = vrot.lane.b32.xlu0 %v3099, 32
        %v4363 = vpop.permute.xlu0 %4362
        %4364 = vrot.lane.b32.xlu0 %v3100, 32
        %v4365 = vpop.permute.xlu0 %4364
        %4366 = vrot.lane.b32.xlu0 %v3101, 32
        %v4367 = vpop.permute.xlu0 %4366
        %4368 = vrot.lane.b32.xlu0 %v3108, 32
        %v4369 = vpop.permute.xlu0 %4368
        %4370 = vrot.lane.b32.xlu0 %v3109, 32
        %v4371 = vpop.permute.xlu0 %4370
        %4372 = vrot.lane.b32.xlu0 %v3110, 32
        %v4373 = vpop.permute.xlu0 %4372
        %v4422 = vsel %vm708, %v2949, %v3160
        %v4423 = vsel %vm708, %v2950, %v3162
        %v4424 = vsel %vm708, %v2951, %v3164
        %v4425 = vsel %vm708, %v2952, %v3166
        %v4426 = vsel %vm708, %v2953, %v3168
        %v4427 = vsel %vm708, %v2954, %v3170
        %v4428 = vsel %vm708, %v2955, %v3172
        %v4429 = vsel %vm708, %v2956, %v3174
        %v4430 = vsel %vm708, %v2957, %v3176
        %v4431 = vsel %vm708, %v2958, %v3178
        %v4432 = vsel %vm708, %v2959, %v3180
        %v4433 = vsel %vm708, %v2960, %v3182
        %v4434 = vsel %vm708, %v2961, %v3184
        %v4435 = vsel %vm708, %v2962, %v3186
        %v4436 = vsel %vm708, %v2963, %v3188
        %v4437 = vsel %vm708, %v2964, %v3190
        %v4438 = vsel %vm708, %v2965, %v3192
        %v4439 = vsel %vm708, %v2966, %v3194
        %v4440 = vsel %vm708, %v2967, %v3196
        %v4441 = vsel %vm708, %v2968, %v3198
        %v4442 = vsel %vm708, %v2969, %v3200
        %v4443 = vsel %vm708, %v2970, %v3202
        %v4444 = vsel %vm708, %v2971, %v3204
        %v4445 = vsel %vm708, %v2972, %v3206
        %v4446 = vsel %vm708, %v2973, %v3208
        %v4447 = vsel %vm708, %v2974, %v3210
        %v4448 = vsel %vm708, %v2975, %v3212
        %v4449 = vsel %vm708, %v2976, %v3214
        %v4450 = vsel %vm708, %v2977, %v3216
        %v4451 = vsel %vm708, %v2978, %v3218
        %v4452 = vsel %vm708, %v2979, %v3220
        %v4453 = vsel %vm708, %v2980, %v3222
        %v4454 = vsel %vm708, %v2981, %v3224
        %v4455 = vsel %vm708, %v2982, %v3226
        %v4456 = vsel %vm708, %v2983, %v3228
        %v4457 = vsel %vm708, %v2984, %v3230
        %v4458 = vsel %vm708, %v2985, %v3232
        %v4459 = vsel %vm708, %v2986, %v3234
        %v4460 = vsel %vm708, %v2987, %v3236
        %v4461 = vsel %vm708, %v2988, %v3238
        %v4462 = vsel %vm708, %v2989, %v3240
        %v4463 = vsel %vm708, %v2990, %v3242
        %v4464 = vsel %vm708, %v2991, %v3244
        %v4465 = vsel %vm708, %v2992, %v3246
        %v4466 = vsel %vm708, %v2993, %v3248
        %v4467 = vsel %vm708, %v2994, %v3250
        %v4468 = vsel %vm708, %v2995, %v3252
        %v4469 = vsel %vm708, %v2996, %v3254
        %vm4470 = vcmask 64512
        %v4471 = vsel %vm4470, %v4422, %v3352
        %v4472 = vsel %vm4470, %v4423, %v3354
        %v4473 = vsel %vm4470, %v4424, %v3356
        %v4474 = vsel %vm4470, %v4425, %v3358
        %v4475 = vsel %vm4470, %v4426, %v3360
        %v4476 = vsel %vm4470, %v4427, %v3362
        %v4477 = vsel %vm4470, %v4428, %v3364
        %v4478 = vsel %vm4470, %v4429, %v3366
        %v4479 = vsel %vm4470, %v4430, %v3368
        %v4480 = vsel %vm4470, %v4431, %v3370
        %v4481 = vsel %vm4470, %v4432, %v3372
        %v4482 = vsel %vm4470, %v4433, %v3374
        %v4483 = vsel %vm4470, %v4434, %v3376
        %v4484 = vsel %vm4470, %v4435, %v3378
        %v4485 = vsel %vm4470, %v4436, %v3380
        %v4486 = vsel %vm4470, %v4437, %v3382
        %v4487 = vsel %vm4470, %v4438, %v3384
        %v4488 = vsel %vm4470, %v4439, %v3386
        %v4489 = vsel %vm4470, %v4440, %v3388
        %v4490 = vsel %vm4470, %v4441, %v3390
        %v4491 = vsel %vm4470, %v4442, %v3392
        %v4492 = vsel %vm4470, %v4443, %v3394
        %v4493 = vsel %vm4470, %v4444, %v3396
        %v4494 = vsel %vm4470, %v4445, %v3398
        %v4495 = vsel %vm4470, %v4446, %v3400
        %v4496 = vsel %vm4470, %v4447, %v3402
        %v4497 = vsel %vm4470, %v4448, %v3404
        %v4498 = vsel %vm4470, %v4449, %v3406
        %v4499 = vsel %vm4470, %v4450, %v3408
        %v4500 = vsel %vm4470, %v4451, %v3410
        %v4501 = vsel %vm4470, %v4452, %v3412
        %v4502 = vsel %vm4470, %v4453, %v3414
        %v4503 = vsel %vm4470, %v4454, %v3416
        %v4504 = vsel %vm4470, %v4455, %v3418
        %v4505 = vsel %vm4470, %v4456, %v3420
        %v4506 = vsel %vm4470, %v4457, %v3422
        %v4507 = vsel %vm4470, %v4458, %v3424
        %v4508 = vsel %vm4470, %v4459, %v3426
        %v4509 = vsel %vm4470, %v4460, %v3428
        %v4510 = vsel %vm4470, %v4461, %v3430
        %v4511 = vsel %vm4470, %v4462, %v3432
        %v4512 = vsel %vm4470, %v4463, %v3434
        %v4513 = vsel %vm4470, %v4464, %v3436
        %v4514 = vsel %vm4470, %v4465, %v3438
        %v4515 = vsel %vm4470, %v4466, %v3440
        %v4516 = vsel %vm4470, %v4467, %v3442
        %v4517 = vsel %vm4470, %v4468, %v3444
        %v4518 = vsel %vm4470, %v4469, %v3446
        %vm4519 = vcmask 97280
        %v4520 = vsel %vm4519, %v4471, %v3544
        %v4521 = vsel %vm4519, %v4472, %v3546
        %v4522 = vsel %vm4519, %v4473, %v3548
        %v4523 = vsel %vm4519, %v4474, %v3550
        %v4524 = vsel %vm4519, %v4475, %v3552
        %v4525 = vsel %vm4519, %v4476, %v3554
        %v4526 = vsel %vm4519, %v4477, %v3556
        %v4527 = vsel %vm4519, %v4478, %v3558
        %v4528 = vsel %vm4519, %v4479, %v3560
        %v4529 = vsel %vm4519, %v4480, %v3562
        %v4530 = vsel %vm4519, %v4481, %v3564
        %v4531 = vsel %vm4519, %v4482, %v3566
        %v4532 = vsel %vm4519, %v4483, %v3568
        %v4533 = vsel %vm4519, %v4484, %v3570
        %v4534 = vsel %vm4519, %v4485, %v3572
        %v4535 = vsel %vm4519, %v4486, %v3574
        %v4536 = vsel %vm4519, %v4487, %v3576
        %v4537 = vsel %vm4519, %v4488, %v3578
        %v4538 = vsel %vm4519, %v4489, %v3580
        %v4539 = vsel %vm4519, %v4490, %v3582
        %v4540 = vsel %vm4519, %v4491, %v3584
        %v4541 = vsel %vm4519, %v4492, %v3586
        %v4542 = vsel %vm4519, %v4493, %v3588
        %v4543 = vsel %vm4519, %v4494, %v3590
        %v4544 = vsel %vm4519, %v4495, %v3592
        %v4545 = vsel %vm4519, %v4496, %v3594
        %v4546 = vsel %vm4519, %v4497, %v3596
        %v4547 = vsel %vm4519, %v4498, %v3598
        %v4548 = vsel %vm4519, %v4499, %v3600
        %v4549 = vsel %vm4519, %v4500, %v3602
        %v4550 = vsel %vm4519, %v4501, %v3604
        %v4551 = vsel %vm4519, %v4502, %v3606
        %v4552 = vsel %vm4519, %v4503, %v3608
        %v4553 = vsel %vm4519, %v4504, %v3610
        %v4554 = vsel %vm4519, %v4505, %v3612
        %v4555 = vsel %vm4519, %v4506, %v3614
        %v4556 = vsel %vm4519, %v4507, %v3616
        %v4557 = vsel %vm4519, %v4508, %v3618
        %v4558 = vsel %vm4519, %v4509, %v3620
        %v4559 = vsel %vm4519, %v4510, %v3622
        %v4560 = vsel %vm4519, %v4511, %v3624
        %v4561 = vsel %vm4519, %v4512, %v3626
        %v4562 = vsel %vm4519, %v4513, %v3628
        %v4563 = vsel %vm4519, %v4514, %v3630
        %v4564 = vsel %vm4519, %v4515, %v3632
        %v4565 = vsel %vm4519, %v4516, %v3634
        %v4566 = vsel %vm4519, %v4517, %v3636
        %v4567 = vsel %vm4519, %v4518, %v3638
        %vm4568 = vcmask 130048
        %v4569 = vsel %vm4568, %v4520, %v3691
        %v4570 = vsel %vm4568, %v4521, %v3693
        %v4571 = vsel %vm4568, %v4522, %v3695
        %v4572 = vsel %vm4568, %v4523, %v3697
        %v4573 = vsel %vm4568, %v4524, %v3699
        %v4574 = vsel %vm4568, %v4525, %v3701
        %v4575 = vsel %vm4568, %v4526, %v3703
        %v4576 = vsel %vm4568, %v4527, %v3705
        %v4577 = vsel %vm4568, %v4528, %v3707
        %v4578 = vsel %vm4568, %v4529, %v3709
        %v4579 = vsel %vm4568, %v4530, %v3711
        %v4580 = vsel %vm4568, %v4531, %v3713
        %v4581 = vsel %vm4568, %v4532, %v3715
        %v4582 = vsel %vm4568, %v4533, %v3717
        %v4583 = vsel %vm4568, %v4534, %v3719
        %v4584 = vsel %vm4568, %v4535, %v3721
        %v4585 = vsel %vm4568, %v4536, %v3723
        %v4586 = vsel %vm4568, %v4537, %v3725
        %v4587 = vsel %vm4568, %v4538, %v3727
        %v4588 = vsel %vm4568, %v4539, %v3729
        %v4589 = vsel %vm4568, %v4540, %v3731
        %v4590 = vsel %vm4568, %v4541, %v3733
        %v4591 = vsel %vm4568, %v4542, %v3735
        %v4592 = vsel %vm4568, %v4543, %v3737
        %v4593 = vsel %vm4568, %v4544, %v3739
        %v4594 = vsel %vm4568, %v4545, %v3741
        %v4595 = vsel %vm4568, %v4546, %v3743
        %v4596 = vsel %vm4568, %v4547, %v3745
        %v4597 = vsel %vm4568, %v4548, %v3747
        %v4598 = vsel %vm4568, %v4549, %v3749
        %v4599 = vsel %vm4568, %v4550, %v3751
        %v4600 = vsel %vm4568, %v4551, %v3753
        %v4601 = vsel %vm4568, %v4552, %v3755
        %v4602 = vsel %vm4568, %v4553, %v3757
        %v4603 = vsel %vm4568, %v4554, %v3759
        %v4604 = vsel %vm4568, %v4555, %v3761
        %v4605 = vsel %vm4568, %v4556, %v3763
        %v4606 = vsel %vm4568, %v4557, %v3765
        %v4607 = vsel %vm4568, %v4558, %v3767
        %v4608 = vsel %vm4568, %v4559, %v3769
        %v4609 = vsel %vm4568, %v4560, %v3771
        %v4610 = vsel %vm4568, %v4561, %v3773
        %v4611 = vsel %vm4568, %v4562, %v3775
        %v4612 = vsel %vm4568, %v4563, %v3777
        %v4613 = vsel %vm4568, %v4564, %v3779
        %v4614 = vsel %vm4568, %v4565, %v3781
        %v4615 = vsel %vm4568, %v4566, %v3783
        %v4616 = vsel %vm4568, %v4567, %v3785
        %vm4617 = vcmask 162816
        %v4618 = vsel %vm4617, %v4569, %v3838
        %v4619 = vsel %vm4617, %v4570, %v3840
        %v4620 = vsel %vm4617, %v4571, %v3842
        %v4621 = vsel %vm4617, %v4572, %v3844
        %v4622 = vsel %vm4617, %v4573, %v3846
        %v4623 = vsel %vm4617, %v4574, %v3848
        %v4624 = vsel %vm4617, %v4575, %v3850
        %v4625 = vsel %vm4617, %v4576, %v3852
        %v4626 = vsel %vm4617, %v4577, %v3854
        %v4627 = vsel %vm4617, %v4578, %v3856
        %v4628 = vsel %vm4617, %v4579, %v3858
        %v4629 = vsel %vm4617, %v4580, %v3860
        %v4630 = vsel %vm4617, %v4581, %v3862
        %v4631 = vsel %vm4617, %v4582, %v3864
        %v4632 = vsel %vm4617, %v4583, %v3866
        %v4633 = vsel %vm4617, %v4584, %v3868
        %v4634 = vsel %vm4617, %v4585, %v3870
        %v4635 = vsel %vm4617, %v4586, %v3872
        %v4636 = vsel %vm4617, %v4587, %v3874
        %v4637 = vsel %vm4617, %v4588, %v3876
        %v4638 = vsel %vm4617, %v4589, %v3878
        %v4639 = vsel %vm4617, %v4590, %v3880
        %v4640 = vsel %vm4617, %v4591, %v3882
        %v4641 = vsel %vm4617, %v4592, %v3884
        %v4642 = vsel %vm4617, %v4593, %v3886
        %v4643 = vsel %vm4617, %v4594, %v3888
        %v4644 = vsel %vm4617, %v4595, %v3890
        %v4645 = vsel %vm4617, %v4596, %v3892
        %v4646 = vsel %vm4617, %v4597, %v3894
        %v4647 = vsel %vm4617, %v4598, %v3896
        %v4648 = vsel %vm4617, %v4599, %v3898
        %v4649 = vsel %vm4617, %v4600, %v3900
        %v4650 = vsel %vm4617, %v4601, %v3902
        %v4651 = vsel %vm4617, %v4602, %v3904
        %v4652 = vsel %vm4617, %v4603, %v3906
        %v4653 = vsel %vm4617, %v4604, %v3908
        %v4654 = vsel %vm4617, %v4605, %v3910
        %v4655 = vsel %vm4617, %v4606, %v3912
        %v4656 = vsel %vm4617, %v4607, %v3914
        %v4657 = vsel %vm4617, %v4608, %v3916
        %v4658 = vsel %vm4617, %v4609, %v3918
        %v4659 = vsel %vm4617, %v4610, %v3920
        %v4660 = vsel %vm4617, %v4611, %v3922
        %v4661 = vsel %vm4617, %v4612, %v3924
        %v4662 = vsel %vm4617, %v4613, %v3926
        %v4663 = vsel %vm4617, %v4614, %v3928
        %v4664 = vsel %vm4617, %v4615, %v3930
        %v4665 = vsel %vm4617, %v4616, %v3932
        %vm4666 = vcmask 195584
        %v4667 = vsel %vm4666, %v4618, %v3985
        %v4668 = vsel %vm4666, %v4619, %v3987
        %v4669 = vsel %vm4666, %v4620, %v3989
        %v4670 = vsel %vm4666, %v4621, %v3991
        %v4671 = vsel %vm4666, %v4622, %v3993
        %v4672 = vsel %vm4666, %v4623, %v3995
        %v4673 = vsel %vm4666, %v4624, %v3997
        %v4674 = vsel %vm4666, %v4625, %v3999
        %v4675 = vsel %vm4666, %v4626, %v4001
        %v4676 = vsel %vm4666, %v4627, %v4003
        %v4677 = vsel %vm4666, %v4628, %v4005
        %v4678 = vsel %vm4666, %v4629, %v4007
        %v4679 = vsel %vm4666, %v4630, %v4009
        %v4680 = vsel %vm4666, %v4631, %v4011
        %v4681 = vsel %vm4666, %v4632, %v4013
        %v4682 = vsel %vm4666, %v4633, %v4015
        %v4683 = vsel %vm4666, %v4634, %v4017
        %v4684 = vsel %vm4666, %v4635, %v4019
        %v4685 = vsel %vm4666, %v4636, %v4021
        %v4686 = vsel %vm4666, %v4637, %v4023
        %v4687 = vsel %vm4666, %v4638, %v4025
        %v4688 = vsel %vm4666, %v4639, %v4027
        %v4689 = vsel %vm4666, %v4640, %v4029
        %v4690 = vsel %vm4666, %v4641, %v4031
        %v4691 = vsel %vm4666, %v4642, %v4033
        %v4692 = vsel %vm4666, %v4643, %v4035
        %v4693 = vsel %vm4666, %v4644, %v4037
        %v4694 = vsel %vm4666, %v4645, %v4039
        %v4695 = vsel %vm4666, %v4646, %v4041
        %v4696 = vsel %vm4666, %v4647, %v4043
        %v4697 = vsel %vm4666, %v4648, %v4045
        %v4698 = vsel %vm4666, %v4649, %v4047
        %v4699 = vsel %vm4666, %v4650, %v4049
        %v4700 = vsel %vm4666, %v4651, %v4051
        %v4701 = vsel %vm4666, %v4652, %v4053
        %v4702 = vsel %vm4666, %v4653, %v4055
        %v4703 = vsel %vm4666, %v4654, %v4057
        %v4704 = vsel %vm4666, %v4655, %v4059
        %v4705 = vsel %vm4666, %v4656, %v4061
        %v4706 = vsel %vm4666, %v4657, %v4063
        %v4707 = vsel %vm4666, %v4658, %v4065
        %v4708 = vsel %vm4666, %v4659, %v4067
        %v4709 = vsel %vm4666, %v4660, %v4069
        %v4710 = vsel %vm4666, %v4661, %v4071
        %v4711 = vsel %vm4666, %v4662, %v4073
        %v4712 = vsel %vm4666, %v4663, %v4075
        %v4713 = vsel %vm4666, %v4664, %v4077
        %v4714 = vsel %vm4666, %v4665, %v4079
        %vm4715 = vcmask 228352
        %v4716 = vsel %vm4715, %v4667, %v4132
        %v4717 = vsel %vm4715, %v4668, %v4134
        %v4718 = vsel %vm4715, %v4669, %v4136
        %v4719 = vsel %vm4715, %v4670, %v4138
        %v4720 = vsel %vm4715, %v4671, %v4140
        %v4721 = vsel %vm4715, %v4672, %v4142
        %v4722 = vsel %vm4715, %v4673, %v4144
        %v4723 = vsel %vm4715, %v4674, %v4146
        %v4724 = vsel %vm4715, %v4675, %v4148
        %v4725 = vsel %vm4715, %v4676, %v4150
        %v4726 = vsel %vm4715, %v4677, %v4152
        %v4727 = vsel %vm4715, %v4678, %v4154
        %v4728 = vsel %vm4715, %v4679, %v4156
        %v4729 = vsel %vm4715, %v4680, %v4158
        %v4730 = vsel %vm4715, %v4681, %v4160
        %v4731 = vsel %vm4715, %v4682, %v4162
        %v4732 = vsel %vm4715, %v4683, %v4164
        %v4733 = vsel %vm4715, %v4684, %v4166
        %v4734 = vsel %vm4715, %v4685, %v4168
        %v4735 = vsel %vm4715, %v4686, %v4170
        %v4736 = vsel %vm4715, %v4687, %v4172
        %v4737 = vsel %vm4715, %v4688, %v4174
        %v4738 = vsel %vm4715, %v4689, %v4176
        %v4739 = vsel %vm4715, %v4690, %v4178
        %v4740 = vsel %vm4715, %v4691, %v4180
        %v4741 = vsel %vm4715, %v4692, %v4182
        %v4742 = vsel %vm4715, %v4693, %v4184
        %v4743 = vsel %vm4715, %v4694, %v4186
        %v4744 = vsel %vm4715, %v4695, %v4188
        %v4745 = vsel %vm4715, %v4696, %v4190
        %v4746 = vsel %vm4715, %v4697, %v4192
        %v4747 = vsel %vm4715, %v4698, %v4194
        %v4748 = vsel %vm4715, %v4699, %v4196
        %v4749 = vsel %vm4715, %v4700, %v4198
        %v4750 = vsel %vm4715, %v4701, %v4200
        %v4751 = vsel %vm4715, %v4702, %v4202
        %v4752 = vsel %vm4715, %v4703, %v4204
        %v4753 = vsel %vm4715, %v4704, %v4206
        %v4754 = vsel %vm4715, %v4705, %v4208
        %v4755 = vsel %vm4715, %v4706, %v4210
        %v4756 = vsel %vm4715, %v4707, %v4212
        %v4757 = vsel %vm4715, %v4708, %v4214
        %v4758 = vsel %vm4715, %v4709, %v4216
        %v4759 = vsel %vm4715, %v4710, %v4218
        %v4760 = vsel %vm4715, %v4711, %v4220
        %v4761 = vsel %vm4715, %v4712, %v4222
        %v4762 = vsel %vm4715, %v4713, %v4224
        %v4763 = vsel %vm4715, %v4714, %v4226
        %vm4764 = vcmask 261120
        %v4765 = vsel %vm4764, %v4716, %v4279
        %v4766 = vsel %vm4764, %v4717, %v4281
        %v4767 = vsel %vm4764, %v4718, %v4283
        %v4768 = vsel %vm4764, %v4719, %v4285
        %v4769 = vsel %vm4764, %v4720, %v4287
        %v4770 = vsel %vm4764, %v4721, %v4289
        %v4771 = vsel %vm4764, %v4722, %v4291
        %v4772 = vsel %vm4764, %v4723, %v4293
        %v4773 = vsel %vm4764, %v4724, %v4295
        %v4774 = vsel %vm4764, %v4725, %v4297
        %v4775 = vsel %vm4764, %v4726, %v4299
        %v4776 = vsel %vm4764, %v4727, %v4301
        %v4777 = vsel %vm4764, %v4728, %v4303
        %v4778 = vsel %vm4764, %v4729, %v4305
        %v4779 = vsel %vm4764, %v4730, %v4307
        %v4780 = vsel %vm4764, %v4731, %v4309
        %v4781 = vsel %vm4764, %v4732, %v4311
        %v4782 = vsel %vm4764, %v4733, %v4313
        %v4783 = vsel %vm4764, %v4734, %v4315
        %v4784 = vsel %vm4764, %v4735, %v4317
        %v4785 = vsel %vm4764, %v4736, %v4319
        %v4786 = vsel %vm4764, %v4737, %v4321
        %v4787 = vsel %vm4764, %v4738, %v4323
        %v4788 = vsel %vm4764, %v4739, %v4325
        %v4789 = vsel %vm4764, %v4740, %v4327
        %v4790 = vsel %vm4764, %v4741, %v4329
        %v4791 = vsel %vm4764, %v4742, %v4331
        %v4792 = vsel %vm4764, %v4743, %v4333
        %v4793 = vsel %vm4764, %v4744, %v4335
        %v4794 = vsel %vm4764, %v4745, %v4337
        %v4795 = vsel %vm4764, %v4746, %v4339
        %v4796 = vsel %vm4764, %v4747, %v4341
        %v4797 = vsel %vm4764, %v4748, %v4343
        %v4798 = vsel %vm4764, %v4749, %v4345
        %v4799 = vsel %vm4764, %v4750, %v4347
        %v4800 = vsel %vm4764, %v4751, %v4349
        %v4801 = vsel %vm4764, %v4752, %v4351
        %v4802 = vsel %vm4764, %v4753, %v4353
        %v4803 = vsel %vm4764, %v4754, %v4355
        %v4804 = vsel %vm4764, %v4755, %v4357
        %v4805 = vsel %vm4764, %v4756, %v4359
        %v4806 = vsel %vm4764, %v4757, %v4361
        %v4807 = vsel %vm4764, %v4758, %v4363
        %v4808 = vsel %vm4764, %v4759, %v4365
        %v4809 = vsel %vm4764, %v4760, %v4367
        %v4810 = vsel %vm4764, %v4761, %v4369
        %v4811 = vsel %vm4764, %v4762, %v4371
        %v4812 = vsel %vm4764, %v4763, %v4373
        %v4813 = vld [vmem:[%s7] sm:$0xff]
        %v4814 = vld [vmem:[%s7 + $0x8] sm:$0xff]
        %v4815 = vld [vmem:[%s7 + $0x10] sm:$0xff]
        %v4816 = vld [vmem:[%s7 + $0x18] sm:$0xff]
        %v4817 = vld [vmem:[%s7 + $0x20] sm:$0xf]
        %v4818 = vld [vmem:[%s8] sm:$0x1]
        %v4820 = vlaneseq
        %v4821 = vshrl.u32 %v4820, 7
        %v4822 = vsub.s32 0, %v4821
        %v4823 = vrot.slane %v4818, %v4822
        %vm4825 = vcmask 293888
        %v4827 = vsel %vm4825, %v4765, 0
        %v4830 = vsel %vm4825, %v4766, 0
        %v4833 = vsel %vm4825, %v4767, 0
        %v4836 = vsel %vm4825, %v4768, 0
        %v4839 = vsel %vm4825, %v4769, 0
        %v4842 = vsel %vm4825, %v4770, 0
        %v4845 = vsel %vm4825, %v4771, 0
        %v4848 = vsel %vm4825, %v4772, 0
        %v4851 = vsel %vm4825, %v4773, 0
        %v4854 = vsel %vm4825, %v4774, 0
        %v4857 = vsel %vm4825, %v4775, 0
        %v4860 = vsel %vm4825, %v4776, 0
        %v4863 = vsel %vm4825, %v4777, 0
        %v4866 = vsel %vm4825, %v4778, 0
        %v4869 = vsel %vm4825, %v4779, 0
        %v4872 = vsel %vm4825, %v4780, 0
        %v4875 = vsel %vm4825, %v4781, 0
        %v4878 = vsel %vm4825, %v4782, 0
        %v4881 = vsel %vm4825, %v4783, 0
        %v4884 = vsel %vm4825, %v4784, 0
        %v4887 = vsel %vm4825, %v4785, 0
        %v4890 = vsel %vm4825, %v4786, 0
        %v4893 = vsel %vm4825, %v4787, 0
        %v4896 = vsel %vm4825, %v4788, 0
        %v4899 = vsel %vm4825, %v4789, 0
        %v4902 = vsel %vm4825, %v4790, 0
        %v4905 = vsel %vm4825, %v4791, 0
        %v4908 = vsel %vm4825, %v4792, 0
        %v4911 = vsel %vm4825, %v4793, 0
        %v4914 = vsel %vm4825, %v4794, 0
        %v4917 = vsel %vm4825, %v4795, 0
        %v4920 = vsel %vm4825, %v4796, 0
        %v4923 = vsel %vm4825, %v4797, 0
        %v4926 = vsel %vm4825, %v4798, 0
        %v4929 = vsel %vm4825, %v4799, 0
        %v4932 = vsel %vm4825, %v4800, 0
        %v4935 = vsel %vm4825, %v4801, 0
        %v4938 = vsel %vm4825, %v4802, 0
        %v4941 = vsel %vm4825, %v4803, 0
        %v4944 = vsel %vm4825, %v4804, 0
        %v4947 = vsel %vm4825, %v4805, 0
        %v4950 = vsel %vm4825, %v4806, 0
        %v4953 = vsel %vm4825, %v4807, 0
        %v4956 = vsel %vm4825, %v4808, 0
        %v4959 = vsel %vm4825, %v4809, 0
        %v4962 = vsel %vm4825, %v4810, 0
        %v4965 = vsel %vm4825, %v4811, 0
        %v4968 = vsel %vm4825, %v4812, 0
        %v4971 = vsel %vm1926, %v4817, 0
        %4973 = vmatprep.subr.mxu0 0.0
        %4974 = vmatpush1.msra.mxu0 %v4813
        %4975 = vmatprep.subr.mxu0 0.0
        %4976 = vmatpush1.msra.mxu0 %v4814
        %4977 = vmatprep.subr.mxu0 0.0
        %4978 = vmatpush1.msra.mxu0 %v4815
        %4979 = vmatprep.subr.mxu0 0.0
        %4980 = vmatpush1.msra.mxu0 %v4816
        %4981 = vmatprep.subr.mxu0 0.0
        %4982 = vmatpush1.msra.mxu0 %v4971
        %4983 = vmatprep.subr.mxu0 0.0
        %4984 = vmatpush1.msra.mxu0 0.0
        %4985 = vmatprep.subr.mxu0 0.0
        %4986 = vmatpush1.msra.mxu0 0.0
        %4987 = vmatprep.subr.mxu0 0.0
        %4988 = vmatpush1.msra.mxu0 0.0
        %4989 = vmatprep.subr.mxu0 0.0
        %4990 = vmatpush1.msra.mxu0 0.0
        %4991 = vmatprep.subr.mxu0 0.0
        %4992 = vmatpush1.msra.mxu0 0.0
        %4993 = vmatprep.subr.mxu0 0.0
        %4994 = vmatpush1.msra.mxu0 0.0
        %4995 = vmatprep.subr.mxu0 0.0
        %4996 = vmatpush1.msra.mxu0 0.0
        %4997 = vmatprep.subr.mxu0 0.0
        %4998 = vmatpush1.msra.mxu0 0.0
        %4999 = vmatprep.subr.mxu0 0.0
        %5000 = vmatpush1.msra.mxu0 0.0
        %5001 = vmatprep.subr.mxu0 0.0
        %5002 = vmatpush1.msra.mxu0 0.0
        %5003 = vmatprep.subr.mxu0 0.0
        %5004 = vmatpush1.msra.mxu0 0.0
        %5005 = vmatprep.subr.mxu0 0.0
        %5006 = vmatpush1.msra.mxu0 0.0
        %5007 = vmatprep.subr.mxu0 0.0
        %5008 = vmatpush1.msra.mxu0 0.0
        %5009 = vmatprep.subr.mxu0 0.0
        %5010 = vmatpush1.msra.mxu0 0.0
        %5011 = vmatprep.subr.mxu0 0.0
        %5012 = vmatpush1.msra.mxu0 0.0
        %5013 = vmatprep.subr.mxu0 0.0
        %5014 = vmatpush1.msra.mxu0 0.0
        %5015 = vmatprep.subr.mxu0 0.0
        %5016 = vmatpush1.msra.mxu0 0.0
        %5017 = vmatprep.subr.mxu0 0.0
        %5018 = vmatpush1.msra.mxu0 0.0
        %5019 = vmatprep.subr.mxu0 0.0
        %5020 = vmatpush1.msra.mxu0 0.0
        %5021 = vmatprep.subr.mxu0 0.0
        %5022 = vmatpush1.msra.mxu0 0.0
        %5023 = vmatprep.subr.mxu0 0.0
        %5024 = vmatpush1.msra.mxu0 0.0
        %5025 = vmatprep.subr.mxu0 0.0
        %5026 = vmatpush1.msra.mxu0 0.0
        %5027 = vmatprep.subr.mxu0 0.0
        %5028 = vmatpush1.msra.mxu0 0.0
        %5029 = vmatprep.subr.mxu0 0.0
        %5030 = vmatpush1.msra.mxu0 0.0
        %5031 = vmatprep.subr.mxu0 0.0
        %5032 = vmatpush1.msra.mxu0 0.0
        %5033 = vmatprep.subr.mxu0 0.0
        %5034 = vmatpush1.msra.mxu0 0.0
        %5035 = vmatprep.subr.mxu0 0.0
        %5036 = vmatpush1.msra.mxu0 0.0
        %5037 = vmatprep.mubr.f32.mxu0 0.0
        %5038 = vmatmul.mubr.f32.gmra.mrb[0].mxu0 %v4827
        %v5039 = vpop.f32.mrb[0].mxu0
        %v5040 = vadd.f32 %v4823, %v5039
        %v5041 = vpop.f32.mrb[0].mxu0
        %5042 = vmatprep.mubr.f32.mxu0 0.0
        %5043 = vmatmul.mubr.f32.gmra.mrb[0].mxu0 %v4830
        %v5044 = vpop.f32.mrb[0].mxu0
        %v5045 = vadd.f32 %v4823, %v5044
        %v5046 = vpop.f32.mrb[0].mxu0
        %5047 = vmatprep.mubr.f32.mxu0 0.0
        %5048 = vmatmul.mubr.f32.gmra.mrb[0].mxu0 %v4833
        %v5049 = vpop.f32.mrb[0].mxu0
        %v5050 = vadd.f32 %v4823, %v5049
        %v5051 = vpop.f32.mrb[0].mxu0
        %5052 = vmatprep.mubr.f32.mxu0 0.0
        %5053 = vmatmul.mubr.f32.gmra.mrb[0].mxu0 %v4836
        %v5054 = vpop.f32.mrb[0].mxu0
        %v5055 = vadd.f32 %v4823, %v5054
        %v5056 = vpop.f32.mrb[0].mxu0
        %5057 = vmatprep.mubr.f32.mxu0 0.0
        %5058 = vmatmul.mubr.f32.gmra.mrb[0].mxu0 %v4839
        %v5059 = vpop.f32.mrb[0].mxu0
        %v5060 = vadd.f32 %v4823, %v5059
        %v5061 = vpop.f32.mrb[0].mxu0
        %5062 = vmatprep.mubr.f32.mxu0 0.0
        %5063 = vmatmul.mubr.f32.gmra.mrb[0].mxu0 %v4842
        %v5064 = vpop.f32.mrb[0].mxu0
        %v5065 = vadd.f32 %v4823, %v5064
        %v5066 = vpop.f32.mrb[0].mxu0
        %5067 = vmatprep.mubr.f32.mxu0 0.0
        %5068 = vmatmul.mubr.f32.gmra.mrb[0].mxu0 %v4845
        %v5069 = vpop.f32.mrb[0].mxu0
        %v5070 = vadd.f32 %v4823, %v5069
        %v5071 = vpop.f32.mrb[0].mxu0
        %5072 = vmatprep.mubr.f32.mxu0 0.0
        %5073 = vmatmul.mubr.f32.gmra.mrb[0].mxu0 %v4848
        %v5074 = vpop.f32.mrb[0].mxu0
        %v5075 = vadd.f32 %v4823, %v5074
        %v5076 = vpop.f32.mrb[0].mxu0
        %5077 = vmatprep.mubr.f32.mxu0 0.0
        %5078 = vmatmul.mubr.f32.gmra.mrb[0].mxu0 %v4851
        %v5079 = vpop.f32.mrb[0].mxu0
        %v5080 = vadd.f32 %v4823, %v5079
        %v5081 = vpop.f32.mrb[0].mxu0
        %5082 = vmatprep.mubr.f32.mxu0 0.0
        %5083 = vmatmul.mubr.f32.gmra.mrb[0].mxu0 %v4854
        %v5084 = vpop.f32.mrb[0].mxu0
        %v5085 = vadd.f32 %v4823, %v5084
        %v5086 = vpop.f32.mrb[0].mxu0
        %5087 = vmatprep.mubr.f32.mxu0 0.0
        %5088 = vmatmul.mubr.f32.gmra.mrb[0].mxu0 %v4857
        %v5089 = vpop.f32.mrb[0].mxu0
        %v5090 = vadd.f32 %v4823, %v5089
        %v5091 = vpop.f32.mrb[0].mxu0
        %5092 = vmatprep.mubr.f32.mxu0 0.0
        %5093 = vmatmul.mubr.f32.gmra.mrb[0].mxu0 %v4860
        %v5094 = vpop.f32.mrb[0].mxu0
        %v5095 = vadd.f32 %v4823, %v5094
        %v5096 = vpop.f32.mrb[0].mxu0
        %5097 = vmatprep.mubr.f32.mxu0 0.0
        %5098 = vmatmul.mubr.f32.gmra.mrb[0].mxu0 %v4863
        %v5099 = vpop.f32.mrb[0].mxu0
        %v5100 = vadd.f32 %v4823, %v5099
        %v5101 = vpop.f32.mrb[0].mxu0
        %5102 = vmatprep.mubr.f32.mxu0 0.0
        %5103 = vmatmul.mubr.f32.gmra.mrb[0].mxu0 %v4866
        %v5104 = vpop.f32.mrb[0].mxu0
        %v5105 = vadd.f32 %v4823, %v5104
        %v5106 = vpop.f32.mrb[0].mxu0
        %5107 = vmatprep.mubr.f32.mxu0 0.0
        %5108 = vmatmul.mubr.f32.gmra.mrb[0].mxu0 %v4869
        %v5109 = vpop.f32.mrb[0].mxu0
        %v5110 = vadd.f32 %v4823, %v5109
        %v5111 = vpop.f32.mrb[0].mxu0
        %5112 = vmatprep.mubr.f32.mxu0 0.0
        %5113 = vmatmul.mubr.f32.gmra.mrb[0].mxu0 %v4872
        %v5114 = vpop.f32.mrb[0].mxu0
        %v5115 = vadd.f32 %v4823, %v5114
        %v5116 = vpop.f32.mrb[0].mxu0
        %5117 = vmatprep.mubr.f32.mxu0 0.0
        %5118 = vmatmul.mubr.f32.gmra.mrb[0].mxu0 %v4875
        %v5119 = vpop.f32.mrb[0].mxu0
        %v5120 = vadd.f32 %v4823, %v5119
        %v5121 = vpop.f32.mrb[0].mxu0
        %5122 = vmatprep.mubr.f32.mxu0 0.0
        %5123 = vmatmul.mubr.f32.gmra.mrb[0].mxu0 %v4878
        %v5124 = vpop.f32.mrb[0].mxu0
        %v5125 = vadd.f32 %v4823, %v5124
        %v5126 = vpop.f32.mrb[0].mxu0
        %5127 = vmatprep.mubr.f32.mxu0 0.0
        %5128 = vmatmul.mubr.f32.gmra.mrb[0].mxu0 %v4881
        %v5129 = vpop.f32.mrb[0].mxu0
        %v5130 = vadd.f32 %v4823, %v5129
        %v5131 = vpop.f32.mrb[0].mxu0
        %5132 = vmatprep.mubr.f32.mxu0 0.0
        %5133 = vmatmul.mubr.f32.gmra.mrb[0].mxu0 %v4884
        %v5134 = vpop.f32.mrb[0].mxu0
        %v5135 = vadd.f32 %v4823, %v5134
        %v5136 = vpop.f32.mrb[0].mxu0
        %5137 = vmatprep.mubr.f32.mxu0 0.0
        %5138 = vmatmul.mubr.f32.gmra.mrb[0].mxu0 %v4887
        %v5139 = vpop.f32.mrb[0].mxu0
        %v5140 = vadd.f32 %v4823, %v5139
        %v5141 = vpop.f32.mrb[0].mxu0
        %5142 = vmatprep.mubr.f32.mxu0 0.0
        %5143 = vmatmul.mubr.f32.gmra.mrb[0].mxu0 %v4890
        %v5144 = vpop.f32.mrb[0].mxu0
        %v5145 = vadd.f32 %v4823, %v5144
        %v5146 = vpop.f32.mrb[0].mxu0
        %5147 = vmatprep.mubr.f32.mxu0 0.0
        %5148 = vmatmul.mubr.f32.gmra.mrb[0].mxu0 %v4893
        %v5149 = vpop.f32.mrb[0].mxu0
        %v5150 = vadd.f32 %v4823, %v5149
        %v5151 = vpop.f32.mrb[0].mxu0
        %5152 = vmatprep.mubr.f32.mxu0 0.0
        %5153 = vmatmul.mubr.f32.gmra.mrb[0].mxu0 %v4896
        %v5154 = vpop.f32.mrb[0].mxu0
        %v5155 = vadd.f32 %v4823, %v5154
        %v5156 = vpop.f32.mrb[0].mxu0
        %5157 = vmatprep.mubr.f32.mxu0 0.0
        %5158 = vmatmul.mubr.f32.gmra.mrb[0].mxu0 %v4899
        %v5159 = vpop.f32.mrb[0].mxu0
        %v5160 = vadd.f32 %v4823, %v5159
        %v5161 = vpop.f32.mrb[0].mxu0
        %5162 = vmatprep.mubr.f32.mxu0 0.0
        %5163 = vmatmul.mubr.f32.gmra.mrb[0].mxu0 %v4902
        %v5164 = vpop.f32.mrb[0].mxu0
        %v5165 = vadd.f32 %v4823, %v5164
        %v5166 = vpop.f32.mrb[0].mxu0
        %5167 = vmatprep.mubr.f32.mxu0 0.0
        %5168 = vmatmul.mubr.f32.gmra.mrb[0].mxu0 %v4905
        %v5169 = vpop.f32.mrb[0].mxu0
        %v5170 = vadd.f32 %v4823, %v5169
        %v5171 = vpop.f32.mrb[0].mxu0
        %5172 = vmatprep.mubr.f32.mxu0 0.0
        %5173 = vmatmul.mubr.f32.gmra.mrb[0].mxu0 %v4908
        %v5174 = vpop.f32.mrb[0].mxu0
        %v5175 = vadd.f32 %v4823, %v5174
        %v5176 = vpop.f32.mrb[0].mxu0
        %5177 = vmatprep.mubr.f32.mxu0 0.0
        %5178 = vmatmul.mubr.f32.gmra.mrb[0].mxu0 %v4911
        %v5179 = vpop.f32.mrb[0].mxu0
        %v5180 = vadd.f32 %v4823, %v5179
        %v5181 = vpop.f32.mrb[0].mxu0
        %5182 = vmatprep.mubr.f32.mxu0 0.0
        %5183 = vmatmul.mubr.f32.gmra.mrb[0].mxu0 %v4914
        %v5184 = vpop.f32.mrb[0].mxu0
        %v5185 = vadd.f32 %v4823, %v5184
        %v5186 = vpop.f32.mrb[0].mxu0
        %5187 = vmatprep.mubr.f32.mxu0 0.0
        %5188 = vmatmul.mubr.f32.gmra.mrb[0].mxu0 %v4917
        %v5189 = vpop.f32.mrb[0].mxu0
        %v5190 = vadd.f32 %v4823, %v5189
        %v5191 = vpop.f32.mrb[0].mxu0
        %5192 = vmatprep.mubr.f32.mxu0 0.0
        %5193 = vmatmul.mubr.f32.gmra.mrb[0].mxu0 %v4920
        %v5194 = vpop.f32.mrb[0].mxu0
        %v5195 = vadd.f32 %v4823, %v5194
        %v5196 = vpop.f32.mrb[0].mxu0
        %5197 = vmatprep.mubr.f32.mxu0 0.0
        %5198 = vmatmul.mubr.f32.gmra.mrb[0].mxu0 %v4923
        %v5199 = vpop.f32.mrb[0].mxu0
        %v5200 = vadd.f32 %v4823, %v5199
        %v5201 = vpop.f32.mrb[0].mxu0
        %5202 = vmatprep.mubr.f32.mxu0 0.0
        %5203 = vmatmul.mubr.f32.gmra.mrb[0].mxu0 %v4926
        %v5204 = vpop.f32.mrb[0].mxu0
        %v5205 = vadd.f32 %v4823, %v5204
        %v5206 = vpop.f32.mrb[0].mxu0
        %5207 = vmatprep.mubr.f32.mxu0 0.0
        %5208 = vmatmul.mubr.f32.gmra.mrb[0].mxu0 %v4929
        %v5209 = vpop.f32.mrb[0].mxu0
        %v5210 = vadd.f32 %v4823, %v5209
        %v5211 = vpop.f32.mrb[0].mxu0
        %5212 = vmatprep.mubr.f32.mxu0 0.0
        %5213 = vmatmul.mubr.f32.gmra.mrb[0].mxu0 %v4932
        %v5214 = vpop.f32.mrb[0].mxu0
        %v5215 = vadd.f32 %v4823, %v5214
        %v5216 = vpop.f32.mrb[0].mxu0
        %5217 = vmatprep.mubr.f32.mxu0 0.0
        %5218 = vmatmul.mubr.f32.gmra.mrb[0].mxu0 %v4935
        %v5219 = vpop.f32.mrb[0].mxu0
        %v5220 = vadd.f32 %v4823, %v5219
        %v5221 = vpop.f32.mrb[0].mxu0
        %5222 = vmatprep.mubr.f32.mxu0 0.0
        %5223 = vmatmul.mubr.f32.gmra.mrb[0].mxu0 %v4938
        %v5224 = vpop.f32.mrb[0].mxu0
        %v5225 = vadd.f32 %v4823, %v5224
        %v5226 = vpop.f32.mrb[0].mxu0
        %5227 = vmatprep.mubr.f32.mxu0 0.0
        %5228 = vmatmul.mubr.f32.gmra.mrb[0].mxu0 %v4941
        %v5229 = vpop.f32.mrb[0].mxu0
        %v5230 = vadd.f32 %v4823, %v5229
        %v5231 = vpop.f32.mrb[0].mxu0
        %5232 = vmatprep.mubr.f32.mxu0 0.0
        %5233 = vmatmul.mubr.f32.gmra.mrb[0].mxu0 %v4944
        %v5234 = vpop.f32.mrb[0].mxu0
        %v5235 = vadd.f32 %v4823, %v5234
        %v5236 = vpop.f32.mrb[0].mxu0
        %5237 = vmatprep.mubr.f32.mxu0 0.0
        %5238 = vmatmul.mubr.f32.gmra.mrb[0].mxu0 %v4947
        %v5239 = vpop.f32.mrb[0].mxu0
        %v5240 = vadd.f32 %v4823, %v5239
        %v5241 = vpop.f32.mrb[0].mxu0
        %5242 = vmatprep.mubr.f32.mxu0 0.0
        %5243 = vmatmul.mubr.f32.gmra.mrb[0].mxu0 %v4950
        %v5244 = vpop.f32.mrb[0].mxu0
        %v5245 = vadd.f32 %v4823, %v5244
        %v5246 = vpop.f32.mrb[0].mxu0
        %5247 = vmatprep.mubr.f32.mxu0 0.0
        %5248 = vmatmul.mubr.f32.gmra.mrb[0].mxu0 %v4953
        %v5249 = vpop.f32.mrb[0].mxu0
        %v5250 = vadd.f32 %v4823, %v5249
        %v5251 = vpop.f32.mrb[0].mxu0
        %5252 = vmatprep.mubr.f32.mxu0 0.0
        %5253 = vmatmul.mubr.f32.gmra.mrb[0].mxu0 %v4956
        %v5254 = vpop.f32.mrb[0].mxu0
        %v5255 = vadd.f32 %v4823, %v5254
        %v5256 = vpop.f32.mrb[0].mxu0
        %5257 = vmatprep.mubr.f32.mxu0 0.0
        %5258 = vmatmul.mubr.f32.gmra.mrb[0].mxu0 %v4959
        %v5259 = vpop.f32.mrb[0].mxu0
        %v5260 = vadd.f32 %v4823, %v5259
        %v5261 = vpop.f32.mrb[0].mxu0
        %5262 = vmatprep.mubr.f32.mxu0 0.0
        %5263 = vmatmul.mubr.f32.gmra.mrb[0].mxu0 %v4962
        %v5264 = vpop.f32.mrb[0].mxu0
        %v5265 = vadd.f32 %v4823, %v5264
        %v5266 = vpop.f32.mrb[0].mxu0
        %5267 = vmatprep.mubr.f32.mxu0 0.0
        %5268 = vmatmul.mubr.f32.gmra.mrb[0].mxu0 %v4965
        %v5269 = vpop.f32.mrb[0].mxu0
        %v5270 = vadd.f32 %v4823, %v5269
        %v5271 = vpop.f32.mrb[0].mxu0
        %5272 = vmatprep.mubr.f32.mxu0 0.0
        %5273 = vmatmul.mubr.f32.gmra.mrb[0].mxu0 %v4968
        %v5274 = vpop.f32.mrb[0].mxu0
        %v5275 = vadd.f32 %v4823, %v5274
        %v5276 = vpop.f32.mrb[0].mxu0
        %5277 = vdwg.mxu0
        %v5278 = vmax.f32 %v5040, 0.0
        %v5279 = vmax.f32 %v5045, 0.0
        %v5280 = vmax.f32 %v5050, 0.0
        %v5281 = vmax.f32 %v5055, 0.0
        %v5282 = vmax.f32 %v5060, 0.0
        %v5283 = vmax.f32 %v5065, 0.0
        %v5284 = vmax.f32 %v5070, 0.0
        %v5285 = vmax.f32 %v5075, 0.0
        %v5286 = vmax.f32 %v5080, 0.0
        %v5287 = vmax.f32 %v5085, 0.0
        %v5288 = vmax.f32 %v5090, 0.0
        %v5289 = vmax.f32 %v5095, 0.0
        %v5290 = vmax.f32 %v5100, 0.0
        %v5291 = vmax.f32 %v5105, 0.0
        %v5292 = vmax.f32 %v5110, 0.0
        %v5293 = vmax.f32 %v5115, 0.0
        %v5294 = vmax.f32 %v5120, 0.0
        %v5295 = vmax.f32 %v5125, 0.0
        %v5296 = vmax.f32 %v5130, 0.0
        %v5297 = vmax.f32 %v5135, 0.0
        %v5298 = vmax.f32 %v5140, 0.0
        %v5299 = vmax.f32 %v5145, 0.0
        %v5300 = vmax.f32 %v5150, 0.0
        %v5301 = vmax.f32 %v5155, 0.0
        %v5302 = vmax.f32 %v5160, 0.0
        %v5303 = vmax.f32 %v5165, 0.0
        %v5304 = vmax.f32 %v5170, 0.0
        %v5305 = vmax.f32 %v5175, 0.0
        %v5306 = vmax.f32 %v5180, 0.0
        %v5307 = vmax.f32 %v5185, 0.0
        %v5308 = vmax.f32 %v5190, 0.0
        %v5309 = vmax.f32 %v5195, 0.0
        %v5310 = vmax.f32 %v5200, 0.0
        %v5311 = vmax.f32 %v5205, 0.0
        %v5312 = vmax.f32 %v5210, 0.0
        %v5313 = vmax.f32 %v5215, 0.0
        %v5314 = vmax.f32 %v5220, 0.0
        %v5315 = vmax.f32 %v5225, 0.0
        %v5316 = vmax.f32 %v5230, 0.0
        %v5317 = vmax.f32 %v5235, 0.0
        %v5318 = vmax.f32 %v5240, 0.0
        %v5319 = vmax.f32 %v5245, 0.0
        %v5320 = vmax.f32 %v5250, 0.0
        %v5321 = vmax.f32 %v5255, 0.0
        %v5322 = vmax.f32 %v5260, 0.0
        %v5323 = vmax.f32 %v5265, 0.0
        %v5324 = vmax.f32 %v5270, 0.0
        %v5325 = vmax.f32 %v5275, 0.0
        %v5326 = vld [vmem:[%s9] sm:$0xf]
        %v5327 = vld [vmem:[%s10] sm:$0x1]
        %v5329 = vlaneseq
        %v5330 = vshrl.u32 %v5329, 7
        %v5331 = vsub.s32 0, %v5330
        %v5332 = vrot.slane %v5327, %v5331
        %v5335 = vsel %vm708, %v5278, 0
        %v5338 = vsel %vm708, %v5279, 0
        %v5341 = vsel %vm708, %v5280, 0
        %v5344 = vsel %vm708, %v5281, 0
        %v5347 = vsel %vm708, %v5282, 0
        %v5350 = vsel %vm708, %v5283, 0
        %v5353 = vsel %vm708, %v5284, 0
        %v5356 = vsel %vm708, %v5285, 0
        %v5359 = vsel %vm708, %v5286, 0
        %v5362 = vsel %vm708, %v5287, 0
        %v5365 = vsel %vm708, %v5288, 0
        %v5368 = vsel %vm708, %v5289, 0
        %v5371 = vsel %vm708, %v5290, 0
        %v5374 = vsel %vm708, %v5291, 0
        %v5377 = vsel %vm708, %v5292, 0
        %v5380 = vsel %vm708, %v5293, 0
        %v5383 = vsel %vm708, %v5294, 0
        %v5386 = vsel %vm708, %v5295, 0
        %v5389 = vsel %vm708, %v5296, 0
        %v5392 = vsel %vm708, %v5297, 0
        %v5395 = vsel %vm708, %v5298, 0
        %v5398 = vsel %vm708, %v5299, 0
        %v5401 = vsel %vm708, %v5300, 0
        %v5404 = vsel %vm708, %v5301, 0
        %v5407 = vsel %vm708, %v5302, 0
        %v5410 = vsel %vm708, %v5303, 0
        %v5413 = vsel %vm708, %v5304, 0
        %v5416 = vsel %vm708, %v5305, 0
        %v5419 = vsel %vm708, %v5306, 0
        %v5422 = vsel %vm708, %v5307, 0
        %v5425 = vsel %vm708, %v5308, 0
        %v5428 = vsel %vm708, %v5309, 0
        %v5431 = vsel %vm708, %v5310, 0
        %v5434 = vsel %vm708, %v5311, 0
        %v5437 = vsel %vm708, %v5312, 0
        %v5440 = vsel %vm708, %v5313, 0
        %v5443 = vsel %vm708, %v5314, 0
        %v5446 = vsel %vm708, %v5315, 0
        %v5449 = vsel %vm708, %v5316, 0
        %v5452 = vsel %vm708, %v5317, 0
        %v5455 = vsel %vm708, %v5318, 0
        %v5458 = vsel %vm708, %v5319, 0
        %v5461 = vsel %vm708, %v5320, 0
        %v5464 = vsel %vm708, %v5321, 0
        %v5467 = vsel %vm708, %v5322, 0
        %v5470 = vsel %vm708, %v5323, 0
        %v5473 = vsel %vm708, %v5324, 0
        %v5476 = vsel %vm708, %v5325, 0
        %v5479 = vsel %vm1926, %v5326, 0
        %5481 = vmatprep.subr.mxu0 0.0
        %5482 = vmatpush1.msra.mxu0 %v5479
        %5483 = vmatprep.subr.mxu0 0.0
        %5484 = vmatpush1.msra.mxu0 0.0
        %5485 = vmatprep.subr.mxu0 0.0
        %5486 = vmatpush1.msra.mxu0 0.0
        %5487 = vmatprep.subr.mxu0 0.0
        %5488 = vmatpush1.msra.mxu0 0.0
        %5489 = vmatprep.subr.mxu0 0.0
        %5490 = vmatpush1.msra.mxu0 0.0
        %5491 = vmatprep.subr.mxu0 0.0
        %5492 = vmatpush1.msra.mxu0 0.0
        %5493 = vmatprep.subr.mxu0 0.0
        %5494 = vmatpush1.msra.mxu0 0.0
        %5495 = vmatprep.subr.mxu0 0.0
        %5496 = vmatpush1.msra.mxu0 0.0
        %5497 = vmatprep.subr.mxu0 0.0
        %5498 = vmatpush1.msra.mxu0 0.0
        %5499 = vmatprep.subr.mxu0 0.0
        %5500 = vmatpush1.msra.mxu0 0.0
        %5501 = vmatprep.subr.mxu0 0.0
        %5502 = vmatpush1.msra.mxu0 0.0
        %5503 = vmatprep.subr.mxu0 0.0
        %5504 = vmatpush1.msra.mxu0 0.0
        %5505 = vmatprep.subr.mxu0 0.0
        %5506 = vmatpush1.msra.mxu0 0.0
        %5507 = vmatprep.subr.mxu0 0.0
        %5508 = vmatpush1.msra.mxu0 0.0
        %5509 = vmatprep.subr.mxu0 0.0
        %5510 = vmatpush1.msra.mxu0 0.0
        %5511 = vmatprep.subr.mxu0 0.0
        %5512 = vmatpush1.msra.mxu0 0.0
        %5513 = vmatprep.subr.mxu0 0.0
        %5514 = vmatpush1.msra.mxu0 0.0
        %5515 = vmatprep.subr.mxu0 0.0
        %5516 = vmatpush1.msra.mxu0 0.0
        %5517 = vmatprep.subr.mxu0 0.0
        %5518 = vmatpush1.msra.mxu0 0.0
        %5519 = vmatprep.subr.mxu0 0.0
        %5520 = vmatpush1.msra.mxu0 0.0
        %5521 = vmatprep.subr.mxu0 0.0
        %5522 = vmatpush1.msra.mxu0 0.0
        %5523 = vmatprep.subr.mxu0 0.0
        %5524 = vmatpush1.msra.mxu0 0.0
        %5525 = vmatprep.subr.mxu0 0.0
        %5526 = vmatpush1.msra.mxu0 0.0
        %5527 = vmatprep.subr.mxu0 0.0
        %5528 = vmatpush1.msra.mxu0 0.0
        %5529 = vmatprep.subr.mxu0 0.0
        %5530 = vmatpush1.msra.mxu0 0.0
        %5531 = vmatprep.subr.mxu0 0.0
        %5532 = vmatpush1.msra.mxu0 0.0
        %5533 = vmatprep.subr.mxu0 0.0
        %5534 = vmatpush1.msra.mxu0 0.0
        %5535 = vmatprep.subr.mxu0 0.0
        %5536 = vmatpush1.msra.mxu0 0.0
        %5537 = vmatprep.subr.mxu0 0.0
        %5538 = vmatpush1.msra.mxu0 0.0
        %5539 = vmatprep.subr.mxu0 0.0
        %5540 = vmatpush1.msra.mxu0 0.0
        %5541 = vmatprep.subr.mxu0 0.0
        %5542 = vmatpush1.msra.mxu0 0.0
        %5543 = vmatprep.subr.mxu0 0.0
        %5544 = vmatpush1.msra.mxu0 0.0
        %5545 = vmatprep.mubr.f32.mxu0 0.0
        %5546 = vmatmul.mubr.f32.gmra.mrb[0].mxu0 %v5335
        %v5547 = vpop.f32.mrb[0].mxu0
        %v5548 = vadd.f32 %v5332, %v5547
        %v5549 = vpop.f32.mrb[0].mxu0
        %5550 = vmatprep.mubr.f32.mxu0 0.0
        %5551 = vmatmul.mubr.f32.gmra.mrb[0].mxu0 %v5338
        %v5552 = vpop.f32.mrb[0].mxu0
        %v5553 = vadd.f32 %v5332, %v5552
        %v5554 = vpop.f32.mrb[0].mxu0
        %5555 = vmatprep.mubr.f32.mxu0 0.0
        %5556 = vmatmul.mubr.f32.gmra.mrb[0].mxu0 %v5341
        %v5557 = vpop.f32.mrb[0].mxu0
        %v5558 = vadd.f32 %v5332, %v5557
        %v5559 = vpop.f32.mrb[0].mxu0
        %5560 = vmatprep.mubr.f32.mxu0 0.0
        %5561 = vmatmul.mubr.f32.gmra.mrb[0].mxu0 %v5344
        %v5562 = vpop.f32.mrb[0].mxu0
        %v5563 = vadd.f32 %v5332, %v5562
        %v5564 = vpop.f32.mrb[0].mxu0
        %5565 = vmatprep.mubr.f32.mxu0 0.0
        %5566 = vmatmul.mubr.f32.gmra.mrb[0].mxu0 %v5347
        %v5567 = vpop.f32.mrb[0].mxu0
        %v5568 = vadd.f32 %v5332, %v5567
        %v5569 = vpop.f32.mrb[0].mxu0
        %5570 = vmatprep.mubr.f32.mxu0 0.0
        %5571 = vmatmul.mubr.f32.gmra.mrb[0].mxu0 %v5350
        %v5572 = vpop.f32.mrb[0].mxu0
        %v5573 = vadd.f32 %v5332, %v5572
        %v5574 = vpop.f32.mrb[0].mxu0
        %5575 = vmatprep.mubr.f32.mxu0 0.0
        %5576 = vmatmul.mubr.f32.gmra.mrb[0].mxu0 %v5353
        %v5577 = vpop.f32.mrb[0].mxu0
        %v5578 = vadd.f32 %v5332, %v5577
        %v5579 = vpop.f32.mrb[0].mxu0
        %5580 = vmatprep.mubr.f32.mxu0 0.0
        %5581 = vmatmul.mubr.f32.gmra.mrb[0].mxu0 %v5356
        %v5582 = vpop.f32.mrb[0].mxu0
        %v5583 = vadd.f32 %v5332, %v5582
        %v5584 = vpop.f32.mrb[0].mxu0
        %5585 = vmatprep.mubr.f32.mxu0 0.0
        %5586 = vmatmul.mubr.f32.gmra.mrb[0].mxu0 %v5359
        %v5587 = vpop.f32.mrb[0].mxu0
        %v5588 = vadd.f32 %v5332, %v5587
        %v5589 = vpop.f32.mrb[0].mxu0
        %5590 = vmatprep.mubr.f32.mxu0 0.0
        %5591 = vmatmul.mubr.f32.gmra.mrb[0].mxu0 %v5362
        %v5592 = vpop.f32.mrb[0].mxu0
        %v5593 = vadd.f32 %v5332, %v5592
        %v5594 = vpop.f32.mrb[0].mxu0
        %5595 = vmatprep.mubr.f32.mxu0 0.0
        %5596 = vmatmul.mubr.f32.gmra.mrb[0].mxu0 %v5365
        %v5597 = vpop.f32.mrb[0].mxu0
        %v5598 = vadd.f32 %v5332, %v5597
        %v5599 = vpop.f32.mrb[0].mxu0
        %5600 = vmatprep.mubr.f32.mxu0 0.0
        %5601 = vmatmul.mubr.f32.gmra.mrb[0].mxu0 %v5368
        %v5602 = vpop.f32.mrb[0].mxu0
        %v5603 = vadd.f32 %v5332, %v5602
        %v5604 = vpop.f32.mrb[0].mxu0
        %5605 = vmatprep.mubr.f32.mxu0 0.0
        %5606 = vmatmul.mubr.f32.gmra.mrb[0].mxu0 %v5371
        %v5607 = vpop.f32.mrb[0].mxu0
        %v5608 = vadd.f32 %v5332, %v5607
        %v5609 = vpop.f32.mrb[0].mxu0
        %5610 = vmatprep.mubr.f32.mxu0 0.0
        %5611 = vmatmul.mubr.f32.gmra.mrb[0].mxu0 %v5374
        %v5612 = vpop.f32.mrb[0].mxu0
        %v5613 = vadd.f32 %v5332, %v5612
        %v5614 = vpop.f32.mrb[0].mxu0
        %5615 = vmatprep.mubr.f32.mxu0 0.0
        %5616 = vmatmul.mubr.f32.gmra.mrb[0].mxu0 %v5377
        %v5617 = vpop.f32.mrb[0].mxu0
        %v5618 = vadd.f32 %v5332, %v5617
        %v5619 = vpop.f32.mrb[0].mxu0
        %5620 = vmatprep.mubr.f32.mxu0 0.0
        %5621 = vmatmul.mubr.f32.gmra.mrb[0].mxu0 %v5380
        %v5622 = vpop.f32.mrb[0].mxu0
        %v5623 = vadd.f32 %v5332, %v5622
        %v5624 = vpop.f32.mrb[0].mxu0
        %5625 = vmatprep.mubr.f32.mxu0 0.0
        %5626 = vmatmul.mubr.f32.gmra.mrb[0].mxu0 %v5383
        %v5627 = vpop.f32.mrb[0].mxu0
        %v5628 = vadd.f32 %v5332, %v5627
        %v5629 = vpop.f32.mrb[0].mxu0
        %5630 = vmatprep.mubr.f32.mxu0 0.0
        %5631 = vmatmul.mubr.f32.gmra.mrb[0].mxu0 %v5386
        %v5632 = vpop.f32.mrb[0].mxu0
        %v5633 = vadd.f32 %v5332, %v5632
        %v5634 = vpop.f32.mrb[0].mxu0
        %5635 = vmatprep.mubr.f32.mxu0 0.0
        %5636 = vmatmul.mubr.f32.gmra.mrb[0].mxu0 %v5389
        %v5637 = vpop.f32.mrb[0].mxu0
        %v5638 = vadd.f32 %v5332, %v5637
        %v5639 = vpop.f32.mrb[0].mxu0
        %5640 = vmatprep.mubr.f32.mxu0 0.0
        %5641 = vmatmul.mubr.f32.gmra.mrb[0].mxu0 %v5392
        %v5642 = vpop.f32.mrb[0].mxu0
        %v5643 = vadd.f32 %v5332, %v5642
        %v5644 = vpop.f32.mrb[0].mxu0
        %5645 = vmatprep.mubr.f32.mxu0 0.0
        %5646 = vmatmul.mubr.f32.gmra.mrb[0].mxu0 %v5395
        %v5647 = vpop.f32.mrb[0].mxu0
        %v5648 = vadd.f32 %v5332, %v5647
        %v5649 = vpop.f32.mrb[0].mxu0
        %5650 = vmatprep.mubr.f32.mxu0 0.0
        %5651 = vmatmul.mubr.f32.gmra.mrb[0].mxu0 %v5398
        %v5652 = vpop.f32.mrb[0].mxu0
        %v5653 = vadd.f32 %v5332, %v5652
        %v5654 = vpop.f32.mrb[0].mxu0
        %5655 = vmatprep.mubr.f32.mxu0 0.0
        %5656 = vmatmul.mubr.f32.gmra.mrb[0].mxu0 %v5401
        %v5657 = vpop.f32.mrb[0].mxu0
        %v5658 = vadd.f32 %v5332, %v5657
        %v5659 = vpop.f32.mrb[0].mxu0
        %5660 = vmatprep.mubr.f32.mxu0 0.0
        %5661 = vmatmul.mubr.f32.gmra.mrb[0].mxu0 %v5404
        %v5662 = vpop.f32.mrb[0].mxu0
        %v5663 = vadd.f32 %v5332, %v5662
        %v5664 = vpop.f32.mrb[0].mxu0
        %5665 = vmatprep.mubr.f32.mxu0 0.0
        %5666 = vmatmul.mubr.f32.gmra.mrb[0].mxu0 %v5407
        %v5667 = vpop.f32.mrb[0].mxu0
        %v5668 = vadd.f32 %v5332, %v5667
        %v5669 = vpop.f32.mrb[0].mxu0
        %5670 = vmatprep.mubr.f32.mxu0 0.0
        %5671 = vmatmul.mubr.f32.gmra.mrb[0].mxu0 %v5410
        %v5672 = vpop.f32.mrb[0].mxu0
        %v5673 = vadd.f32 %v5332, %v5672
        %v5674 = vpop.f32.mrb[0].mxu0
        %5675 = vmatprep.mubr.f32.mxu0 0.0
        %5676 = vmatmul.mubr.f32.gmra.mrb[0].mxu0 %v5413
        %v5677 = vpop.f32.mrb[0].mxu0
        %v5678 = vadd.f32 %v5332, %v5677
        %v5679 = vpop.f32.mrb[0].mxu0
        %5680 = vmatprep.mubr.f32.mxu0 0.0
        %5681 = vmatmul.mubr.f32.gmra.mrb[0].mxu0 %v5416
        %v5682 = vpop.f32.mrb[0].mxu0
        %v5683 = vadd.f32 %v5332, %v5682
        %v5684 = vpop.f32.mrb[0].mxu0
        %5685 = vmatprep.mubr.f32.mxu0 0.0
        %5686 = vmatmul.mubr.f32.gmra.mrb[0].mxu0 %v5419
        %v5687 = vpop.f32.mrb[0].mxu0
        %v5688 = vadd.f32 %v5332, %v5687
        %v5689 = vpop.f32.mrb[0].mxu0
        %5690 = vmatprep.mubr.f32.mxu0 0.0
        %5691 = vmatmul.mubr.f32.gmra.mrb[0].mxu0 %v5422
        %v5692 = vpop.f32.mrb[0].mxu0
        %v5693 = vadd.f32 %v5332, %v5692
        %v5694 = vpop.f32.mrb[0].mxu0
        %5695 = vmatprep.mubr.f32.mxu0 0.0
        %5696 = vmatmul.mubr.f32.gmra.mrb[0].mxu0 %v5425
        %v5697 = vpop.f32.mrb[0].mxu0
        %v5698 = vadd.f32 %v5332, %v5697
        %v5699 = vpop.f32.mrb[0].mxu0
        %5700 = vmatprep.mubr.f32.mxu0 0.0
        %5701 = vmatmul.mubr.f32.gmra.mrb[0].mxu0 %v5428
        %v5702 = vpop.f32.mrb[0].mxu0
        %v5703 = vadd.f32 %v5332, %v5702
        %v5704 = vpop.f32.mrb[0].mxu0
        %5705 = vmatprep.mubr.f32.mxu0 0.0
        %5706 = vmatmul.mubr.f32.gmra.mrb[0].mxu0 %v5431
        %v5707 = vpop.f32.mrb[0].mxu0
        %v5708 = vadd.f32 %v5332, %v5707
        %v5709 = vpop.f32.mrb[0].mxu0
        %5710 = vmatprep.mubr.f32.mxu0 0.0
        %5711 = vmatmul.mubr.f32.gmra.mrb[0].mxu0 %v5434
        %v5712 = vpop.f32.mrb[0].mxu0
        %v5713 = vadd.f32 %v5332, %v5712
        %v5714 = vpop.f32.mrb[0].mxu0
        %5715 = vmatprep.mubr.f32.mxu0 0.0
        %5716 = vmatmul.mubr.f32.gmra.mrb[0].mxu0 %v5437
        %v5717 = vpop.f32.mrb[0].mxu0
        %v5718 = vadd.f32 %v5332, %v5717
        %v5719 = vpop.f32.mrb[0].mxu0
        %5720 = vmatprep.mubr.f32.mxu0 0.0
        %5721 = vmatmul.mubr.f32.gmra.mrb[0].mxu0 %v5440
        %v5722 = vpop.f32.mrb[0].mxu0
        %v5723 = vadd.f32 %v5332, %v5722
        %v5724 = vpop.f32.mrb[0].mxu0
        %5725 = vmatprep.mubr.f32.mxu0 0.0
        %5726 = vmatmul.mubr.f32.gmra.mrb[0].mxu0 %v5443
        %v5727 = vpop.f32.mrb[0].mxu0
        %v5728 = vadd.f32 %v5332, %v5727
        %v5729 = vpop.f32.mrb[0].mxu0
        %5730 = vmatprep.mubr.f32.mxu0 0.0
        %5731 = vmatmul.mubr.f32.gmra.mrb[0].mxu0 %v5446
        %v5732 = vpop.f32.mrb[0].mxu0
        %v5733 = vadd.f32 %v5332, %v5732
        %v5734 = vpop.f32.mrb[0].mxu0
        %5735 = vmatprep.mubr.f32.mxu0 0.0
        %5736 = vmatmul.mubr.f32.gmra.mrb[0].mxu0 %v5449
        %v5737 = vpop.f32.mrb[0].mxu0
        %v5738 = vadd.f32 %v5332, %v5737
        %v5739 = vpop.f32.mrb[0].mxu0
        %5740 = vmatprep.mubr.f32.mxu0 0.0
        %5741 = vmatmul.mubr.f32.gmra.mrb[0].mxu0 %v5452
        %v5742 = vpop.f32.mrb[0].mxu0
        %v5743 = vadd.f32 %v5332, %v5742
        %v5744 = vpop.f32.mrb[0].mxu0
        %5745 = vmatprep.mubr.f32.mxu0 0.0
        %5746 = vmatmul.mubr.f32.gmra.mrb[0].mxu0 %v5455
        %v5747 = vpop.f32.mrb[0].mxu0
        %v5748 = vadd.f32 %v5332, %v5747
        %v5749 = vpop.f32.mrb[0].mxu0
        %5750 = vmatprep.mubr.f32.mxu0 0.0
        %5751 = vmatmul.mubr.f32.gmra.mrb[0].mxu0 %v5458
        %v5752 = vpop.f32.mrb[0].mxu0
        %v5753 = vadd.f32 %v5332, %v5752
        %v5754 = vpop.f32.mrb[0].mxu0
        %5755 = vmatprep.mubr.f32.mxu0 0.0
        %5756 = vmatmul.mubr.f32.gmra.mrb[0].mxu0 %v5461
        %v5757 = vpop.f32.mrb[0].mxu0
        %v5758 = vadd.f32 %v5332, %v5757
        %v5759 = vpop.f32.mrb[0].mxu0
        %5760 = vmatprep.mubr.f32.mxu0 0.0
        %5761 = vmatmul.mubr.f32.gmra.mrb[0].mxu0 %v5464
        %v5762 = vpop.f32.mrb[0].mxu0
        %v5763 = vadd.f32 %v5332, %v5762
        %v5764 = vpop.f32.mrb[0].mxu0
        %5765 = vmatprep.mubr.f32.mxu0 0.0
        %5766 = vmatmul.mubr.f32.gmra.mrb[0].mxu0 %v5467
        %v5767 = vpop.f32.mrb[0].mxu0
        %v5768 = vadd.f32 %v5332, %v5767
        %v5769 = vpop.f32.mrb[0].mxu0
        %5770 = vmatprep.mubr.f32.mxu0 0.0
        %5771 = vmatmul.mubr.f32.gmra.mrb[0].mxu0 %v5470
        %v5772 = vpop.f32.mrb[0].mxu0
        %v5773 = vadd.f32 %v5332, %v5772
        %v5774 = vpop.f32.mrb[0].mxu0
        %5775 = vmatprep.mubr.f32.mxu0 0.0
        %5776 = vmatmul.mubr.f32.gmra.mrb[0].mxu0 %v5473
        %v5777 = vpop.f32.mrb[0].mxu0
        %v5778 = vadd.f32 %v5332, %v5777
        %v5779 = vpop.f32.mrb[0].mxu0
        %5780 = vmatprep.mubr.f32.mxu0 0.0
        %5781 = vmatmul.mubr.f32.gmra.mrb[0].mxu0 %v5476
        %v5782 = vpop.f32.mrb[0].mxu0
        %v5783 = vadd.f32 %v5332, %v5782
        %v5784 = vpop.f32.mrb[0].mxu0
        %5785 = vdwg.mxu0
        %v5786 = vmax.f32 %v5548, 0.0
        %v5787 = vmax.f32 %v5553, 0.0
        %v5788 = vmax.f32 %v5558, 0.0
        %v5789 = vmax.f32 %v5563, 0.0
        %v5790 = vmax.f32 %v5568, 0.0
        %v5791 = vmax.f32 %v5573, 0.0
        %v5792 = vmax.f32 %v5578, 0.0
        %v5793 = vmax.f32 %v5583, 0.0
        %v5794 = vmax.f32 %v5588, 0.0
        %v5795 = vmax.f32 %v5593, 0.0
        %v5796 = vmax.f32 %v5598, 0.0
        %v5797 = vmax.f32 %v5603, 0.0
        %v5798 = vmax.f32 %v5608, 0.0
        %v5799 = vmax.f32 %v5613, 0.0
        %v5800 = vmax.f32 %v5618, 0.0
        %v5801 = vmax.f32 %v5623, 0.0
        %v5802 = vmax.f32 %v5628, 0.0
        %v5803 = vmax.f32 %v5633, 0.0
        %v5804 = vmax.f32 %v5638, 0.0
        %v5805 = vmax.f32 %v5643, 0.0
        %v5806 = vmax.f32 %v5648, 0.0
        %v5807 = vmax.f32 %v5653, 0.0
        %v5808 = vmax.f32 %v5658, 0.0
        %v5809 = vmax.f32 %v5663, 0.0
        %v5810 = vmax.f32 %v5668, 0.0
        %v5811 = vmax.f32 %v5673, 0.0
        %v5812 = vmax.f32 %v5678, 0.0
        %v5813 = vmax.f32 %v5683, 0.0
        %v5814 = vmax.f32 %v5688, 0.0
        %v5815 = vmax.f32 %v5693, 0.0
        %v5816 = vmax.f32 %v5698, 0.0
        %v5817 = vmax.f32 %v5703, 0.0
        %v5818 = vmax.f32 %v5708, 0.0
        %v5819 = vmax.f32 %v5713, 0.0
        %v5820 = vmax.f32 %v5718, 0.0
        %v5821 = vmax.f32 %v5723, 0.0
        %v5822 = vmax.f32 %v5728, 0.0
        %v5823 = vmax.f32 %v5733, 0.0
        %v5824 = vmax.f32 %v5738, 0.0
        %v5825 = vmax.f32 %v5743, 0.0
        %v5826 = vmax.f32 %v5748, 0.0
        %v5827 = vmax.f32 %v5753, 0.0
        %v5828 = vmax.f32 %v5758, 0.0
        %v5829 = vmax.f32 %v5763, 0.0
        %v5830 = vmax.f32 %v5768, 0.0
        %v5831 = vmax.f32 %v5773, 0.0
        %v5832 = vmax.f32 %v5778, 0.0
        %v5833 = vmax.f32 %v5783, 0.0
        %v5834 = vadd.f32 %v1997, %v5786
        %v5835 = vadd.f32 %v2002, %v5787
        %v5836 = vadd.f32 %v2007, %v5788
        %v5837 = vadd.f32 %v2012, %v5789
        %v5838 = vadd.f32 %v2017, %v5790
        %v5839 = vadd.f32 %v2022, %v5791
        %v5840 = vadd.f32 %v2027, %v5792
        %v5841 = vadd.f32 %v2032, %v5793
        %v5842 = vadd.f32 %v2037, %v5794
        %v5843 = vadd.f32 %v2042, %v5795
        %v5844 = vadd.f32 %v2047, %v5796
        %v5845 = vadd.f32 %v2052, %v5797
        %v5846 = vadd.f32 %v2057, %v5798
        %v5847 = vadd.f32 %v2062, %v5799
        %v5848 = vadd.f32 %v2067, %v5800
        %v5849 = vadd.f32 %v2072, %v5801
        %v5850 = vadd.f32 %v2077, %v5802
        %v5851 = vadd.f32 %v2082, %v5803
        %v5852 = vadd.f32 %v2087, %v5804
        %v5853 = vadd.f32 %v2092, %v5805
        %v5854 = vadd.f32 %v2097, %v5806
        %v5855 = vadd.f32 %v2102, %v5807
        %v5856 = vadd.f32 %v2107, %v5808
        %v5857 = vadd.f32 %v2112, %v5809
        %v5858 = vadd.f32 %v2117, %v5810
        %v5859 = vadd.f32 %v2122, %v5811
        %v5860 = vadd.f32 %v2127, %v5812
        %v5861 = vadd.f32 %v2132, %v5813
        %v5862 = vadd.f32 %v2137, %v5814
        %v5863 = vadd.f32 %v2142, %v5815
        %v5864 = vadd.f32 %v2147, %v5816
        %v5865 = vadd.f32 %v2152, %v5817
        %v5866 = vadd.f32 %v2157, %v5818
        %v5867 = vadd.f32 %v2162, %v5819
        %v5868 = vadd.f32 %v2167, %v5820
        %v5869 = vadd.f32 %v2172, %v5821
        %v5870 = vadd.f32 %v2177, %v5822
        %v5871 = vadd.f32 %v2182, %v5823
        %v5872 = vadd.f32 %v2187, %v5824
        %v5873 = vadd.f32 %v2192, %v5825
        %v5874 = vadd.f32 %v2197, %v5826
        %v5875 = vadd.f32 %v2202, %v5827
        %v5876 = vadd.f32 %v2207, %v5828
        %v5877 = vadd.f32 %v2212, %v5829
        %v5878 = vadd.f32 %v2217, %v5830
        %v5879 = vadd.f32 %v2222, %v5831
        %v5880 = vadd.f32 %v2227, %v5832
        %v5881 = vadd.f32 %v2232, %v5833
        %5882 = vst.msk [vmem:[#allocation2 + $0x20] sm:$0xff] %vm708, %v5834
        %5883 = vst.msk [vmem:[#allocation2 + $0x28] sm:$0xff] %vm708, %v5835
        %5884 = vst.msk [vmem:[#allocation2 + $0x30] sm:$0xff] %vm708, %v5836
        %5885 = vst.msk [vmem:[#allocation2 + $0x38] sm:$0xff] %vm708, %v5837
        %5886 = vst.msk [vmem:[#allocation2 + $0x40] sm:$0xff] %vm708, %v5838
        %5887 = vst.msk [vmem:[#allocation2 + $0x48] sm:$0xff] %vm708, %v5839
        %5888 = vst.msk [vmem:[#allocation2 + $0x50] sm:$0xff] %vm708, %v5840
        %5889 = vst.msk [vmem:[#allocation2 + $0x58] sm:$0xff] %vm708, %v5841
        %5890 = vst.msk [vmem:[#allocation2 + $0x60] sm:$0xff] %vm708, %v5842
        %5891 = vst.msk [vmem:[#allocation2 + $0x68] sm:$0xff] %vm708, %v5843
        %5892 = vst.msk [vmem:[#allocation2 + $0x70] sm:$0xff] %vm708, %v5844
        %5893 = vst.msk [vmem:[#allocation2 + $0x78] sm:$0xff] %vm708, %v5845
        %5894 = vst.msk [vmem:[#allocation2 + $0x80] sm:$0xff] %vm708, %v5846
        %5895 = vst.msk [vmem:[#allocation2 + $0x88] sm:$0xff] %vm708, %v5847
        %5896 = vst.msk [vmem:[#allocation2 + $0x90] sm:$0xff] %vm708, %v5848
        %5897 = vst.msk [vmem:[#allocation2 + $0x98] sm:$0xff] %vm708, %v5849
        %5898 = vst.msk [vmem:[#allocation2 + $0xa0] sm:$0xff] %vm708, %v5850
        %5899 = vst.msk [vmem:[#allocation2 + $0xa8] sm:$0xff] %vm708, %v5851
        %5900 = vst.msk [vmem:[#allocation2 + $0xb0] sm:$0xff] %vm708, %v5852
        %5901 = vst.msk [vmem:[#allocation2 + $0xb8] sm:$0xff] %vm708, %v5853
        %5902 = vst.msk [vmem:[#allocation2 + $0xc0] sm:$0xff] %vm708, %v5854
        %5903 = vst.msk [vmem:[#allocation2 + $0xc8] sm:$0xff] %vm708, %v5855
        %5904 = vst.msk [vmem:[#allocation2 + $0xd0] sm:$0xff] %vm708, %v5856
        %5905 = vst.msk [vmem:[#allocation2 + $0xd8] sm:$0xff] %vm708, %v5857
        %5906 = vst.msk [vmem:[#allocation2 + $0xe0] sm:$0xff] %vm708, %v5858
        %5907 = vst.msk [vmem:[#allocation2 + $0xe8] sm:$0xff] %vm708, %v5859
        %5908 = vst.msk [vmem:[#allocation2 + $0xf0] sm:$0xff] %vm708, %v5860
        %5909 = vst.msk [vmem:[#allocation2 + $0xf8] sm:$0xff] %vm708, %v5861
        %5910 = vst.msk [vmem:[#allocation2 + $0x100] sm:$0xff] %vm708, %v5862
        %5911 = vst.msk [vmem:[#allocation2 + $0x108] sm:$0xff] %vm708, %v5863
        %5912 = vst.msk [vmem:[#allocation2 + $0x110] sm:$0xff] %vm708, %v5864
        %5913 = vst.msk [vmem:[#allocation2 + $0x118] sm:$0xff] %vm708, %v5865
        %5914 = vst.msk [vmem:[#allocation2 + $0x120] sm:$0xff] %vm708, %v5866
        %5915 = vst.msk [vmem:[#allocation2 + $0x128] sm:$0xff] %vm708, %v5867
        %5916 = vst.msk [vmem:[#allocation2 + $0x130] sm:$0xff] %vm708, %v5868
        %5917 = vst.msk [vmem:[#allocation2 + $0x138] sm:$0xff] %vm708, %v5869
        %5918 = vst.msk [vmem:[#allocation2 + $0x140] sm:$0xff] %vm708, %v5870
        %5919 = vst.msk [vmem:[#allocation2 + $0x148] sm:$0xff] %vm708, %v5871
        %5920 = vst.msk [vmem:[#allocation2 + $0x150] sm:$0xff] %vm708, %v5872
        %5921 = vst.msk [vmem:[#allocation2 + $0x158] sm:$0xff] %vm708, %v5873
        %5922 = vst.msk [vmem:[#allocation2 + $0x160] sm:$0xff] %vm708, %v5874
        %5923 = vst.msk [vmem:[#allocation2 + $0x168] sm:$0xff] %vm708, %v5875
        %5924 = vst.msk [vmem:[#allocation2 + $0x170] sm:$0xff] %vm708, %v5876
        %5925 = vst.msk [vmem:[#allocation2 + $0x178] sm:$0xff] %vm708, %v5877
        %5926 = vst.msk [vmem:[#allocation2 + $0x180] sm:$0xff] %vm708, %v5878
        %5927 = vst.msk [vmem:[#allocation2 + $0x188] sm:$0xff] %vm708, %v5879
        %5928 = vst.msk [vmem:[#allocation2 + $0x190] sm:$0xff] %vm708, %v5880
        %5929 = vst.msk [vmem:[#allocation2 + $0x198] sm:$0xff] %vm708, %v5881
        %5930 = vst.msk [vmem:[#allocation4] sm:$0xff] %vm708, 0.0
        %5931 = vst.msk [vmem:[#allocation4 + $0x8] sm:$0xff] %vm708, 0.0
        %5932 = vst.msk [vmem:[#allocation4 + $0x10] sm:$0xff] %vm708, 0.0
        %5933 = vst.msk [vmem:[#allocation4 + $0x18] sm:$0xff] %vm708, 0.0
        %5934 = vst.msk [vmem:[#allocation4 + $0x20] sm:$0xff] %vm708, 0.0
        %5935 = vst.msk [vmem:[#allocation4 + $0x28] sm:$0xff] %vm708, 0.0
        %5936 = vst.msk [vmem:[#allocation4 + $0x30] sm:$0xff] %vm708, 0.0
        %5937 = vst.msk [vmem:[#allocation4 + $0x38] sm:$0xff] %vm708, 0.0
        %5938 = vst.msk [vmem:[#allocation4 + $0x40] sm:$0xff] %vm708, 0.0
        %5939 = vst.msk [vmem:[#allocation4 + $0x48] sm:$0xff] %vm708, 0.0
        %5940 = vst.msk [vmem:[#allocation4 + $0x50] sm:$0xff] %vm708, 0.0
        %5941 = vst.msk [vmem:[#allocation4 + $0x58] sm:$0xff] %vm708, 0.0
        %5942 = vst.msk [vmem:[#allocation4 + $0x60] sm:$0xff] %vm708, 0.0
        %5943 = vst.msk [vmem:[#allocation4 + $0x68] sm:$0xff] %vm708, 0.0
        %5944 = vst.msk [vmem:[#allocation4 + $0x70] sm:$0xff] %vm708, 0.0
        %5945 = vst.msk [vmem:[#allocation4 + $0x78] sm:$0xff] %vm708, 0.0
        %s5946 = scalar_lea.vmem [#allocation2], 32
        %v5947 = vld [vmem:[%s5946] ss:$2 sm:$0xff]
        %s5948 = scalar_lea.vmem [#allocation2], 33
        %v5949 = vld [vmem:[%s5948] ss:$2 sm:$0xff]
        %s5950 = scalar_lea.vmem [#allocation2], 56
        %v5951 = vld [vmem:[%s5950] ss:$2 sm:$0xff]
        %s5952 = scalar_lea.vmem [#allocation2], 57
        %v5953 = vld [vmem:[%s5952] ss:$2 sm:$0xff]
        %v5954 = vmax.f32 %v5947, %v5949
        %v5955 = vmax.f32 %v5951, %v5953
        %v5956 = vmax.f32 %v5954, %v5955
        %5957 = vst.msk [vmem:[#allocation4] sm:$0xff] %vm708, %v5956
        %s5958 = scalar_lea.vmem [#allocation2], 80
        %v5959 = vld [vmem:[%s5958] ss:$2 sm:$0xff]
        %s5960 = scalar_lea.vmem [#allocation2], 81
        %v5961 = vld [vmem:[%s5960] ss:$2 sm:$0xff]
        %s5962 = scalar_lea.vmem [#allocation2], 104
        %v5963 = vld [vmem:[%s5962] ss:$2 sm:$0xff]
        %s5964 = scalar_lea.vmem [#allocation2], 105
        %v5965 = vld [vmem:[%s5964] ss:$2 sm:$0xff]
        %v5966 = vmax.f32 %v5959, %v5961
        %v5967 = vmax.f32 %v5963, %v5965
        %v5968 = vmax.f32 %v5966, %v5967
        %5969 = vst.msk [vmem:[#allocation4 + $0x10] sm:$0xff] %vm708, %v5968
        %s5970 = scalar_lea.vmem [#allocation2], 128
        %v5971 = vld [vmem:[%s5970] ss:$2 sm:$0xff]
        %s5972 = scalar_lea.vmem [#allocation2], 129
        %v5973 = vld [vmem:[%s5972] ss:$2 sm:$0xff]
        %s5974 = scalar_lea.vmem [#allocation2], 152
        %v5975 = vld [vmem:[%s5974] ss:$2 sm:$0xff]
        %s5976 = scalar_lea.vmem [#allocation2], 153
        %v5977 = vld [vmem:[%s5976] ss:$2 sm:$0xff]
        %v5978 = vmax.f32 %v5971, %v5973
        %v5979 = vmax.f32 %v5975, %v5977
        %v5980 = vmax.f32 %v5978, %v5979
        %5981 = vst.msk [vmem:[#allocation4 + $0x20] sm:$0xff] %vm708, %v5980
        %s5982 = scalar_lea.vmem [#allocation2], 176
        %v5983 = vld [vmem:[%s5982] ss:$2 sm:$0xff]
        %s5984 = scalar_lea.vmem [#allocation2], 177
        %v5985 = vld [vmem:[%s5984] ss:$2 sm:$0xff]
        %s5986 = scalar_lea.vmem [#allocation2], 200
        %v5987 = vld [vmem:[%s5986] ss:$2 sm:$0xff]
        %s5988 = scalar_lea.vmem [#allocation2], 201
        %v5989 = vld [vmem:[%s5988] ss:$2 sm:$0xff]
        %v5990 = vmax.f32 %v5983, %v5985
        %v5991 = vmax.f32 %v5987, %v5989
        %v5992 = vmax.f32 %v5990, %v5991
        %5993 = vst.msk [vmem:[#allocation4 + $0x30] sm:$0xff] %vm708, %v5992
        %s5994 = scalar_lea.vmem [#allocation2], 224
        %v5995 = vld [vmem:[%s5994] ss:$2 sm:$0xff]
        %s5996 = scalar_lea.vmem [#allocation2], 225
        %v5997 = vld [vmem:[%s5996] ss:$2 sm:$0xff]
        %s5998 = scalar_lea.vmem [#allocation2], 248
        %v5999 = vld [vmem:[%s5998] ss:$2 sm:$0xff]
        %s6000 = scalar_lea.vmem [#allocation2], 249
        %v6001 = vld [vmem:[%s6000] ss:$2 sm:$0xff]
        %v6002 = vmax.f32 %v5995, %v5997
        %v6003 = vmax.f32 %v5999, %v6001
        %v6004 = vmax.f32 %v6002, %v6003
        %6005 = vst.msk [vmem:[#allocation4 + $0x40] sm:$0xff] %vm708, %v6004
        %s6006 = scalar_lea.vmem [#allocation2], 272
        %v6007 = vld [vmem:[%s6006] ss:$2 sm:$0xff]
        %s6008 = scalar_lea.vmem [#allocation2], 273
        %v6009 = vld [vmem:[%s6008] ss:$2 sm:$0xff]
        %s6010 = scalar_lea.vmem [#allocation2], 296
        %v6011 = vld [vmem:[%s6010] ss:$2 sm:$0xff]
        %s6012 = scalar_lea.vmem [#allocation2], 297
        %v6013 = vld [vmem:[%s6012] ss:$2 sm:$0xff]
        %v6014 = vmax.f32 %v6007, %v6009
        %v6015 = vmax.f32 %v6011, %v6013
        %v6016 = vmax.f32 %v6014, %v6015
        %6017 = vst.msk [vmem:[#allocation4 + $0x50] sm:$0xff] %vm708, %v6016
        %s6018 = scalar_lea.vmem [#allocation2], 320
        %v6019 = vld [vmem:[%s6018] ss:$2 sm:$0xff]
        %s6020 = scalar_lea.vmem [#allocation2], 321
        %v6021 = vld [vmem:[%s6020] ss:$2 sm:$0xff]
        %s6022 = scalar_lea.vmem [#allocation2], 344
        %v6023 = vld [vmem:[%s6022] ss:$2 sm:$0xff]
        %s6024 = scalar_lea.vmem [#allocation2], 345
        %v6025 = vld [vmem:[%s6024] ss:$2 sm:$0xff]
        %v6026 = vmax.f32 %v6019, %v6021
        %v6027 = vmax.f32 %v6023, %v6025
        %v6028 = vmax.f32 %v6026, %v6027
        %6029 = vst.msk [vmem:[#allocation4 + $0x60] sm:$0xff] %vm708, %v6028
        %s6030 = scalar_lea.vmem [#allocation2], 368
        %v6031 = vld [vmem:[%s6030] ss:$2 sm:$0xff]
        %s6032 = scalar_lea.vmem [#allocation2], 369
        %v6033 = vld [vmem:[%s6032] ss:$2 sm:$0xff]
        %s6034 = scalar_lea.vmem [#allocation2], 392
        %v6035 = vld [vmem:[%s6034] ss:$2 sm:$0xff]
        %s6036 = scalar_lea.vmem [#allocation2], 393
        %v6037 = vld [vmem:[%s6036] ss:$2 sm:$0xff]
        %v6038 = vmax.f32 %v6031, %v6033
        %v6039 = vmax.f32 %v6035, %v6037
        %v6040 = vmax.f32 %v6038, %v6039
        %6041 = vst.msk [vmem:[#allocation4 + $0x70] sm:$0xff] %vm708, %v6040
        %6042 = vst.msk [vmem:[#allocation3] sm:$0xff] %vm4470, 0.0
        %6043 = vst.msk [vmem:[#allocation3 + $0x8] sm:$0xff] %vm4470, 0.0
        %6044 = vst.msk [vmem:[#allocation3 + $0x10] sm:$0xff] %vm4470, 0.0
        %6045 = vst.msk [vmem:[#allocation3 + $0x18] sm:$0xff] %vm4470, 0.0
        %6046 = vst.msk [vmem:[#allocation3 + $0x20] sm:$0xff] %vm4470, 0.0
        %6047 = vst.msk [vmem:[#allocation3 + $0x28] sm:$0xff] %vm4470, 0.0
        %6048 = vst.msk [vmem:[#allocation3 + $0x30] sm:$0xff] %vm4470, 0.0
        %6049 = vst.msk [vmem:[#allocation3 + $0x38] sm:$0xff] %vm4470, 0.0
        %6050 = vst.msk [vmem:[#allocation3 + $0x40] sm:$0xff] %vm4470, 0.0
        %6051 = vst.msk [vmem:[#allocation3 + $0x48] sm:$0xff] %vm4470, 0.0
        %6052 = vst.msk [vmem:[#allocation3 + $0x50] sm:$0xff] %vm4470, 0.0
        %6053 = vst.msk [vmem:[#allocation3 + $0x58] sm:$0xff] %vm4470, 0.0
        %6054 = vst.msk [vmem:[#allocation3 + $0x60] sm:$0xff] %vm4470, 0.0
        %6055 = vst.msk [vmem:[#allocation3 + $0x68] sm:$0xff] %vm4470, 0.0
        %6056 = vst.msk [vmem:[#allocation3 + $0x70] sm:$0xff] %vm4470, 0.0
        %6057 = vst.msk [vmem:[#allocation3 + $0x78] sm:$0xff] %vm4470, 0.0
        %6058 = vst.msk [vmem:[#allocation3 + $0x80] sm:$0xff] %vm4470, 0.0
        %6059 = vst.msk [vmem:[#allocation3 + $0x88] sm:$0xff] %vm4470, 0.0
        %6060 = vst.msk [vmem:[#allocation3 + $0x90] sm:$0xff] %vm4470, 0.0
        %6061 = vst.msk [vmem:[#allocation3 + $0x98] sm:$0xff] %vm4470, 0.0
        %6062 = vst.msk [vmem:[#allocation3 + $0xa0] sm:$0xff] %vm4470, 0.0
        %6063 = vst.msk [vmem:[#allocation3 + $0xa8] sm:$0xff] %vm4470, 0.0
        %vm6064 = vcmp.lt.s32.totalorder %v766, 0
        %v6065 = vsub.s32 0, %v766
        %v6066 = vsel %vm6064, %v6065, %v766
        %v6067 = vshrl.u32 %v6066, 4
        %v6068 = vand.u32 %v6066, 15
        %v6069 = vsub.s32 0, %v6068
        %v6070 = vsel %vm6064, %v6069, %v6068
        %vm6071 = vcmp.lt.s32.totalorder %v767, 0
        %v6072 = vsub.s32 0, %v767
        %v6073 = vsel %vm6071, %v6072, %v767
        %v6074 = vshrl.u32 %v6073, 4
        %v6075 = vand.u32 %v6073, 15
        %v6076 = vsub.s32 0, %v6075
        %v6077 = vsel %vm6071, %v6076, %v6075
        %vm6078 = vcmp.lt.s32.totalorder %v768, 0
        %v6079 = vsub.s32 0, %v768
        %v6080 = vsel %vm6078, %v6079, %v768
        %v6081 = vshrl.u32 %v6080, 4
        %v6082 = vand.u32 %v6080, 15
        %v6083 = vsub.s32 0, %v6082
        %v6084 = vsel %vm6078, %v6083, %v6082
        %vm6085 = vcmp.lt.s32.totalorder %v769, 0
        %v6086 = vsub.s32 0, %v769
        %v6087 = vsel %vm6085, %v6086, %v769
        %v6088 = vshrl.u32 %v6087, 4
        %v6089 = vand.u32 %v6087, 15
        %v6090 = vsub.s32 0, %v6089
        %v6091 = vsel %vm6085, %v6090, %v6089
        %vm6092 = vcmp.lt.s32.totalorder %v770, 0
        %v6093 = vsub.s32 0, %v770
        %v6094 = vsel %vm6092, %v6093, %v770
        %v6095 = vshrl.u32 %v6094, 4
        %v6096 = vand.u32 %v6094, 15
        %v6097 = vsub.s32 0, %v6096
        %v6098 = vsel %vm6092, %v6097, %v6096
        %vm6099 = vcmp.lt.s32.totalorder %v771, 0
        %v6100 = vsub.s32 0, %v771
        %v6101 = vsel %vm6099, %v6100, %v771
        %v6102 = vshrl.u32 %v6101, 4
        %v6103 = vand.u32 %v6101, 15
        %v6104 = vsub.s32 0, %v6103
        %v6105 = vsel %vm6099, %v6104, %v6103
        %vm6106 = vcmp.lt.s32.totalorder %v772, 0
        %v6107 = vsub.s32 0, %v772
        %v6108 = vsel %vm6106, %v6107, %v772
        %v6109 = vshrl.u32 %v6108, 4
        %v6110 = vand.u32 %v6108, 15
        %v6111 = vsub.s32 0, %v6110
        %v6112 = vsel %vm6106, %v6111, %v6110
        %vm6113 = vcmp.lt.s32.totalorder %v773, 0
        %v6114 = vsub.s32 0, %v773
        %v6115 = vsel %vm6113, %v6114, %v773
        %v6116 = vshrl.u32 %v6115, 4
        %v6117 = vand.u32 %v6115, 15
        %v6118 = vsub.s32 0, %v6117
        %v6119 = vsel %vm6113, %v6118, %v6117
        %vm6120 = vcmp.lt.s32.totalorder %v774, 0
        %v6121 = vsub.s32 0, %v774
        %v6122 = vsel %vm6120, %v6121, %v774
        %v6123 = vshrl.u32 %v6122, 4
        %v6124 = vand.u32 %v6122, 15
        %v6125 = vsub.s32 0, %v6124
        %v6126 = vsel %vm6120, %v6125, %v6124
        %vm6127 = vcmp.lt.s32.totalorder %v775, 0
        %v6128 = vsub.s32 0, %v775
        %v6129 = vsel %vm6127, %v6128, %v775
        %v6130 = vshrl.u32 %v6129, 4
        %v6131 = vand.u32 %v6129, 15
        %v6132 = vsub.s32 0, %v6131
        %v6133 = vsel %vm6127, %v6132, %v6131
        %vm6134 = vcmp.lt.s32.totalorder %v776, 0
        %v6135 = vsub.s32 0, %v776
        %v6136 = vsel %vm6134, %v6135, %v776
        %v6137 = vshrl.u32 %v6136, 4
        %v6138 = vand.u32 %v6136, 15
        %v6139 = vsub.s32 0, %v6138
        %v6140 = vsel %vm6134, %v6139, %v6138
        %vm6141 = vcmp.lt.s32.totalorder %v777, 0
        %v6142 = vsub.s32 0, %v777
        %v6143 = vsel %vm6141, %v6142, %v777
        %v6144 = vshrl.u32 %v6143, 4
        %v6145 = vand.u32 %v6143, 15
        %v6146 = vsub.s32 0, %v6145
        %v6147 = vsel %vm6141, %v6146, %v6145
        %vm6148 = vcmp.lt.s32.totalorder %v778, 0
        %v6149 = vsub.s32 0, %v778
        %v6150 = vsel %vm6148, %v6149, %v778
        %v6151 = vshrl.u32 %v6150, 4
        %v6152 = vand.u32 %v6150, 15
        %v6153 = vsub.s32 0, %v6152
        %v6154 = vsel %vm6148, %v6153, %v6152
        %vm6155 = vcmp.lt.s32.totalorder %v779, 0
        %v6156 = vsub.s32 0, %v779
        %v6157 = vsel %vm6155, %v6156, %v779
        %v6158 = vshrl.u32 %v6157, 4
        %v6159 = vand.u32 %v6157, 15
        %v6160 = vsub.s32 0, %v6159
        %v6161 = vsel %vm6155, %v6160, %v6159
        %vm6162 = vcmp.lt.s32.totalorder %v780, 0
        %v6163 = vsub.s32 0, %v780
        %v6164 = vsel %vm6162, %v6163, %v780
        %v6165 = vshrl.u32 %v6164, 4
        %v6166 = vand.u32 %v6164, 15
        %v6167 = vsub.s32 0, %v6166
        %v6168 = vsel %vm6162, %v6167, %v6166
        %vm6169 = vcmp.lt.s32.totalorder %v781, 0
        %v6170 = vsub.s32 0, %v781
        %v6171 = vsel %vm6169, %v6170, %v781
        %v6172 = vshrl.u32 %v6171, 4
        %v6173 = vand.u32 %v6171, 15
        %v6174 = vsub.s32 0, %v6173
        %v6175 = vsel %vm6169, %v6174, %v6173
        %vm6176 = vcmp.ne.s32.totalorder %v6070, 0
        %vm6177 = vcmp.ne.s32.totalorder %v6077, 0
        %vm6178 = vcmp.ne.s32.totalorder %v6084, 0
        %vm6179 = vcmp.ne.s32.totalorder %v6091, 0
        %vm6180 = vcmp.ne.s32.totalorder %v6098, 0
        %vm6181 = vcmp.ne.s32.totalorder %v6105, 0
        %vm6182 = vcmp.ne.s32.totalorder %v6112, 0
        %vm6183 = vcmp.ne.s32.totalorder %v6119, 0
        %vm6184 = vcmp.ne.s32.totalorder %v6126, 0
        %vm6185 = vcmp.ne.s32.totalorder %v6133, 0
        %vm6186 = vcmp.ne.s32.totalorder %v6140, 0
        %vm6187 = vcmp.ne.s32.totalorder %v6147, 0
        %vm6188 = vcmp.ne.s32.totalorder %v6154, 0
        %vm6189 = vcmp.ne.s32.totalorder %v6161, 0
        %vm6190 = vcmp.ne.s32.totalorder %v6168, 0
        %vm6191 = vcmp.ne.s32.totalorder %v6175, 0
        %vm6192 = vcmp.lt.s32.totalorder %v6070, 0
        %vm6193 = vcmp.lt.s32.totalorder %v6077, 0
        %vm6194 = vcmp.lt.s32.totalorder %v6084, 0
        %vm6195 = vcmp.lt.s32.totalorder %v6091, 0
        %vm6196 = vcmp.lt.s32.totalorder %v6098, 0
        %vm6197 = vcmp.lt.s32.totalorder %v6105, 0
        %vm6198 = vcmp.lt.s32.totalorder %v6112, 0
        %vm6199 = vcmp.lt.s32.totalorder %v6119, 0
        %vm6200 = vcmp.lt.s32.totalorder %v6126, 0
        %vm6201 = vcmp.lt.s32.totalorder %v6133, 0
        %vm6202 = vcmp.lt.s32.totalorder %v6140, 0
        %vm6203 = vcmp.lt.s32.totalorder %v6147, 0
        %vm6204 = vcmp.lt.s32.totalorder %v6154, 0
        %vm6205 = vcmp.lt.s32.totalorder %v6161, 0
        %vm6206 = vcmp.lt.s32.totalorder %v6168, 0
        %vm6207 = vcmp.lt.s32.totalorder %v6175, 0
        %vm6208 = vmand %vm6192, %vm6176
        %vm6209 = vmand %vm6193, %vm6177
        %vm6210 = vmand %vm6194, %vm6178
        %vm6211 = vmand %vm6195, %vm6179
        %vm6212 = vmand %vm6196, %vm6180
        %vm6213 = vmand %vm6197, %vm6181
        %vm6214 = vmand %vm6198, %vm6182
        %vm6215 = vmand %vm6199, %vm6183
        %vm6216 = vmand %vm6200, %vm6184
        %vm6217 = vmand %vm6201, %vm6185
        %vm6218 = vmand %vm6202, %vm6186
        %vm6219 = vmand %vm6203, %vm6187
        %vm6220 = vmand %vm6204, %vm6188
        %vm6221 = vmand %vm6205, %vm6189
        %vm6222 = vmand %vm6206, %vm6190
        %vm6223 = vmand %vm6207, %vm6191
        %v6224 = vadd.s32 %v6070, 16
        %v6225 = vadd.s32 %v6077, 16
        %v6226 = vadd.s32 %v6084, 16
        %v6227 = vadd.s32 %v6091, 16
        %v6228 = vadd.s32 %v6098, 16
        %v6229 = vadd.s32 %v6105, 16
        %v6230 = vadd.s32 %v6112, 16
        %v6231 = vadd.s32 %v6119, 16
        %v6232 = vadd.s32 %v6126, 16
        %v6233 = vadd.s32 %v6133, 16
        %v6234 = vadd.s32 %v6140, 16
        %v6235 = vadd.s32 %v6147, 16
        %v6236 = vadd.s32 %v6154, 16
        %v6237 = vadd.s32 %v6161, 16
        %v6238 = vadd.s32 %v6168, 16
        %v6239 = vadd.s32 %v6175, 16
        %v6240 = vsel %vm6208, %v6224, %v6070
        %v6241 = vsel %vm6209, %v6225, %v6077
        %v6242 = vsel %vm6210, %v6226, %v6084
        %v6243 = vsel %vm6211, %v6227, %v6091
        %v6244 = vsel %vm6212, %v6228, %v6098
        %v6245 = vsel %vm6213, %v6229, %v6105
        %v6246 = vsel %vm6214, %v6230, %v6112
        %v6247 = vsel %vm6215, %v6231, %v6119
        %v6248 = vsel %vm6216, %v6232, %v6126
        %v6249 = vsel %vm6217, %v6233, %v6133
        %v6250 = vsel %vm6218, %v6234, %v6140
        %v6251 = vsel %vm6219, %v6235, %v6147
        %v6252 = vsel %vm6220, %v6236, %v6154
        %v6253 = vsel %vm6221, %v6237, %v6161
        %v6254 = vsel %vm6222, %v6238, %v6168
        %v6255 = vsel %vm6223, %v6239, %v6175
        %vm6256 = vcmp.lt.s32.totalorder %v6240, 8
        %vm6257 = vcmp.lt.s32.totalorder %v6241, 8
        %vm6258 = vcmp.lt.s32.totalorder %v6242, 8
        %vm6259 = vcmp.lt.s32.totalorder %v6243, 8
        %vm6260 = vcmp.lt.s32.totalorder %v6244, 8
        %vm6261 = vcmp.lt.s32.totalorder %v6245, 8
        %vm6262 = vcmp.lt.s32.totalorder %v6246, 8
        %vm6263 = vcmp.lt.s32.totalorder %v6247, 8
        %vm6264 = vcmp.lt.s32.totalorder %v6248, 8
        %vm6265 = vcmp.lt.s32.totalorder %v6249, 8
        %vm6266 = vcmp.lt.s32.totalorder %v6250, 8
        %vm6267 = vcmp.lt.s32.totalorder %v6251, 8
        %vm6268 = vcmp.lt.s32.totalorder %v6252, 8
        %vm6269 = vcmp.lt.s32.totalorder %v6253, 8
        %vm6270 = vcmp.lt.s32.totalorder %v6254, 8
        %vm6271 = vcmp.lt.s32.totalorder %v6255, 8
        %v6272 = vsel %vm6256, 1, 0
        %v6273 = vsel %vm6257, 1, 0
        %v6274 = vsel %vm6258, 1, 0
        %v6275 = vsel %vm6259, 1, 0
        %v6276 = vsel %vm6260, 1, 0
        %v6277 = vsel %vm6261, 1, 0
        %v6278 = vsel %vm6262, 1, 0
        %v6279 = vsel %vm6263, 1, 0
        %v6280 = vsel %vm6264, 1, 0
        %v6281 = vsel %vm6265, 1, 0
        %v6282 = vsel %vm6266, 1, 0
        %v6283 = vsel %vm6267, 1, 0
        %v6284 = vsel %vm6268, 1, 0
        %v6285 = vsel %vm6269, 1, 0
        %v6286 = vsel %vm6270, 1, 0
        %v6287 = vsel %vm6271, 1, 0
        %v6288 = vcvt.s32.f32 %v6272
        %v6289 = vcvt.s32.f32 %v6273
        %v6290 = vcvt.s32.f32 %v6274
        %v6291 = vcvt.s32.f32 %v6275
        %v6292 = vcvt.s32.f32 %v6276
        %v6293 = vcvt.s32.f32 %v6277
        %v6294 = vcvt.s32.f32 %v6278
        %v6295 = vcvt.s32.f32 %v6279
        %v6296 = vcvt.s32.f32 %v6280
        %v6297 = vcvt.s32.f32 %v6281
        %v6298 = vcvt.s32.f32 %v6282
        %v6299 = vcvt.s32.f32 %v6283
        %v6300 = vcvt.s32.f32 %v6284
        %v6301 = vcvt.s32.f32 %v6285
        %v6302 = vcvt.s32.f32 %v6286
        %v6303 = vcvt.s32.f32 %v6287
        %v6304 = vld [vmem:[#allocation4] sm:$0xff]
        %v6305 = vld [vmem:[#allocation4 + $0x8] sm:$0xff]
        %v6306 = vld [vmem:[#allocation4 + $0x10] sm:$0xff]
        %v6307 = vld [vmem:[#allocation4 + $0x18] sm:$0xff]
        %v6308 = vld [vmem:[#allocation4 + $0x20] sm:$0xff]
        %v6309 = vld [vmem:[#allocation4 + $0x28] sm:$0xff]
        %v6310 = vld [vmem:[#allocation4 + $0x30] sm:$0xff]
        %v6311 = vld [vmem:[#allocation4 + $0x38] sm:$0xff]
        %v6312 = vld [vmem:[#allocation4 + $0x40] sm:$0xff]
        %v6313 = vld [vmem:[#allocation4 + $0x48] sm:$0xff]
        %v6314 = vld [vmem:[#allocation4 + $0x50] sm:$0xff]
        %v6315 = vld [vmem:[#allocation4 + $0x58] sm:$0xff]
        %v6316 = vld [vmem:[#allocation4 + $0x60] sm:$0xff]
        %v6317 = vld [vmem:[#allocation4 + $0x68] sm:$0xff]
        %v6318 = vld [vmem:[#allocation4 + $0x70] sm:$0xff]
        %v6319 = vld [vmem:[#allocation4 + $0x78] sm:$0xff]
        %v6320 = vld [vmem:[%s11] sm:$0xf]
        %v6321 = vld [vmem:[%s12] sm:$0x1]
        %v6323 = vlaneseq
        %v6324 = vshrl.u32 %v6323, 7
        %v6325 = vsub.s32 0, %v6324
        %v6326 = vrot.slane %v6321, %v6325
        %v6329 = vsel %vm708, %v6304, 0
        %v6332 = vsel %vm708, %v6305, 0
        %v6335 = vsel %vm708, %v6306, 0
        %v6338 = vsel %vm708, %v6307, 0
        %v6341 = vsel %vm708, %v6308, 0
        %v6344 = vsel %vm708, %v6309, 0
        %v6347 = vsel %vm708, %v6310, 0
        %v6350 = vsel %vm708, %v6311, 0
        %v6353 = vsel %vm708, %v6312, 0
        %v6356 = vsel %vm708, %v6313, 0
        %v6359 = vsel %vm708, %v6314, 0
        %v6362 = vsel %vm708, %v6315, 0
        %v6365 = vsel %vm708, %v6316, 0
        %v6368 = vsel %vm708, %v6317, 0
        %v6371 = vsel %vm708, %v6318, 0
        %v6374 = vsel %vm708, %v6319, 0
        %v6377 = vsel %vm1926, %v6320, 0
        %6379 = vmatprep.subr.mxu0 0.0
        %6380 = vmatpush1.msra.mxu0 %v6377
        %6381 = vmatprep.subr.mxu0 0.0
        %6382 = vmatpush1.msra.mxu0 0.0
        %6383 = vmatprep.subr.mxu0 0.0
        %6384 = vmatpush1.msra.mxu0 0.0
        %6385 = vmatprep.subr.mxu0 0.0
        %6386 = vmatpush1.msra.mxu0 0.0
        %6387 = vmatprep.subr.mxu0 0.0
        %6388 = vmatpush1.msra.mxu0 0.0
        %6389 = vmatprep.subr.mxu0 0.0
        %6390 = vmatpush1.msra.mxu0 0.0
        %6391 = vmatprep.subr.mxu0 0.0
        %6392 = vmatpush1.msra.mxu0 0.0
        %6393 = vmatprep.subr.mxu0 0.0
        %6394 = vmatpush1.msra.mxu0 0.0
        %6395 = vmatprep.subr.mxu0 0.0
        %6396 = vmatpush1.msra.mxu0 0.0
        %6397 = vmatprep.subr.mxu0 0.0
        %6398 = vmatpush1.msra.mxu0 0.0
        %6399 = vmatprep.subr.mxu0 0.0
        %6400 = vmatpush1.msra.mxu0 0.0
        %6401 = vmatprep.subr.mxu0 0.0
        %6402 = vmatpush1.msra.mxu0 0.0
        %6403 = vmatprep.subr.mxu0 0.0
        %6404 = vmatpush1.msra.mxu0 0.0
        %6405 = vmatprep.subr.mxu0 0.0
        %6406 = vmatpush1.msra.mxu0 0.0
        %6407 = vmatprep.subr.mxu0 0.0
        %6408 = vmatpush1.msra.mxu0 0.0
        %6409 = vmatprep.subr.mxu0 0.0
        %6410 = vmatpush1.msra.mxu0 0.0
        %6411 = vmatprep.subr.mxu0 0.0
        %6412 = vmatpush1.msra.mxu0 0.0
        %6413 = vmatprep.subr.mxu0 0.0
        %6414 = vmatpush1.msra.mxu0 0.0
        %6415 = vmatprep.subr.mxu0 0.0
        %6416 = vmatpush1.msra.mxu0 0.0
        %6417 = vmatprep.subr.mxu0 0.0
        %6418 = vmatpush1.msra.mxu0 0.0
        %6419 = vmatprep.subr.mxu0 0.0
        %6420 = vmatpush1.msra.mxu0 0.0
        %6421 = vmatprep.subr.mxu0 0.0
        %6422 = vmatpush1.msra.mxu0 0.0
        %6423 = vmatprep.subr.mxu0 0.0
        %6424 = vmatpush1.msra.mxu0 0.0
        %6425 = vmatprep.subr.mxu0 0.0
        %6426 = vmatpush1.msra.mxu0 0.0
        %6427 = vmatprep.subr.mxu0 0.0
        %6428 = vmatpush1.msra.mxu0 0.0
        %6429 = vmatprep.subr.mxu0 0.0
        %6430 = vmatpush1.msra.mxu0 0.0
        %6431 = vmatprep.subr.mxu0 0.0
        %6432 = vmatpush1.msra.mxu0 0.0
        %6433 = vmatprep.subr.mxu0 0.0
        %6434 = vmatpush1.msra.mxu0 0.0
        %6435 = vmatprep.subr.mxu0 0.0
        %6436 = vmatpush1.msra.mxu0 0.0
        %6437 = vmatprep.subr.mxu0 0.0
        %6438 = vmatpush1.msra.mxu0 0.0
        %6439 = vmatprep.subr.mxu0 0.0
        %6440 = vmatpush1.msra.mxu0 0.0
        %6441 = vmatprep.subr.mxu0 0.0
        %6442 = vmatpush1.msra.mxu0 0.0
        %6443 = vmatprep.mubr.f32.mxu0 0.0
        %6444 = vmatmul.mubr.f32.gmra.mrb[0].mxu0 %v6329
        %v6445 = vpop.f32.mrb[0].mxu0
        %v6446 = vadd.f32 %v6326, %v6445
        %v6447 = vpop.f32.mrb[0].mxu0
        %6448 = vmatprep.mubr.f32.mxu0 0.0
        %6449 = vmatmul.mubr.f32.gmra.mrb[0].mxu0 %v6332
        %v6450 = vpop.f32.mrb[0].mxu0
        %v6451 = vadd.f32 %v6326, %v6450
        %v6452 = vpop.f32.mrb[0].mxu0
        %6453 = vmatprep.mubr.f32.mxu0 0.0
        %6454 = vmatmul.mubr.f32.gmra.mrb[0].mxu0 %v6335
        %v6455 = vpop.f32.mrb[0].mxu0
        %v6456 = vadd.f32 %v6326, %v6455
        %v6457 = vpop.f32.mrb[0].mxu0
        %6458 = vmatprep.mubr.f32.mxu0 0.0
        %6459 = vmatmul.mubr.f32.gmra.mrb[0].mxu0 %v6338
        %v6460 = vpop.f32.mrb[0].mxu0
        %v6461 = vadd.f32 %v6326, %v6460
        %v6462 = vpop.f32.mrb[0].mxu0
        %6463 = vmatprep.mubr.f32.mxu0 0.0
        %6464 = vmatmul.mubr.f32.gmra.mrb[0].mxu0 %v6341
        %v6465 = vpop.f32.mrb[0].mxu0
        %v6466 = vadd.f32 %v6326, %v6465
        %v6467 = vpop.f32.mrb[0].mxu0
        %6468 = vmatprep.mubr.f32.mxu0 0.0
        %6469 = vmatmul.mubr.f32.gmra.mrb[0].mxu0 %v6344
        %v6470 = vpop.f32.mrb[0].mxu0
        %v6471 = vadd.f32 %v6326, %v6470
        %v6472 = vpop.f32.mrb[0].mxu0
        %6473 = vmatprep.mubr.f32.mxu0 0.0
        %6474 = vmatmul.mubr.f32.gmra.mrb[0].mxu0 %v6347
        %v6475 = vpop.f32.mrb[0].mxu0
        %v6476 = vadd.f32 %v6326, %v6475
        %v6477 = vpop.f32.mrb[0].mxu0
        %6478 = vmatprep.mubr.f32.mxu0 0.0
        %6479 = vmatmul.mubr.f32.gmra.mrb[0].mxu0 %v6350
        %v6480 = vpop.f32.mrb[0].mxu0
        %v6481 = vadd.f32 %v6326, %v6480
        %v6482 = vpop.f32.mrb[0].mxu0
        %6483 = vmatprep.mubr.f32.mxu0 0.0
        %6484 = vmatmul.mubr.f32.gmra.mrb[0].mxu0 %v6353
        %v6485 = vpop.f32.mrb[0].mxu0
        %v6486 = vadd.f32 %v6326, %v6485
        %v6487 = vpop.f32.mrb[0].mxu0
        %6488 = vmatprep.mubr.f32.mxu0 0.0
        %6489 = vmatmul.mubr.f32.gmra.mrb[0].mxu0 %v6356
        %v6490 = vpop.f32.mrb[0].mxu0
        %v6491 = vadd.f32 %v6326, %v6490
        %v6492 = vpop.f32.mrb[0].mxu0
        %6493 = vmatprep.mubr.f32.mxu0 0.0
        %6494 = vmatmul.mubr.f32.gmra.mrb[0].mxu0 %v6359
        %v6495 = vpop.f32.mrb[0].mxu0
        %v6496 = vadd.f32 %v6326, %v6495
        %v6497 = vpop.f32.mrb[0].mxu0
        %6498 = vmatprep.mubr.f32.mxu0 0.0
        %6499 = vmatmul.mubr.f32.gmra.mrb[0].mxu0 %v6362
        %v6500 = vpop.f32.mrb[0].mxu0
        %v6501 = vadd.f32 %v6326, %v6500
        %v6502 = vpop.f32.mrb[0].mxu0
        %6503 = vmatprep.mubr.f32.mxu0 0.0
        %6504 = vmatmul.mubr.f32.gmra.mrb[0].mxu0 %v6365
        %v6505 = vpop.f32.mrb[0].mxu0
        %v6506 = vadd.f32 %v6326, %v6505
        %v6507 = vpop.f32.mrb[0].mxu0
        %6508 = vmatprep.mubr.f32.mxu0 0.0
        %6509 = vmatmul.mubr.f32.gmra.mrb[0].mxu0 %v6368
        %v6510 = vpop.f32.mrb[0].mxu0
        %v6511 = vadd.f32 %v6326, %v6510
        %v6512 = vpop.f32.mrb[0].mxu0
        %6513 = vmatprep.mubr.f32.mxu0 0.0
        %6514 = vmatmul.mubr.f32.gmra.mrb[0].mxu0 %v6371
        %v6515 = vpop.f32.mrb[0].mxu0
        %v6516 = vadd.f32 %v6326, %v6515
        %v6517 = vpop.f32.mrb[0].mxu0
        %6518 = vmatprep.mubr.f32.mxu0 0.0
        %6519 = vmatmul.mubr.f32.gmra.mrb[0].mxu0 %v6374
        %v6520 = vpop.f32.mrb[0].mxu0
        %v6521 = vadd.f32 %v6326, %v6520
        %v6522 = vpop.f32.mrb[0].mxu0
        %6523 = vdwg.mxu0
        %v6524 = vld [vmem:[%s13] sm:$0xff]
        %v6525 = vld [vmem:[%s14] sm:$0x1]
        %v6527 = vlaneseq
        %v6528 = vshrl.u32 %v6527, 7
        %v6529 = vsub.s32 0, %v6528
        %v6530 = vrot.slane %v6525, %v6529
        %v6533 = vsel %vm4470, %v6446, 0
        %v6536 = vsel %vm4470, %v6451, 0
        %v6539 = vsel %vm4470, %v6456, 0
        %v6542 = vsel %vm4470, %v6461, 0
        %v6545 = vsel %vm4470, %v6466, 0
        %v6548 = vsel %vm4470, %v6471, 0
        %v6551 = vsel %vm4470, %v6476, 0
        %v6554 = vsel %vm4470, %v6481, 0
        %v6557 = vsel %vm4470, %v6486, 0
        %v6560 = vsel %vm4470, %v6491, 0
        %v6563 = vsel %vm4470, %v6496, 0
        %v6566 = vsel %vm4470, %v6501, 0
        %v6569 = vsel %vm4470, %v6506, 0
        %v6572 = vsel %vm4470, %v6511, 0
        %v6575 = vsel %vm4470, %v6516, 0
        %v6578 = vsel %vm4470, %v6521, 0
        %6580 = vmatprep.subr.mxu0 0.0
        %6581 = vmatpush1.msra.mxu0 %v6524
        %6582 = vmatprep.subr.mxu0 0.0
        %6583 = vmatpush1.msra.mxu0 0.0
        %6584 = vmatprep.subr.mxu0 0.0
        %6585 = vmatpush1.msra.mxu0 0.0
        %6586 = vmatprep.subr.mxu0 0.0
        %6587 = vmatpush1.msra.mxu0 0.0
        %6588 = vmatprep.subr.mxu0 0.0
        %6589 = vmatpush1.msra.mxu0 0.0
        %6590 = vmatprep.subr.mxu0 0.0
        %6591 = vmatpush1.msra.mxu0 0.0
        %6592 = vmatprep.subr.mxu0 0.0
        %6593 = vmatpush1.msra.mxu0 0.0
        %6594 = vmatprep.subr.mxu0 0.0
        %6595 = vmatpush1.msra.mxu0 0.0
        %6596 = vmatprep.subr.mxu0 0.0
        %6597 = vmatpush1.msra.mxu0 0.0
        %6598 = vmatprep.subr.mxu0 0.0
        %6599 = vmatpush1.msra.mxu0 0.0
        %6600 = vmatprep.subr.mxu0 0.0
        %6601 = vmatpush1.msra.mxu0 0.0
        %6602 = vmatprep.subr.mxu0 0.0
        %6603 = vmatpush1.msra.mxu0 0.0
        %6604 = vmatprep.subr.mxu0 0.0
        %6605 = vmatpush1.msra.mxu0 0.0
        %6606 = vmatprep.subr.mxu0 0.0
        %6607 = vmatpush1.msra.mxu0 0.0
        %6608 = vmatprep.subr.mxu0 0.0
        %6609 = vmatpush1.msra.mxu0 0.0
        %6610 = vmatprep.subr.mxu0 0.0
        %6611 = vmatpush1.msra.mxu0 0.0
        %6612 = vmatprep.subr.mxu0 0.0
        %6613 = vmatpush1.msra.mxu0 0.0
        %6614 = vmatprep.subr.mxu0 0.0
        %6615 = vmatpush1.msra.mxu0 0.0
        %6616 = vmatprep.subr.mxu0 0.0
        %6617 = vmatpush1.msra.mxu0 0.0
        %6618 = vmatprep.subr.mxu0 0.0
        %6619 = vmatpush1.msra.mxu0 0.0
        %6620 = vmatprep.subr.mxu0 0.0
        %6621 = vmatpush1.msra.mxu0 0.0
        %6622 = vmatprep.subr.mxu0 0.0
        %6623 = vmatpush1.msra.mxu0 0.0
        %6624 = vmatprep.subr.mxu0 0.0
        %6625 = vmatpush1.msra.mxu0 0.0
        %6626 = vmatprep.subr.mxu0 0.0
        %6627 = vmatpush1.msra.mxu0 0.0
        %6628 = vmatprep.subr.mxu0 0.0
        %6629 = vmatpush1.msra.mxu0 0.0
        %6630 = vmatprep.subr.mxu0 0.0
        %6631 = vmatpush1.msra.mxu0 0.0
        %6632 = vmatprep.subr.mxu0 0.0
        %6633 = vmatpush1.msra.mxu0 0.0
        %6634 = vmatprep.subr.mxu0 0.0
        %6635 = vmatpush1.msra.mxu0 0.0
        %6636 = vmatprep.subr.mxu0 0.0
        %6637 = vmatpush1.msra.mxu0 0.0
        %6638 = vmatprep.subr.mxu0 0.0
        %6639 = vmatpush1.msra.mxu0 0.0
        %6640 = vmatprep.subr.mxu0 0.0
        %6641 = vmatpush1.msra.mxu0 0.0
        %6642 = vmatprep.subr.mxu0 0.0
        %6643 = vmatpush1.msra.mxu0 0.0
        %6644 = vmatprep.mubr.f32.mxu0 0.0
        %6645 = vmatmul.mubr.f32.gmra.mrb[0].mxu0 %v6533
        %v6646 = vpop.f32.mrb[0].mxu0
        %v6647 = vadd.f32 %v6530, %v6646
        %v6648 = vpop.f32.mrb[0].mxu0
        %6649 = vmatprep.mubr.f32.mxu0 0.0
        %6650 = vmatmul.mubr.f32.gmra.mrb[0].mxu0 %v6536
        %v6651 = vpop.f32.mrb[0].mxu0
        %v6652 = vadd.f32 %v6530, %v6651
        %v6653 = vpop.f32.mrb[0].mxu0
        %6654 = vmatprep.mubr.f32.mxu0 0.0
        %6655 = vmatmul.mubr.f32.gmra.mrb[0].mxu0 %v6539
        %v6656 = vpop.f32.mrb[0].mxu0
        %v6657 = vadd.f32 %v6530, %v6656
        %v6658 = vpop.f32.mrb[0].mxu0
        %6659 = vmatprep.mubr.f32.mxu0 0.0
        %6660 = vmatmul.mubr.f32.gmra.mrb[0].mxu0 %v6542
        %v6661 = vpop.f32.mrb[0].mxu0
        %v6662 = vadd.f32 %v6530, %v6661
        %v6663 = vpop.f32.mrb[0].mxu0
        %6664 = vmatprep.mubr.f32.mxu0 0.0
        %6665 = vmatmul.mubr.f32.gmra.mrb[0].mxu0 %v6545
        %v6666 = vpop.f32.mrb[0].mxu0
        %v6667 = vadd.f32 %v6530, %v6666
        %v6668 = vpop.f32.mrb[0].mxu0
        %6669 = vmatprep.mubr.f32.mxu0 0.0
        %6670 = vmatmul.mubr.f32.gmra.mrb[0].mxu0 %v6548
        %v6671 = vpop.f32.mrb[0].mxu0
        %v6672 = vadd.f32 %v6530, %v6671
        %v6673 = vpop.f32.mrb[0].mxu0
        %6674 = vmatprep.mubr.f32.mxu0 0.0
        %6675 = vmatmul.mubr.f32.gmra.mrb[0].mxu0 %v6551
        %v6676 = vpop.f32.mrb[0].mxu0
        %v6677 = vadd.f32 %v6530, %v6676
        %v6678 = vpop.f32.mrb[0].mxu0
        %6679 = vmatprep.mubr.f32.mxu0 0.0
        %6680 = vmatmul.mubr.f32.gmra.mrb[0].mxu0 %v6554
        %v6681 = vpop.f32.mrb[0].mxu0
        %v6682 = vadd.f32 %v6530, %v6681
        %v6683 = vpop.f32.mrb[0].mxu0
        %6684 = vmatprep.mubr.f32.mxu0 0.0
        %6685 = vmatmul.mubr.f32.gmra.mrb[0].mxu0 %v6557
        %v6686 = vpop.f32.mrb[0].mxu0
        %v6687 = vadd.f32 %v6530, %v6686
        %v6688 = vpop.f32.mrb[0].mxu0
        %6689 = vmatprep.mubr.f32.mxu0 0.0
        %6690 = vmatmul.mubr.f32.gmra.mrb[0].mxu0 %v6560
        %v6691 = vpop.f32.mrb[0].mxu0
        %v6692 = vadd.f32 %v6530, %v6691
        %v6693 = vpop.f32.mrb[0].mxu0
        %6694 = vmatprep.mubr.f32.mxu0 0.0
        %6695 = vmatmul.mubr.f32.gmra.mrb[0].mxu0 %v6563
        %v6696 = vpop.f32.mrb[0].mxu0
        %v6697 = vadd.f32 %v6530, %v6696
        %v6698 = vpop.f32.mrb[0].mxu0
        %6699 = vmatprep.mubr.f32.mxu0 0.0
        %6700 = vmatmul.mubr.f32.gmra.mrb[0].mxu0 %v6566
        %v6701 = vpop.f32.mrb[0].mxu0
        %v6702 = vadd.f32 %v6530, %v6701
        %v6703 = vpop.f32.mrb[0].mxu0
        %6704 = vmatprep.mubr.f32.mxu0 0.0
        %6705 = vmatmul.mubr.f32.gmra.mrb[0].mxu0 %v6569
        %v6706 = vpop.f32.mrb[0].mxu0
        %v6707 = vadd.f32 %v6530, %v6706
        %v6708 = vpop.f32.mrb[0].mxu0
        %6709 = vmatprep.mubr.f32.mxu0 0.0
        %6710 = vmatmul.mubr.f32.gmra.mrb[0].mxu0 %v6572
        %v6711 = vpop.f32.mrb[0].mxu0
        %v6712 = vadd.f32 %v6530, %v6711
        %v6713 = vpop.f32.mrb[0].mxu0
        %6714 = vmatprep.mubr.f32.mxu0 0.0
        %6715 = vmatmul.mubr.f32.gmra.mrb[0].mxu0 %v6575
        %v6716 = vpop.f32.mrb[0].mxu0
        %v6717 = vadd.f32 %v6530, %v6716
        %v6718 = vpop.f32.mrb[0].mxu0
        %6719 = vmatprep.mubr.f32.mxu0 0.0
        %6720 = vmatmul.mubr.f32.gmra.mrb[0].mxu0 %v6578
        %v6721 = vpop.f32.mrb[0].mxu0
        %v6722 = vadd.f32 %v6530, %v6721
        %v6723 = vpop.f32.mrb[0].mxu0
        %6724 = vdwg.mxu0
        %v6725 = vmax.f32 %v6647, 0.0
        %v6726 = vmax.f32 %v6652, 0.0
        %v6727 = vmax.f32 %v6657, 0.0
        %v6728 = vmax.f32 %v6662, 0.0
        %v6729 = vmax.f32 %v6667, 0.0
        %v6730 = vmax.f32 %v6672, 0.0
        %v6731 = vmax.f32 %v6677, 0.0
        %v6732 = vmax.f32 %v6682, 0.0
        %v6733 = vmax.f32 %v6687, 0.0
        %v6734 = vmax.f32 %v6692, 0.0
        %v6735 = vmax.f32 %v6697, 0.0
        %v6736 = vmax.f32 %v6702, 0.0
        %v6737 = vmax.f32 %v6707, 0.0
        %v6738 = vmax.f32 %v6712, 0.0
        %v6739 = vmax.f32 %v6717, 0.0
        %v6740 = vmax.f32 %v6722, 0.0
        %v6741 = vld [vmem:[%s15] sm:$0x1]
        %v6743 = vlaneseq
        %v6744 = vshrl.u32 %v6743, 7
        %v6745 = vsub.s32 0, %v6744
        %v6746 = vrot.slane %v6741, %v6745
        %v6748 = vmul.f32 %v6725, %v6746
        %v6749 = vmul.f32 %v6726, %v6746
        %v6750 = vmul.f32 %v6727, %v6746
        %v6751 = vmul.f32 %v6728, %v6746
        %v6752 = vmul.f32 %v6729, %v6746
        %v6753 = vmul.f32 %v6730, %v6746
        %v6754 = vmul.f32 %v6731, %v6746
        %v6755 = vmul.f32 %v6732, %v6746
        %v6756 = vmul.f32 %v6733, %v6746
        %v6757 = vmul.f32 %v6734, %v6746
        %v6758 = vmul.f32 %v6735, %v6746
        %v6759 = vmul.f32 %v6736, %v6746
        %v6760 = vmul.f32 %v6737, %v6746
        %v6761 = vmul.f32 %v6738, %v6746
        %v6762 = vmul.f32 %v6739, %v6746
        %v6763 = vmul.f32 %v6740, %v6746
        %v6764 = vld [vmem:[%s16] sm:$0x1]
        %v6766 = vlaneseq
        %v6767 = vshrl.u32 %v6766, 7
        %v6768 = vsub.s32 0, %v6767
        %v6769 = vrot.slane %v6764, %v6768
        %v6771 = vadd.f32 %v6748, %v6769
        %v6772 = vadd.f32 %v6749, %v6769
        %v6773 = vadd.f32 %v6750, %v6769
        %v6774 = vadd.f32 %v6751, %v6769
        %v6775 = vadd.f32 %v6752, %v6769
        %v6776 = vadd.f32 %v6753, %v6769
        %v6777 = vadd.f32 %v6754, %v6769
        %v6778 = vadd.f32 %v6755, %v6769
        %v6779 = vadd.f32 %v6756, %v6769
        %v6780 = vadd.f32 %v6757, %v6769
        %v6781 = vadd.f32 %v6758, %v6769
        %v6782 = vadd.f32 %v6759, %v6769
        %v6783 = vadd.f32 %v6760, %v6769
        %v6784 = vadd.f32 %v6761, %v6769
        %v6785 = vadd.f32 %v6762, %v6769
        %v6786 = vadd.f32 %v6763, %v6769
        %v6787 = vmul.f32 %v6771, %v6288
        %v6788 = vmul.f32 %v6772, %v6289
        %v6789 = vmul.f32 %v6773, %v6290
        %v6790 = vmul.f32 %v6774, %v6291
        %v6791 = vmul.f32 %v6775, %v6292
        %v6792 = vmul.f32 %v6776, %v6293
        %v6793 = vmul.f32 %v6777, %v6294
        %v6794 = vmul.f32 %v6778, %v6295
        %v6795 = vmul.f32 %v6779, %v6296
        %v6796 = vmul.f32 %v6780, %v6297
        %v6797 = vmul.f32 %v6781, %v6298
        %v6798 = vmul.f32 %v6782, %v6299
        %v6799 = vmul.f32 %v6783, %v6300
        %v6800 = vmul.f32 %v6784, %v6301
        %v6801 = vmul.f32 %v6785, %v6302
        %v6802 = vmul.f32 %v6786, %v6303
        %6803 = vst.msk [vmem:[#allocation3 + $0x18] sm:$0xff] %vm4470, %v6787
        %6804 = vst.msk [vmem:[#allocation3 + $0x20] sm:$0xff] %vm4470, %v6788
        %6805 = vst.msk [vmem:[#allocation3 + $0x28] sm:$0xff] %vm4470, %v6789
        %6806 = vst.msk [vmem:[#allocation3 + $0x30] sm:$0xff] %vm4470, %v6790
        %6807 = vst.msk [vmem:[#allocation3 + $0x38] sm:$0xff] %vm4470, %v6791
        %6808 = vst.msk [vmem:[#allocation3 + $0x40] sm:$0xff] %vm4470, %v6792
        %6809 = vst.msk [vmem:[#allocation3 + $0x48] sm:$0xff] %vm4470, %v6793
        %6810 = vst.msk [vmem:[#allocation3 + $0x50] sm:$0xff] %vm4470, %v6794
        %6811 = vst.msk [vmem:[#allocation3 + $0x58] sm:$0xff] %vm4470, %v6795
        %6812 = vst.msk [vmem:[#allocation3 + $0x60] sm:$0xff] %vm4470, %v6796
        %6813 = vst.msk [vmem:[#allocation3 + $0x68] sm:$0xff] %vm4470, %v6797
        %6814 = vst.msk [vmem:[#allocation3 + $0x70] sm:$0xff] %vm4470, %v6798
        %6815 = vst.msk [vmem:[#allocation3 + $0x78] sm:$0xff] %vm4470, %v6799
        %6816 = vst.msk [vmem:[#allocation3 + $0x80] sm:$0xff] %vm4470, %v6800
        %6817 = vst.msk [vmem:[#allocation3 + $0x88] sm:$0xff] %vm4470, %v6801
        %6818 = vst.msk [vmem:[#allocation3 + $0x90] sm:$0xff] %vm4470, %v6802
        %v6819 = vld [vmem:[#allocation3 + $0x7] sm:$0xff]
        %v6820 = vld [vmem:[#allocation3 + $0xf] sm:$0xff]
        %v6821 = vld [vmem:[#allocation3 + $0x17] sm:$0xff]
        %v6822 = vld [vmem:[#allocation3 + $0x1f] sm:$0xff]
        %v6823 = vld [vmem:[#allocation3 + $0x27] sm:$0xff]
        %v6824 = vld [vmem:[#allocation3 + $0x2f] sm:$0xff]
        %v6825 = vld [vmem:[#allocation3 + $0x37] sm:$0xff]
        %v6826 = vld [vmem:[#allocation3 + $0x3f] sm:$0xff]
        %v6827 = vld [vmem:[#allocation3 + $0x47] sm:$0xff]
        %v6828 = vld [vmem:[#allocation3 + $0x4f] sm:$0xff]
        %v6829 = vld [vmem:[#allocation3 + $0x57] sm:$0xff]
        %v6830 = vld [vmem:[#allocation3 + $0x5f] sm:$0xff]
        %v6831 = vld [vmem:[#allocation3 + $0x67] sm:$0xff]
        %v6832 = vld [vmem:[#allocation3 + $0x6f] sm:$0xff]
        %v6833 = vld [vmem:[#allocation3 + $0x77] sm:$0xff]
        %v6834 = vld [vmem:[#allocation3 + $0x7f] sm:$0xff]
        %v6835 = vld [vmem:[#allocation3 + $0x8] sm:$0xff]
        %v6836 = vld [vmem:[#allocation3 + $0x10] sm:$0xff]
        %v6837 = vld [vmem:[#allocation3 + $0x18] sm:$0xff]
        %v6838 = vld [vmem:[#allocation3 + $0x20] sm:$0xff]
        %v6839 = vld [vmem:[#allocation3 + $0x28] sm:$0xff]
        %v6840 = vld [vmem:[#allocation3 + $0x30] sm:$0xff]
        %v6841 = vld [vmem:[#allocation3 + $0x38] sm:$0xff]
        %v6842 = vld [vmem:[#allocation3 + $0x40] sm:$0xff]
        %v6843 = vld [vmem:[#allocation3 + $0x48] sm:$0xff]
        %v6844 = vld [vmem:[#allocation3 + $0x50] sm:$0xff]
        %v6845 = vld [vmem:[#allocation3 + $0x58] sm:$0xff]
        %v6846 = vld [vmem:[#allocation3 + $0x60] sm:$0xff]
        %v6847 = vld [vmem:[#allocation3 + $0x68] sm:$0xff]
        %v6848 = vld [vmem:[#allocation3 + $0x70] sm:$0xff]
        %v6849 = vld [vmem:[#allocation3 + $0x78] sm:$0xff]
        %v6850 = vld [vmem:[#allocation3 + $0x80] sm:$0xff]
        %v6851 = vld [vmem:[#allocation3 + $0x9] sm:$0xff]
        %v6852 = vld [vmem:[#allocation3 + $0x11] sm:$0xff]
        %v6853 = vld [vmem:[#allocation3 + $0x19] sm:$0xff]
        %v6854 = vld [vmem:[#allocation3 + $0x21] sm:$0xff]
        %v6855 = vld [vmem:[#allocation3 + $0x29] sm:$0xff]
        %v6856 = vld [vmem:[#allocation3 + $0x31] sm:$0xff]
        %v6857 = vld [vmem:[#allocation3 + $0x39] sm:$0xff]
        %v6858 = vld [vmem:[#allocation3 + $0x41] sm:$0xff]
        %v6859 = vld [vmem:[#allocation3 + $0x49] sm:$0xff]
        %v6860 = vld [vmem:[#allocation3 + $0x51] sm:$0xff]
        %v6861 = vld [vmem:[#allocation3 + $0x59] sm:$0xff]
        %v6862 = vld [vmem:[#allocation3 + $0x61] sm:$0xff]
        %v6863 = vld [vmem:[#allocation3 + $0x69] sm:$0xff]
        %v6864 = vld [vmem:[#allocation3 + $0x71] sm:$0xff]
        %v6865 = vld [vmem:[#allocation3 + $0x79] sm:$0xff]
        %v6866 = vld [vmem:[#allocation3 + $0x81] sm:$0xff]
        %v6867 = vld [vmem:[#allocation3 + $0x87] sm:$0xff]
        %v6868 = vld [vmem:[#allocation3 + $0x8f] sm:$0xff]
        %v6869 = vld [vmem:[#allocation3 + $0x88] sm:$0xff]
        %v6870 = vld [vmem:[#allocation3 + $0x90] sm:$0xff]
        %v6871 = vld [vmem:[#allocation3 + $0x89] sm:$0xff]
        %v6872 = vld [vmem:[#allocation3 + $0x91] sm:$0xff]
        %v6873 = vld [vmem:[#allocation3 + $0x97] sm:$0xff]
        %v6874 = vld [vmem:[#allocation3 + $0x9f] sm:$0xff]
        %v6875 = vld [vmem:[#allocation3 + $0x98] sm:$0xff]
        %v6876 = vld [vmem:[#allocation3 + $0xa0] sm:$0xff]
        %v6877 = vld [vmem:[#allocation3 + $0x99] sm:$0xff]
        %v6878 = vld [vmem:[#allocation3 + $0xa1] sm:$0xff]
        %6895 = vrot.lane.b32.xlu0 %v6835, 8
        %v6896 = vpop.permute.xlu0 %6895
        %6897 = vrot.lane.b32.xlu0 %v6836, 8
        %v6898 = vpop.permute.xlu0 %6897
        %6899 = vrot.lane.b32.xlu0 %v6837, 8
        %v6900 = vpop.permute.xlu0 %6899
        %6901 = vrot.lane.b32.xlu0 %v6838, 8
        %v6902 = vpop.permute.xlu0 %6901
        %6903 = vrot.lane.b32.xlu0 %v6839, 8
        %v6904 = vpop.permute.xlu0 %6903
        %6905 = vrot.lane.b32.xlu0 %v6840, 8
        %v6906 = vpop.permute.xlu0 %6905
        %6907 = vrot.lane.b32.xlu0 %v6841, 8
        %v6908 = vpop.permute.xlu0 %6907
        %6909 = vrot.lane.b32.xlu0 %v6842, 8
        %v6910 = vpop.permute.xlu0 %6909
        %6911 = vrot.lane.b32.xlu0 %v6843, 8
        %v6912 = vpop.permute.xlu0 %6911
        %6913 = vrot.lane.b32.xlu0 %v6844, 8
        %v6914 = vpop.permute.xlu0 %6913
        %6915 = vrot.lane.b32.xlu0 %v6845, 8
        %v6916 = vpop.permute.xlu0 %6915
        %6917 = vrot.lane.b32.xlu0 %v6846, 8
        %v6918 = vpop.permute.xlu0 %6917
        %6919 = vrot.lane.b32.xlu0 %v6847, 8
        %v6920 = vpop.permute.xlu0 %6919
        %6921 = vrot.lane.b32.xlu0 %v6848, 8
        %v6922 = vpop.permute.xlu0 %6921
        %6923 = vrot.lane.b32.xlu0 %v6849, 8
        %v6924 = vpop.permute.xlu0 %6923
        %6925 = vrot.lane.b32.xlu0 %v6850, 8
        %v6926 = vpop.permute.xlu0 %6925
        %6959 = vrot.lane.b32.xlu0 %v6851, 16
        %v6960 = vpop.permute.xlu0 %6959
        %6961 = vrot.lane.b32.xlu0 %v6852, 16
        %v6962 = vpop.permute.xlu0 %6961
        %6963 = vrot.lane.b32.xlu0 %v6853, 16
        %v6964 = vpop.permute.xlu0 %6963
        %6965 = vrot.lane.b32.xlu0 %v6854, 16
        %v6966 = vpop.permute.xlu0 %6965
        %6967 = vrot.lane.b32.xlu0 %v6855, 16
        %v6968 = vpop.permute.xlu0 %6967
        %6969 = vrot.lane.b32.xlu0 %v6856, 16
        %v6970 = vpop.permute.xlu0 %6969
        %6971 = vrot.lane.b32.xlu0 %v6857, 16
        %v6972 = vpop.permute.xlu0 %6971
        %6973 = vrot.lane.b32.xlu0 %v6858, 16
        %v6974 = vpop.permute.xlu0 %6973
        %6975 = vrot.lane.b32.xlu0 %v6859, 16
        %v6976 = vpop.permute.xlu0 %6975
        %6977 = vrot.lane.b32.xlu0 %v6860, 16
        %v6978 = vpop.permute.xlu0 %6977
        %6979 = vrot.lane.b32.xlu0 %v6861, 16
        %v6980 = vpop.permute.xlu0 %6979
        %6981 = vrot.lane.b32.xlu0 %v6862, 16
        %v6982 = vpop.permute.xlu0 %6981
        %6983 = vrot.lane.b32.xlu0 %v6863, 16
        %v6984 = vpop.permute.xlu0 %6983
        %6985 = vrot.lane.b32.xlu0 %v6864, 16
        %v6986 = vpop.permute.xlu0 %6985
        %6987 = vrot.lane.b32.xlu0 %v6865, 16
        %v6988 = vpop.permute.xlu0 %6987
        %6989 = vrot.lane.b32.xlu0 %v6866, 16
        %v6990 = vpop.permute.xlu0 %6989
        %7023 = vrot.lane.b32.xlu0 %v6821, 24
        %v7024 = vpop.permute.xlu0 %7023
        %7025 = vrot.lane.b32.xlu0 %v6822, 24
        %v7026 = vpop.permute.xlu0 %7025
        %7027 = vrot.lane.b32.xlu0 %v6823, 24
        %v7028 = vpop.permute.xlu0 %7027
        %7029 = vrot.lane.b32.xlu0 %v6824, 24
        %v7030 = vpop.permute.xlu0 %7029
        %7031 = vrot.lane.b32.xlu0 %v6825, 24
        %v7032 = vpop.permute.xlu0 %7031
        %7033 = vrot.lane.b32.xlu0 %v6826, 24
        %v7034 = vpop.permute.xlu0 %7033
        %7035 = vrot.lane.b32.xlu0 %v6827, 24
        %v7036 = vpop.permute.xlu0 %7035
        %7037 = vrot.lane.b32.xlu0 %v6828, 24
        %v7038 = vpop.permute.xlu0 %7037
        %7039 = vrot.lane.b32.xlu0 %v6829, 24
        %v7040 = vpop.permute.xlu0 %7039
        %7041 = vrot.lane.b32.xlu0 %v6830, 24
        %v7042 = vpop.permute.xlu0 %7041
        %7043 = vrot.lane.b32.xlu0 %v6831, 24
        %v7044 = vpop.permute.xlu0 %7043
        %7045 = vrot.lane.b32.xlu0 %v6832, 24
        %v7046 = vpop.permute.xlu0 %7045
        %7047 = vrot.lane.b32.xlu0 %v6833, 24
        %v7048 = vpop.permute.xlu0 %7047
        %7049 = vrot.lane.b32.xlu0 %v6834, 24
        %v7050 = vpop.permute.xlu0 %7049
        %7051 = vrot.lane.b32.xlu0 %v6867, 24
        %v7052 = vpop.permute.xlu0 %7051
        %7053 = vrot.lane.b32.xlu0 %v6868, 24
        %v7054 = vpop.permute.xlu0 %7053
        %7073 = vrot.lane.b32.xlu0 %v6837, 32
        %v7074 = vpop.permute.xlu0 %7073
        %7075 = vrot.lane.b32.xlu0 %v6838, 32
        %v7076 = vpop.permute.xlu0 %7075
        %7077 = vrot.lane.b32.xlu0 %v6839, 32
        %v7078 = vpop.permute.xlu0 %7077
        %7079 = vrot.lane.b32.xlu0 %v6840, 32
        %v7080 = vpop.permute.xlu0 %7079
        %7081 = vrot.lane.b32.xlu0 %v6841, 32
        %v7082 = vpop.permute.xlu0 %7081
        %7083 = vrot.lane.b32.xlu0 %v6842, 32
        %v7084 = vpop.permute.xlu0 %7083
        %7085 = vrot.lane.b32.xlu0 %v6843, 32
        %v7086 = vpop.permute.xlu0 %7085
        %7087 = vrot.lane.b32.xlu0 %v6844, 32
        %v7088 = vpop.permute.xlu0 %7087
        %7089 = vrot.lane.b32.xlu0 %v6845, 32
        %v7090 = vpop.permute.xlu0 %7089
        %7091 = vrot.lane.b32.xlu0 %v6846, 32
        %v7092 = vpop.permute.xlu0 %7091
        %7093 = vrot.lane.b32.xlu0 %v6847, 32
        %v7094 = vpop.permute.xlu0 %7093
        %7095 = vrot.lane.b32.xlu0 %v6848, 32
        %v7096 = vpop.permute.xlu0 %7095
        %7097 = vrot.lane.b32.xlu0 %v6849, 32
        %v7098 = vpop.permute.xlu0 %7097
        %7099 = vrot.lane.b32.xlu0 %v6850, 32
        %v7100 = vpop.permute.xlu0 %7099
        %7101 = vrot.lane.b32.xlu0 %v6869, 32
        %v7102 = vpop.permute.xlu0 %7101
        %7103 = vrot.lane.b32.xlu0 %v6870, 32
        %v7104 = vpop.permute.xlu0 %7103
        %7123 = vrot.lane.b32.xlu0 %v6853, 40
        %v7124 = vpop.permute.xlu0 %7123
        %7125 = vrot.lane.b32.xlu0 %v6854, 40
        %v7126 = vpop.permute.xlu0 %7125
        %7127 = vrot.lane.b32.xlu0 %v6855, 40
        %v7128 = vpop.permute.xlu0 %7127
        %7129 = vrot.lane.b32.xlu0 %v6856, 40
        %v7130 = vpop.permute.xlu0 %7129
        %7131 = vrot.lane.b32.xlu0 %v6857, 40
        %v7132 = vpop.permute.xlu0 %7131
        %7133 = vrot.lane.b32.xlu0 %v6858, 40
        %v7134 = vpop.permute.xlu0 %7133
        %7135 = vrot.lane.b32.xlu0 %v6859, 40
        %v7136 = vpop.permute.xlu0 %7135
        %7137 = vrot.lane.b32.xlu0 %v6860, 40
        %v7138 = vpop.permute.xlu0 %7137
        %7139 = vrot.lane.b32.xlu0 %v6861, 40
        %v7140 = vpop.permute.xlu0 %7139
        %7141 = vrot.lane.b32.xlu0 %v6862, 40
        %v7142 = vpop.permute.xlu0 %7141
        %7143 = vrot.lane.b32.xlu0 %v6863, 40
        %v7144 = vpop.permute.xlu0 %7143
        %7145 = vrot.lane.b32.xlu0 %v6864, 40
        %v7146 = vpop.permute.xlu0 %7145
        %7147 = vrot.lane.b32.xlu0 %v6865, 40
        %v7148 = vpop.permute.xlu0 %7147
        %7149 = vrot.lane.b32.xlu0 %v6866, 40
        %v7150 = vpop.permute.xlu0 %7149
        %7151 = vrot.lane.b32.xlu0 %v6871, 40
        %v7152 = vpop.permute.xlu0 %7151
        %7153 = vrot.lane.b32.xlu0 %v6872, 40
        %v7154 = vpop.permute.xlu0 %7153
        %7173 = vrot.lane.b32.xlu0 %v6823, 48
        %v7174 = vpop.permute.xlu0 %7173
        %7175 = vrot.lane.b32.xlu0 %v6824, 48
        %v7176 = vpop.permute.xlu0 %7175
        %7177 = vrot.lane.b32.xlu0 %v6825, 48
        %v7178 = vpop.permute.xlu0 %7177
        %7179 = vrot.lane.b32.xlu0 %v6826, 48
        %v7180 = vpop.permute.xlu0 %7179
        %7181 = vrot.lane.b32.xlu0 %v6827, 48
        %v7182 = vpop.permute.xlu0 %7181
        %7183 = vrot.lane.b32.xlu0 %v6828, 48
        %v7184 = vpop.permute.xlu0 %7183
        %7185 = vrot.lane.b32.xlu0 %v6829, 48
        %v7186 = vpop.permute.xlu0 %7185
        %7187 = vrot.lane.b32.xlu0 %v6830, 48
        %v7188 = vpop.permute.xlu0 %7187
        %7189 = vrot.lane.b32.xlu0 %v6831, 48
        %v7190 = vpop.permute.xlu0 %7189
        %7191 = vrot.lane.b32.xlu0 %v6832, 48
        %v7192 = vpop.permute.xlu0 %7191
        %7193 = vrot.lane.b32.xlu0 %v6833, 48
        %v7194 = vpop.permute.xlu0 %7193
        %7195 = vrot.lane.b32.xlu0 %v6834, 48
        %v7196 = vpop.permute.xlu0 %7195
        %7197 = vrot.lane.b32.xlu0 %v6867, 48
        %v7198 = vpop.permute.xlu0 %7197
        %7199 = vrot.lane.b32.xlu0 %v6868, 48
        %v7200 = vpop.permute.xlu0 %7199
        %7201 = vrot.lane.b32.xlu0 %v6873, 48
        %v7202 = vpop.permute.xlu0 %7201
        %7203 = vrot.lane.b32.xlu0 %v6874, 48
        %v7204 = vpop.permute.xlu0 %7203
        %7223 = vrot.lane.b32.xlu0 %v6839, 56
        %v7224 = vpop.permute.xlu0 %7223
        %7225 = vrot.lane.b32.xlu0 %v6840, 56
        %v7226 = vpop.permute.xlu0 %7225
        %7227 = vrot.lane.b32.xlu0 %v6841, 56
        %v7228 = vpop.permute.xlu0 %7227
        %7229 = vrot.lane.b32.xlu0 %v6842, 56
        %v7230 = vpop.permute.xlu0 %7229
        %7231 = vrot.lane.b32.xlu0 %v6843, 56
        %v7232 = vpop.permute.xlu0 %7231
        %7233 = vrot.lane.b32.xlu0 %v6844, 56
        %v7234 = vpop.permute.xlu0 %7233
        %7235 = vrot.lane.b32.xlu0 %v6845, 56
        %v7236 = vpop.permute.xlu0 %7235
        %7237 = vrot.lane.b32.xlu0 %v6846, 56
        %v7238 = vpop.permute.xlu0 %7237
        %7239 = vrot.lane.b32.xlu0 %v6847, 56
        %v7240 = vpop.permute.xlu0 %7239
        %7241 = vrot.lane.b32.xlu0 %v6848, 56
        %v7242 = vpop.permute.xlu0 %7241
        %7243 = vrot.lane.b32.xlu0 %v6849, 56
        %v7244 = vpop.permute.xlu0 %7243
        %7245 = vrot.lane.b32.xlu0 %v6850, 56
        %v7246 = vpop.permute.xlu0 %7245
        %7247 = vrot.lane.b32.xlu0 %v6869, 56
        %v7248 = vpop.permute.xlu0 %7247
        %7249 = vrot.lane.b32.xlu0 %v6870, 56
        %v7250 = vpop.permute.xlu0 %7249
        %7251 = vrot.lane.b32.xlu0 %v6875, 56
        %v7252 = vpop.permute.xlu0 %7251
        %7253 = vrot.lane.b32.xlu0 %v6876, 56
        %v7254 = vpop.permute.xlu0 %7253
        %7273 = vrot.lane.b32.xlu0 %v6855, 64
        %v7274 = vpop.permute.xlu0 %7273
        %7275 = vrot.lane.b32.xlu0 %v6856, 64
        %v7276 = vpop.permute.xlu0 %7275
        %7277 = vrot.lane.b32.xlu0 %v6857, 64
        %v7278 = vpop.permute.xlu0 %7277
        %7279 = vrot.lane.b32.xlu0 %v6858, 64
        %v7280 = vpop.permute.xlu0 %7279
        %7281 = vrot.lane.b32.xlu0 %v6859, 64
        %v7282 = vpop.permute.xlu0 %7281
        %7283 = vrot.lane.b32.xlu0 %v6860, 64
        %v7284 = vpop.permute.xlu0 %7283
        %7285 = vrot.lane.b32.xlu0 %v6861, 64
        %v7286 = vpop.permute.xlu0 %7285
        %7287 = vrot.lane.b32.xlu0 %v6862, 64
        %v7288 = vpop.permute.xlu0 %7287
        %7289 = vrot.lane.b32.xlu0 %v6863, 64
        %v7290 = vpop.permute.xlu0 %7289
        %7291 = vrot.lane.b32.xlu0 %v6864, 64
        %v7292 = vpop.permute.xlu0 %7291
        %7293 = vrot.lane.b32.xlu0 %v6865, 64
        %v7294 = vpop.permute.xlu0 %7293
        %7295 = vrot.lane.b32.xlu0 %v6866, 64
        %v7296 = vpop.permute.xlu0 %7295
        %7297 = vrot.lane.b32.xlu0 %v6871, 64
        %v7298 = vpop.permute.xlu0 %7297
        %7299 = vrot.lane.b32.xlu0 %v6872, 64
        %v7300 = vpop.permute.xlu0 %7299
        %7301 = vrot.lane.b32.xlu0 %v6877, 64
        %v7302 = vpop.permute.xlu0 %7301
        %7303 = vrot.lane.b32.xlu0 %v6878, 64
        %v7304 = vpop.permute.xlu0 %7303
        %v7321 = vsel %vm4470, %v6819, %v6896
        %v7322 = vsel %vm4470, %v6820, %v6898
        %v7323 = vsel %vm4470, %v6821, %v6900
        %v7324 = vsel %vm4470, %v6822, %v6902
        %v7325 = vsel %vm4470, %v6823, %v6904
        %v7326 = vsel %vm4470, %v6824, %v6906
        %v7327 = vsel %vm4470, %v6825, %v6908
        %v7328 = vsel %vm4470, %v6826, %v6910
        %v7329 = vsel %vm4470, %v6827, %v6912
        %v7330 = vsel %vm4470, %v6828, %v6914
        %v7331 = vsel %vm4470, %v6829, %v6916
        %v7332 = vsel %vm4470, %v6830, %v6918
        %v7333 = vsel %vm4470, %v6831, %v6920
        %v7334 = vsel %vm4470, %v6832, %v6922
        %v7335 = vsel %vm4470, %v6833, %v6924
        %v7336 = vsel %vm4470, %v6834, %v6926
        %v7337 = vsel %vm4568, %v7321, %v6960
        %v7338 = vsel %vm4568, %v7322, %v6962
        %v7339 = vsel %vm4568, %v7323, %v6964
        %v7340 = vsel %vm4568, %v7324, %v6966
        %v7341 = vsel %vm4568, %v7325, %v6968
        %v7342 = vsel %vm4568, %v7326, %v6970
        %v7343 = vsel %vm4568, %v7327, %v6972
        %v7344 = vsel %vm4568, %v7328, %v6974
        %v7345 = vsel %vm4568, %v7329, %v6976
        %v7346 = vsel %vm4568, %v7330, %v6978
        %v7347 = vsel %vm4568, %v7331, %v6980
        %v7348 = vsel %vm4568, %v7332, %v6982
        %v7349 = vsel %vm4568, %v7333, %v6984
        %v7350 = vsel %vm4568, %v7334, %v6986
        %v7351 = vsel %vm4568, %v7335, %v6988
        %v7352 = vsel %vm4568, %v7336, %v6990
        %v7353 = vsel %vm4666, %v7337, %v7024
        %v7354 = vsel %vm4666, %v7338, %v7026
        %v7355 = vsel %vm4666, %v7339, %v7028
        %v7356 = vsel %vm4666, %v7340, %v7030
        %v7357 = vsel %vm4666, %v7341, %v7032
        %v7358 = vsel %vm4666, %v7342, %v7034
        %v7359 = vsel %vm4666, %v7343, %v7036
        %v7360 = vsel %vm4666, %v7344, %v7038
        %v7361 = vsel %vm4666, %v7345, %v7040
        %v7362 = vsel %vm4666, %v7346, %v7042
        %v7363 = vsel %vm4666, %v7347, %v7044
        %v7364 = vsel %vm4666, %v7348, %v7046
        %v7365 = vsel %vm4666, %v7349, %v7048
        %v7366 = vsel %vm4666, %v7350, %v7050
        %v7367 = vsel %vm4666, %v7351, %v7052
        %v7368 = vsel %vm4666, %v7352, %v7054
        %v7369 = vsel %vm4764, %v7353, %v7074
        %v7370 = vsel %vm4764, %v7354, %v7076
        %v7371 = vsel %vm4764, %v7355, %v7078
        %v7372 = vsel %vm4764, %v7356, %v7080
        %v7373 = vsel %vm4764, %v7357, %v7082
        %v7374 = vsel %vm4764, %v7358, %v7084
        %v7375 = vsel %vm4764, %v7359, %v7086
        %v7376 = vsel %vm4764, %v7360, %v7088
        %v7377 = vsel %vm4764, %v7361, %v7090
        %v7378 = vsel %vm4764, %v7362, %v7092
        %v7379 = vsel %vm4764, %v7363, %v7094
        %v7380 = vsel %vm4764, %v7364, %v7096
        %v7381 = vsel %vm4764, %v7365, %v7098
        %v7382 = vsel %vm4764, %v7366, %v7100
        %v7383 = vsel %vm4764, %v7367, %v7102
        %v7384 = vsel %vm4764, %v7368, %v7104
        %vm7385 = vcmask 326656
        %v7386 = vsel %vm7385, %v7369, %v7124
        %v7387 = vsel %vm7385, %v7370, %v7126
        %v7388 = vsel %vm7385, %v7371, %v7128
        %v7389 = vsel %vm7385, %v7372, %v7130
        %v7390 = vsel %vm7385, %v7373, %v7132
        %v7391 = vsel %vm7385, %v7374, %v7134
        %v7392 = vsel %vm7385, %v7375, %v7136
        %v7393 = vsel %vm7385, %v7376, %v7138
        %v7394 = vsel %vm7385, %v7377, %v7140
        %v7395 = vsel %vm7385, %v7378, %v7142
        %v7396 = vsel %vm7385, %v7379, %v7144
        %v7397 = vsel %vm7385, %v7380, %v7146
        %v7398 = vsel %vm7385, %v7381, %v7148
        %v7399 = vsel %vm7385, %v7382, %v7150
        %v7400 = vsel %vm7385, %v7383, %v7152
        %v7401 = vsel %vm7385, %v7384, %v7154
        %vm7402 = vcmask 392192
        %v7403 = vsel %vm7402, %v7386, %v7174
        %v7404 = vsel %vm7402, %v7387, %v7176
        %v7405 = vsel %vm7402, %v7388, %v7178
        %v7406 = vsel %vm7402, %v7389, %v7180
        %v7407 = vsel %vm7402, %v7390, %v7182
        %v7408 = vsel %vm7402, %v7391, %v7184
        %v7409 = vsel %vm7402, %v7392, %v7186
        %v7410 = vsel %vm7402, %v7393, %v7188
        %v7411 = vsel %vm7402, %v7394, %v7190
        %v7412 = vsel %vm7402, %v7395, %v7192
        %v7413 = vsel %vm7402, %v7396, %v7194
        %v7414 = vsel %vm7402, %v7397, %v7196
        %v7415 = vsel %vm7402, %v7398, %v7198
        %v7416 = vsel %vm7402, %v7399, %v7200
        %v7417 = vsel %vm7402, %v7400, %v7202
        %v7418 = vsel %vm7402, %v7401, %v7204
        %vm7419 = vcmask 457728
        %v7420 = vsel %vm7419, %v7403, %v7224
        %v7421 = vsel %vm7419, %v7404, %v7226
        %v7422 = vsel %vm7419, %v7405, %v7228
        %v7423 = vsel %vm7419, %v7406, %v7230
        %v7424 = vsel %vm7419, %v7407, %v7232
        %v7425 = vsel %vm7419, %v7408, %v7234
        %v7426 = vsel %vm7419, %v7409, %v7236
        %v7427 = vsel %vm7419, %v7410, %v7238
        %v7428 = vsel %vm7419, %v7411, %v7240
        %v7429 = vsel %vm7419, %v7412, %v7242
        %v7430 = vsel %vm7419, %v7413, %v7244
        %v7431 = vsel %vm7419, %v7414, %v7246
        %v7432 = vsel %vm7419, %v7415, %v7248
        %v7433 = vsel %vm7419, %v7416, %v7250
        %v7434 = vsel %vm7419, %v7417, %v7252
        %v7435 = vsel %vm7419, %v7418, %v7254
        %vm7436 = vcmask 523264
        %v7437 = vsel %vm7436, %v7420, %v7274
        %v7438 = vsel %vm7436, %v7421, %v7276
        %v7439 = vsel %vm7436, %v7422, %v7278
        %v7440 = vsel %vm7436, %v7423, %v7280
        %v7441 = vsel %vm7436, %v7424, %v7282
        %v7442 = vsel %vm7436, %v7425, %v7284
        %v7443 = vsel %vm7436, %v7426, %v7286
        %v7444 = vsel %vm7436, %v7427, %v7288
        %v7445 = vsel %vm7436, %v7428, %v7290
        %v7446 = vsel %vm7436, %v7429, %v7292
        %v7447 = vsel %vm7436, %v7430, %v7294
        %v7448 = vsel %vm7436, %v7431, %v7296
        %v7449 = vsel %vm7436, %v7432, %v7298
        %v7450 = vsel %vm7436, %v7433, %v7300
        %v7451 = vsel %vm7436, %v7434, %v7302
        %v7452 = vsel %vm7436, %v7435, %v7304
        %v7453 = vld [vmem:[%s17] sm:$0xff]
        %v7454 = vld [vmem:[%s17 + $0x8] sm:$0xff]
        %v7455 = vld [vmem:[%s17 + $0x10] sm:$0xff]
        %v7456 = vld [vmem:[%s17 + $0x18] sm:$0xff]
        %v7457 = vld [vmem:[%s17 + $0x20] sm:$0xff]
        %v7458 = vld [vmem:[%s17 + $0x28] sm:$0xff]
        %v7459 = vld [vmem:[%s17 + $0x30] sm:$0xff]
        %v7460 = vld [vmem:[%s17 + $0x38] sm:$0xff]
        %v7461 = vld [vmem:[%s17 + $0x40] sm:$0xff]
        %v7462 = vld [vmem:[%s18] sm:$0x1]
        %v7464 = vlaneseq
        %v7465 = vshrl.u32 %v7464, 7
        %v7466 = vsub.s32 0, %v7465
        %v7467 = vrot.slane %v7462, %v7466
        %vm7469 = vcmask 588800
        %v7471 = vsel %vm7469, %v7437, 0
        %v7474 = vsel %vm7469, %v7438, 0
        %v7477 = vsel %vm7469, %v7439, 0
        %v7480 = vsel %vm7469, %v7440, 0
        %v7483 = vsel %vm7469, %v7441, 0
        %v7486 = vsel %vm7469, %v7442, 0
        %v7489 = vsel %vm7469, %v7443, 0
        %v7492 = vsel %vm7469, %v7444, 0
        %v7495 = vsel %vm7469, %v7445, 0
        %v7498 = vsel %vm7469, %v7446, 0
        %v7501 = vsel %vm7469, %v7447, 0
        %v7504 = vsel %vm7469, %v7448, 0
        %v7507 = vsel %vm7469, %v7449, 0
        %v7510 = vsel %vm7469, %v7450, 0
        %v7513 = vsel %vm7469, %v7451, 0
        %v7516 = vsel %vm7469, %v7452, 0
        %7518 = vmatprep.subr.mxu0 0.0
        %7519 = vmatpush1.msra.mxu0 %v7453
        %7520 = vmatprep.subr.mxu0 0.0
        %7521 = vmatpush1.msra.mxu0 %v7454
        %7522 = vmatprep.subr.mxu0 0.0
        %7523 = vmatpush1.msra.mxu0 %v7455
        %7524 = vmatprep.subr.mxu0 0.0
        %7525 = vmatpush1.msra.mxu0 %v7456
        %7526 = vmatprep.subr.mxu0 0.0
        %7527 = vmatpush1.msra.mxu0 %v7457
        %7528 = vmatprep.subr.mxu0 0.0
        %7529 = vmatpush1.msra.mxu0 %v7458
        %7530 = vmatprep.subr.mxu0 0.0
        %7531 = vmatpush1.msra.mxu0 %v7459
        %7532 = vmatprep.subr.mxu0 0.0
        %7533 = vmatpush1.msra.mxu0 %v7460
        %7534 = vmatprep.subr.mxu0 0.0
        %7535 = vmatpush1.msra.mxu0 %v7461
        %7536 = vmatprep.subr.mxu0 0.0
        %7537 = vmatpush1.msra.mxu0 0.0
        %7538 = vmatprep.subr.mxu0 0.0
        %7539 = vmatpush1.msra.mxu0 0.0
        %7540 = vmatprep.subr.mxu0 0.0
        %7541 = vmatpush1.msra.mxu0 0.0
        %7542 = vmatprep.subr.mxu0 0.0
        %7543 = vmatpush1.msra.mxu0 0.0
        %7544 = vmatprep.subr.mxu0 0.0
        %7545 = vmatpush1.msra.mxu0 0.0
        %7546 = vmatprep.subr.mxu0 0.0
        %7547 = vmatpush1.msra.mxu0 0.0
        %7548 = vmatprep.subr.mxu0 0.0
        %7549 = vmatpush1.msra.mxu0 0.0
        %7550 = vmatprep.subr.mxu0 0.0
        %7551 = vmatpush1.msra.mxu0 0.0
        %7552 = vmatprep.subr.mxu0 0.0
        %7553 = vmatpush1.msra.mxu0 0.0
        %7554 = vmatprep.subr.mxu0 0.0
        %7555 = vmatpush1.msra.mxu0 0.0
        %7556 = vmatprep.subr.mxu0 0.0
        %7557 = vmatpush1.msra.mxu0 0.0
        %7558 = vmatprep.subr.mxu0 0.0
        %7559 = vmatpush1.msra.mxu0 0.0
        %7560 = vmatprep.subr.mxu0 0.0
        %7561 = vmatpush1.msra.mxu0 0.0
        %7562 = vmatprep.subr.mxu0 0.0
        %7563 = vmatpush1.msra.mxu0 0.0
        %7564 = vmatprep.subr.mxu0 0.0
        %7565 = vmatpush1.msra.mxu0 0.0
        %7566 = vmatprep.subr.mxu0 0.0
        %7567 = vmatpush1.msra.mxu0 0.0
        %7568 = vmatprep.subr.mxu0 0.0
        %7569 = vmatpush1.msra.mxu0 0.0
        %7570 = vmatprep.subr.mxu0 0.0
        %7571 = vmatpush1.msra.mxu0 0.0
        %7572 = vmatprep.subr.mxu0 0.0
        %7573 = vmatpush1.msra.mxu0 0.0
        %7574 = vmatprep.subr.mxu0 0.0
        %7575 = vmatpush1.msra.mxu0 0.0
        %7576 = vmatprep.subr.mxu0 0.0
        %7577 = vmatpush1.msra.mxu0 0.0
        %7578 = vmatprep.subr.mxu0 0.0
        %7579 = vmatpush1.msra.mxu0 0.0
        %7580 = vmatprep.subr.mxu0 0.0
        %7581 = vmatpush1.msra.mxu0 0.0
        %7582 = vmatprep.mubr.f32.mxu0 0.0
        %7583 = vmatmul.mubr.f32.gmra.mrb[0].mxu0 %v7471
        %v7584 = vpop.f32.mrb[0].mxu0
        %v7585 = vadd.f32 %v7467, %v7584
        %v7586 = vpop.f32.mrb[0].mxu0
        %7587 = vmatprep.mubr.f32.mxu0 0.0
        %7588 = vmatmul.mubr.f32.gmra.mrb[0].mxu0 %v7474
        %v7589 = vpop.f32.mrb[0].mxu0
        %v7590 = vadd.f32 %v7467, %v7589
        %v7591 = vpop.f32.mrb[0].mxu0
        %7592 = vmatprep.mubr.f32.mxu0 0.0
        %7593 = vmatmul.mubr.f32.gmra.mrb[0].mxu0 %v7477
        %v7594 = vpop.f32.mrb[0].mxu0
        %v7595 = vadd.f32 %v7467, %v7594
        %v7596 = vpop.f32.mrb[0].mxu0
        %7597 = vmatprep.mubr.f32.mxu0 0.0
        %7598 = vmatmul.mubr.f32.gmra.mrb[0].mxu0 %v7480
        %v7599 = vpop.f32.mrb[0].mxu0
        %v7600 = vadd.f32 %v7467, %v7599
        %v7601 = vpop.f32.mrb[0].mxu0
        %7602 = vmatprep.mubr.f32.mxu0 0.0
        %7603 = vmatmul.mubr.f32.gmra.mrb[0].mxu0 %v7483
        %v7604 = vpop.f32.mrb[0].mxu0
        %v7605 = vadd.f32 %v7467, %v7604
        %v7606 = vpop.f32.mrb[0].mxu0
        %7607 = vmatprep.mubr.f32.mxu0 0.0
        %7608 = vmatmul.mubr.f32.gmra.mrb[0].mxu0 %v7486
        %v7609 = vpop.f32.mrb[0].mxu0
        %v7610 = vadd.f32 %v7467, %v7609
        %v7611 = vpop.f32.mrb[0].mxu0
        %7612 = vmatprep.mubr.f32.mxu0 0.0
        %7613 = vmatmul.mubr.f32.gmra.mrb[0].mxu0 %v7489
        %v7614 = vpop.f32.mrb[0].mxu0
        %v7615 = vadd.f32 %v7467, %v7614
        %v7616 = vpop.f32.mrb[0].mxu0
        %7617 = vmatprep.mubr.f32.mxu0 0.0
        %7618 = vmatmul.mubr.f32.gmra.mrb[0].mxu0 %v7492
        %v7619 = vpop.f32.mrb[0].mxu0
        %v7620 = vadd.f32 %v7467, %v7619
        %v7621 = vpop.f32.mrb[0].mxu0
        %7622 = vmatprep.mubr.f32.mxu0 0.0
        %7623 = vmatmul.mubr.f32.gmra.mrb[0].mxu0 %v7495
        %v7624 = vpop.f32.mrb[0].mxu0
        %v7625 = vadd.f32 %v7467, %v7624
        %v7626 = vpop.f32.mrb[0].mxu0
        %7627 = vmatprep.mubr.f32.mxu0 0.0
        %7628 = vmatmul.mubr.f32.gmra.mrb[0].mxu0 %v7498
        %v7629 = vpop.f32.mrb[0].mxu0
        %v7630 = vadd.f32 %v7467, %v7629
        %v7631 = vpop.f32.mrb[0].mxu0
        %7632 = vmatprep.mubr.f32.mxu0 0.0
        %7633 = vmatmul.mubr.f32.gmra.mrb[0].mxu0 %v7501
        %v7634 = vpop.f32.mrb[0].mxu0
        %v7635 = vadd.f32 %v7467, %v7634
        %v7636 = vpop.f32.mrb[0].mxu0
        %7637 = vmatprep.mubr.f32.mxu0 0.0
        %7638 = vmatmul.mubr.f32.gmra.mrb[0].mxu0 %v7504
        %v7639 = vpop.f32.mrb[0].mxu0
        %v7640 = vadd.f32 %v7467, %v7639
        %v7641 = vpop.f32.mrb[0].mxu0
        %7642 = vmatprep.mubr.f32.mxu0 0.0
        %7643 = vmatmul.mubr.f32.gmra.mrb[0].mxu0 %v7507
        %v7644 = vpop.f32.mrb[0].mxu0
        %v7645 = vadd.f32 %v7467, %v7644
        %v7646 = vpop.f32.mrb[0].mxu0
        %7647 = vmatprep.mubr.f32.mxu0 0.0
        %7648 = vmatmul.mubr.f32.gmra.mrb[0].mxu0 %v7510
        %v7649 = vpop.f32.mrb[0].mxu0
        %v7650 = vadd.f32 %v7467, %v7649
        %v7651 = vpop.f32.mrb[0].mxu0
        %7652 = vmatprep.mubr.f32.mxu0 0.0
        %7653 = vmatmul.mubr.f32.gmra.mrb[0].mxu0 %v7513
        %v7654 = vpop.f32.mrb[0].mxu0
        %v7655 = vadd.f32 %v7467, %v7654
        %v7656 = vpop.f32.mrb[0].mxu0
        %7657 = vmatprep.mubr.f32.mxu0 0.0
        %7658 = vmatmul.mubr.f32.gmra.mrb[0].mxu0 %v7516
        %v7659 = vpop.f32.mrb[0].mxu0
        %v7660 = vadd.f32 %v7467, %v7659
        %v7661 = vpop.f32.mrb[0].mxu0
        %7662 = vdwg.mxu0
        %v7663 = vmax.f32 %v7585, 0.0
        %v7664 = vmax.f32 %v7590, 0.0
        %v7665 = vmax.f32 %v7595, 0.0
        %v7666 = vmax.f32 %v7600, 0.0
        %v7667 = vmax.f32 %v7605, 0.0
        %v7668 = vmax.f32 %v7610, 0.0
        %v7669 = vmax.f32 %v7615, 0.0
        %v7670 = vmax.f32 %v7620, 0.0
        %v7671 = vmax.f32 %v7625, 0.0
        %v7672 = vmax.f32 %v7630, 0.0
        %v7673 = vmax.f32 %v7635, 0.0
        %v7674 = vmax.f32 %v7640, 0.0
        %v7675 = vmax.f32 %v7645, 0.0
        %v7676 = vmax.f32 %v7650, 0.0
        %v7677 = vmax.f32 %v7655, 0.0
        %v7678 = vmax.f32 %v7660, 0.0
        %v7679 = vld [vmem:[%s19] sm:$0xff]
        %v7680 = vld [vmem:[%s20] sm:$0x1]
        %v7682 = vlaneseq
        %v7683 = vshrl.u32 %v7682, 7
        %v7684 = vsub.s32 0, %v7683
        %v7685 = vrot.slane %v7680, %v7684
        %v7688 = vsel %vm4470, %v7663, 0
        %v7691 = vsel %vm4470, %v7664, 0
        %v7694 = vsel %vm4470, %v7665, 0
        %v7697 = vsel %vm4470, %v7666, 0
        %v7700 = vsel %vm4470, %v7667, 0
        %v7703 = vsel %vm4470, %v7668, 0
        %v7706 = vsel %vm4470, %v7669, 0
        %v7709 = vsel %vm4470, %v7670, 0
        %v7712 = vsel %vm4470, %v7671, 0
        %v7715 = vsel %vm4470, %v7672, 0
        %v7718 = vsel %vm4470, %v7673, 0
        %v7721 = vsel %vm4470, %v7674, 0
        %v7724 = vsel %vm4470, %v7675, 0
        %v7727 = vsel %vm4470, %v7676, 0
        %v7730 = vsel %vm4470, %v7677, 0
        %v7733 = vsel %vm4470, %v7678, 0
        %7735 = vmatprep.subr.mxu0 0.0
        %7736 = vmatpush1.msra.mxu0 %v7679
        %7737 = vmatprep.subr.mxu0 0.0
        %7738 = vmatpush1.msra.mxu0 0.0
        %7739 = vmatprep.subr.mxu0 0.0
        %7740 = vmatpush1.msra.mxu0 0.0
        %7741 = vmatprep.subr.mxu0 0.0
        %7742 = vmatpush1.msra.mxu0 0.0
        %7743 = vmatprep.subr.mxu0 0.0
        %7744 = vmatpush1.msra.mxu0 0.0
        %7745 = vmatprep.subr.mxu0 0.0
        %7746 = vmatpush1.msra.mxu0 0.0
        %7747 = vmatprep.subr.mxu0 0.0
        %7748 = vmatpush1.msra.mxu0 0.0
        %7749 = vmatprep.subr.mxu0 0.0
        %7750 = vmatpush1.msra.mxu0 0.0
        %7751 = vmatprep.subr.mxu0 0.0
        %7752 = vmatpush1.msra.mxu0 0.0
        %7753 = vmatprep.subr.mxu0 0.0
        %7754 = vmatpush1.msra.mxu0 0.0
        %7755 = vmatprep.subr.mxu0 0.0
        %7756 = vmatpush1.msra.mxu0 0.0
        %7757 = vmatprep.subr.mxu0 0.0
        %7758 = vmatpush1.msra.mxu0 0.0
        %7759 = vmatprep.subr.mxu0 0.0
        %7760 = vmatpush1.msra.mxu0 0.0
        %7761 = vmatprep.subr.mxu0 0.0
        %7762 = vmatpush1.msra.mxu0 0.0
        %7763 = vmatprep.subr.mxu0 0.0
        %7764 = vmatpush1.msra.mxu0 0.0
        %7765 = vmatprep.subr.mxu0 0.0
        %7766 = vmatpush1.msra.mxu0 0.0
        %7767 = vmatprep.subr.mxu0 0.0
        %7768 = vmatpush1.msra.mxu0 0.0
        %7769 = vmatprep.subr.mxu0 0.0
        %7770 = vmatpush1.msra.mxu0 0.0
        %7771 = vmatprep.subr.mxu0 0.0
        %7772 = vmatpush1.msra.mxu0 0.0
        %7773 = vmatprep.subr.mxu0 0.0
        %7774 = vmatpush1.msra.mxu0 0.0
        %7775 = vmatprep.subr.mxu0 0.0
        %7776 = vmatpush1.msra.mxu0 0.0
        %7777 = vmatprep.subr.mxu0 0.0
        %7778 = vmatpush1.msra.mxu0 0.0
        %7779 = vmatprep.subr.mxu0 0.0
        %7780 = vmatpush1.msra.mxu0 0.0
        %7781 = vmatprep.subr.mxu0 0.0
        %7782 = vmatpush1.msra.mxu0 0.0
        %7783 = vmatprep.subr.mxu0 0.0
        %7784 = vmatpush1.msra.mxu0 0.0
        %7785 = vmatprep.subr.mxu0 0.0
        %7786 = vmatpush1.msra.mxu0 0.0
        %7787 = vmatprep.subr.mxu0 0.0
        %7788 = vmatpush1.msra.mxu0 0.0
        %7789 = vmatprep.subr.mxu0 0.0
        %7790 = vmatpush1.msra.mxu0 0.0
        %7791 = vmatprep.subr.mxu0 0.0
        %7792 = vmatpush1.msra.mxu0 0.0
        %7793 = vmatprep.subr.mxu0 0.0
        %7794 = vmatpush1.msra.mxu0 0.0
        %7795 = vmatprep.subr.mxu0 0.0
        %7796 = vmatpush1.msra.mxu0 0.0
        %7797 = vmatprep.subr.mxu0 0.0
        %7798 = vmatpush1.msra.mxu0 0.0
        %7799 = vmatprep.mubr.f32.mxu0 0.0
        %7800 = vmatmul.mubr.f32.gmra.mrb[0].mxu0 %v7688
        %v7801 = vpop.f32.mrb[0].mxu0
        %v7802 = vadd.f32 %v7685, %v7801
        %v7803 = vpop.f32.mrb[0].mxu0
        %7804 = vmatprep.mubr.f32.mxu0 0.0
        %7805 = vmatmul.mubr.f32.gmra.mrb[0].mxu0 %v7691
        %v7806 = vpop.f32.mrb[0].mxu0
        %v7807 = vadd.f32 %v7685, %v7806
        %v7808 = vpop.f32.mrb[0].mxu0
        %7809 = vmatprep.mubr.f32.mxu0 0.0
        %7810 = vmatmul.mubr.f32.gmra.mrb[0].mxu0 %v7694
        %v7811 = vpop.f32.mrb[0].mxu0
        %v7812 = vadd.f32 %v7685, %v7811
        %v7813 = vpop.f32.mrb[0].mxu0
        %7814 = vmatprep.mubr.f32.mxu0 0.0
        %7815 = vmatmul.mubr.f32.gmra.mrb[0].mxu0 %v7697
        %v7816 = vpop.f32.mrb[0].mxu0
        %v7817 = vadd.f32 %v7685, %v7816
        %v7818 = vpop.f32.mrb[0].mxu0
        %7819 = vmatprep.mubr.f32.mxu0 0.0
        %7820 = vmatmul.mubr.f32.gmra.mrb[0].mxu0 %v7700
        %v7821 = vpop.f32.mrb[0].mxu0
        %v7822 = vadd.f32 %v7685, %v7821
        %v7823 = vpop.f32.mrb[0].mxu0
        %7824 = vmatprep.mubr.f32.mxu0 0.0
        %7825 = vmatmul.mubr.f32.gmra.mrb[0].mxu0 %v7703
        %v7826 = vpop.f32.mrb[0].mxu0
        %v7827 = vadd.f32 %v7685, %v7826
        %v7828 = vpop.f32.mrb[0].mxu0
        %7829 = vmatprep.mubr.f32.mxu0 0.0
        %7830 = vmatmul.mubr.f32.gmra.mrb[0].mxu0 %v7706
        %v7831 = vpop.f32.mrb[0].mxu0
        %v7832 = vadd.f32 %v7685, %v7831
        %v7833 = vpop.f32.mrb[0].mxu0
        %7834 = vmatprep.mubr.f32.mxu0 0.0
        %7835 = vmatmul.mubr.f32.gmra.mrb[0].mxu0 %v7709
        %v7836 = vpop.f32.mrb[0].mxu0
        %v7837 = vadd.f32 %v7685, %v7836
        %v7838 = vpop.f32.mrb[0].mxu0
        %7839 = vmatprep.mubr.f32.mxu0 0.0
        %7840 = vmatmul.mubr.f32.gmra.mrb[0].mxu0 %v7712
        %v7841 = vpop.f32.mrb[0].mxu0
        %v7842 = vadd.f32 %v7685, %v7841
        %v7843 = vpop.f32.mrb[0].mxu0
        %7844 = vmatprep.mubr.f32.mxu0 0.0
        %7845 = vmatmul.mubr.f32.gmra.mrb[0].mxu0 %v7715
        %v7846 = vpop.f32.mrb[0].mxu0
        %v7847 = vadd.f32 %v7685, %v7846
        %v7848 = vpop.f32.mrb[0].mxu0
        %7849 = vmatprep.mubr.f32.mxu0 0.0
        %7850 = vmatmul.mubr.f32.gmra.mrb[0].mxu0 %v7718
        %v7851 = vpop.f32.mrb[0].mxu0
        %v7852 = vadd.f32 %v7685, %v7851
        %v7853 = vpop.f32.mrb[0].mxu0
        %7854 = vmatprep.mubr.f32.mxu0 0.0
        %7855 = vmatmul.mubr.f32.gmra.mrb[0].mxu0 %v7721
        %v7856 = vpop.f32.mrb[0].mxu0
        %v7857 = vadd.f32 %v7685, %v7856
        %v7858 = vpop.f32.mrb[0].mxu0
        %7859 = vmatprep.mubr.f32.mxu0 0.0
        %7860 = vmatmul.mubr.f32.gmra.mrb[0].mxu0 %v7724
        %v7861 = vpop.f32.mrb[0].mxu0
        %v7862 = vadd.f32 %v7685, %v7861
        %v7863 = vpop.f32.mrb[0].mxu0
        %7864 = vmatprep.mubr.f32.mxu0 0.0
        %7865 = vmatmul.mubr.f32.gmra.mrb[0].mxu0 %v7727
        %v7866 = vpop.f32.mrb[0].mxu0
        %v7867 = vadd.f32 %v7685, %v7866
        %v7868 = vpop.f32.mrb[0].mxu0
        %7869 = vmatprep.mubr.f32.mxu0 0.0
        %7870 = vmatmul.mubr.f32.gmra.mrb[0].mxu0 %v7730
        %v7871 = vpop.f32.mrb[0].mxu0
        %v7872 = vadd.f32 %v7685, %v7871
        %v7873 = vpop.f32.mrb[0].mxu0
        %7874 = vmatprep.mubr.f32.mxu0 0.0
        %7875 = vmatmul.mubr.f32.gmra.mrb[0].mxu0 %v7733
        %v7876 = vpop.f32.mrb[0].mxu0
        %v7877 = vadd.f32 %v7685, %v7876
        %v7878 = vpop.f32.mrb[0].mxu0
        %7879 = vdwg.mxu0
        %v7880 = vmax.f32 %v7802, 0.0
        %v7881 = vmax.f32 %v7807, 0.0
        %v7882 = vmax.f32 %v7812, 0.0
        %v7883 = vmax.f32 %v7817, 0.0
        %v7884 = vmax.f32 %v7822, 0.0
        %v7885 = vmax.f32 %v7827, 0.0
        %v7886 = vmax.f32 %v7832, 0.0
        %v7887 = vmax.f32 %v7837, 0.0
        %v7888 = vmax.f32 %v7842, 0.0
        %v7889 = vmax.f32 %v7847, 0.0
        %v7890 = vmax.f32 %v7852, 0.0
        %v7891 = vmax.f32 %v7857, 0.0
        %v7892 = vmax.f32 %v7862, 0.0
        %v7893 = vmax.f32 %v7867, 0.0
        %v7894 = vmax.f32 %v7872, 0.0
        %v7895 = vmax.f32 %v7877, 0.0
        %v7896 = vadd.f32 %v6446, %v7880
        %v7897 = vadd.f32 %v6451, %v7881
        %v7898 = vadd.f32 %v6456, %v7882
        %v7899 = vadd.f32 %v6461, %v7883
        %v7900 = vadd.f32 %v6466, %v7884
        %v7901 = vadd.f32 %v6471, %v7885
        %v7902 = vadd.f32 %v6476, %v7886
        %v7903 = vadd.f32 %v6481, %v7887
        %v7904 = vadd.f32 %v6486, %v7888
        %v7905 = vadd.f32 %v6491, %v7889
        %v7906 = vadd.f32 %v6496, %v7890
        %v7907 = vadd.f32 %v6501, %v7891
        %v7908 = vadd.f32 %v6506, %v7892
        %v7909 = vadd.f32 %v6511, %v7893
        %v7910 = vadd.f32 %v6516, %v7894
        %v7911 = vadd.f32 %v6521, %v7895
        %7912 = vst.msk [vmem:[#allocation3 + $0x18] sm:$0xff] %vm4470, %v7896
        %7913 = vst.msk [vmem:[#allocation3 + $0x20] sm:$0xff] %vm4470, %v7897
        %7914 = vst.msk [vmem:[#allocation3 + $0x28] sm:$0xff] %vm4470, %v7898
        %7915 = vst.msk [vmem:[#allocation3 + $0x30] sm:$0xff] %vm4470, %v7899
        %7916 = vst.msk [vmem:[#allocation3 + $0x38] sm:$0xff] %vm4470, %v7900
        %7917 = vst.msk [vmem:[#allocation3 + $0x40] sm:$0xff] %vm4470, %v7901
        %7918 = vst.msk [vmem:[#allocation3 + $0x48] sm:$0xff] %vm4470, %v7902
        %7919 = vst.msk [vmem:[#allocation3 + $0x50] sm:$0xff] %vm4470, %v7903
        %7920 = vst.msk [vmem:[#allocation3 + $0x58] sm:$0xff] %vm4470, %v7904
        %7921 = vst.msk [vmem:[#allocation3 + $0x60] sm:$0xff] %vm4470, %v7905
        %7922 = vst.msk [vmem:[#allocation3 + $0x68] sm:$0xff] %vm4470, %v7906
        %7923 = vst.msk [vmem:[#allocation3 + $0x70] sm:$0xff] %vm4470, %v7907
        %7924 = vst.msk [vmem:[#allocation3 + $0x78] sm:$0xff] %vm4470, %v7908
        %7925 = vst.msk [vmem:[#allocation3 + $0x80] sm:$0xff] %vm4470, %v7909
        %7926 = vst.msk [vmem:[#allocation3 + $0x88] sm:$0xff] %vm4470, %v7910
        %7927 = vst.msk [vmem:[#allocation3 + $0x90] sm:$0xff] %vm4470, %v7911
        %s7928 = scalar_lea.vmem [#allocation3], 24
        %v7929 = vld [vmem:[%s7928] ss:$2 sm:$0xf]
        %s7930 = scalar_lea.vmem [#allocation3], 25
        %v7931 = vld [vmem:[%s7930] ss:$2 sm:$0xf]
        %s7932 = scalar_lea.vmem [#allocation3], 40
        %v7933 = vld [vmem:[%s7932] ss:$2 sm:$0xf]
        %s7934 = scalar_lea.vmem [#allocation3], 41
        %v7935 = vld [vmem:[%s7934] ss:$2 sm:$0xf]
        %v7936 = vmax.f32 %v7929, %v7931
        %v7937 = vmax.f32 %v7933, %v7935
        %v7938 = vmax.f32 %v7936, %v7937
        %v7939 = vadd.f32 %v7938, 0.0
        %s7940 = scalar_lea.vmem [#allocation3], 56
        %v7941 = vld [vmem:[%s7940] ss:$2 sm:$0xf]
        %s7942 = scalar_lea.vmem [#allocation3], 57
        %v7943 = vld [vmem:[%s7942] ss:$2 sm:$0xf]
        %s7944 = scalar_lea.vmem [#allocation3], 72
        %v7945 = vld [vmem:[%s7944] ss:$2 sm:$0xf]
        %s7946 = scalar_lea.vmem [#allocation3], 73
        %v7947 = vld [vmem:[%s7946] ss:$2 sm:$0xf]
        %v7948 = vmax.f32 %v7941, %v7943
        %v7949 = vmax.f32 %v7945, %v7947
        %v7950 = vmax.f32 %v7948, %v7949
        %v7951 = vadd.f32 %v7939, %v7950
        %s7952 = scalar_lea.vmem [#allocation3], 88
        %v7953 = vld [vmem:[%s7952] ss:$2 sm:$0xf]
        %s7954 = scalar_lea.vmem [#allocation3], 89
        %v7955 = vld [vmem:[%s7954] ss:$2 sm:$0xf]
        %s7956 = scalar_lea.vmem [#allocation3], 104
        %v7957 = vld [vmem:[%s7956] ss:$2 sm:$0xf]
        %s7958 = scalar_lea.vmem [#allocation3], 105
        %v7959 = vld [vmem:[%s7958] ss:$2 sm:$0xf]
        %v7960 = vmax.f32 %v7953, %v7955
        %v7961 = vmax.f32 %v7957, %v7959
        %v7962 = vmax.f32 %v7960, %v7961
        %v7963 = vadd.f32 %v7951, %v7962
        %s7964 = scalar_lea.vmem [#allocation3], 120
        %v7965 = vld [vmem:[%s7964] ss:$2 sm:$0xf]
        %s7966 = scalar_lea.vmem [#allocation3], 121
        %v7967 = vld [vmem:[%s7966] ss:$2 sm:$0xf]
        %s7968 = scalar_lea.vmem [#allocation3], 136
        %v7969 = vld [vmem:[%s7968] ss:$2 sm:$0xf]
        %s7970 = scalar_lea.vmem [#allocation3], 137
        %v7971 = vld [vmem:[%s7970] ss:$2 sm:$0xf]
        %v7972 = vmax.f32 %v7965, %v7967
        %v7973 = vmax.f32 %v7969, %v7971
        %v7974 = vmax.f32 %v7972, %v7973
        %v7975 = vadd.f32 %v7963, %v7974
        %vm7976 = vcmask 60416
        %v7977 = vsel %vm7976, %v7975, 0.0
        %v7978 = vrot.slane %v7977, 4
        %v7979 = vadd.f32 %v7977, %v7978
        %v7980 = vrot.slane %v7979, 2
        %v7981 = vadd.f32 %v7979, %v7980
        %v7982 = vrot.slane %v7981, 1
        %v7983 = vadd.f32 %v7981, %v7982
        %v7984 = vld [vmem:[%s21] sm:$0xff]
        %v7985 = vld [vmem:[%s22] sm:$0x1]
        %v7987 = vsel %vm4470, %v7983, 0
        %7989 = vmatprep.subr.mxu0 0.0
        %7990 = vmatpush1.msra.mxu0 %v7984
        %7991 = vmatprep.subr.mxu0 0.0
        %7992 = vmatpush1.msra.mxu0 0.0
        %7993 = vmatprep.subr.mxu0 0.0
        %7994 = vmatpush1.msra.mxu0 0.0
        %7995 = vmatprep.subr.mxu0 0.0
        %7996 = vmatpush1.msra.mxu0 0.0
        %7997 = vmatprep.subr.mxu0 0.0
        %7998 = vmatpush1.msra.mxu0 0.0
        %7999 = vmatprep.subr.mxu0 0.0
        %8000 = vmatpush1.msra.mxu0 0.0
        %8001 = vmatprep.subr.mxu0 0.0
        %8002 = vmatpush1.msra.mxu0 0.0
        %8003 = vmatprep.subr.mxu0 0.0
        %8004 = vmatpush1.msra.mxu0 0.0
        %8005 = vmatprep.subr.mxu0 0.0
        %8006 = vmatpush1.msra.mxu0 0.0
        %8007 = vmatprep.subr.mxu0 0.0
        %8008 = vmatpush1.msra.mxu0 0.0
        %8009 = vmatprep.subr.mxu0 0.0
        %8010 = vmatpush1.msra.mxu0 0.0
        %8011 = vmatprep.subr.mxu0 0.0
        %8012 = vmatpush1.msra.mxu0 0.0
        %8013 = vmatprep.subr.mxu0 0.0
        %8014 = vmatpush1.msra.mxu0 0.0
        %8015 = vmatprep.subr.mxu0 0.0
        %8016 = vmatpush1.msra.mxu0 0.0
        %8017 = vmatprep.subr.mxu0 0.0
        %8018 = vmatpush1.msra.mxu0 0.0
        %8019 = vmatprep.subr.mxu0 0.0
        %8020 = vmatpush1.msra.mxu0 0.0
        %8021 = vmatprep.subr.mxu0 0.0
        %8022 = vmatpush1.msra.mxu0 0.0
        %8023 = vmatprep.subr.mxu0 0.0
        %8024 = vmatpush1.msra.mxu0 0.0
        %8025 = vmatprep.subr.mxu0 0.0
        %8026 = vmatpush1.msra.mxu0 0.0
        %8027 = vmatprep.subr.mxu0 0.0
        %8028 = vmatpush1.msra.mxu0 0.0
        %8029 = vmatprep.subr.mxu0 0.0
        %8030 = vmatpush1.msra.mxu0 0.0
        %8031 = vmatprep.subr.mxu0 0.0
        %8032 = vmatpush1.msra.mxu0 0.0
        %8033 = vmatprep.subr.mxu0 0.0
        %8034 = vmatpush1.msra.mxu0 0.0
        %8035 = vmatprep.subr.mxu0 0.0
        %8036 = vmatpush1.msra.mxu0 0.0
        %8037 = vmatprep.subr.mxu0 0.0
        %8038 = vmatpush1.msra.mxu0 0.0
        %8039 = vmatprep.subr.mxu0 0.0
        %8040 = vmatpush1.msra.mxu0 0.0
        %8041 = vmatprep.subr.mxu0 0.0
        %8042 = vmatpush1.msra.mxu0 0.0
        %8043 = vmatprep.subr.mxu0 0.0
        %8044 = vmatpush1.msra.mxu0 0.0
        %8045 = vmatprep.subr.mxu0 0.0
        %8046 = vmatpush1.msra.mxu0 0.0
        %8047 = vmatprep.subr.mxu0 0.0
        %8048 = vmatpush1.msra.mxu0 0.0
        %8049 = vmatprep.subr.mxu0 0.0
        %8050 = vmatpush1.msra.mxu0 0.0
        %8051 = vmatprep.subr.mxu0 0.0
        %8052 = vmatpush1.msra.mxu0 0.0
        %8053 = vmatprep.mubr.f32.mxu0 0.0
        %8054 = vmatmul.mubr.f32.gmra.mrb[0].mxu0 %v7987
        %v8055 = vpop.f32.mrb[0].mxu0
        %v8056 = vadd.f32 %v7985, %v8055
        %v8057 = vpop.f32.mrb[0].mxu0
        %8058 = vdwg.mxu0
        %vm8059 = vcmask 73728
        %8060 = vst.msk [vmem:[%s702] sm:$0x1] %vm8059, %v8056
        %s8061 = sand.u32 %s533, 1
        %s8062 = scalar_lea.sflag [#allocation6], %s8061
        %s8063 = sand.u32 %s533, 1
        %s8064 = scalar_lea.vmem [#allocation5], %s8063
        // Predicated region
        $region113: #{pallas_forward.1} parent=111 // pred_check
          %p8065 = pneg %p543
        $region114: #{pallas_forward.1} parent=111 // pred_check_branch
          %8067 = sbr.rel (%p8065) target = $region116
        $region115: #{pallas_forward.1} parent=111 // pred_region
          %s8069 = ssub.s32 16, 16
          %8070 = vsyncadd %s8062, %s8069
          %s8071 = smul.addr %s37, 16
          %s8072 = scalar_lea.hbm %s23, %s8071
          %s8074 = sshll.u32 %s8064, 4
          %s8075 = int_to_ptr.vmem [resolvable:$true] %s8074
          %8077 = dma.vmem_to_hbm [thread:$0]  %s8075, 16, %s8072, %s8062
        $region116: #{pallas_forward.1} parent=111 // pred_fallthru
          _
      $region112: #{pallas_forward.1} parent=5 // pred_fallthru
        _
      %p8078 = scmp.le.s32.totalorder 2, %s32
      // Predicated region
      $region117: #{pallas_forward.1} parent=5 // pred_check
        %p8079 = pneg %p8078
      $region118: #{pallas_forward.1} parent=5 // pred_check_branch
        %8081 = sbr.rel (%p8079) target = $region120
      $region119: #{pallas_forward.1} parent=5 // pred_region
        %s8082 = ssub.s32 %s32, 2
        // Predicated region
        $region121: #{pallas_forward.1} parent=119 // pred_check
          %p8083 = pneg %p549
        $region122: #{pallas_forward.1} parent=119 // pred_check_branch
          %8085 = sbr.rel (%p8083) target = $region124
        $region123: #{pallas_forward.1} parent=119 // pred_region
          %s8086 = sand.u32 %s534, 1
          %s8087 = scalar_lea.sflag [#allocation6], %s8086
          %s8088 = sand.u32 %s534, 1
          %s8089 = scalar_lea.vmem [#allocation5], %s8088
          %8090 = dma.done %s8087, 16
        $region124: #{pallas_forward.1} parent=119 // pred_fallthru
          _
      $region120: #{pallas_forward.1} parent=5 // pred_fallthru
        _
    $region6: #{pallas_forward.1} parent=1 // loop_footer
      %s36 = sadd.s32 1, %s32
    $region7: #{pallas_forward.1} parent=1 // loop_footer_branch
      %31 = sbr.rel target = $region3
    $region8: #{pallas_forward.1} parent=1 // loop_exit
      _
    %8091 = vsyncpa [#allocation6], 1
    %s8092 = scalar_lea.sflag [#allocation6], 1
    %8093 = vsyncpa %s8092, 1

</llo_original>
